<compile_context>
chip_gen: v6e
topology: v6e:2x2x1
jax: 0.10.0
libtpu: 0.0.40
codegen_flags: <defaults>
</compile_context>

<pallas_src>
import jax
import jax.numpy as jnp
from jax.experimental import pallas as pl
from jax.experimental.pallas import tpu as pltpu

X_DIM = 2048
ATT_DIM = 312
IN_DIM = X_DIM + ATT_DIM   # 2360
HID_DIM = 1024
OUT_DIM = 1
LRELU_SLOPE = 0.2


def _disc_kernel(x_ref, att_ref, w1x_ref, w1a_ref, b1_ref, w2_ref, b2_ref,
                 out_ref, hid_ref):
    # fc1 split into two aligned matmuls, bf16 operands, f32 accumulation.
    xb = x_ref[...].astype(jnp.bfloat16)
    ab = att_ref[...].astype(jnp.bfloat16)
    z1 = jnp.dot(xb, w1x_ref[...], preferred_element_type=jnp.float32)
    z1 = z1 + jnp.dot(ab, w1a_ref[...], preferred_element_type=jnp.float32)
    z1 = z1 + b1_ref[...]
    # LeakyReLU(0.2)
    hidden = jnp.where(z1 >= 0, z1, LRELU_SLOPE * z1)
    hid_ref[...] = hidden.astype(hid_ref.dtype)
    # fc2: N=1 -> VPU multiply + XLU lane reduction (skip the MXU matvec).
    out_ref[...] = (
        jnp.sum(hidden * w2_ref[...], axis=-1, keepdims=True) + b2_ref[...]
    ).astype(out_ref.dtype)


def init_params(key):
    """Master f32 params, PyTorch weights_init: Linear ~ N(0, 0.02), bias = 0."""
    k1, k2 = jax.random.split(key)
    w1 = 0.02 * jax.random.normal(k1, (IN_DIM, HID_DIM), dtype=jnp.float32)
    b1 = jnp.zeros((1, HID_DIM), dtype=jnp.float32)
    w2 = 0.02 * jax.random.normal(k2, (HID_DIM, OUT_DIM), dtype=jnp.float32)
    b2 = jnp.zeros((1, OUT_DIM), dtype=jnp.float32)
    return {"w1": w1, "b1": b1, "w2": w2, "b2": b2}


def prepare_params(params):
    """One-time conversion of master params into the kernel layout."""
    w1 = params["w1"]
    return {
        "w1x": w1[:X_DIM].astype(jnp.bfloat16),          # [2048, 1024] bf16
        "w1a": w1[X_DIM:].astype(jnp.bfloat16),          # [ 312, 1024] bf16
        "b1": params["b1"].reshape(1, HID_DIM).astype(jnp.float32),
        "w2": params["w2"].reshape(1, HID_DIM).astype(jnp.float32),  # row vec
        "b2": params["b2"].reshape(1, OUT_DIM).astype(jnp.float32),
    }


def discriminator_forward(x, att, kparams, tm=256):
    """x: [B, 2048] f32, att: [B, 312] f32 -> (out [B,1], hidden [B,1024])."""
    B = x.shape[0]
    # Sublane-align batch and pick a batch tile; pad so the tile divides B.
    bpad = -(-B // 8) * 8
    tm_eff = min(tm, bpad)
    bpad = -(-bpad // tm_eff) * tm_eff
    if bpad != B:
        x = jnp.pad(x, ((0, bpad - B), (0, 0)))
        att = jnp.pad(att, ((0, bpad - B), (0, 0)))
    grid = (bpad // tm_eff,)

    row = lambda shape: pl.BlockSpec(shape, lambda i: (i, 0))   # batch-tiled
    rep = lambda shape: pl.BlockSpec(shape, lambda i: (0, 0))   # weights resident

    out, hidden = pl.pallas_call(
        _disc_kernel,
        out_shape=(
            jax.ShapeDtypeStruct((bpad, OUT_DIM), jnp.float32),
            jax.ShapeDtypeStruct((bpad, HID_DIM), jnp.float32),
        ),
        grid_spec=pltpu.PrefetchScalarGridSpec(
            num_scalar_prefetch=0,
            grid=grid,
            in_specs=[
                row((tm_eff, X_DIM)),
                row((tm_eff, ATT_DIM)),
                rep((X_DIM, HID_DIM)),
                rep((ATT_DIM, HID_DIM)),
                rep((1, HID_DIM)),
                rep((1, HID_DIM)),
                rep((1, OUT_DIM)),
            ],
            out_specs=[
                row((tm_eff, OUT_DIM)),
                row((tm_eff, HID_DIM)),
            ],
        ),
        compiler_params=pltpu.CompilerParams(
            dimension_semantics=("parallel",),
            vmem_limit_bytes=32 << 20,
        ),
    )(x, att, kparams["w1x"], kparams["w1a"], kparams["b1"],
      kparams["w2"], kparams["b2"])
    return out[:B], hidden[:B]


def _reference(x, att, params):
    """Pure f32 reference of the PyTorch forward."""
    h = jnp.concatenate([x, att], axis=1)
    z1 = h @ params["w1"] + params["b1"]
    hidden = jnp.where(z1 >= 0, z1, LRELU_SLOPE * z1)
    return hidden @ params["w2"] + params["b2"], hidden


if __name__ == "__main__":
    key = jax.random.PRNGKey(0)
    kp, kx, ka = jax.random.split(key, 3)

    B = 8  # small batch; feature dims fixed by the module's Linear layers
    params = init_params(kp)
    kparams = prepare_params(params)
    x = jax.random.normal(kx, (B, X_DIM), dtype=jnp.float32)
    att = jax.random.normal(ka, (B, ATT_DIM), dtype=jnp.float32)

    out, hidden = discriminator_forward(x, att, kparams)
    out = jax.block_until_ready(out)
    hidden = jax.block_until_ready(hidden)

    ref_out, ref_hidden = _reference(x, att, params)
    assert out.shape == (B, OUT_DIM) and hidden.shape == (B, HID_DIM)
    # Tolerance loosened vs. the f32 reference because fc1 uses bf16 operands
    # (f32 accumulation); expected deviation is ~1e-2 absolute here.
    assert jnp.allclose(out, ref_out, atol=3e-2, rtol=3e-2)
    assert jnp.allclose(hidden, ref_hidden, atol=3e-2, rtol=3e-2)

    print("KERNEL_OK")
</pallas_src>

<mosaic_0001>
module attributes {stable_mosaic.version = 11 : i64} {
  func.func @_disc_kernel(%arg0: i32, %arg1: memref<8x2048xf32, #tpu.memory_space<vmem>>, %arg2: memref<8x312xf32, #tpu.memory_space<vmem>>, %arg3: memref<2048x1024xbf16, #tpu.memory_space<vmem>>, %arg4: memref<312x1024xbf16, #tpu.memory_space<vmem>>, %arg5: memref<1x1024xf32, #tpu.memory_space<vmem>>, %arg6: memref<1x1024xf32, #tpu.memory_space<vmem>>, %arg7: memref<1x1xf32, #tpu.memory_space<vmem>>, %arg8: memref<8x1xf32, #tpu.memory_space<vmem>>, %arg9: memref<8x1024xf32, #tpu.memory_space<vmem>>) attributes {dimension_semantics = [#tpu.dimension_semantics<parallel>], iteration_bounds = array<i64: 1>, scalar_prefetch = 0 : i64, scratch_operands = 0 : i64, tpu.core_type = #tpu.core_type<tc>, window_params = [{transform_indices = @transform_0, window_bounds = array<i64: 8, 2048>}, {transform_indices = @transform_1, window_bounds = array<i64: 8, 312>}, {pipeline_mode = #tpu.pipeline_mode<synchronous>, transform_indices = @transform_2, window_bounds = array<i64: 2048, 1024>}, {pipeline_mode = #tpu.pipeline_mode<synchronous>, transform_indices = @transform_3, window_bounds = array<i64: 312, 1024>}, {pipeline_mode = #tpu.pipeline_mode<synchronous>, transform_indices = @transform_4, window_bounds = array<i64: 1, 1024>}, {pipeline_mode = #tpu.pipeline_mode<synchronous>, transform_indices = @transform_5, window_bounds = array<i64: 1, 1024>}, {pipeline_mode = #tpu.pipeline_mode<synchronous>, transform_indices = @transform_6, window_bounds = array<i64: 1, 1>}, {transform_indices = @transform_7, window_bounds = array<i64: 8, 1>}, {transform_indices = @transform_8, window_bounds = array<i64: 8, 1024>}]} {
    %c0 = arith.constant 0 : index
    %c0_0 = arith.constant 0 : index
    %0 = vector.load %arg1[%c0, %c0_0] : memref<8x2048xf32, #tpu.memory_space<vmem>>, vector<8x2048xf32>
    %1 = arith.truncf %0 : vector<8x2048xf32> to vector<8x2048xbf16>
    %c0_1 = arith.constant 0 : index
    %c0_2 = arith.constant 0 : index
    %2 = vector.load %arg2[%c0_1, %c0_2] : memref<8x312xf32, #tpu.memory_space<vmem>>, vector<8x312xf32>
    %3 = arith.truncf %2 : vector<8x312xf32> to vector<8x312xbf16>
    %c0_3 = arith.constant 0 : index
    %c0_4 = arith.constant 0 : index
    %4 = vector.load %arg3[%c0_3, %c0_4] : memref<2048x1024xbf16, #tpu.memory_space<vmem>>, vector<2048x1024xbf16>
    %cst = arith.constant dense<0.000000e+00> : vector<8x1024xf32>
    %5 = tpu.matmul %1, %4, %cst {dimension_numbers = #tpu.dot_dimension_numbers<[1], [0], [0], [1], [0, 0, 1, 1], [], []>} : vector<8x2048xbf16>, vector<2048x1024xbf16>, vector<8x1024xf32> -> vector<8x1024xf32>
    %c0_5 = arith.constant 0 : index
    %c0_6 = arith.constant 0 : index
    %6 = vector.load %arg4[%c0_5, %c0_6] : memref<312x1024xbf16, #tpu.memory_space<vmem>>, vector<312x1024xbf16>
    %cst_7 = arith.constant dense<0.000000e+00> : vector<8x1024xf32>
    %7 = tpu.matmul %3, %6, %cst_7 {dimension_numbers = #tpu.dot_dimension_numbers<[1], [0], [0], [1], [0, 0, 1, 1], [], []>} : vector<8x312xbf16>, vector<312x1024xbf16>, vector<8x1024xf32> -> vector<8x1024xf32>
    %8 = arith.addf %5, %7 : vector<8x1024xf32>
    %c0_8 = arith.constant 0 : index
    %c0_9 = arith.constant 0 : index
    %9 = vector.load %arg5[%c0_8, %c0_9] : memref<1x1024xf32, #tpu.memory_space<vmem>>, vector<1x1024xf32>
    %10 = vector.broadcast %9 : vector<1x1024xf32> to vector<8x1024xf32>
    %11 = arith.addf %8, %10 : vector<8x1024xf32>
    %cst_10 = arith.constant 0.000000e+00 : f32
    %12 = vector.broadcast %cst_10 : f32 to vector<8x1024xf32>
    %13 = arith.cmpf oge, %11, %12 : vector<8x1024xf32>
    %cst_11 = arith.constant 2.000000e-01 : f32
    %14 = vector.broadcast %cst_11 : f32 to vector<8x1024xf32>
    %15 = arith.mulf %14, %11 : vector<8x1024xf32>
    %16 = arith.select %13, %11, %15 : vector<8x1024xi1>, vector<8x1024xf32>
    %c0_12 = arith.constant 0 : index
    %c0_13 = arith.constant 0 : index
    %17 = vector.load %arg9[%c0_12, %c0_13] : memref<8x1024xf32, #tpu.memory_space<vmem>>, vector<8x1024xf32>
    tpu.vector_store %arg9[%c0_12, %c0_13], %16 {strides = array<i32>} : memref<8x1024xf32, #tpu.memory_space<vmem>>, vector<8x1024xf32>,
    %c0_14 = arith.constant 0 : index
    %c0_15 = arith.constant 0 : index
    %18 = vector.load %arg6[%c0_14, %c0_15] : memref<1x1024xf32, #tpu.memory_space<vmem>>, vector<1x1024xf32>
    %19 = vector.broadcast %18 : vector<1x1024xf32> to vector<8x1024xf32>
    %20 = arith.mulf %16, %19 : vector<8x1024xf32>
    %cst_16 = arith.constant dense<0.000000e+00> : vector<8xf32>
    %21 = vector.multi_reduction <add>, %20, %cst_16 [1] : vector<8x1024xf32> to vector<8xf32>
    %22 = vector.shape_cast %21 : vector<8xf32> to vector<8x1xf32>
    %c0_17 = arith.constant 0 : index
    %c0_18 = arith.constant 0 : index
    %23 = vector.load %arg7[%c0_17, %c0_18] : memref<1x1xf32, #tpu.memory_space<vmem>>, vector<1x1xf32>
    %24 = vector.broadcast %23 : vector<1x1xf32> to vector<8x1xf32>
    %25 = arith.addf %22, %24 : vector<8x1xf32>
    %c0_19 = arith.constant 0 : index
    %c0_20 = arith.constant 0 : index
    %26 = vector.load %arg8[%c0_19, %c0_20] : memref<8x1xf32, #tpu.memory_space<vmem>>, vector<8x1xf32>
    tpu.vector_store %arg8[%c0_19, %c0_20], %25 {strides = array<i32>} : memref<8x1xf32, #tpu.memory_space<vmem>>, vector<8x1xf32>,
    return
  }
  func.func @transform_0(%arg0: i32) -> (i32, i32) {
    %c0_i32 = arith.constant 0 : i32
    %c0_i32_0 = arith.constant 0 : i32
    return %arg0, %c0_i32 : i32, i32
  }
  func.func @transform_1(%arg0: i32) -> (i32, i32) {
    %c0_i32 = arith.constant 0 : i32
    %c0_i32_0 = arith.constant 0 : i32
    return %arg0, %c0_i32 : i32, i32
  }
  func.func @transform_2(%arg0: i32) -> (i32, i32) {
    %c0_i32 = arith.constant 0 : i32
    %c0_i32_0 = arith.constant 0 : i32
    %c0_i32_1 = arith.constant 0 : i32
    return %c0_i32, %c0_i32_0 : i32, i32
  }
  func.func @transform_3(%arg0: i32) -> (i32, i32) {
    %c0_i32 = arith.constant 0 : i32
    %c0_i32_0 = arith.constant 0 : i32
    %c0_i32_1 = arith.constant 0 : i32
    return %c0_i32, %c0_i32_0 : i32, i32
  }
  func.func @transform_4(%arg0: i32) -> (i32, i32) {
    %c0_i32 = arith.constant 0 : i32
    %c0_i32_0 = arith.constant 0 : i32
    %c0_i32_1 = arith.constant 0 : i32
    return %c0_i32, %c0_i32_0 : i32, i32
  }
  func.func @transform_5(%arg0: i32) -> (i32, i32) {
    %c0_i32 = arith.constant 0 : i32
    %c0_i32_0 = arith.constant 0 : i32
    %c0_i32_1 = arith.constant 0 : i32
    return %c0_i32, %c0_i32_0 : i32, i32
  }
  func.func @transform_6(%arg0: i32) -> (i32, i32) {
    %c0_i32 = arith.constant 0 : i32
    %c0_i32_0 = arith.constant 0 : i32
    %c0_i32_1 = arith.constant 0 : i32
    return %c0_i32, %c0_i32_0 : i32, i32
  }
  func.func @transform_7(%arg0: i32) -> (i32, i32) {
    %c0_i32 = arith.constant 0 : i32
    %c0_i32_0 = arith.constant 0 : i32
    return %arg0, %c0_i32 : i32, i32
  }
  func.func @transform_8(%arg0: i32) -> (i32, i32) {
    %c0_i32 = arith.constant 0 : i32
    %c0_i32_0 = arith.constant 0 : i32
    return %arg0, %c0_i32 : i32, i32
  }
}

</mosaic_0001>

<llo_original>
// kernel: tpu_custom_call.1
$region0: #{tpu_custom_call.1}
  #allocation0 [shape = 'u32[]', space=smem, size = 0x4, offset = 0x4, fixed_abs, tag = 'smem constant byte address 0x4 - core index']
  #allocation1 [shape = 'u32[144,128]{1,0:T(1,128)}', space=vmem, size = 0x12000, scoped, tag = 'internal scratch']
  #allocation2 [shape = 'f32[1,1]{1,0:T(1,128)S(1)}', space=vmem, size = 0x200, scoped, tag = 'scoped memory for tpu_custom_call.1']
  %s0 = inlined_call_operand.hbm [shape: f32[8,2048], index: 0, kind: input, shape index: {}]
  %s1 = inlined_call_operand.hbm [shape: f32[8,312], index: 1, kind: input, shape index: {}]
  %s2 = inlined_call_operand.hbm [shape: bf16[2048,1024], index: 2, kind: input, shape index: {}]
  %s3 = inlined_call_operand.hbm [shape: bf16[312,1024], index: 3, kind: input, shape index: {}]
  %s4 = inlined_call_operand.hbm [shape: f32[1,1024], index: 4, kind: input, shape index: {}]
  %s5 = inlined_call_operand.hbm [shape: f32[1,1024], index: 5, kind: input, shape index: {}]
  %s6 = inlined_call_operand.<no memory space> [shape: f32[1,1], index: 6, kind: input, shape index: {}]
  %s7 = inlined_call_operand.vmem [shape: f32[8,1], index: 7, kind: output, shape index: {0}]
  %s8 = inlined_call_operand.hbm [shape: f32[8,1024], index: 8, kind: output, shape index: {1}]
  %9 = xla_tuple %s7, %s8
  %s10 = sld [smem:[#allocation0]]
  $region70: #{tpu_custom_call.1} parent=0
    _
  %s12 = ssub.s32 1, %s10
  %s13 = scalar_select 0, %s12, %s10
  %v14 = vstv %s6
  %15 = vst [vmem:[#allocation2] sm:$0x1] %v14
  $region1: #{tpu_custom_call.1} parent=0
    #allocation3 [shape = 'u8[65536]{0}', space=vmem, size = 0x10000, scoped, tag = 'input window, operand 0, single buffered']
    #allocation4 [shape = 's32[1]{0}', space=sflag, size = 0x4, scoped, tag = 'scoped memory for tpu_custom_call.1']
    #allocation5 [shape = 's32[1]{0}', space=sflag, size = 0x4, scoped, tag = 'scoped memory for tpu_custom_call.1']
    #allocation6 [shape = 'u8[12288]{0}', space=vmem, size = 0x3000, scoped, tag = 'input window, operand 1, single buffered']
    #allocation7 [shape = 's32[1]{0}', space=sflag, size = 0x4, scoped, tag = 'scoped memory for tpu_custom_call.1']
    #allocation8 [shape = 'u8[4194304]{0}', space=vmem, size = 0x400000, scoped, tag = 'input window, operand 2, single buffered']
    #allocation9 [shape = 'u8[638976]{0}', space=vmem, size = 0x9c000, scoped, tag = 'input window, operand 3, single buffered']
    #allocation10 [shape = 's32[1]{0}', space=sflag, size = 0x4, scoped, tag = 'scoped memory for tpu_custom_call.1']
    #allocation11 [shape = 'u8[4096]{0}', space=vmem, size = 0x1000, scoped, tag = 'input window, operand 4, single buffered']
    #allocation12 [shape = 'u8[4096]{0}', space=vmem, size = 0x1000, scoped, tag = 'input window, operand 5, single buffered']
    #allocation13 [shape = 's32[1]{0}', space=sflag, size = 0x4, scoped, tag = 'scoped memory for tpu_custom_call.1']
    #allocation14 [shape = 'u8[32768]{0}', space=vmem, size = 0x8000, scoped, tag = 'output window, operand 1, single buffered']
    %16 = vsyncpa [#allocation4], 0
    %17 = vsyncpa [#allocation7], 0
    %18 = vsyncpa [#allocation10], 0
    %19 = vsyncpa [#allocation13], 0
    %20 = vsyncpa [#allocation5], 0
    // Predicated region
    $region2: #{tpu_custom_call.1} parent=1 // pred_check
      _
    $region3: #{tpu_custom_call.1} parent=1 // pred_check_branch
      %22 = sbr.rel (0) target = $region5
    $region4: #{tpu_custom_call.1} parent=1 // pred_region
      %s24 = ssub.s32 2048, 2048
      %25 = vsyncadd [#allocation4], %s24
      %s27 = sshll.u32 [#allocation3], 4
      %s28 = int_to_ptr.vmem [resolvable:$true] %s27
      %30 = dma.hbm_to_vmem [thread:$0]  %s0, 2048, %s28, [#allocation4]
    $region5: #{tpu_custom_call.1} parent=1 // pred_fallthru
      _
    // Predicated region
    $region6: #{tpu_custom_call.1} parent=1 // pred_check
      _
    $region7: #{tpu_custom_call.1} parent=1 // pred_check_branch
      %32 = sbr.rel (0) target = $region9
    $region8: #{tpu_custom_call.1} parent=1 // pred_region
      %s34 = ssub.s32 384, 384
      %35 = vsyncadd [#allocation7], %s34
      %s37 = sshll.u32 [#allocation6], 4
      %s38 = int_to_ptr.vmem [resolvable:$true] %s37
      %40 = dma.hbm_to_vmem [thread:$0]  %s1, 384, %s38, [#allocation7]
    $region9: #{tpu_custom_call.1} parent=1 // pred_fallthru
      _
    // Predicated region
    $region10: #{tpu_custom_call.1} parent=1 // pred_check
      _
    $region11: #{tpu_custom_call.1} parent=1 // pred_check_branch
      %42 = sbr.rel (0) target = $region13
    $region12: #{tpu_custom_call.1} parent=1 // pred_region
      %s44 = ssub.s32 131072, 131072
      %45 = vsyncadd [#allocation7], %s44
      %s46 = sshll.u32 [#allocation8], 4
      %s47 = int_to_ptr.vmem [resolvable:$true] %s46
      %52 = dma.hbm_to_vmem [thread:$0]  %s2, 131072, %s47, [#allocation7], 512, 512, 32
    $region13: #{tpu_custom_call.1} parent=1 // pred_fallthru
      _
    // Predicated region
    $region14: #{tpu_custom_call.1} parent=1 // pred_check
      _
    $region15: #{tpu_custom_call.1} parent=1 // pred_check_branch
      %54 = sbr.rel (0) target = $region17
    $region16: #{tpu_custom_call.1} parent=1 // pred_region
      %s56 = ssub.s32 19968, 19968
      %57 = vsyncadd [#allocation10], %s56
      %s58 = sshll.u32 [#allocation9], 4
      %s59 = int_to_ptr.vmem [resolvable:$true] %s58
      %64 = dma.hbm_to_vmem [thread:$0]  %s3, 19968, %s59, [#allocation10], 512, 512, 32
    $region17: #{tpu_custom_call.1} parent=1 // pred_fallthru
      _
    // Predicated region
    $region18: #{tpu_custom_call.1} parent=1 // pred_check
      _
    $region19: #{tpu_custom_call.1} parent=1 // pred_check_branch
      %66 = sbr.rel (0) target = $region21
    $region20: #{tpu_custom_call.1} parent=1 // pred_region
      %s68 = ssub.s32 128, 128
      %69 = vsyncadd [#allocation10], %s68
      %s71 = sshll.u32 [#allocation11], 4
      %s72 = int_to_ptr.vmem [resolvable:$true] %s71
      %74 = dma.hbm_to_vmem [thread:$0]  %s4, 128, %s72, [#allocation10]
    $region21: #{tpu_custom_call.1} parent=1 // pred_fallthru
      _
    // Predicated region
    $region22: #{tpu_custom_call.1} parent=1 // pred_check
      _
    $region23: #{tpu_custom_call.1} parent=1 // pred_check_branch
      %76 = sbr.rel (0) target = $region25
    $region24: #{tpu_custom_call.1} parent=1 // pred_region
      %s78 = ssub.s32 128, 128
      %79 = vsyncadd [#allocation13], %s78
      %s81 = sshll.u32 [#allocation12], 4
      %s82 = int_to_ptr.vmem [resolvable:$true] %s81
      %84 = dma.hbm_to_vmem [thread:$0]  %s5, 128, %s82, [#allocation13]
    $region25: #{tpu_custom_call.1} parent=1 // pred_fallthru
      _
    // Predicated region
    $region26: #{tpu_custom_call.1} parent=1 // pred_check
      _
    $region27: #{tpu_custom_call.1} parent=1 // pred_check_branch
      %86 = sbr.rel (0) target = $region29
    $region28: #{tpu_custom_call.1} parent=1 // pred_region
      _
    $region29: #{tpu_custom_call.1} parent=1 // pred_fallthru
      _
    // Predicated region
    $region30: #{tpu_custom_call.1} parent=1 // pred_check
      _
    $region31: #{tpu_custom_call.1} parent=1 // pred_check_branch
      %88 = sbr.rel (0) target = $region33
    $region32: #{tpu_custom_call.1} parent=1 // pred_region
      %89 = dma.done [#allocation4], 2048
    $region33: #{tpu_custom_call.1} parent=1 // pred_fallthru
      _
    // Predicated region
    $region34: #{tpu_custom_call.1} parent=1 // pred_check
      _
    $region35: #{tpu_custom_call.1} parent=1 // pred_check_branch
      %91 = sbr.rel (0) target = $region37
    $region36: #{tpu_custom_call.1} parent=1 // pred_region
      %92 = dma.done [#allocation7], 384
    $region37: #{tpu_custom_call.1} parent=1 // pred_fallthru
      _
    // Predicated region
    $region38: #{tpu_custom_call.1} parent=1 // pred_check
      _
    $region39: #{tpu_custom_call.1} parent=1 // pred_check_branch
      %94 = sbr.rel (0) target = $region41
    $region40: #{tpu_custom_call.1} parent=1 // pred_region
      %95 = dma.done [#allocation7], 131072
    $region41: #{tpu_custom_call.1} parent=1 // pred_fallthru
      _
    // Predicated region
    $region42: #{tpu_custom_call.1} parent=1 // pred_check
      _
    $region43: #{tpu_custom_call.1} parent=1 // pred_check_branch
      %97 = sbr.rel (0) target = $region45
    $region44: #{tpu_custom_call.1} parent=1 // pred_region
      %98 = dma.done [#allocation10], 19968
    $region45: #{tpu_custom_call.1} parent=1 // pred_fallthru
      _
    // Predicated region
    $region46: #{tpu_custom_call.1} parent=1 // pred_check
      _
    $region47: #{tpu_custom_call.1} parent=1 // pred_check_branch
      %100 = sbr.rel (0) target = $region49
    $region48: #{tpu_custom_call.1} parent=1 // pred_region
      %101 = dma.done [#allocation10], 128
    $region49: #{tpu_custom_call.1} parent=1 // pred_fallthru
      _
    // Predicated region
    $region50: #{tpu_custom_call.1} parent=1 // pred_check
      _
    $region51: #{tpu_custom_call.1} parent=1 // pred_check_branch
      %103 = sbr.rel (0) target = $region53
    $region52: #{tpu_custom_call.1} parent=1 // pred_region
      %104 = dma.done [#allocation13], 128
    $region53: #{tpu_custom_call.1} parent=1 // pred_fallthru
      _
    %v106 = vld [vmem:[#allocation3] sm:$0xff]
    %v107 = vld [vmem:[#allocation3 + $0x8] sm:$0xff]
    %v108 = vld [vmem:[#allocation3 + $0x10] sm:$0xff]
    %v109 = vld [vmem:[#allocation3 + $0x18] sm:$0xff]
    %v110 = vld [vmem:[#allocation3 + $0x20] sm:$0xff]
    %v111 = vld [vmem:[#allocation3 + $0x28] sm:$0xff]
    %v112 = vld [vmem:[#allocation3 + $0x30] sm:$0xff]
    %v113 = vld [vmem:[#allocation3 + $0x38] sm:$0xff]
    %v114 = vld [vmem:[#allocation3 + $0x40] sm:$0xff]
    %v115 = vld [vmem:[#allocation3 + $0x48] sm:$0xff]
    %v116 = vld [vmem:[#allocation3 + $0x50] sm:$0xff]
    %v117 = vld [vmem:[#allocation3 + $0x58] sm:$0xff]
    %v118 = vld [vmem:[#allocation3 + $0x60] sm:$0xff]
    %v119 = vld [vmem:[#allocation3 + $0x68] sm:$0xff]
    %v120 = vld [vmem:[#allocation3 + $0x70] sm:$0xff]
    %v121 = vld [vmem:[#allocation3 + $0x78] sm:$0xff]
    %v122 = vpack.c.bf16 %v106, %v106
    %v123 = vpack.c.bf16 %v107, %v107
    %v124 = vpack.c.bf16 %v108, %v108
    %v125 = vpack.c.bf16 %v109, %v109
    %v126 = vpack.c.bf16 %v110, %v110
    %v127 = vpack.c.bf16 %v111, %v111
    %v128 = vpack.c.bf16 %v112, %v112
    %v129 = vpack.c.bf16 %v113, %v113
    %v130 = vpack.c.bf16 %v114, %v114
    %v131 = vpack.c.bf16 %v115, %v115
    %v132 = vpack.c.bf16 %v116, %v116
    %v133 = vpack.c.bf16 %v117, %v117
    %v134 = vpack.c.bf16 %v118, %v118
    %v135 = vpack.c.bf16 %v119, %v119
    %v136 = vpack.c.bf16 %v120, %v120
    %v137 = vpack.c.bf16 %v121, %v121
    %v138 = vld [vmem:[#allocation6] sm:$0xff]
    %v139 = vld [vmem:[#allocation6 + $0x8] sm:$0xff]
    %v140 = vld [vmem:[#allocation6 + $0x10] sm:$0xff]
    %v141 = vpack.c.bf16 %v138, %v138
    %v142 = vpack.c.bf16 %v139, %v139
    %v143 = vpack.c.bf16 %v140, %v140
    %v144 = vld [vmem:[#allocation8] sm:$0xff]
    %v145 = vld [vmem:[#allocation8 + $0x8] sm:$0xff]
    %v146 = vld [vmem:[#allocation8 + $0x10] sm:$0xff]
    %v147 = vld [vmem:[#allocation8 + $0x18] sm:$0xff]
    %v148 = vld [vmem:[#allocation8 + $0x20] sm:$0xff]
    %v149 = vld [vmem:[#allocation8 + $0x28] sm:$0xff]
    %v150 = vld [vmem:[#allocation8 + $0x30] sm:$0xff]
    %v151 = vld [vmem:[#allocation8 + $0x38] sm:$0xff]
    %v152 = vld [vmem:[#allocation8 + $0x40] sm:$0xff]
    %v153 = vld [vmem:[#allocation8 + $0x48] sm:$0xff]
    %v154 = vld [vmem:[#allocation8 + $0x50] sm:$0xff]
    %v155 = vld [vmem:[#allocation8 + $0x58] sm:$0xff]
    %v156 = vld [vmem:[#allocation8 + $0x60] sm:$0xff]
    %v157 = vld [vmem:[#allocation8 + $0x68] sm:$0xff]
    %v158 = vld [vmem:[#allocation8 + $0x70] sm:$0xff]
    %v159 = vld [vmem:[#allocation8 + $0x78] sm:$0xff]
    %v160 = vld [vmem:[#allocation8 + $0x80] sm:$0xff]
    %v161 = vld [vmem:[#allocation8 + $0x88] sm:$0xff]
    %v162 = vld [vmem:[#allocation8 + $0x90] sm:$0xff]
    %v163 = vld [vmem:[#allocation8 + $0x98] sm:$0xff]
    %v164 = vld [vmem:[#allocation8 + $0xa0] sm:$0xff]
    %v165 = vld [vmem:[#allocation8 + $0xa8] sm:$0xff]
    %v166 = vld [vmem:[#allocation8 + $0xb0] sm:$0xff]
    %v167 = vld [vmem:[#allocation8 + $0xb8] sm:$0xff]
    %v168 = vld [vmem:[#allocation8 + $0xc0] sm:$0xff]
    %v169 = vld [vmem:[#allocation8 + $0xc8] sm:$0xff]
    %v170 = vld [vmem:[#allocation8 + $0xd0] sm:$0xff]
    %v171 = vld [vmem:[#allocation8 + $0xd8] sm:$0xff]
    %v172 = vld [vmem:[#allocation8 + $0xe0] sm:$0xff]
    %v173 = vld [vmem:[#allocation8 + $0xe8] sm:$0xff]
    %v174 = vld [vmem:[#allocation8 + $0xf0] sm:$0xff]
    %v175 = vld [vmem:[#allocation8 + $0xf8] sm:$0xff]
    %v176 = vld [vmem:[#allocation8 + $0x100] sm:$0xff]
    %v177 = vld [vmem:[#allocation8 + $0x108] sm:$0xff]
    %v178 = vld [vmem:[#allocation8 + $0x110] sm:$0xff]
    %v179 = vld [vmem:[#allocation8 + $0x118] sm:$0xff]
    %v180 = vld [vmem:[#allocation8 + $0x120] sm:$0xff]
    %v181 = vld [vmem:[#allocation8 + $0x128] sm:$0xff]
    %v182 = vld [vmem:[#allocation8 + $0x130] sm:$0xff]
    %v183 = vld [vmem:[#allocation8 + $0x138] sm:$0xff]
    %v184 = vld [vmem:[#allocation8 + $0x140] sm:$0xff]
    %v185 = vld [vmem:[#allocation8 + $0x148] sm:$0xff]
    %v186 = vld [vmem:[#allocation8 + $0x150] sm:$0xff]
    %v187 = vld [vmem:[#allocation8 + $0x158] sm:$0xff]
    %v188 = vld [vmem:[#allocation8 + $0x160] sm:$0xff]
    %v189 = vld [vmem:[#allocation8 + $0x168] sm:$0xff]
    %v190 = vld [vmem:[#allocation8 + $0x170] sm:$0xff]
    %v191 = vld [vmem:[#allocation8 + $0x178] sm:$0xff]
    %v192 = vld [vmem:[#allocation8 + $0x180] sm:$0xff]
    %v193 = vld [vmem:[#allocation8 + $0x188] sm:$0xff]
    %v194 = vld [vmem:[#allocation8 + $0x190] sm:$0xff]
    %v195 = vld [vmem:[#allocation8 + $0x198] sm:$0xff]
    %v196 = vld [vmem:[#allocation8 + $0x1a0] sm:$0xff]
    %v197 = vld [vmem:[#allocation8 + $0x1a8] sm:$0xff]
    %v198 = vld [vmem:[#allocation8 + $0x1b0] sm:$0xff]
    %v199 = vld [vmem:[#allocation8 + $0x1b8] sm:$0xff]
    %v200 = vld [vmem:[#allocation8 + $0x1c0] sm:$0xff]
    %v201 = vld [vmem:[#allocation8 + $0x1c8] sm:$0xff]
    %v202 = vld [vmem:[#allocation8 + $0x1d0] sm:$0xff]
    %v203 = vld [vmem:[#allocation8 + $0x1d8] sm:$0xff]
    %v204 = vld [vmem:[#allocation8 + $0x1e0] sm:$0xff]
    %v205 = vld [vmem:[#allocation8 + $0x1e8] sm:$0xff]
    %v206 = vld [vmem:[#allocation8 + $0x1f0] sm:$0xff]
    %v207 = vld [vmem:[#allocation8 + $0x1f8] sm:$0xff]
    %v208 = vld [vmem:[#allocation8 + $0x200] sm:$0xff]
    %v209 = vld [vmem:[#allocation8 + $0x208] sm:$0xff]
    %v210 = vld [vmem:[#allocation8 + $0x210] sm:$0xff]
    %v211 = vld [vmem:[#allocation8 + $0x218] sm:$0xff]
    %v212 = vld [vmem:[#allocation8 + $0x220] sm:$0xff]
    %v213 = vld [vmem:[#allocation8 + $0x228] sm:$0xff]
    %v214 = vld [vmem:[#allocation8 + $0x230] sm:$0xff]
    %v215 = vld [vmem:[#allocation8 + $0x238] sm:$0xff]
    %v216 = vld [vmem:[#allocation8 + $0x240] sm:$0xff]
    %v217 = vld [vmem:[#allocation8 + $0x248] sm:$0xff]
    %v218 = vld [vmem:[#allocation8 + $0x250] sm:$0xff]
    %v219 = vld [vmem:[#allocation8 + $0x258] sm:$0xff]
    %v220 = vld [vmem:[#allocation8 + $0x260] sm:$0xff]
    %v221 = vld [vmem:[#allocation8 + $0x268] sm:$0xff]
    %v222 = vld [vmem:[#allocation8 + $0x270] sm:$0xff]
    %v223 = vld [vmem:[#allocation8 + $0x278] sm:$0xff]
    %v224 = vld [vmem:[#allocation8 + $0x280] sm:$0xff]
    %v225 = vld [vmem:[#allocation8 + $0x288] sm:$0xff]
    %v226 = vld [vmem:[#allocation8 + $0x290] sm:$0xff]
    %v227 = vld [vmem:[#allocation8 + $0x298] sm:$0xff]
    %v228 = vld [vmem:[#allocation8 + $0x2a0] sm:$0xff]
    %v229 = vld [vmem:[#allocation8 + $0x2a8] sm:$0xff]
    %v230 = vld [vmem:[#allocation8 + $0x2b0] sm:$0xff]
    %v231 = vld [vmem:[#allocation8 + $0x2b8] sm:$0xff]
    %v232 = vld [vmem:[#allocation8 + $0x2c0] sm:$0xff]
    %v233 = vld [vmem:[#allocation8 + $0x2c8] sm:$0xff]
    %v234 = vld [vmem:[#allocation8 + $0x2d0] sm:$0xff]
    %v235 = vld [vmem:[#allocation8 + $0x2d8] sm:$0xff]
    %v236 = vld [vmem:[#allocation8 + $0x2e0] sm:$0xff]
    %v237 = vld [vmem:[#allocation8 + $0x2e8] sm:$0xff]
    %v238 = vld [vmem:[#allocation8 + $0x2f0] sm:$0xff]
    %v239 = vld [vmem:[#allocation8 + $0x2f8] sm:$0xff]
    %v240 = vld [vmem:[#allocation8 + $0x300] sm:$0xff]
    %v241 = vld [vmem:[#allocation8 + $0x308] sm:$0xff]
    %v242 = vld [vmem:[#allocation8 + $0x310] sm:$0xff]
    %v243 = vld [vmem:[#allocation8 + $0x318] sm:$0xff]
    %v244 = vld [vmem:[#allocation8 + $0x320] sm:$0xff]
    %v245 = vld [vmem:[#allocation8 + $0x328] sm:$0xff]
    %v246 = vld [vmem:[#allocation8 + $0x330] sm:$0xff]
    %v247 = vld [vmem:[#allocation8 + $0x338] sm:$0xff]
    %v248 = vld [vmem:[#allocation8 + $0x340] sm:$0xff]
    %v249 = vld [vmem:[#allocation8 + $0x348] sm:$0xff]
    %v250 = vld [vmem:[#allocation8 + $0x350] sm:$0xff]
    %v251 = vld [vmem:[#allocation8 + $0x358] sm:$0xff]
    %v252 = vld [vmem:[#allocation8 + $0x360] sm:$0xff]
    %v253 = vld [vmem:[#allocation8 + $0x368] sm:$0xff]
    %v254 = vld [vmem:[#allocation8 + $0x370] sm:$0xff]
    %v255 = vld [vmem:[#allocation8 + $0x378] sm:$0xff]
    %v256 = vld [vmem:[#allocation8 + $0x380] sm:$0xff]
    %v257 = vld [vmem:[#allocation8 + $0x388] sm:$0xff]
    %v258 = vld [vmem:[#allocation8 + $0x390] sm:$0xff]
    %v259 = vld [vmem:[#allocation8 + $0x398] sm:$0xff]
    %v260 = vld [vmem:[#allocation8 + $0x3a0] sm:$0xff]
    %v261 = vld [vmem:[#allocation8 + $0x3a8] sm:$0xff]
    %v262 = vld [vmem:[#allocation8 + $0x3b0] sm:$0xff]
    %v263 = vld [vmem:[#allocation8 + $0x3b8] sm:$0xff]
    %v264 = vld [vmem:[#allocation8 + $0x3c0] sm:$0xff]
    %v265 = vld [vmem:[#allocation8 + $0x3c8] sm:$0xff]
    %v266 = vld [vmem:[#allocation8 + $0x3d0] sm:$0xff]
    %v267 = vld [vmem:[#allocation8 + $0x3d8] sm:$0xff]
    %v268 = vld [vmem:[#allocation8 + $0x3e0] sm:$0xff]
    %v269 = vld [vmem:[#allocation8 + $0x3e8] sm:$0xff]
    %v270 = vld [vmem:[#allocation8 + $0x3f0] sm:$0xff]
    %v271 = vld [vmem:[#allocation8 + $0x3f8] sm:$0xff]
    %v272 = vld [vmem:[#allocation8 + $0x400] sm:$0xff]
    %v273 = vld [vmem:[#allocation8 + $0x408] sm:$0xff]
    %v274 = vld [vmem:[#allocation8 + $0x410] sm:$0xff]
    %v275 = vld [vmem:[#allocation8 + $0x418] sm:$0xff]
    %v276 = vld [vmem:[#allocation8 + $0x420] sm:$0xff]
    %v277 = vld [vmem:[#allocation8 + $0x428] sm:$0xff]
    %v278 = vld [vmem:[#allocation8 + $0x430] sm:$0xff]
    %v279 = vld [vmem:[#allocation8 + $0x438] sm:$0xff]
    %v280 = vld [vmem:[#allocation8 + $0x440] sm:$0xff]
    %v281 = vld [vmem:[#allocation8 + $0x448] sm:$0xff]
    %v282 = vld [vmem:[#allocation8 + $0x450] sm:$0xff]
    %v283 = vld [vmem:[#allocation8 + $0x458] sm:$0xff]
    %v284 = vld [vmem:[#allocation8 + $0x460] sm:$0xff]
    %v285 = vld [vmem:[#allocation8 + $0x468] sm:$0xff]
    %v286 = vld [vmem:[#allocation8 + $0x470] sm:$0xff]
    %v287 = vld [vmem:[#allocation8 + $0x478] sm:$0xff]
    %v288 = vld [vmem:[#allocation8 + $0x480] sm:$0xff]
    %v289 = vld [vmem:[#allocation8 + $0x488] sm:$0xff]
    %v290 = vld [vmem:[#allocation8 + $0x490] sm:$0xff]
    %v291 = vld [vmem:[#allocation8 + $0x498] sm:$0xff]
    %v292 = vld [vmem:[#allocation8 + $0x4a0] sm:$0xff]
    %v293 = vld [vmem:[#allocation8 + $0x4a8] sm:$0xff]
    %v294 = vld [vmem:[#allocation8 + $0x4b0] sm:$0xff]
    %v295 = vld [vmem:[#allocation8 + $0x4b8] sm:$0xff]
    %v296 = vld [vmem:[#allocation8 + $0x4c0] sm:$0xff]
    %v297 = vld [vmem:[#allocation8 + $0x4c8] sm:$0xff]
    %v298 = vld [vmem:[#allocation8 + $0x4d0] sm:$0xff]
    %v299 = vld [vmem:[#allocation8 + $0x4d8] sm:$0xff]
    %v300 = vld [vmem:[#allocation8 + $0x4e0] sm:$0xff]
    %v301 = vld [vmem:[#allocation8 + $0x4e8] sm:$0xff]
    %v302 = vld [vmem:[#allocation8 + $0x4f0] sm:$0xff]
    %v303 = vld [vmem:[#allocation8 + $0x4f8] sm:$0xff]
    %v304 = vld [vmem:[#allocation8 + $0x500] sm:$0xff]
    %v305 = vld [vmem:[#allocation8 + $0x508] sm:$0xff]
    %v306 = vld [vmem:[#allocation8 + $0x510] sm:$0xff]
    %v307 = vld [vmem:[#allocation8 + $0x518] sm:$0xff]
    %v308 = vld [vmem:[#allocation8 + $0x520] sm:$0xff]
    %v309 = vld [vmem:[#allocation8 + $0x528] sm:$0xff]
    %v310 = vld [vmem:[#allocation8 + $0x530] sm:$0xff]
    %v311 = vld [vmem:[#allocation8 + $0x538] sm:$0xff]
    %v312 = vld [vmem:[#allocation8 + $0x540] sm:$0xff]
    %v313 = vld [vmem:[#allocation8 + $0x548] sm:$0xff]
    %v314 = vld [vmem:[#allocation8 + $0x550] sm:$0xff]
    %v315 = vld [vmem:[#allocation8 + $0x558] sm:$0xff]
    %v316 = vld [vmem:[#allocation8 + $0x560] sm:$0xff]
    %v317 = vld [vmem:[#allocation8 + $0x568] sm:$0xff]
    %v318 = vld [vmem:[#allocation8 + $0x570] sm:$0xff]
    %v319 = vld [vmem:[#allocation8 + $0x578] sm:$0xff]
    %v320 = vld [vmem:[#allocation8 + $0x580] sm:$0xff]
    %v321 = vld [vmem:[#allocation8 + $0x588] sm:$0xff]
    %v322 = vld [vmem:[#allocation8 + $0x590] sm:$0xff]
    %v323 = vld [vmem:[#allocation8 + $0x598] sm:$0xff]
    %v324 = vld [vmem:[#allocation8 + $0x5a0] sm:$0xff]
    %v325 = vld [vmem:[#allocation8 + $0x5a8] sm:$0xff]
    %v326 = vld [vmem:[#allocation8 + $0x5b0] sm:$0xff]
    %v327 = vld [vmem:[#allocation8 + $0x5b8] sm:$0xff]
    %v328 = vld [vmem:[#allocation8 + $0x5c0] sm:$0xff]
    %v329 = vld [vmem:[#allocation8 + $0x5c8] sm:$0xff]
    %v330 = vld [vmem:[#allocation8 + $0x5d0] sm:$0xff]
    %v331 = vld [vmem:[#allocation8 + $0x5d8] sm:$0xff]
    %v332 = vld [vmem:[#allocation8 + $0x5e0] sm:$0xff]
    %v333 = vld [vmem:[#allocation8 + $0x5e8] sm:$0xff]
    %v334 = vld [vmem:[#allocation8 + $0x5f0] sm:$0xff]
    %v335 = vld [vmem:[#allocation8 + $0x5f8] sm:$0xff]
    %v336 = vld [vmem:[#allocation8 + $0x600] sm:$0xff]
    %v337 = vld [vmem:[#allocation8 + $0x608] sm:$0xff]
    %v338 = vld [vmem:[#allocation8 + $0x610] sm:$0xff]
    %v339 = vld [vmem:[#allocation8 + $0x618] sm:$0xff]
    %v340 = vld [vmem:[#allocation8 + $0x620] sm:$0xff]
    %v341 = vld [vmem:[#allocation8 + $0x628] sm:$0xff]
    %v342 = vld [vmem:[#allocation8 + $0x630] sm:$0xff]
    %v343 = vld [vmem:[#allocation8 + $0x638] sm:$0xff]
    %v344 = vld [vmem:[#allocation8 + $0x640] sm:$0xff]
    %v345 = vld [vmem:[#allocation8 + $0x648] sm:$0xff]
    %v346 = vld [vmem:[#allocation8 + $0x650] sm:$0xff]
    %v347 = vld [vmem:[#allocation8 + $0x658] sm:$0xff]
    %v348 = vld [vmem:[#allocation8 + $0x660] sm:$0xff]
    %v349 = vld [vmem:[#allocation8 + $0x668] sm:$0xff]
    %v350 = vld [vmem:[#allocation8 + $0x670] sm:$0xff]
    %v351 = vld [vmem:[#allocation8 + $0x678] sm:$0xff]
    %v352 = vld [vmem:[#allocation8 + $0x680] sm:$0xff]
    %v353 = vld [vmem:[#allocation8 + $0x688] sm:$0xff]
    %v354 = vld [vmem:[#allocation8 + $0x690] sm:$0xff]
    %v355 = vld [vmem:[#allocation8 + $0x698] sm:$0xff]
    %v356 = vld [vmem:[#allocation8 + $0x6a0] sm:$0xff]
    %v357 = vld [vmem:[#allocation8 + $0x6a8] sm:$0xff]
    %v358 = vld [vmem:[#allocation8 + $0x6b0] sm:$0xff]
    %v359 = vld [vmem:[#allocation8 + $0x6b8] sm:$0xff]
    %v360 = vld [vmem:[#allocation8 + $0x6c0] sm:$0xff]
    %v361 = vld [vmem:[#allocation8 + $0x6c8] sm:$0xff]
    %v362 = vld [vmem:[#allocation8 + $0x6d0] sm:$0xff]
    %v363 = vld [vmem:[#allocation8 + $0x6d8] sm:$0xff]
    %v364 = vld [vmem:[#allocation8 + $0x6e0] sm:$0xff]
    %v365 = vld [vmem:[#allocation8 + $0x6e8] sm:$0xff]
    %v366 = vld [vmem:[#allocation8 + $0x6f0] sm:$0xff]
    %v367 = vld [vmem:[#allocation8 + $0x6f8] sm:$0xff]
    %v368 = vld [vmem:[#allocation8 + $0x700] sm:$0xff]
    %v369 = vld [vmem:[#allocation8 + $0x708] sm:$0xff]
    %v370 = vld [vmem:[#allocation8 + $0x710] sm:$0xff]
    %v371 = vld [vmem:[#allocation8 + $0x718] sm:$0xff]
    %v372 = vld [vmem:[#allocation8 + $0x720] sm:$0xff]
    %v373 = vld [vmem:[#allocation8 + $0x728] sm:$0xff]
    %v374 = vld [vmem:[#allocation8 + $0x730] sm:$0xff]
    %v375 = vld [vmem:[#allocation8 + $0x738] sm:$0xff]
    %v376 = vld [vmem:[#allocation8 + $0x740] sm:$0xff]
    %v377 = vld [vmem:[#allocation8 + $0x748] sm:$0xff]
    %v378 = vld [vmem:[#allocation8 + $0x750] sm:$0xff]
    %v379 = vld [vmem:[#allocation8 + $0x758] sm:$0xff]
    %v380 = vld [vmem:[#allocation8 + $0x760] sm:$0xff]
    %v381 = vld [vmem:[#allocation8 + $0x768] sm:$0xff]
    %v382 = vld [vmem:[#allocation8 + $0x770] sm:$0xff]
    %v383 = vld [vmem:[#allocation8 + $0x778] sm:$0xff]
    %v384 = vld [vmem:[#allocation8 + $0x780] sm:$0xff]
    %v385 = vld [vmem:[#allocation8 + $0x788] sm:$0xff]
    %v386 = vld [vmem:[#allocation8 + $0x790] sm:$0xff]
    %v387 = vld [vmem:[#allocation8 + $0x798] sm:$0xff]
    %v388 = vld [vmem:[#allocation8 + $0x7a0] sm:$0xff]
    %v389 = vld [vmem:[#allocation8 + $0x7a8] sm:$0xff]
    %v390 = vld [vmem:[#allocation8 + $0x7b0] sm:$0xff]
    %v391 = vld [vmem:[#allocation8 + $0x7b8] sm:$0xff]
    %v392 = vld [vmem:[#allocation8 + $0x7c0] sm:$0xff]
    %v393 = vld [vmem:[#allocation8 + $0x7c8] sm:$0xff]
    %v394 = vld [vmem:[#allocation8 + $0x7d0] sm:$0xff]
    %v395 = vld [vmem:[#allocation8 + $0x7d8] sm:$0xff]
    %v396 = vld [vmem:[#allocation8 + $0x7e0] sm:$0xff]
    %v397 = vld [vmem:[#allocation8 + $0x7e8] sm:$0xff]
    %v398 = vld [vmem:[#allocation8 + $0x7f0] sm:$0xff]
    %v399 = vld [vmem:[#allocation8 + $0x7f8] sm:$0xff]
    %v400 = vld [vmem:[#allocation8 + $0x800] sm:$0xff]
    %v401 = vld [vmem:[#allocation8 + $0x808] sm:$0xff]
    %v402 = vld [vmem:[#allocation8 + $0x810] sm:$0xff]
    %v403 = vld [vmem:[#allocation8 + $0x818] sm:$0xff]
    %v404 = vld [vmem:[#allocation8 + $0x820] sm:$0xff]
    %v405 = vld [vmem:[#allocation8 + $0x828] sm:$0xff]
    %v406 = vld [vmem:[#allocation8 + $0x830] sm:$0xff]
    %v407 = vld [vmem:[#allocation8 + $0x838] sm:$0xff]
    %v408 = vld [vmem:[#allocation8 + $0x840] sm:$0xff]
    %v409 = vld [vmem:[#allocation8 + $0x848] sm:$0xff]
    %v410 = vld [vmem:[#allocation8 + $0x850] sm:$0xff]
    %v411 = vld [vmem:[#allocation8 + $0x858] sm:$0xff]
    %v412 = vld [vmem:[#allocation8 + $0x860] sm:$0xff]
    %v413 = vld [vmem:[#allocation8 + $0x868] sm:$0xff]
    %v414 = vld [vmem:[#allocation8 + $0x870] sm:$0xff]
    %v415 = vld [vmem:[#allocation8 + $0x878] sm:$0xff]
    %v416 = vld [vmem:[#allocation8 + $0x880] sm:$0xff]
    %v417 = vld [vmem:[#allocation8 + $0x888] sm:$0xff]
    %v418 = vld [vmem:[#allocation8 + $0x890] sm:$0xff]
    %v419 = vld [vmem:[#allocation8 + $0x898] sm:$0xff]
    %v420 = vld [vmem:[#allocation8 + $0x8a0] sm:$0xff]
    %v421 = vld [vmem:[#allocation8 + $0x8a8] sm:$0xff]
    %v422 = vld [vmem:[#allocation8 + $0x8b0] sm:$0xff]
    %v423 = vld [vmem:[#allocation8 + $0x8b8] sm:$0xff]
    %v424 = vld [vmem:[#allocation8 + $0x8c0] sm:$0xff]
    %v425 = vld [vmem:[#allocation8 + $0x8c8] sm:$0xff]
    %v426 = vld [vmem:[#allocation8 + $0x8d0] sm:$0xff]
    %v427 = vld [vmem:[#allocation8 + $0x8d8] sm:$0xff]
    %v428 = vld [vmem:[#allocation8 + $0x8e0] sm:$0xff]
    %v429 = vld [vmem:[#allocation8 + $0x8e8] sm:$0xff]
    %v430 = vld [vmem:[#allocation8 + $0x8f0] sm:$0xff]
    %v431 = vld [vmem:[#allocation8 + $0x8f8] sm:$0xff]
    %v432 = vld [vmem:[#allocation8 + $0x900] sm:$0xff]
    %v433 = vld [vmem:[#allocation8 + $0x908] sm:$0xff]
    %v434 = vld [vmem:[#allocation8 + $0x910] sm:$0xff]
    %v435 = vld [vmem:[#allocation8 + $0x918] sm:$0xff]
    %v436 = vld [vmem:[#allocation8 + $0x920] sm:$0xff]
    %v437 = vld [vmem:[#allocation8 + $0x928] sm:$0xff]
    %v438 = vld [vmem:[#allocation8 + $0x930] sm:$0xff]
    %v439 = vld [vmem:[#allocation8 + $0x938] sm:$0xff]
    %v440 = vld [vmem:[#allocation8 + $0x940] sm:$0xff]
    %v441 = vld [vmem:[#allocation8 + $0x948] sm:$0xff]
    %v442 = vld [vmem:[#allocation8 + $0x950] sm:$0xff]
    %v443 = vld [vmem:[#allocation8 + $0x958] sm:$0xff]
    %v444 = vld [vmem:[#allocation8 + $0x960] sm:$0xff]
    %v445 = vld [vmem:[#allocation8 + $0x968] sm:$0xff]
    %v446 = vld [vmem:[#allocation8 + $0x970] sm:$0xff]
    %v447 = vld [vmem:[#allocation8 + $0x978] sm:$0xff]
    %v448 = vld [vmem:[#allocation8 + $0x980] sm:$0xff]
    %v449 = vld [vmem:[#allocation8 + $0x988] sm:$0xff]
    %v450 = vld [vmem:[#allocation8 + $0x990] sm:$0xff]
    %v451 = vld [vmem:[#allocation8 + $0x998] sm:$0xff]
    %v452 = vld [vmem:[#allocation8 + $0x9a0] sm:$0xff]
    %v453 = vld [vmem:[#allocation8 + $0x9a8] sm:$0xff]
    %v454 = vld [vmem:[#allocation8 + $0x9b0] sm:$0xff]
    %v455 = vld [vmem:[#allocation8 + $0x9b8] sm:$0xff]
    %v456 = vld [vmem:[#allocation8 + $0x9c0] sm:$0xff]
    %v457 = vld [vmem:[#allocation8 + $0x9c8] sm:$0xff]
    %v458 = vld [vmem:[#allocation8 + $0x9d0] sm:$0xff]
    %v459 = vld [vmem:[#allocation8 + $0x9d8] sm:$0xff]
    %v460 = vld [vmem:[#allocation8 + $0x9e0] sm:$0xff]
    %v461 = vld [vmem:[#allocation8 + $0x9e8] sm:$0xff]
    %v462 = vld [vmem:[#allocation8 + $0x9f0] sm:$0xff]
    %v463 = vld [vmem:[#allocation8 + $0x9f8] sm:$0xff]
    %v464 = vld [vmem:[#allocation8 + $0xa00] sm:$0xff]
    %v465 = vld [vmem:[#allocation8 + $0xa08] sm:$0xff]
    %v466 = vld [vmem:[#allocation8 + $0xa10] sm:$0xff]
    %v467 = vld [vmem:[#allocation8 + $0xa18] sm:$0xff]
    %v468 = vld [vmem:[#allocation8 + $0xa20] sm:$0xff]
    %v469 = vld [vmem:[#allocation8 + $0xa28] sm:$0xff]
    %v470 = vld [vmem:[#allocation8 + $0xa30] sm:$0xff]
    %v471 = vld [vmem:[#allocation8 + $0xa38] sm:$0xff]
    %v472 = vld [vmem:[#allocation8 + $0xa40] sm:$0xff]
    %v473 = vld [vmem:[#allocation8 + $0xa48] sm:$0xff]
    %v474 = vld [vmem:[#allocation8 + $0xa50] sm:$0xff]
    %v475 = vld [vmem:[#allocation8 + $0xa58] sm:$0xff]
    %v476 = vld [vmem:[#allocation8 + $0xa60] sm:$0xff]
    %v477 = vld [vmem:[#allocation8 + $0xa68] sm:$0xff]
    %v478 = vld [vmem:[#allocation8 + $0xa70] sm:$0xff]
    %v479 = vld [vmem:[#allocation8 + $0xa78] sm:$0xff]
    %v480 = vld [vmem:[#allocation8 + $0xa80] sm:$0xff]
    %v481 = vld [vmem:[#allocation8 + $0xa88] sm:$0xff]
    %v482 = vld [vmem:[#allocation8 + $0xa90] sm:$0xff]
    %v483 = vld [vmem:[#allocation8 + $0xa98] sm:$0xff]
    %v484 = vld [vmem:[#allocation8 + $0xaa0] sm:$0xff]
    %v485 = vld [vmem:[#allocation8 + $0xaa8] sm:$0xff]
    %v486 = vld [vmem:[#allocation8 + $0xab0] sm:$0xff]
    %v487 = vld [vmem:[#allocation8 + $0xab8] sm:$0xff]
    %v488 = vld [vmem:[#allocation8 + $0xac0] sm:$0xff]
    %v489 = vld [vmem:[#allocation8 + $0xac8] sm:$0xff]
    %v490 = vld [vmem:[#allocation8 + $0xad0] sm:$0xff]
    %v491 = vld [vmem:[#allocation8 + $0xad8] sm:$0xff]
    %v492 = vld [vmem:[#allocation8 + $0xae0] sm:$0xff]
    %v493 = vld [vmem:[#allocation8 + $0xae8] sm:$0xff]
    %v494 = vld [vmem:[#allocation8 + $0xaf0] sm:$0xff]
    %v495 = vld [vmem:[#allocation8 + $0xaf8] sm:$0xff]
    %v496 = vld [vmem:[#allocation8 + $0xb00] sm:$0xff]
    %v497 = vld [vmem:[#allocation8 + $0xb08] sm:$0xff]
    %v498 = vld [vmem:[#allocation8 + $0xb10] sm:$0xff]
    %v499 = vld [vmem:[#allocation8 + $0xb18] sm:$0xff]
    %v500 = vld [vmem:[#allocation8 + $0xb20] sm:$0xff]
    %v501 = vld [vmem:[#allocation8 + $0xb28] sm:$0xff]
    %v502 = vld [vmem:[#allocation8 + $0xb30] sm:$0xff]
    %v503 = vld [vmem:[#allocation8 + $0xb38] sm:$0xff]
    %v504 = vld [vmem:[#allocation8 + $0xb40] sm:$0xff]
    %v505 = vld [vmem:[#allocation8 + $0xb48] sm:$0xff]
    %v506 = vld [vmem:[#allocation8 + $0xb50] sm:$0xff]
    %v507 = vld [vmem:[#allocation8 + $0xb58] sm:$0xff]
    %v508 = vld [vmem:[#allocation8 + $0xb60] sm:$0xff]
    %v509 = vld [vmem:[#allocation8 + $0xb68] sm:$0xff]
    %v510 = vld [vmem:[#allocation8 + $0xb70] sm:$0xff]
    %v511 = vld [vmem:[#allocation8 + $0xb78] sm:$0xff]
    %v512 = vld [vmem:[#allocation8 + $0xb80] sm:$0xff]
    %v513 = vld [vmem:[#allocation8 + $0xb88] sm:$0xff]
    %v514 = vld [vmem:[#allocation8 + $0xb90] sm:$0xff]
    %v515 = vld [vmem:[#allocation8 + $0xb98] sm:$0xff]
    %v516 = vld [vmem:[#allocation8 + $0xba0] sm:$0xff]
    %v517 = vld [vmem:[#allocation8 + $0xba8] sm:$0xff]
    %v518 = vld [vmem:[#allocation8 + $0xbb0] sm:$0xff]
    %v519 = vld [vmem:[#allocation8 + $0xbb8] sm:$0xff]
    %v520 = vld [vmem:[#allocation8 + $0xbc0] sm:$0xff]
    %v521 = vld [vmem:[#allocation8 + $0xbc8] sm:$0xff]
    %v522 = vld [vmem:[#allocation8 + $0xbd0] sm:$0xff]
    %v523 = vld [vmem:[#allocation8 + $0xbd8] sm:$0xff]
    %v524 = vld [vmem:[#allocation8 + $0xbe0] sm:$0xff]
    %v525 = vld [vmem:[#allocation8 + $0xbe8] sm:$0xff]
    %v526 = vld [vmem:[#allocation8 + $0xbf0] sm:$0xff]
    %v527 = vld [vmem:[#allocation8 + $0xbf8] sm:$0xff]
    %v528 = vld [vmem:[#allocation8 + $0xc00] sm:$0xff]
    %v529 = vld [vmem:[#allocation8 + $0xc08] sm:$0xff]
    %v530 = vld [vmem:[#allocation8 + $0xc10] sm:$0xff]
    %v531 = vld [vmem:[#allocation8 + $0xc18] sm:$0xff]
    %v532 = vld [vmem:[#allocation8 + $0xc20] sm:$0xff]
    %v533 = vld [vmem:[#allocation8 + $0xc28] sm:$0xff]
    %v534 = vld [vmem:[#allocation8 + $0xc30] sm:$0xff]
    %v535 = vld [vmem:[#allocation8 + $0xc38] sm:$0xff]
    %v536 = vld [vmem:[#allocation8 + $0xc40] sm:$0xff]
    %v537 = vld [vmem:[#allocation8 + $0xc48] sm:$0xff]
    %v538 = vld [vmem:[#allocation8 + $0xc50] sm:$0xff]
    %v539 = vld [vmem:[#allocation8 + $0xc58] sm:$0xff]
    %v540 = vld [vmem:[#allocation8 + $0xc60] sm:$0xff]
    %v541 = vld [vmem:[#allocation8 + $0xc68] sm:$0xff]
    %v542 = vld [vmem:[#allocation8 + $0xc70] sm:$0xff]
    %v543 = vld [vmem:[#allocation8 + $0xc78] sm:$0xff]
    %v544 = vld [vmem:[#allocation8 + $0xc80] sm:$0xff]
    %v545 = vld [vmem:[#allocation8 + $0xc88] sm:$0xff]
    %v546 = vld [vmem:[#allocation8 + $0xc90] sm:$0xff]
    %v547 = vld [vmem:[#allocation8 + $0xc98] sm:$0xff]
    %v548 = vld [vmem:[#allocation8 + $0xca0] sm:$0xff]
    %v549 = vld [vmem:[#allocation8 + $0xca8] sm:$0xff]
    %v550 = vld [vmem:[#allocation8 + $0xcb0] sm:$0xff]
    %v551 = vld [vmem:[#allocation8 + $0xcb8] sm:$0xff]
    %v552 = vld [vmem:[#allocation8 + $0xcc0] sm:$0xff]
    %v553 = vld [vmem:[#allocation8 + $0xcc8] sm:$0xff]
    %v554 = vld [vmem:[#allocation8 + $0xcd0] sm:$0xff]
    %v555 = vld [vmem:[#allocation8 + $0xcd8] sm:$0xff]
    %v556 = vld [vmem:[#allocation8 + $0xce0] sm:$0xff]
    %v557 = vld [vmem:[#allocation8 + $0xce8] sm:$0xff]
    %v558 = vld [vmem:[#allocation8 + $0xcf0] sm:$0xff]
    %v559 = vld [vmem:[#allocation8 + $0xcf8] sm:$0xff]
    %v560 = vld [vmem:[#allocation8 + $0xd00] sm:$0xff]
    %v561 = vld [vmem:[#allocation8 + $0xd08] sm:$0xff]
    %v562 = vld [vmem:[#allocation8 + $0xd10] sm:$0xff]
    %v563 = vld [vmem:[#allocation8 + $0xd18] sm:$0xff]
    %v564 = vld [vmem:[#allocation8 + $0xd20] sm:$0xff]
    %v565 = vld [vmem:[#allocation8 + $0xd28] sm:$0xff]
    %v566 = vld [vmem:[#allocation8 + $0xd30] sm:$0xff]
    %v567 = vld [vmem:[#allocation8 + $0xd38] sm:$0xff]
    %v568 = vld [vmem:[#allocation8 + $0xd40] sm:$0xff]
    %v569 = vld [vmem:[#allocation8 + $0xd48] sm:$0xff]
    %v570 = vld [vmem:[#allocation8 + $0xd50] sm:$0xff]
    %v571 = vld [vmem:[#allocation8 + $0xd58] sm:$0xff]
    %v572 = vld [vmem:[#allocation8 + $0xd60] sm:$0xff]
    %v573 = vld [vmem:[#allocation8 + $0xd68] sm:$0xff]
    %v574 = vld [vmem:[#allocation8 + $0xd70] sm:$0xff]
    %v575 = vld [vmem:[#allocation8 + $0xd78] sm:$0xff]
    %v576 = vld [vmem:[#allocation8 + $0xd80] sm:$0xff]
    %v577 = vld [vmem:[#allocation8 + $0xd88] sm:$0xff]
    %v578 = vld [vmem:[#allocation8 + $0xd90] sm:$0xff]
    %v579 = vld [vmem:[#allocation8 + $0xd98] sm:$0xff]
    %v580 = vld [vmem:[#allocation8 + $0xda0] sm:$0xff]
    %v581 = vld [vmem:[#allocation8 + $0xda8] sm:$0xff]
    %v582 = vld [vmem:[#allocation8 + $0xdb0] sm:$0xff]
    %v583 = vld [vmem:[#allocation8 + $0xdb8] sm:$0xff]
    %v584 = vld [vmem:[#allocation8 + $0xdc0] sm:$0xff]
    %v585 = vld [vmem:[#allocation8 + $0xdc8] sm:$0xff]
    %v586 = vld [vmem:[#allocation8 + $0xdd0] sm:$0xff]
    %v587 = vld [vmem:[#allocation8 + $0xdd8] sm:$0xff]
    %v588 = vld [vmem:[#allocation8 + $0xde0] sm:$0xff]
    %v589 = vld [vmem:[#allocation8 + $0xde8] sm:$0xff]
    %v590 = vld [vmem:[#allocation8 + $0xdf0] sm:$0xff]
    %v591 = vld [vmem:[#allocation8 + $0xdf8] sm:$0xff]
    %v592 = vld [vmem:[#allocation8 + $0xe00] sm:$0xff]
    %v593 = vld [vmem:[#allocation8 + $0xe08] sm:$0xff]
    %v594 = vld [vmem:[#allocation8 + $0xe10] sm:$0xff]
    %v595 = vld [vmem:[#allocation8 + $0xe18] sm:$0xff]
    %v596 = vld [vmem:[#allocation8 + $0xe20] sm:$0xff]
    %v597 = vld [vmem:[#allocation8 + $0xe28] sm:$0xff]
    %v598 = vld [vmem:[#allocation8 + $0xe30] sm:$0xff]
    %v599 = vld [vmem:[#allocation8 + $0xe38] sm:$0xff]
    %v600 = vld [vmem:[#allocation8 + $0xe40] sm:$0xff]
    %v601 = vld [vmem:[#allocation8 + $0xe48] sm:$0xff]
    %v602 = vld [vmem:[#allocation8 + $0xe50] sm:$0xff]
    %v603 = vld [vmem:[#allocation8 + $0xe58] sm:$0xff]
    %v604 = vld [vmem:[#allocation8 + $0xe60] sm:$0xff]
    %v605 = vld [vmem:[#allocation8 + $0xe68] sm:$0xff]
    %v606 = vld [vmem:[#allocation8 + $0xe70] sm:$0xff]
    %v607 = vld [vmem:[#allocation8 + $0xe78] sm:$0xff]
    %v608 = vld [vmem:[#allocation8 + $0xe80] sm:$0xff]
    %v609 = vld [vmem:[#allocation8 + $0xe88] sm:$0xff]
    %v610 = vld [vmem:[#allocation8 + $0xe90] sm:$0xff]
    %v611 = vld [vmem:[#allocation8 + $0xe98] sm:$0xff]
    %v612 = vld [vmem:[#allocation8 + $0xea0] sm:$0xff]
    %v613 = vld [vmem:[#allocation8 + $0xea8] sm:$0xff]
    %v614 = vld [vmem:[#allocation8 + $0xeb0] sm:$0xff]
    %v615 = vld [vmem:[#allocation8 + $0xeb8] sm:$0xff]
    %v616 = vld [vmem:[#allocation8 + $0xec0] sm:$0xff]
    %v617 = vld [vmem:[#allocation8 + $0xec8] sm:$0xff]
    %v618 = vld [vmem:[#allocation8 + $0xed0] sm:$0xff]
    %v619 = vld [vmem:[#allocation8 + $0xed8] sm:$0xff]
    %v620 = vld [vmem:[#allocation8 + $0xee0] sm:$0xff]
    %v621 = vld [vmem:[#allocation8 + $0xee8] sm:$0xff]
    %v622 = vld [vmem:[#allocation8 + $0xef0] sm:$0xff]
    %v623 = vld [vmem:[#allocation8 + $0xef8] sm:$0xff]
    %v624 = vld [vmem:[#allocation8 + $0xf00] sm:$0xff]
    %v625 = vld [vmem:[#allocation8 + $0xf08] sm:$0xff]
    %v626 = vld [vmem:[#allocation8 + $0xf10] sm:$0xff]
    %v627 = vld [vmem:[#allocation8 + $0xf18] sm:$0xff]
    %v628 = vld [vmem:[#allocation8 + $0xf20] sm:$0xff]
    %v629 = vld [vmem:[#allocation8 + $0xf28] sm:$0xff]
    %v630 = vld [vmem:[#allocation8 + $0xf30] sm:$0xff]
    %v631 = vld [vmem:[#allocation8 + $0xf38] sm:$0xff]
    %v632 = vld [vmem:[#allocation8 + $0xf40] sm:$0xff]
    %v633 = vld [vmem:[#allocation8 + $0xf48] sm:$0xff]
    %v634 = vld [vmem:[#allocation8 + $0xf50] sm:$0xff]
    %v635 = vld [vmem:[#allocation8 + $0xf58] sm:$0xff]
    %v636 = vld [vmem:[#allocation8 + $0xf60] sm:$0xff]
    %v637 = vld [vmem:[#allocation8 + $0xf68] sm:$0xff]
    %v638 = vld [vmem:[#allocation8 + $0xf70] sm:$0xff]
    %v639 = vld [vmem:[#allocation8 + $0xf78] sm:$0xff]
    %v640 = vld [vmem:[#allocation8 + $0xf80] sm:$0xff]
    %v641 = vld [vmem:[#allocation8 + $0xf88] sm:$0xff]
    %v642 = vld [vmem:[#allocation8 + $0xf90] sm:$0xff]
    %v643 = vld [vmem:[#allocation8 + $0xf98] sm:$0xff]
    %v644 = vld [vmem:[#allocation8 + $0xfa0] sm:$0xff]
    %v645 = vld [vmem:[#allocation8 + $0xfa8] sm:$0xff]
    %v646 = vld [vmem:[#allocation8 + $0xfb0] sm:$0xff]
    %v647 = vld [vmem:[#allocation8 + $0xfb8] sm:$0xff]
    %v648 = vld [vmem:[#allocation8 + $0xfc0] sm:$0xff]
    %v649 = vld [vmem:[#allocation8 + $0xfc8] sm:$0xff]
    %v650 = vld [vmem:[#allocation8 + $0xfd0] sm:$0xff]
    %v651 = vld [vmem:[#allocation8 + $0xfd8] sm:$0xff]
    %v652 = vld [vmem:[#allocation8 + $0xfe0] sm:$0xff]
    %v653 = vld [vmem:[#allocation8 + $0xfe8] sm:$0xff]
    %v654 = vld [vmem:[#allocation8 + $0xff0] sm:$0xff]
    %v655 = vld [vmem:[#allocation8 + $0xff8] sm:$0xff]
    %v656 = vld [vmem:[#allocation8 + $0x1000] sm:$0xff]
    %v657 = vld [vmem:[#allocation8 + $0x1008] sm:$0xff]
    %v658 = vld [vmem:[#allocation8 + $0x1010] sm:$0xff]
    %v659 = vld [vmem:[#allocation8 + $0x1018] sm:$0xff]
    %v660 = vld [vmem:[#allocation8 + $0x1020] sm:$0xff]
    %v661 = vld [vmem:[#allocation8 + $0x1028] sm:$0xff]
    %v662 = vld [vmem:[#allocation8 + $0x1030] sm:$0xff]
    %v663 = vld [vmem:[#allocation8 + $0x1038] sm:$0xff]
    %v664 = vld [vmem:[#allocation8 + $0x1040] sm:$0xff]
    %v665 = vld [vmem:[#allocation8 + $0x1048] sm:$0xff]
    %v666 = vld [vmem:[#allocation8 + $0x1050] sm:$0xff]
    %v667 = vld [vmem:[#allocation8 + $0x1058] sm:$0xff]
    %v668 = vld [vmem:[#allocation8 + $0x1060] sm:$0xff]
    %v669 = vld [vmem:[#allocation8 + $0x1068] sm:$0xff]
    %v670 = vld [vmem:[#allocation8 + $0x1070] sm:$0xff]
    %v671 = vld [vmem:[#allocation8 + $0x1078] sm:$0xff]
    %v672 = vld [vmem:[#allocation8 + $0x1080] sm:$0xff]
    %v673 = vld [vmem:[#allocation8 + $0x1088] sm:$0xff]
    %v674 = vld [vmem:[#allocation8 + $0x1090] sm:$0xff]
    %v675 = vld [vmem:[#allocation8 + $0x1098] sm:$0xff]
    %v676 = vld [vmem:[#allocation8 + $0x10a0] sm:$0xff]
    %v677 = vld [vmem:[#allocation8 + $0x10a8] sm:$0xff]
    %v678 = vld [vmem:[#allocation8 + $0x10b0] sm:$0xff]
    %v679 = vld [vmem:[#allocation8 + $0x10b8] sm:$0xff]
    %v680 = vld [vmem:[#allocation8 + $0x10c0] sm:$0xff]
    %v681 = vld [vmem:[#allocation8 + $0x10c8] sm:$0xff]
    %v682 = vld [vmem:[#allocation8 + $0x10d0] sm:$0xff]
    %v683 = vld [vmem:[#allocation8 + $0x10d8] sm:$0xff]
    %v684 = vld [vmem:[#allocation8 + $0x10e0] sm:$0xff]
    %v685 = vld [vmem:[#allocation8 + $0x10e8] sm:$0xff]
    %v686 = vld [vmem:[#allocation8 + $0x10f0] sm:$0xff]
    %v687 = vld [vmem:[#allocation8 + $0x10f8] sm:$0xff]
    %v688 = vld [vmem:[#allocation8 + $0x1100] sm:$0xff]
    %v689 = vld [vmem:[#allocation8 + $0x1108] sm:$0xff]
    %v690 = vld [vmem:[#allocation8 + $0x1110] sm:$0xff]
    %v691 = vld [vmem:[#allocation8 + $0x1118] sm:$0xff]
    %v692 = vld [vmem:[#allocation8 + $0x1120] sm:$0xff]
    %v693 = vld [vmem:[#allocation8 + $0x1128] sm:$0xff]
    %v694 = vld [vmem:[#allocation8 + $0x1130] sm:$0xff]
    %v695 = vld [vmem:[#allocation8 + $0x1138] sm:$0xff]
    %v696 = vld [vmem:[#allocation8 + $0x1140] sm:$0xff]
    %v697 = vld [vmem:[#allocation8 + $0x1148] sm:$0xff]
    %v698 = vld [vmem:[#allocation8 + $0x1150] sm:$0xff]
    %v699 = vld [vmem:[#allocation8 + $0x1158] sm:$0xff]
    %v700 = vld [vmem:[#allocation8 + $0x1160] sm:$0xff]
    %v701 = vld [vmem:[#allocation8 + $0x1168] sm:$0xff]
    %v702 = vld [vmem:[#allocation8 + $0x1170] sm:$0xff]
    %v703 = vld [vmem:[#allocation8 + $0x1178] sm:$0xff]
    %v704 = vld [vmem:[#allocation8 + $0x1180] sm:$0xff]
    %v705 = vld [vmem:[#allocation8 + $0x1188] sm:$0xff]
    %v706 = vld [vmem:[#allocation8 + $0x1190] sm:$0xff]
    %v707 = vld [vmem:[#allocation8 + $0x1198] sm:$0xff]
    %v708 = vld [vmem:[#allocation8 + $0x11a0] sm:$0xff]
    %v709 = vld [vmem:[#allocation8 + $0x11a8] sm:$0xff]
    %v710 = vld [vmem:[#allocation8 + $0x11b0] sm:$0xff]
    %v711 = vld [vmem:[#allocation8 + $0x11b8] sm:$0xff]
    %v712 = vld [vmem:[#allocation8 + $0x11c0] sm:$0xff]
    %v713 = vld [vmem:[#allocation8 + $0x11c8] sm:$0xff]
    %v714 = vld [vmem:[#allocation8 + $0x11d0] sm:$0xff]
    %v715 = vld [vmem:[#allocation8 + $0x11d8] sm:$0xff]
    %v716 = vld [vmem:[#allocation8 + $0x11e0] sm:$0xff]
    %v717 = vld [vmem:[#allocation8 + $0x11e8] sm:$0xff]
    %v718 = vld [vmem:[#allocation8 + $0x11f0] sm:$0xff]
    %v719 = vld [vmem:[#allocation8 + $0x11f8] sm:$0xff]
    %v720 = vld [vmem:[#allocation8 + $0x1200] sm:$0xff]
    %v721 = vld [vmem:[#allocation8 + $0x1208] sm:$0xff]
    %v722 = vld [vmem:[#allocation8 + $0x1210] sm:$0xff]
    %v723 = vld [vmem:[#allocation8 + $0x1218] sm:$0xff]
    %v724 = vld [vmem:[#allocation8 + $0x1220] sm:$0xff]
    %v725 = vld [vmem:[#allocation8 + $0x1228] sm:$0xff]
    %v726 = vld [vmem:[#allocation8 + $0x1230] sm:$0xff]
    %v727 = vld [vmem:[#allocation8 + $0x1238] sm:$0xff]
    %v728 = vld [vmem:[#allocation8 + $0x1240] sm:$0xff]
    %v729 = vld [vmem:[#allocation8 + $0x1248] sm:$0xff]
    %v730 = vld [vmem:[#allocation8 + $0x1250] sm:$0xff]
    %v731 = vld [vmem:[#allocation8 + $0x1258] sm:$0xff]
    %v732 = vld [vmem:[#allocation8 + $0x1260] sm:$0xff]
    %v733 = vld [vmem:[#allocation8 + $0x1268] sm:$0xff]
    %v734 = vld [vmem:[#allocation8 + $0x1270] sm:$0xff]
    %v735 = vld [vmem:[#allocation8 + $0x1278] sm:$0xff]
    %v736 = vld [vmem:[#allocation8 + $0x1280] sm:$0xff]
    %v737 = vld [vmem:[#allocation8 + $0x1288] sm:$0xff]
    %v738 = vld [vmem:[#allocation8 + $0x1290] sm:$0xff]
    %v739 = vld [vmem:[#allocation8 + $0x1298] sm:$0xff]
    %v740 = vld [vmem:[#allocation8 + $0x12a0] sm:$0xff]
    %v741 = vld [vmem:[#allocation8 + $0x12a8] sm:$0xff]
    %v742 = vld [vmem:[#allocation8 + $0x12b0] sm:$0xff]
    %v743 = vld [vmem:[#allocation8 + $0x12b8] sm:$0xff]
    %v744 = vld [vmem:[#allocation8 + $0x12c0] sm:$0xff]
    %v745 = vld [vmem:[#allocation8 + $0x12c8] sm:$0xff]
    %v746 = vld [vmem:[#allocation8 + $0x12d0] sm:$0xff]
    %v747 = vld [vmem:[#allocation8 + $0x12d8] sm:$0xff]
    %v748 = vld [vmem:[#allocation8 + $0x12e0] sm:$0xff]
    %v749 = vld [vmem:[#allocation8 + $0x12e8] sm:$0xff]
    %v750 = vld [vmem:[#allocation8 + $0x12f0] sm:$0xff]
    %v751 = vld [vmem:[#allocation8 + $0x12f8] sm:$0xff]
    %v752 = vld [vmem:[#allocation8 + $0x1300] sm:$0xff]
    %v753 = vld [vmem:[#allocation8 + $0x1308] sm:$0xff]
    %v754 = vld [vmem:[#allocation8 + $0x1310] sm:$0xff]
    %v755 = vld [vmem:[#allocation8 + $0x1318] sm:$0xff]
    %v756 = vld [vmem:[#allocation8 + $0x1320] sm:$0xff]
    %v757 = vld [vmem:[#allocation8 + $0x1328] sm:$0xff]
    %v758 = vld [vmem:[#allocation8 + $0x1330] sm:$0xff]
    %v759 = vld [vmem:[#allocation8 + $0x1338] sm:$0xff]
    %v760 = vld [vmem:[#allocation8 + $0x1340] sm:$0xff]
    %v761 = vld [vmem:[#allocation8 + $0x1348] sm:$0xff]
    %v762 = vld [vmem:[#allocation8 + $0x1350] sm:$0xff]
    %v763 = vld [vmem:[#allocation8 + $0x1358] sm:$0xff]
    %v764 = vld [vmem:[#allocation8 + $0x1360] sm:$0xff]
    %v765 = vld [vmem:[#allocation8 + $0x1368] sm:$0xff]
    %v766 = vld [vmem:[#allocation8 + $0x1370] sm:$0xff]
    %v767 = vld [vmem:[#allocation8 + $0x1378] sm:$0xff]
    %v768 = vld [vmem:[#allocation8 + $0x1380] sm:$0xff]
    %v769 = vld [vmem:[#allocation8 + $0x1388] sm:$0xff]
    %v770 = vld [vmem:[#allocation8 + $0x1390] sm:$0xff]
    %v771 = vld [vmem:[#allocation8 + $0x1398] sm:$0xff]
    %v772 = vld [vmem:[#allocation8 + $0x13a0] sm:$0xff]
    %v773 = vld [vmem:[#allocation8 + $0x13a8] sm:$0xff]
    %v774 = vld [vmem:[#allocation8 + $0x13b0] sm:$0xff]
    %v775 = vld [vmem:[#allocation8 + $0x13b8] sm:$0xff]
    %v776 = vld [vmem:[#allocation8 + $0x13c0] sm:$0xff]
    %v777 = vld [vmem:[#allocation8 + $0x13c8] sm:$0xff]
    %v778 = vld [vmem:[#allocation8 + $0x13d0] sm:$0xff]
    %v779 = vld [vmem:[#allocation8 + $0x13d8] sm:$0xff]
    %v780 = vld [vmem:[#allocation8 + $0x13e0] sm:$0xff]
    %v781 = vld [vmem:[#allocation8 + $0x13e8] sm:$0xff]
    %v782 = vld [vmem:[#allocation8 + $0x13f0] sm:$0xff]
    %v783 = vld [vmem:[#allocation8 + $0x13f8] sm:$0xff]
    %v784 = vld [vmem:[#allocation8 + $0x1400] sm:$0xff]
    %v785 = vld [vmem:[#allocation8 + $0x1408] sm:$0xff]
    %v786 = vld [vmem:[#allocation8 + $0x1410] sm:$0xff]
    %v787 = vld [vmem:[#allocation8 + $0x1418] sm:$0xff]
    %v788 = vld [vmem:[#allocation8 + $0x1420] sm:$0xff]
    %v789 = vld [vmem:[#allocation8 + $0x1428] sm:$0xff]
    %v790 = vld [vmem:[#allocation8 + $0x1430] sm:$0xff]
    %v791 = vld [vmem:[#allocation8 + $0x1438] sm:$0xff]
    %v792 = vld [vmem:[#allocation8 + $0x1440] sm:$0xff]
    %v793 = vld [vmem:[#allocation8 + $0x1448] sm:$0xff]
    %v794 = vld [vmem:[#allocation8 + $0x1450] sm:$0xff]
    %v795 = vld [vmem:[#allocation8 + $0x1458] sm:$0xff]
    %v796 = vld [vmem:[#allocation8 + $0x1460] sm:$0xff]
    %v797 = vld [vmem:[#allocation8 + $0x1468] sm:$0xff]
    %v798 = vld [vmem:[#allocation8 + $0x1470] sm:$0xff]
    %v799 = vld [vmem:[#allocation8 + $0x1478] sm:$0xff]
    %v800 = vld [vmem:[#allocation8 + $0x1480] sm:$0xff]
    %v801 = vld [vmem:[#allocation8 + $0x1488] sm:$0xff]
    %v802 = vld [vmem:[#allocation8 + $0x1490] sm:$0xff]
    %v803 = vld [vmem:[#allocation8 + $0x1498] sm:$0xff]
    %v804 = vld [vmem:[#allocation8 + $0x14a0] sm:$0xff]
    %v805 = vld [vmem:[#allocation8 + $0x14a8] sm:$0xff]
    %v806 = vld [vmem:[#allocation8 + $0x14b0] sm:$0xff]
    %v807 = vld [vmem:[#allocation8 + $0x14b8] sm:$0xff]
    %v808 = vld [vmem:[#allocation8 + $0x14c0] sm:$0xff]
    %v809 = vld [vmem:[#allocation8 + $0x14c8] sm:$0xff]
    %v810 = vld [vmem:[#allocation8 + $0x14d0] sm:$0xff]
    %v811 = vld [vmem:[#allocation8 + $0x14d8] sm:$0xff]
    %v812 = vld [vmem:[#allocation8 + $0x14e0] sm:$0xff]
    %v813 = vld [vmem:[#allocation8 + $0x14e8] sm:$0xff]
    %v814 = vld [vmem:[#allocation8 + $0x14f0] sm:$0xff]
    %v815 = vld [vmem:[#allocation8 + $0x14f8] sm:$0xff]
    %v816 = vld [vmem:[#allocation8 + $0x1500] sm:$0xff]
    %v817 = vld [vmem:[#allocation8 + $0x1508] sm:$0xff]
    %v818 = vld [vmem:[#allocation8 + $0x1510] sm:$0xff]
    %v819 = vld [vmem:[#allocation8 + $0x1518] sm:$0xff]
    %v820 = vld [vmem:[#allocation8 + $0x1520] sm:$0xff]
    %v821 = vld [vmem:[#allocation8 + $0x1528] sm:$0xff]
    %v822 = vld [vmem:[#allocation8 + $0x1530] sm:$0xff]
    %v823 = vld [vmem:[#allocation8 + $0x1538] sm:$0xff]
    %v824 = vld [vmem:[#allocation8 + $0x1540] sm:$0xff]
    %v825 = vld [vmem:[#allocation8 + $0x1548] sm:$0xff]
    %v826 = vld [vmem:[#allocation8 + $0x1550] sm:$0xff]
    %v827 = vld [vmem:[#allocation8 + $0x1558] sm:$0xff]
    %v828 = vld [vmem:[#allocation8 + $0x1560] sm:$0xff]
    %v829 = vld [vmem:[#allocation8 + $0x1568] sm:$0xff]
    %v830 = vld [vmem:[#allocation8 + $0x1570] sm:$0xff]
    %v831 = vld [vmem:[#allocation8 + $0x1578] sm:$0xff]
    %v832 = vld [vmem:[#allocation8 + $0x1580] sm:$0xff]
    %v833 = vld [vmem:[#allocation8 + $0x1588] sm:$0xff]
    %v834 = vld [vmem:[#allocation8 + $0x1590] sm:$0xff]
    %v835 = vld [vmem:[#allocation8 + $0x1598] sm:$0xff]
    %v836 = vld [vmem:[#allocation8 + $0x15a0] sm:$0xff]
    %v837 = vld [vmem:[#allocation8 + $0x15a8] sm:$0xff]
    %v838 = vld [vmem:[#allocation8 + $0x15b0] sm:$0xff]
    %v839 = vld [vmem:[#allocation8 + $0x15b8] sm:$0xff]
    %v840 = vld [vmem:[#allocation8 + $0x15c0] sm:$0xff]
    %v841 = vld [vmem:[#allocation8 + $0x15c8] sm:$0xff]
    %v842 = vld [vmem:[#allocation8 + $0x15d0] sm:$0xff]
    %v843 = vld [vmem:[#allocation8 + $0x15d8] sm:$0xff]
    %v844 = vld [vmem:[#allocation8 + $0x15e0] sm:$0xff]
    %v845 = vld [vmem:[#allocation8 + $0x15e8] sm:$0xff]
    %v846 = vld [vmem:[#allocation8 + $0x15f0] sm:$0xff]
    %v847 = vld [vmem:[#allocation8 + $0x15f8] sm:$0xff]
    %v848 = vld [vmem:[#allocation8 + $0x1600] sm:$0xff]
    %v849 = vld [vmem:[#allocation8 + $0x1608] sm:$0xff]
    %v850 = vld [vmem:[#allocation8 + $0x1610] sm:$0xff]
    %v851 = vld [vmem:[#allocation8 + $0x1618] sm:$0xff]
    %v852 = vld [vmem:[#allocation8 + $0x1620] sm:$0xff]
    %v853 = vld [vmem:[#allocation8 + $0x1628] sm:$0xff]
    %v854 = vld [vmem:[#allocation8 + $0x1630] sm:$0xff]
    %v855 = vld [vmem:[#allocation8 + $0x1638] sm:$0xff]
    %v856 = vld [vmem:[#allocation8 + $0x1640] sm:$0xff]
    %v857 = vld [vmem:[#allocation8 + $0x1648] sm:$0xff]
    %v858 = vld [vmem:[#allocation8 + $0x1650] sm:$0xff]
    %v859 = vld [vmem:[#allocation8 + $0x1658] sm:$0xff]
    %v860 = vld [vmem:[#allocation8 + $0x1660] sm:$0xff]
    %v861 = vld [vmem:[#allocation8 + $0x1668] sm:$0xff]
    %v862 = vld [vmem:[#allocation8 + $0x1670] sm:$0xff]
    %v863 = vld [vmem:[#allocation8 + $0x1678] sm:$0xff]
    %v864 = vld [vmem:[#allocation8 + $0x1680] sm:$0xff]
    %v865 = vld [vmem:[#allocation8 + $0x1688] sm:$0xff]
    %v866 = vld [vmem:[#allocation8 + $0x1690] sm:$0xff]
    %v867 = vld [vmem:[#allocation8 + $0x1698] sm:$0xff]
    %v868 = vld [vmem:[#allocation8 + $0x16a0] sm:$0xff]
    %v869 = vld [vmem:[#allocation8 + $0x16a8] sm:$0xff]
    %v870 = vld [vmem:[#allocation8 + $0x16b0] sm:$0xff]
    %v871 = vld [vmem:[#allocation8 + $0x16b8] sm:$0xff]
    %v872 = vld [vmem:[#allocation8 + $0x16c0] sm:$0xff]
    %v873 = vld [vmem:[#allocation8 + $0x16c8] sm:$0xff]
    %v874 = vld [vmem:[#allocation8 + $0x16d0] sm:$0xff]
    %v875 = vld [vmem:[#allocation8 + $0x16d8] sm:$0xff]
    %v876 = vld [vmem:[#allocation8 + $0x16e0] sm:$0xff]
    %v877 = vld [vmem:[#allocation8 + $0x16e8] sm:$0xff]
    %v878 = vld [vmem:[#allocation8 + $0x16f0] sm:$0xff]
    %v879 = vld [vmem:[#allocation8 + $0x16f8] sm:$0xff]
    %v880 = vld [vmem:[#allocation8 + $0x1700] sm:$0xff]
    %v881 = vld [vmem:[#allocation8 + $0x1708] sm:$0xff]
    %v882 = vld [vmem:[#allocation8 + $0x1710] sm:$0xff]
    %v883 = vld [vmem:[#allocation8 + $0x1718] sm:$0xff]
    %v884 = vld [vmem:[#allocation8 + $0x1720] sm:$0xff]
    %v885 = vld [vmem:[#allocation8 + $0x1728] sm:$0xff]
    %v886 = vld [vmem:[#allocation8 + $0x1730] sm:$0xff]
    %v887 = vld [vmem:[#allocation8 + $0x1738] sm:$0xff]
    %v888 = vld [vmem:[#allocation8 + $0x1740] sm:$0xff]
    %v889 = vld [vmem:[#allocation8 + $0x1748] sm:$0xff]
    %v890 = vld [vmem:[#allocation8 + $0x1750] sm:$0xff]
    %v891 = vld [vmem:[#allocation8 + $0x1758] sm:$0xff]
    %v892 = vld [vmem:[#allocation8 + $0x1760] sm:$0xff]
    %v893 = vld [vmem:[#allocation8 + $0x1768] sm:$0xff]
    %v894 = vld [vmem:[#allocation8 + $0x1770] sm:$0xff]
    %v895 = vld [vmem:[#allocation8 + $0x1778] sm:$0xff]
    %v896 = vld [vmem:[#allocation8 + $0x1780] sm:$0xff]
    %v897 = vld [vmem:[#allocation8 + $0x1788] sm:$0xff]
    %v898 = vld [vmem:[#allocation8 + $0x1790] sm:$0xff]
    %v899 = vld [vmem:[#allocation8 + $0x1798] sm:$0xff]
    %v900 = vld [vmem:[#allocation8 + $0x17a0] sm:$0xff]
    %v901 = vld [vmem:[#allocation8 + $0x17a8] sm:$0xff]
    %v902 = vld [vmem:[#allocation8 + $0x17b0] sm:$0xff]
    %v903 = vld [vmem:[#allocation8 + $0x17b8] sm:$0xff]
    %v904 = vld [vmem:[#allocation8 + $0x17c0] sm:$0xff]
    %v905 = vld [vmem:[#allocation8 + $0x17c8] sm:$0xff]
    %v906 = vld [vmem:[#allocation8 + $0x17d0] sm:$0xff]
    %v907 = vld [vmem:[#allocation8 + $0x17d8] sm:$0xff]
    %v908 = vld [vmem:[#allocation8 + $0x17e0] sm:$0xff]
    %v909 = vld [vmem:[#allocation8 + $0x17e8] sm:$0xff]
    %v910 = vld [vmem:[#allocation8 + $0x17f0] sm:$0xff]
    %v911 = vld [vmem:[#allocation8 + $0x17f8] sm:$0xff]
    %v912 = vld [vmem:[#allocation8 + $0x1800] sm:$0xff]
    %v913 = vld [vmem:[#allocation8 + $0x1808] sm:$0xff]
    %v914 = vld [vmem:[#allocation8 + $0x1810] sm:$0xff]
    %v915 = vld [vmem:[#allocation8 + $0x1818] sm:$0xff]
    %v916 = vld [vmem:[#allocation8 + $0x1820] sm:$0xff]
    %v917 = vld [vmem:[#allocation8 + $0x1828] sm:$0xff]
    %v918 = vld [vmem:[#allocation8 + $0x1830] sm:$0xff]
    %v919 = vld [vmem:[#allocation8 + $0x1838] sm:$0xff]
    %v920 = vld [vmem:[#allocation8 + $0x1840] sm:$0xff]
    %v921 = vld [vmem:[#allocation8 + $0x1848] sm:$0xff]
    %v922 = vld [vmem:[#allocation8 + $0x1850] sm:$0xff]
    %v923 = vld [vmem:[#allocation8 + $0x1858] sm:$0xff]
    %v924 = vld [vmem:[#allocation8 + $0x1860] sm:$0xff]
    %v925 = vld [vmem:[#allocation8 + $0x1868] sm:$0xff]
    %v926 = vld [vmem:[#allocation8 + $0x1870] sm:$0xff]
    %v927 = vld [vmem:[#allocation8 + $0x1878] sm:$0xff]
    %v928 = vld [vmem:[#allocation8 + $0x1880] sm:$0xff]
    %v929 = vld [vmem:[#allocation8 + $0x1888] sm:$0xff]
    %v930 = vld [vmem:[#allocation8 + $0x1890] sm:$0xff]
    %v931 = vld [vmem:[#allocation8 + $0x1898] sm:$0xff]
    %v932 = vld [vmem:[#allocation8 + $0x18a0] sm:$0xff]
    %v933 = vld [vmem:[#allocation8 + $0x18a8] sm:$0xff]
    %v934 = vld [vmem:[#allocation8 + $0x18b0] sm:$0xff]
    %v935 = vld [vmem:[#allocation8 + $0x18b8] sm:$0xff]
    %v936 = vld [vmem:[#allocation8 + $0x18c0] sm:$0xff]
    %v937 = vld [vmem:[#allocation8 + $0x18c8] sm:$0xff]
    %v938 = vld [vmem:[#allocation8 + $0x18d0] sm:$0xff]
    %v939 = vld [vmem:[#allocation8 + $0x18d8] sm:$0xff]
    %v940 = vld [vmem:[#allocation8 + $0x18e0] sm:$0xff]
    %v941 = vld [vmem:[#allocation8 + $0x18e8] sm:$0xff]
    %v942 = vld [vmem:[#allocation8 + $0x18f0] sm:$0xff]
    %v943 = vld [vmem:[#allocation8 + $0x18f8] sm:$0xff]
    %v944 = vld [vmem:[#allocation8 + $0x1900] sm:$0xff]
    %v945 = vld [vmem:[#allocation8 + $0x1908] sm:$0xff]
    %v946 = vld [vmem:[#allocation8 + $0x1910] sm:$0xff]
    %v947 = vld [vmem:[#allocation8 + $0x1918] sm:$0xff]
    %v948 = vld [vmem:[#allocation8 + $0x1920] sm:$0xff]
    %v949 = vld [vmem:[#allocation8 + $0x1928] sm:$0xff]
    %v950 = vld [vmem:[#allocation8 + $0x1930] sm:$0xff]
    %v951 = vld [vmem:[#allocation8 + $0x1938] sm:$0xff]
    %v952 = vld [vmem:[#allocation8 + $0x1940] sm:$0xff]
    %v953 = vld [vmem:[#allocation8 + $0x1948] sm:$0xff]
    %v954 = vld [vmem:[#allocation8 + $0x1950] sm:$0xff]
    %v955 = vld [vmem:[#allocation8 + $0x1958] sm:$0xff]
    %v956 = vld [vmem:[#allocation8 + $0x1960] sm:$0xff]
    %v957 = vld [vmem:[#allocation8 + $0x1968] sm:$0xff]
    %v958 = vld [vmem:[#allocation8 + $0x1970] sm:$0xff]
    %v959 = vld [vmem:[#allocation8 + $0x1978] sm:$0xff]
    %v960 = vld [vmem:[#allocation8 + $0x1980] sm:$0xff]
    %v961 = vld [vmem:[#allocation8 + $0x1988] sm:$0xff]
    %v962 = vld [vmem:[#allocation8 + $0x1990] sm:$0xff]
    %v963 = vld [vmem:[#allocation8 + $0x1998] sm:$0xff]
    %v964 = vld [vmem:[#allocation8 + $0x19a0] sm:$0xff]
    %v965 = vld [vmem:[#allocation8 + $0x19a8] sm:$0xff]
    %v966 = vld [vmem:[#allocation8 + $0x19b0] sm:$0xff]
    %v967 = vld [vmem:[#allocation8 + $0x19b8] sm:$0xff]
    %v968 = vld [vmem:[#allocation8 + $0x19c0] sm:$0xff]
    %v969 = vld [vmem:[#allocation8 + $0x19c8] sm:$0xff]
    %v970 = vld [vmem:[#allocation8 + $0x19d0] sm:$0xff]
    %v971 = vld [vmem:[#allocation8 + $0x19d8] sm:$0xff]
    %v972 = vld [vmem:[#allocation8 + $0x19e0] sm:$0xff]
    %v973 = vld [vmem:[#allocation8 + $0x19e8] sm:$0xff]
    %v974 = vld [vmem:[#allocation8 + $0x19f0] sm:$0xff]
    %v975 = vld [vmem:[#allocation8 + $0x19f8] sm:$0xff]
    %v976 = vld [vmem:[#allocation8 + $0x1a00] sm:$0xff]
    %v977 = vld [vmem:[#allocation8 + $0x1a08] sm:$0xff]
    %v978 = vld [vmem:[#allocation8 + $0x1a10] sm:$0xff]
    %v979 = vld [vmem:[#allocation8 + $0x1a18] sm:$0xff]
    %v980 = vld [vmem:[#allocation8 + $0x1a20] sm:$0xff]
    %v981 = vld [vmem:[#allocation8 + $0x1a28] sm:$0xff]
    %v982 = vld [vmem:[#allocation8 + $0x1a30] sm:$0xff]
    %v983 = vld [vmem:[#allocation8 + $0x1a38] sm:$0xff]
    %v984 = vld [vmem:[#allocation8 + $0x1a40] sm:$0xff]
    %v985 = vld [vmem:[#allocation8 + $0x1a48] sm:$0xff]
    %v986 = vld [vmem:[#allocation8 + $0x1a50] sm:$0xff]
    %v987 = vld [vmem:[#allocation8 + $0x1a58] sm:$0xff]
    %v988 = vld [vmem:[#allocation8 + $0x1a60] sm:$0xff]
    %v989 = vld [vmem:[#allocation8 + $0x1a68] sm:$0xff]
    %v990 = vld [vmem:[#allocation8 + $0x1a70] sm:$0xff]
    %v991 = vld [vmem:[#allocation8 + $0x1a78] sm:$0xff]
    %v992 = vld [vmem:[#allocation8 + $0x1a80] sm:$0xff]
    %v993 = vld [vmem:[#allocation8 + $0x1a88] sm:$0xff]
    %v994 = vld [vmem:[#allocation8 + $0x1a90] sm:$0xff]
    %v995 = vld [vmem:[#allocation8 + $0x1a98] sm:$0xff]
    %v996 = vld [vmem:[#allocation8 + $0x1aa0] sm:$0xff]
    %v997 = vld [vmem:[#allocation8 + $0x1aa8] sm:$0xff]
    %v998 = vld [vmem:[#allocation8 + $0x1ab0] sm:$0xff]
    %v999 = vld [vmem:[#allocation8 + $0x1ab8] sm:$0xff]
    %v1000 = vld [vmem:[#allocation8 + $0x1ac0] sm:$0xff]
    %v1001 = vld [vmem:[#allocation8 + $0x1ac8] sm:$0xff]
    %v1002 = vld [vmem:[#allocation8 + $0x1ad0] sm:$0xff]
    %v1003 = vld [vmem:[#allocation8 + $0x1ad8] sm:$0xff]
    %v1004 = vld [vmem:[#allocation8 + $0x1ae0] sm:$0xff]
    %v1005 = vld [vmem:[#allocation8 + $0x1ae8] sm:$0xff]
    %v1006 = vld [vmem:[#allocation8 + $0x1af0] sm:$0xff]
    %v1007 = vld [vmem:[#allocation8 + $0x1af8] sm:$0xff]
    %v1008 = vld [vmem:[#allocation8 + $0x1b00] sm:$0xff]
    %v1009 = vld [vmem:[#allocation8 + $0x1b08] sm:$0xff]
    %v1010 = vld [vmem:[#allocation8 + $0x1b10] sm:$0xff]
    %v1011 = vld [vmem:[#allocation8 + $0x1b18] sm:$0xff]
    %v1012 = vld [vmem:[#allocation8 + $0x1b20] sm:$0xff]
    %v1013 = vld [vmem:[#allocation8 + $0x1b28] sm:$0xff]
    %v1014 = vld [vmem:[#allocation8 + $0x1b30] sm:$0xff]
    %v1015 = vld [vmem:[#allocation8 + $0x1b38] sm:$0xff]
    %v1016 = vld [vmem:[#allocation8 + $0x1b40] sm:$0xff]
    %v1017 = vld [vmem:[#allocation8 + $0x1b48] sm:$0xff]
    %v1018 = vld [vmem:[#allocation8 + $0x1b50] sm:$0xff]
    %v1019 = vld [vmem:[#allocation8 + $0x1b58] sm:$0xff]
    %v1020 = vld [vmem:[#allocation8 + $0x1b60] sm:$0xff]
    %v1021 = vld [vmem:[#allocation8 + $0x1b68] sm:$0xff]
    %v1022 = vld [vmem:[#allocation8 + $0x1b70] sm:$0xff]
    %v1023 = vld [vmem:[#allocation8 + $0x1b78] sm:$0xff]
    %v1024 = vld [vmem:[#allocation8 + $0x1b80] sm:$0xff]
    %v1025 = vld [vmem:[#allocation8 + $0x1b88] sm:$0xff]
    %v1026 = vld [vmem:[#allocation8 + $0x1b90] sm:$0xff]
    %v1027 = vld [vmem:[#allocation8 + $0x1b98] sm:$0xff]
    %v1028 = vld [vmem:[#allocation8 + $0x1ba0] sm:$0xff]
    %v1029 = vld [vmem:[#allocation8 + $0x1ba8] sm:$0xff]
    %v1030 = vld [vmem:[#allocation8 + $0x1bb0] sm:$0xff]
    %v1031 = vld [vmem:[#allocation8 + $0x1bb8] sm:$0xff]
    %v1032 = vld [vmem:[#allocation8 + $0x1bc0] sm:$0xff]
    %v1033 = vld [vmem:[#allocation8 + $0x1bc8] sm:$0xff]
    %v1034 = vld [vmem:[#allocation8 + $0x1bd0] sm:$0xff]
    %v1035 = vld [vmem:[#allocation8 + $0x1bd8] sm:$0xff]
    %v1036 = vld [vmem:[#allocation8 + $0x1be0] sm:$0xff]
    %v1037 = vld [vmem:[#allocation8 + $0x1be8] sm:$0xff]
    %v1038 = vld [vmem:[#allocation8 + $0x1bf0] sm:$0xff]
    %v1039 = vld [vmem:[#allocation8 + $0x1bf8] sm:$0xff]
    %v1040 = vld [vmem:[#allocation8 + $0x1c00] sm:$0xff]
    %v1041 = vld [vmem:[#allocation8 + $0x1c08] sm:$0xff]
    %v1042 = vld [vmem:[#allocation8 + $0x1c10] sm:$0xff]
    %v1043 = vld [vmem:[#allocation8 + $0x1c18] sm:$0xff]
    %v1044 = vld [vmem:[#allocation8 + $0x1c20] sm:$0xff]
    %v1045 = vld [vmem:[#allocation8 + $0x1c28] sm:$0xff]
    %v1046 = vld [vmem:[#allocation8 + $0x1c30] sm:$0xff]
    %v1047 = vld [vmem:[#allocation8 + $0x1c38] sm:$0xff]
    %v1048 = vld [vmem:[#allocation8 + $0x1c40] sm:$0xff]
    %v1049 = vld [vmem:[#allocation8 + $0x1c48] sm:$0xff]
    %v1050 = vld [vmem:[#allocation8 + $0x1c50] sm:$0xff]
    %v1051 = vld [vmem:[#allocation8 + $0x1c58] sm:$0xff]
    %v1052 = vld [vmem:[#allocation8 + $0x1c60] sm:$0xff]
    %v1053 = vld [vmem:[#allocation8 + $0x1c68] sm:$0xff]
    %v1054 = vld [vmem:[#allocation8 + $0x1c70] sm:$0xff]
    %v1055 = vld [vmem:[#allocation8 + $0x1c78] sm:$0xff]
    %v1056 = vld [vmem:[#allocation8 + $0x1c80] sm:$0xff]
    %v1057 = vld [vmem:[#allocation8 + $0x1c88] sm:$0xff]
    %v1058 = vld [vmem:[#allocation8 + $0x1c90] sm:$0xff]
    %v1059 = vld [vmem:[#allocation8 + $0x1c98] sm:$0xff]
    %v1060 = vld [vmem:[#allocation8 + $0x1ca0] sm:$0xff]
    %v1061 = vld [vmem:[#allocation8 + $0x1ca8] sm:$0xff]
    %v1062 = vld [vmem:[#allocation8 + $0x1cb0] sm:$0xff]
    %v1063 = vld [vmem:[#allocation8 + $0x1cb8] sm:$0xff]
    %v1064 = vld [vmem:[#allocation8 + $0x1cc0] sm:$0xff]
    %v1065 = vld [vmem:[#allocation8 + $0x1cc8] sm:$0xff]
    %v1066 = vld [vmem:[#allocation8 + $0x1cd0] sm:$0xff]
    %v1067 = vld [vmem:[#allocation8 + $0x1cd8] sm:$0xff]
    %v1068 = vld [vmem:[#allocation8 + $0x1ce0] sm:$0xff]
    %v1069 = vld [vmem:[#allocation8 + $0x1ce8] sm:$0xff]
    %v1070 = vld [vmem:[#allocation8 + $0x1cf0] sm:$0xff]
    %v1071 = vld [vmem:[#allocation8 + $0x1cf8] sm:$0xff]
    %v1072 = vld [vmem:[#allocation8 + $0x1d00] sm:$0xff]
    %v1073 = vld [vmem:[#allocation8 + $0x1d08] sm:$0xff]
    %v1074 = vld [vmem:[#allocation8 + $0x1d10] sm:$0xff]
    %v1075 = vld [vmem:[#allocation8 + $0x1d18] sm:$0xff]
    %v1076 = vld [vmem:[#allocation8 + $0x1d20] sm:$0xff]
    %v1077 = vld [vmem:[#allocation8 + $0x1d28] sm:$0xff]
    %v1078 = vld [vmem:[#allocation8 + $0x1d30] sm:$0xff]
    %v1079 = vld [vmem:[#allocation8 + $0x1d38] sm:$0xff]
    %v1080 = vld [vmem:[#allocation8 + $0x1d40] sm:$0xff]
    %v1081 = vld [vmem:[#allocation8 + $0x1d48] sm:$0xff]
    %v1082 = vld [vmem:[#allocation8 + $0x1d50] sm:$0xff]
    %v1083 = vld [vmem:[#allocation8 + $0x1d58] sm:$0xff]
    %v1084 = vld [vmem:[#allocation8 + $0x1d60] sm:$0xff]
    %v1085 = vld [vmem:[#allocation8 + $0x1d68] sm:$0xff]
    %v1086 = vld [vmem:[#allocation8 + $0x1d70] sm:$0xff]
    %v1087 = vld [vmem:[#allocation8 + $0x1d78] sm:$0xff]
    %v1088 = vld [vmem:[#allocation8 + $0x1d80] sm:$0xff]
    %v1089 = vld [vmem:[#allocation8 + $0x1d88] sm:$0xff]
    %v1090 = vld [vmem:[#allocation8 + $0x1d90] sm:$0xff]
    %v1091 = vld [vmem:[#allocation8 + $0x1d98] sm:$0xff]
    %v1092 = vld [vmem:[#allocation8 + $0x1da0] sm:$0xff]
    %v1093 = vld [vmem:[#allocation8 + $0x1da8] sm:$0xff]
    %v1094 = vld [vmem:[#allocation8 + $0x1db0] sm:$0xff]
    %v1095 = vld [vmem:[#allocation8 + $0x1db8] sm:$0xff]
    %v1096 = vld [vmem:[#allocation8 + $0x1dc0] sm:$0xff]
    %v1097 = vld [vmem:[#allocation8 + $0x1dc8] sm:$0xff]
    %v1098 = vld [vmem:[#allocation8 + $0x1dd0] sm:$0xff]
    %v1099 = vld [vmem:[#allocation8 + $0x1dd8] sm:$0xff]
    %v1100 = vld [vmem:[#allocation8 + $0x1de0] sm:$0xff]
    %v1101 = vld [vmem:[#allocation8 + $0x1de8] sm:$0xff]
    %v1102 = vld [vmem:[#allocation8 + $0x1df0] sm:$0xff]
    %v1103 = vld [vmem:[#allocation8 + $0x1df8] sm:$0xff]
    %v1104 = vld [vmem:[#allocation8 + $0x1e00] sm:$0xff]
    %v1105 = vld [vmem:[#allocation8 + $0x1e08] sm:$0xff]
    %v1106 = vld [vmem:[#allocation8 + $0x1e10] sm:$0xff]
    %v1107 = vld [vmem:[#allocation8 + $0x1e18] sm:$0xff]
    %v1108 = vld [vmem:[#allocation8 + $0x1e20] sm:$0xff]
    %v1109 = vld [vmem:[#allocation8 + $0x1e28] sm:$0xff]
    %v1110 = vld [vmem:[#allocation8 + $0x1e30] sm:$0xff]
    %v1111 = vld [vmem:[#allocation8 + $0x1e38] sm:$0xff]
    %v1112 = vld [vmem:[#allocation8 + $0x1e40] sm:$0xff]
    %v1113 = vld [vmem:[#allocation8 + $0x1e48] sm:$0xff]
    %v1114 = vld [vmem:[#allocation8 + $0x1e50] sm:$0xff]
    %v1115 = vld [vmem:[#allocation8 + $0x1e58] sm:$0xff]
    %v1116 = vld [vmem:[#allocation8 + $0x1e60] sm:$0xff]
    %v1117 = vld [vmem:[#allocation8 + $0x1e68] sm:$0xff]
    %v1118 = vld [vmem:[#allocation8 + $0x1e70] sm:$0xff]
    %v1119 = vld [vmem:[#allocation8 + $0x1e78] sm:$0xff]
    %v1120 = vld [vmem:[#allocation8 + $0x1e80] sm:$0xff]
    %v1121 = vld [vmem:[#allocation8 + $0x1e88] sm:$0xff]
    %v1122 = vld [vmem:[#allocation8 + $0x1e90] sm:$0xff]
    %v1123 = vld [vmem:[#allocation8 + $0x1e98] sm:$0xff]
    %v1124 = vld [vmem:[#allocation8 + $0x1ea0] sm:$0xff]
    %v1125 = vld [vmem:[#allocation8 + $0x1ea8] sm:$0xff]
    %v1126 = vld [vmem:[#allocation8 + $0x1eb0] sm:$0xff]
    %v1127 = vld [vmem:[#allocation8 + $0x1eb8] sm:$0xff]
    %v1128 = vld [vmem:[#allocation8 + $0x1ec0] sm:$0xff]
    %v1129 = vld [vmem:[#allocation8 + $0x1ec8] sm:$0xff]
    %v1130 = vld [vmem:[#allocation8 + $0x1ed0] sm:$0xff]
    %v1131 = vld [vmem:[#allocation8 + $0x1ed8] sm:$0xff]
    %v1132 = vld [vmem:[#allocation8 + $0x1ee0] sm:$0xff]
    %v1133 = vld [vmem:[#allocation8 + $0x1ee8] sm:$0xff]
    %v1134 = vld [vmem:[#allocation8 + $0x1ef0] sm:$0xff]
    %v1135 = vld [vmem:[#allocation8 + $0x1ef8] sm:$0xff]
    %v1136 = vld [vmem:[#allocation8 + $0x1f00] sm:$0xff]
    %v1137 = vld [vmem:[#allocation8 + $0x1f08] sm:$0xff]
    %v1138 = vld [vmem:[#allocation8 + $0x1f10] sm:$0xff]
    %v1139 = vld [vmem:[#allocation8 + $0x1f18] sm:$0xff]
    %v1140 = vld [vmem:[#allocation8 + $0x1f20] sm:$0xff]
    %v1141 = vld [vmem:[#allocation8 + $0x1f28] sm:$0xff]
    %v1142 = vld [vmem:[#allocation8 + $0x1f30] sm:$0xff]
    %v1143 = vld [vmem:[#allocation8 + $0x1f38] sm:$0xff]
    %v1144 = vld [vmem:[#allocation8 + $0x1f40] sm:$0xff]
    %v1145 = vld [vmem:[#allocation8 + $0x1f48] sm:$0xff]
    %v1146 = vld [vmem:[#allocation8 + $0x1f50] sm:$0xff]
    %v1147 = vld [vmem:[#allocation8 + $0x1f58] sm:$0xff]
    %v1148 = vld [vmem:[#allocation8 + $0x1f60] sm:$0xff]
    %v1149 = vld [vmem:[#allocation8 + $0x1f68] sm:$0xff]
    %v1150 = vld [vmem:[#allocation8 + $0x1f70] sm:$0xff]
    %v1151 = vld [vmem:[#allocation8 + $0x1f78] sm:$0xff]
    %v1152 = vld [vmem:[#allocation8 + $0x1f80] sm:$0xff]
    %v1153 = vld [vmem:[#allocation8 + $0x1f88] sm:$0xff]
    %v1154 = vld [vmem:[#allocation8 + $0x1f90] sm:$0xff]
    %v1155 = vld [vmem:[#allocation8 + $0x1f98] sm:$0xff]
    %v1156 = vld [vmem:[#allocation8 + $0x1fa0] sm:$0xff]
    %v1157 = vld [vmem:[#allocation8 + $0x1fa8] sm:$0xff]
    %v1158 = vld [vmem:[#allocation8 + $0x1fb0] sm:$0xff]
    %v1159 = vld [vmem:[#allocation8 + $0x1fb8] sm:$0xff]
    %v1160 = vld [vmem:[#allocation8 + $0x1fc0] sm:$0xff]
    %v1161 = vld [vmem:[#allocation8 + $0x1fc8] sm:$0xff]
    %v1162 = vld [vmem:[#allocation8 + $0x1fd0] sm:$0xff]
    %v1163 = vld [vmem:[#allocation8 + $0x1fd8] sm:$0xff]
    %v1164 = vld [vmem:[#allocation8 + $0x1fe0] sm:$0xff]
    %v1165 = vld [vmem:[#allocation8 + $0x1fe8] sm:$0xff]
    %v1166 = vld [vmem:[#allocation8 + $0x1ff0] sm:$0xff]
    %v1167 = vld [vmem:[#allocation8 + $0x1ff8] sm:$0xff]
    %v1168 = vld [vmem:[#allocation9] sm:$0xff]
    %v1169 = vld [vmem:[#allocation9 + $0x8] sm:$0xff]
    %v1170 = vld [vmem:[#allocation9 + $0x10] sm:$0xff]
    %v1171 = vld [vmem:[#allocation9 + $0x18] sm:$0xff]
    %v1172 = vld [vmem:[#allocation9 + $0x20] sm:$0xff]
    %v1173 = vld [vmem:[#allocation9 + $0x28] sm:$0xff]
    %v1174 = vld [vmem:[#allocation9 + $0x30] sm:$0xff]
    %v1175 = vld [vmem:[#allocation9 + $0x38] sm:$0xff]
    %v1176 = vld [vmem:[#allocation9 + $0x40] sm:$0xff]
    %v1177 = vld [vmem:[#allocation9 + $0x48] sm:$0xff]
    %v1178 = vld [vmem:[#allocation9 + $0x50] sm:$0xff]
    %v1179 = vld [vmem:[#allocation9 + $0x58] sm:$0xff]
    %v1180 = vld [vmem:[#allocation9 + $0x60] sm:$0xff]
    %v1181 = vld [vmem:[#allocation9 + $0x68] sm:$0xff]
    %v1182 = vld [vmem:[#allocation9 + $0x70] sm:$0xff]
    %v1183 = vld [vmem:[#allocation9 + $0x78] sm:$0xff]
    %v1184 = vld [vmem:[#allocation9 + $0x80] sm:$0xff]
    %v1185 = vld [vmem:[#allocation9 + $0x88] sm:$0xff]
    %v1186 = vld [vmem:[#allocation9 + $0x90] sm:$0xff]
    %v1187 = vld [vmem:[#allocation9 + $0x98] sm:$0xff]
    %v1188 = vld [vmem:[#allocation9 + $0xa0] sm:$0xff]
    %v1189 = vld [vmem:[#allocation9 + $0xa8] sm:$0xff]
    %v1190 = vld [vmem:[#allocation9 + $0xb0] sm:$0xff]
    %v1191 = vld [vmem:[#allocation9 + $0xb8] sm:$0xff]
    %v1192 = vld [vmem:[#allocation9 + $0xc0] sm:$0xff]
    %v1193 = vld [vmem:[#allocation9 + $0xc8] sm:$0xff]
    %v1194 = vld [vmem:[#allocation9 + $0xd0] sm:$0xff]
    %v1195 = vld [vmem:[#allocation9 + $0xd8] sm:$0xff]
    %v1196 = vld [vmem:[#allocation9 + $0xe0] sm:$0xff]
    %v1197 = vld [vmem:[#allocation9 + $0xe8] sm:$0xff]
    %v1198 = vld [vmem:[#allocation9 + $0xf0] sm:$0xff]
    %v1199 = vld [vmem:[#allocation9 + $0xf8] sm:$0xff]
    %v1200 = vld [vmem:[#allocation9 + $0x100] sm:$0xff]
    %v1201 = vld [vmem:[#allocation9 + $0x108] sm:$0xff]
    %v1202 = vld [vmem:[#allocation9 + $0x110] sm:$0xff]
    %v1203 = vld [vmem:[#allocation9 + $0x118] sm:$0xff]
    %v1204 = vld [vmem:[#allocation9 + $0x120] sm:$0xff]
    %v1205 = vld [vmem:[#allocation9 + $0x128] sm:$0xff]
    %v1206 = vld [vmem:[#allocation9 + $0x130] sm:$0xff]
    %v1207 = vld [vmem:[#allocation9 + $0x138] sm:$0xff]
    %v1208 = vld [vmem:[#allocation9 + $0x140] sm:$0xff]
    %v1209 = vld [vmem:[#allocation9 + $0x148] sm:$0xff]
    %v1210 = vld [vmem:[#allocation9 + $0x150] sm:$0xff]
    %v1211 = vld [vmem:[#allocation9 + $0x158] sm:$0xff]
    %v1212 = vld [vmem:[#allocation9 + $0x160] sm:$0xff]
    %v1213 = vld [vmem:[#allocation9 + $0x168] sm:$0xff]
    %v1214 = vld [vmem:[#allocation9 + $0x170] sm:$0xff]
    %v1215 = vld [vmem:[#allocation9 + $0x178] sm:$0xff]
    %v1216 = vld [vmem:[#allocation9 + $0x180] sm:$0xff]
    %v1217 = vld [vmem:[#allocation9 + $0x188] sm:$0xff]
    %v1218 = vld [vmem:[#allocation9 + $0x190] sm:$0xff]
    %v1219 = vld [vmem:[#allocation9 + $0x198] sm:$0xff]
    %v1220 = vld [vmem:[#allocation9 + $0x1a0] sm:$0xff]
    %v1221 = vld [vmem:[#allocation9 + $0x1a8] sm:$0xff]
    %v1222 = vld [vmem:[#allocation9 + $0x1b0] sm:$0xff]
    %v1223 = vld [vmem:[#allocation9 + $0x1b8] sm:$0xff]
    %v1224 = vld [vmem:[#allocation9 + $0x1c0] sm:$0xff]
    %v1225 = vld [vmem:[#allocation9 + $0x1c8] sm:$0xff]
    %v1226 = vld [vmem:[#allocation9 + $0x1d0] sm:$0xff]
    %v1227 = vld [vmem:[#allocation9 + $0x1d8] sm:$0xff]
    %v1228 = vld [vmem:[#allocation9 + $0x1e0] sm:$0xff]
    %v1229 = vld [vmem:[#allocation9 + $0x1e8] sm:$0xff]
    %v1230 = vld [vmem:[#allocation9 + $0x1f0] sm:$0xff]
    %v1231 = vld [vmem:[#allocation9 + $0x1f8] sm:$0xff]
    %v1232 = vld [vmem:[#allocation9 + $0x200] sm:$0xff]
    %v1233 = vld [vmem:[#allocation9 + $0x208] sm:$0xff]
    %v1234 = vld [vmem:[#allocation9 + $0x210] sm:$0xff]
    %v1235 = vld [vmem:[#allocation9 + $0x218] sm:$0xff]
    %v1236 = vld [vmem:[#allocation9 + $0x220] sm:$0xff]
    %v1237 = vld [vmem:[#allocation9 + $0x228] sm:$0xff]
    %v1238 = vld [vmem:[#allocation9 + $0x230] sm:$0xff]
    %v1239 = vld [vmem:[#allocation9 + $0x238] sm:$0xff]
    %v1240 = vld [vmem:[#allocation9 + $0x240] sm:$0xff]
    %v1241 = vld [vmem:[#allocation9 + $0x248] sm:$0xff]
    %v1242 = vld [vmem:[#allocation9 + $0x250] sm:$0xff]
    %v1243 = vld [vmem:[#allocation9 + $0x258] sm:$0xff]
    %v1244 = vld [vmem:[#allocation9 + $0x260] sm:$0xff]
    %v1245 = vld [vmem:[#allocation9 + $0x268] sm:$0xff]
    %v1246 = vld [vmem:[#allocation9 + $0x270] sm:$0xff]
    %v1247 = vld [vmem:[#allocation9 + $0x278] sm:$0xff]
    %v1248 = vld [vmem:[#allocation9 + $0x280] sm:$0xff]
    %v1249 = vld [vmem:[#allocation9 + $0x288] sm:$0xff]
    %v1250 = vld [vmem:[#allocation9 + $0x290] sm:$0xff]
    %v1251 = vld [vmem:[#allocation9 + $0x298] sm:$0xff]
    %v1252 = vld [vmem:[#allocation9 + $0x2a0] sm:$0xff]
    %v1253 = vld [vmem:[#allocation9 + $0x2a8] sm:$0xff]
    %v1254 = vld [vmem:[#allocation9 + $0x2b0] sm:$0xff]
    %v1255 = vld [vmem:[#allocation9 + $0x2b8] sm:$0xff]
    %v1256 = vld [vmem:[#allocation9 + $0x2c0] sm:$0xff]
    %v1257 = vld [vmem:[#allocation9 + $0x2c8] sm:$0xff]
    %v1258 = vld [vmem:[#allocation9 + $0x2d0] sm:$0xff]
    %v1259 = vld [vmem:[#allocation9 + $0x2d8] sm:$0xff]
    %v1260 = vld [vmem:[#allocation9 + $0x2e0] sm:$0xff]
    %v1261 = vld [vmem:[#allocation9 + $0x2e8] sm:$0xff]
    %v1262 = vld [vmem:[#allocation9 + $0x2f0] sm:$0xff]
    %v1263 = vld [vmem:[#allocation9 + $0x2f8] sm:$0xff]
    %v1264 = vld [vmem:[#allocation9 + $0x300] sm:$0xff]
    %v1265 = vld [vmem:[#allocation9 + $0x308] sm:$0xff]
    %v1266 = vld [vmem:[#allocation9 + $0x310] sm:$0xff]
    %v1267 = vld [vmem:[#allocation9 + $0x318] sm:$0xff]
    %v1268 = vld [vmem:[#allocation9 + $0x320] sm:$0xff]
    %v1269 = vld [vmem:[#allocation9 + $0x328] sm:$0xff]
    %v1270 = vld [vmem:[#allocation9 + $0x330] sm:$0xff]
    %v1271 = vld [vmem:[#allocation9 + $0x338] sm:$0xff]
    %v1272 = vld [vmem:[#allocation9 + $0x340] sm:$0xff]
    %v1273 = vld [vmem:[#allocation9 + $0x348] sm:$0xff]
    %v1274 = vld [vmem:[#allocation9 + $0x350] sm:$0xff]
    %v1275 = vld [vmem:[#allocation9 + $0x358] sm:$0xff]
    %v1276 = vld [vmem:[#allocation9 + $0x360] sm:$0xff]
    %v1277 = vld [vmem:[#allocation9 + $0x368] sm:$0xff]
    %v1278 = vld [vmem:[#allocation9 + $0x370] sm:$0xff]
    %v1279 = vld [vmem:[#allocation9 + $0x378] sm:$0xff]
    %v1280 = vld [vmem:[#allocation9 + $0x380] sm:$0xff]
    %v1281 = vld [vmem:[#allocation9 + $0x388] sm:$0xff]
    %v1282 = vld [vmem:[#allocation9 + $0x390] sm:$0xff]
    %v1283 = vld [vmem:[#allocation9 + $0x398] sm:$0xff]
    %v1284 = vld [vmem:[#allocation9 + $0x3a0] sm:$0xff]
    %v1285 = vld [vmem:[#allocation9 + $0x3a8] sm:$0xff]
    %v1286 = vld [vmem:[#allocation9 + $0x3b0] sm:$0xff]
    %v1287 = vld [vmem:[#allocation9 + $0x3b8] sm:$0xff]
    %v1288 = vld [vmem:[#allocation9 + $0x3c0] sm:$0xff]
    %v1289 = vld [vmem:[#allocation9 + $0x3c8] sm:$0xff]
    %v1290 = vld [vmem:[#allocation9 + $0x3d0] sm:$0xff]
    %v1291 = vld [vmem:[#allocation9 + $0x3d8] sm:$0xff]
    %v1292 = vld [vmem:[#allocation9 + $0x3e0] sm:$0xff]
    %v1293 = vld [vmem:[#allocation9 + $0x3e8] sm:$0xff]
    %v1294 = vld [vmem:[#allocation9 + $0x3f0] sm:$0xff]
    %v1295 = vld [vmem:[#allocation9 + $0x3f8] sm:$0xff]
    %v1296 = vld [vmem:[#allocation9 + $0x400] sm:$0xff]
    %v1297 = vld [vmem:[#allocation9 + $0x408] sm:$0xff]
    %v1298 = vld [vmem:[#allocation9 + $0x410] sm:$0xff]
    %v1299 = vld [vmem:[#allocation9 + $0x418] sm:$0xff]
    %v1300 = vld [vmem:[#allocation9 + $0x420] sm:$0xff]
    %v1301 = vld [vmem:[#allocation9 + $0x428] sm:$0xff]
    %v1302 = vld [vmem:[#allocation9 + $0x430] sm:$0xff]
    %v1303 = vld [vmem:[#allocation9 + $0x438] sm:$0xff]
    %v1304 = vld [vmem:[#allocation9 + $0x440] sm:$0xff]
    %v1305 = vld [vmem:[#allocation9 + $0x448] sm:$0xff]
    %v1306 = vld [vmem:[#allocation9 + $0x450] sm:$0xff]
    %v1307 = vld [vmem:[#allocation9 + $0x458] sm:$0xff]
    %v1308 = vld [vmem:[#allocation9 + $0x460] sm:$0xff]
    %v1309 = vld [vmem:[#allocation9 + $0x468] sm:$0xff]
    %v1310 = vld [vmem:[#allocation9 + $0x470] sm:$0xff]
    %v1311 = vld [vmem:[#allocation9 + $0x478] sm:$0xff]
    %v1312 = vld [vmem:[#allocation9 + $0x480] sm:$0xff]
    %v1313 = vld [vmem:[#allocation9 + $0x488] sm:$0xff]
    %v1314 = vld [vmem:[#allocation9 + $0x490] sm:$0xff]
    %v1315 = vld [vmem:[#allocation9 + $0x498] sm:$0xff]
    %v1316 = vld [vmem:[#allocation9 + $0x4a0] sm:$0xff]
    %v1317 = vld [vmem:[#allocation9 + $0x4a8] sm:$0xff]
    %v1318 = vld [vmem:[#allocation9 + $0x4b0] sm:$0xff]
    %v1319 = vld [vmem:[#allocation9 + $0x4b8] sm:$0xff]
    %v1320 = vld [vmem:[#allocation9 + $0x4c0] sm:$0xff]
    %v1321 = vld [vmem:[#allocation9 + $0x4c8] sm:$0xff]
    %v1322 = vld [vmem:[#allocation9 + $0x4d0] sm:$0xff]
    %v1323 = vld [vmem:[#allocation9 + $0x4d8] sm:$0xff]
    %v1480 = vunpack.c.l.b16 %v1168
    %v1481 = vunpack.c.h.b16 %v1168
    %v1482 = vunpack.c.l.b16 %v1169
    %v1483 = vunpack.c.h.b16 %v1169
    %v1484 = vunpack.c.l.b16 %v1170
    %v1485 = vunpack.c.h.b16 %v1170
    %v1486 = vunpack.c.l.b16 %v1171
    %v1487 = vunpack.c.h.b16 %v1171
    %v1488 = vunpack.c.l.b16 %v1172
    %v1489 = vunpack.c.h.b16 %v1172
    %v1490 = vunpack.c.l.b16 %v1173
    %v1491 = vunpack.c.h.b16 %v1173
    %v1492 = vunpack.c.l.b16 %v1174
    %v1493 = vunpack.c.h.b16 %v1174
    %v1494 = vunpack.c.l.b16 %v1175
    %v1495 = vunpack.c.h.b16 %v1175
    %v1496 = vunpack.c.l.b16 %v1176
    %v1497 = vunpack.c.h.b16 %v1176
    %v1498 = vunpack.c.l.b16 %v1177
    %v1499 = vunpack.c.h.b16 %v1177
    %v1500 = vunpack.c.l.b16 %v1178
    %v1501 = vunpack.c.h.b16 %v1178
    %v1502 = vunpack.c.l.b16 %v1179
    %v1503 = vunpack.c.h.b16 %v1179
    %v1504 = vunpack.c.l.b16 %v1180
    %v1505 = vunpack.c.h.b16 %v1180
    %v1506 = vunpack.c.l.b16 %v1181
    %v1507 = vunpack.c.h.b16 %v1181
    %v1508 = vunpack.c.l.b16 %v1182
    %v1509 = vunpack.c.h.b16 %v1182
    %v1510 = vunpack.c.l.b16 %v1183
    %v1511 = vunpack.c.h.b16 %v1183
    %v1512 = vunpack.c.l.b16 %v1184
    %v1513 = vunpack.c.h.b16 %v1184
    %v1514 = vunpack.c.l.b16 %v1185
    %v1515 = vunpack.c.h.b16 %v1185
    %v1516 = vunpack.c.l.b16 %v1186
    %v1517 = vunpack.c.h.b16 %v1186
    %v1518 = vunpack.c.l.b16 %v1187
    %v1519 = vunpack.c.h.b16 %v1187
    %v1520 = vunpack.c.l.b16 %v1188
    %v1521 = vunpack.c.h.b16 %v1188
    %v1522 = vunpack.c.l.b16 %v1189
    %v1523 = vunpack.c.h.b16 %v1189
    %v1524 = vunpack.c.l.b16 %v1190
    %v1525 = vunpack.c.h.b16 %v1190
    %v1526 = vunpack.c.l.b16 %v1191
    %v1527 = vunpack.c.h.b16 %v1191
    %v1528 = vunpack.c.l.b16 %v1192
    %v1529 = vunpack.c.h.b16 %v1192
    %v1530 = vunpack.c.l.b16 %v1193
    %v1531 = vunpack.c.h.b16 %v1193
    %v1532 = vunpack.c.l.b16 %v1194
    %v1533 = vunpack.c.h.b16 %v1194
    %v1534 = vunpack.c.l.b16 %v1195
    %v1535 = vunpack.c.h.b16 %v1195
    %v1536 = vunpack.c.l.b16 %v1196
    %v1537 = vunpack.c.h.b16 %v1196
    %v1538 = vunpack.c.l.b16 %v1197
    %v1539 = vunpack.c.h.b16 %v1197
    %v1540 = vunpack.c.l.b16 %v1198
    %v1541 = vunpack.c.h.b16 %v1198
    %v1542 = vunpack.c.l.b16 %v1199
    %v1543 = vunpack.c.h.b16 %v1199
    %v1544 = vunpack.c.l.b16 %v1200
    %v1545 = vunpack.c.h.b16 %v1200
    %v1546 = vunpack.c.l.b16 %v1201
    %v1547 = vunpack.c.h.b16 %v1201
    %v1548 = vunpack.c.l.b16 %v1202
    %v1549 = vunpack.c.h.b16 %v1202
    %v1550 = vunpack.c.l.b16 %v1203
    %v1551 = vunpack.c.h.b16 %v1203
    %v1552 = vunpack.c.l.b16 %v1204
    %v1553 = vunpack.c.h.b16 %v1204
    %v1554 = vunpack.c.l.b16 %v1205
    %v1555 = vunpack.c.h.b16 %v1205
    %v1556 = vunpack.c.l.b16 %v1206
    %v1557 = vunpack.c.h.b16 %v1206
    %v1558 = vunpack.c.l.b16 %v1207
    %v1559 = vunpack.c.h.b16 %v1207
    %v1560 = vunpack.c.l.b16 %v1208
    %v1561 = vunpack.c.h.b16 %v1208
    %v1562 = vunpack.c.l.b16 %v1209
    %v1563 = vunpack.c.h.b16 %v1209
    %v1564 = vunpack.c.l.b16 %v1210
    %v1565 = vunpack.c.h.b16 %v1210
    %v1566 = vunpack.c.l.b16 %v1211
    %v1567 = vunpack.c.h.b16 %v1211
    %v1568 = vunpack.c.l.b16 %v1212
    %v1569 = vunpack.c.h.b16 %v1212
    %v1570 = vunpack.c.l.b16 %v1213
    %v1571 = vunpack.c.h.b16 %v1213
    %v1572 = vunpack.c.l.b16 %v1214
    %v1573 = vunpack.c.h.b16 %v1214
    %v1574 = vunpack.c.l.b16 %v1215
    %v1575 = vunpack.c.h.b16 %v1215
    %v1576 = vunpack.c.l.b16 %v1216
    %v1577 = vunpack.c.h.b16 %v1216
    %v1578 = vunpack.c.l.b16 %v1217
    %v1579 = vunpack.c.h.b16 %v1217
    %v1580 = vunpack.c.l.b16 %v1218
    %v1581 = vunpack.c.h.b16 %v1218
    %v1582 = vunpack.c.l.b16 %v1219
    %v1583 = vunpack.c.h.b16 %v1219
    %v1584 = vunpack.c.l.b16 %v1220
    %v1585 = vunpack.c.h.b16 %v1220
    %v1586 = vunpack.c.l.b16 %v1221
    %v1587 = vunpack.c.h.b16 %v1221
    %v1588 = vunpack.c.l.b16 %v1222
    %v1589 = vunpack.c.h.b16 %v1222
    %v1590 = vunpack.c.l.b16 %v1223
    %v1591 = vunpack.c.h.b16 %v1223
    %v1592 = vunpack.c.l.b16 %v1224
    %v1593 = vunpack.c.h.b16 %v1224
    %v1594 = vunpack.c.l.b16 %v1225
    %v1595 = vunpack.c.h.b16 %v1225
    %v1596 = vunpack.c.l.b16 %v1226
    %v1597 = vunpack.c.h.b16 %v1226
    %v1598 = vunpack.c.l.b16 %v1227
    %v1599 = vunpack.c.h.b16 %v1227
    %v1600 = vunpack.c.l.b16 %v1228
    %v1601 = vunpack.c.h.b16 %v1228
    %v1602 = vunpack.c.l.b16 %v1229
    %v1603 = vunpack.c.h.b16 %v1229
    %v1604 = vunpack.c.l.b16 %v1230
    %v1605 = vunpack.c.h.b16 %v1230
    %v1606 = vunpack.c.l.b16 %v1231
    %v1607 = vunpack.c.h.b16 %v1231
    %v1608 = vunpack.c.l.b16 %v1232
    %v1609 = vunpack.c.h.b16 %v1232
    %v1610 = vunpack.c.l.b16 %v1233
    %v1611 = vunpack.c.h.b16 %v1233
    %v1612 = vunpack.c.l.b16 %v1234
    %v1613 = vunpack.c.h.b16 %v1234
    %v1614 = vunpack.c.l.b16 %v1235
    %v1615 = vunpack.c.h.b16 %v1235
    %v1616 = vunpack.c.l.b16 %v1236
    %v1617 = vunpack.c.h.b16 %v1236
    %v1618 = vunpack.c.l.b16 %v1237
    %v1619 = vunpack.c.h.b16 %v1237
    %v1620 = vunpack.c.l.b16 %v1238
    %v1621 = vunpack.c.h.b16 %v1238
    %v1622 = vunpack.c.l.b16 %v1239
    %v1623 = vunpack.c.h.b16 %v1239
    %v1624 = vunpack.c.l.b16 %v1240
    %v1625 = vunpack.c.h.b16 %v1240
    %v1626 = vunpack.c.l.b16 %v1241
    %v1627 = vunpack.c.h.b16 %v1241
    %v1628 = vunpack.c.l.b16 %v1242
    %v1629 = vunpack.c.h.b16 %v1242
    %v1630 = vunpack.c.l.b16 %v1243
    %v1631 = vunpack.c.h.b16 %v1243
    %v1632 = vunpack.c.l.b16 %v1244
    %v1633 = vunpack.c.h.b16 %v1244
    %v1634 = vunpack.c.l.b16 %v1245
    %v1635 = vunpack.c.h.b16 %v1245
    %v1636 = vunpack.c.l.b16 %v1246
    %v1637 = vunpack.c.h.b16 %v1246
    %v1638 = vunpack.c.l.b16 %v1247
    %v1639 = vunpack.c.h.b16 %v1247
    %v1640 = vunpack.c.l.b16 %v1248
    %v1641 = vunpack.c.h.b16 %v1248
    %v1642 = vunpack.c.l.b16 %v1249
    %v1643 = vunpack.c.h.b16 %v1249
    %v1644 = vunpack.c.l.b16 %v1250
    %v1645 = vunpack.c.h.b16 %v1250
    %v1646 = vunpack.c.l.b16 %v1251
    %v1647 = vunpack.c.h.b16 %v1251
    %v1648 = vunpack.c.l.b16 %v1252
    %v1649 = vunpack.c.h.b16 %v1252
    %v1650 = vunpack.c.l.b16 %v1253
    %v1651 = vunpack.c.h.b16 %v1253
    %v1652 = vunpack.c.l.b16 %v1254
    %v1653 = vunpack.c.h.b16 %v1254
    %v1654 = vunpack.c.l.b16 %v1255
    %v1655 = vunpack.c.h.b16 %v1255
    %v1656 = vunpack.c.l.b16 %v1256
    %v1657 = vunpack.c.h.b16 %v1256
    %v1658 = vunpack.c.l.b16 %v1257
    %v1659 = vunpack.c.h.b16 %v1257
    %v1660 = vunpack.c.l.b16 %v1258
    %v1661 = vunpack.c.h.b16 %v1258
    %v1662 = vunpack.c.l.b16 %v1259
    %v1663 = vunpack.c.h.b16 %v1259
    %v1664 = vunpack.c.l.b16 %v1260
    %v1665 = vunpack.c.h.b16 %v1260
    %v1666 = vunpack.c.l.b16 %v1261
    %v1667 = vunpack.c.h.b16 %v1261
    %v1668 = vunpack.c.l.b16 %v1262
    %v1669 = vunpack.c.h.b16 %v1262
    %v1670 = vunpack.c.l.b16 %v1263
    %v1671 = vunpack.c.h.b16 %v1263
    %v1672 = vunpack.c.l.b16 %v1264
    %v1673 = vunpack.c.h.b16 %v1264
    %v1674 = vunpack.c.l.b16 %v1265
    %v1675 = vunpack.c.h.b16 %v1265
    %v1676 = vunpack.c.l.b16 %v1266
    %v1677 = vunpack.c.h.b16 %v1266
    %v1678 = vunpack.c.l.b16 %v1267
    %v1679 = vunpack.c.h.b16 %v1267
    %v1680 = vunpack.c.l.b16 %v1268
    %v1681 = vunpack.c.h.b16 %v1268
    %v1682 = vunpack.c.l.b16 %v1269
    %v1683 = vunpack.c.h.b16 %v1269
    %v1684 = vunpack.c.l.b16 %v1270
    %v1685 = vunpack.c.h.b16 %v1270
    %v1686 = vunpack.c.l.b16 %v1271
    %v1687 = vunpack.c.h.b16 %v1271
    %v1688 = vunpack.c.l.b16 %v1272
    %v1689 = vunpack.c.h.b16 %v1272
    %v1690 = vunpack.c.l.b16 %v1273
    %v1691 = vunpack.c.h.b16 %v1273
    %v1692 = vunpack.c.l.b16 %v1274
    %v1693 = vunpack.c.h.b16 %v1274
    %v1694 = vunpack.c.l.b16 %v1275
    %v1695 = vunpack.c.h.b16 %v1275
    %v1696 = vunpack.c.l.b16 %v1276
    %v1697 = vunpack.c.h.b16 %v1276
    %v1698 = vunpack.c.l.b16 %v1277
    %v1699 = vunpack.c.h.b16 %v1277
    %v1700 = vunpack.c.l.b16 %v1278
    %v1701 = vunpack.c.h.b16 %v1278
    %v1702 = vunpack.c.l.b16 %v1279
    %v1703 = vunpack.c.h.b16 %v1279
    %v1704 = vunpack.c.l.b16 %v1280
    %v1705 = vunpack.c.h.b16 %v1280
    %v1706 = vunpack.c.l.b16 %v1281
    %v1707 = vunpack.c.h.b16 %v1281
    %v1708 = vunpack.c.l.b16 %v1282
    %v1709 = vunpack.c.h.b16 %v1282
    %v1710 = vunpack.c.l.b16 %v1283
    %v1711 = vunpack.c.h.b16 %v1283
    %v1712 = vunpack.c.l.b16 %v1284
    %v1713 = vunpack.c.h.b16 %v1284
    %v1714 = vunpack.c.l.b16 %v1285
    %v1715 = vunpack.c.h.b16 %v1285
    %v1716 = vunpack.c.l.b16 %v1286
    %v1717 = vunpack.c.h.b16 %v1286
    %v1718 = vunpack.c.l.b16 %v1287
    %v1719 = vunpack.c.h.b16 %v1287
    %v1720 = vunpack.c.l.b16 %v1288
    %v1721 = vunpack.c.h.b16 %v1288
    %v1722 = vunpack.c.l.b16 %v1289
    %v1723 = vunpack.c.h.b16 %v1289
    %v1724 = vunpack.c.l.b16 %v1290
    %v1725 = vunpack.c.h.b16 %v1290
    %v1726 = vunpack.c.l.b16 %v1291
    %v1727 = vunpack.c.h.b16 %v1291
    %v1728 = vunpack.c.l.b16 %v1292
    %v1729 = vunpack.c.h.b16 %v1292
    %v1730 = vunpack.c.l.b16 %v1293
    %v1731 = vunpack.c.h.b16 %v1293
    %v1732 = vunpack.c.l.b16 %v1294
    %v1733 = vunpack.c.h.b16 %v1294
    %v1734 = vunpack.c.l.b16 %v1295
    %v1735 = vunpack.c.h.b16 %v1295
    %v1736 = vunpack.c.l.b16 %v1296
    %v1737 = vunpack.c.h.b16 %v1296
    %v1738 = vunpack.c.l.b16 %v1297
    %v1739 = vunpack.c.h.b16 %v1297
    %v1740 = vunpack.c.l.b16 %v1298
    %v1741 = vunpack.c.h.b16 %v1298
    %v1742 = vunpack.c.l.b16 %v1299
    %v1743 = vunpack.c.h.b16 %v1299
    %v1744 = vunpack.c.l.b16 %v1300
    %v1745 = vunpack.c.h.b16 %v1300
    %v1746 = vunpack.c.l.b16 %v1301
    %v1747 = vunpack.c.h.b16 %v1301
    %v1748 = vunpack.c.l.b16 %v1302
    %v1749 = vunpack.c.h.b16 %v1302
    %v1750 = vunpack.c.l.b16 %v1303
    %v1751 = vunpack.c.h.b16 %v1303
    %v1752 = vunpack.c.l.b16 %v1304
    %v1753 = vunpack.c.h.b16 %v1304
    %v1754 = vunpack.c.l.b16 %v1305
    %v1755 = vunpack.c.h.b16 %v1305
    %v1756 = vunpack.c.l.b16 %v1306
    %v1757 = vunpack.c.h.b16 %v1306
    %v1758 = vunpack.c.l.b16 %v1307
    %v1759 = vunpack.c.h.b16 %v1307
    %v1760 = vunpack.c.l.b16 %v1308
    %v1761 = vunpack.c.h.b16 %v1308
    %v1762 = vunpack.c.l.b16 %v1309
    %v1763 = vunpack.c.h.b16 %v1309
    %v1764 = vunpack.c.l.b16 %v1310
    %v1765 = vunpack.c.h.b16 %v1310
    %v1766 = vunpack.c.l.b16 %v1311
    %v1767 = vunpack.c.h.b16 %v1311
    %v1768 = vunpack.c.l.b16 %v1312
    %v1769 = vunpack.c.h.b16 %v1312
    %v1770 = vunpack.c.l.b16 %v1313
    %v1771 = vunpack.c.h.b16 %v1313
    %v1772 = vunpack.c.l.b16 %v1314
    %v1773 = vunpack.c.h.b16 %v1314
    %v1774 = vunpack.c.l.b16 %v1315
    %v1775 = vunpack.c.h.b16 %v1315
    %v1776 = vunpack.c.l.b16 %v1316
    %v1777 = vunpack.c.h.b16 %v1316
    %v1778 = vunpack.c.l.b16 %v1317
    %v1779 = vunpack.c.h.b16 %v1317
    %v1780 = vunpack.c.l.b16 %v1318
    %v1781 = vunpack.c.h.b16 %v1318
    %v1782 = vunpack.c.l.b16 %v1319
    %v1783 = vunpack.c.h.b16 %v1319
    %v1784 = vunpack.c.l.b16 %v1320
    %v1785 = vunpack.c.h.b16 %v1320
    %v1786 = vunpack.c.l.b16 %v1321
    %v1787 = vunpack.c.h.b16 %v1321
    %v1788 = vunpack.c.l.b16 %v1322
    %v1789 = vunpack.c.h.b16 %v1322
    %v1790 = vunpack.c.l.b16 %v1323
    %v1791 = vunpack.c.h.b16 %v1323
    %v1792 = vpack.c.b16 %v1488, %v1480
    %v1793 = vpack.c.b16 %v1489, %v1481
    %v1794 = vpack.c.b16 %v1490, %v1482
    %v1795 = vpack.c.b16 %v1491, %v1483
    %v1796 = vpack.c.b16 %v1492, %v1484
    %v1797 = vpack.c.b16 %v1493, %v1485
    %v1798 = vpack.c.b16 %v1494, %v1486
    %v1799 = vpack.c.b16 %v1495, %v1487
    %v1800 = vpack.c.b16 %v1504, %v1496
    %v1801 = vpack.c.b16 %v1505, %v1497
    %v1802 = vpack.c.b16 %v1506, %v1498
    %v1803 = vpack.c.b16 %v1507, %v1499
    %v1804 = vpack.c.b16 %v1508, %v1500
    %v1805 = vpack.c.b16 %v1509, %v1501
    %v1806 = vpack.c.b16 %v1510, %v1502
    %v1807 = vpack.c.b16 %v1511, %v1503
    %v1808 = vpack.c.b16 %v1520, %v1512
    %v1809 = vpack.c.b16 %v1521, %v1513
    %v1810 = vpack.c.b16 %v1522, %v1514
    %v1811 = vpack.c.b16 %v1523, %v1515
    %v1812 = vpack.c.b16 %v1524, %v1516
    %v1813 = vpack.c.b16 %v1525, %v1517
    %v1814 = vpack.c.b16 %v1526, %v1518
    %v1815 = vpack.c.b16 %v1527, %v1519
    %v1816 = vpack.c.b16 %v1536, %v1528
    %v1817 = vpack.c.b16 %v1537, %v1529
    %v1818 = vpack.c.b16 %v1538, %v1530
    %v1819 = vpack.c.b16 %v1539, %v1531
    %v1820 = vpack.c.b16 %v1540, %v1532
    %v1821 = vpack.c.b16 %v1541, %v1533
    %v1822 = vpack.c.b16 %v1542, %v1534
    %v1823 = vpack.c.b16 %v1543, %v1535
    %v1824 = vpack.c.b16 %v1552, %v1544
    %v1825 = vpack.c.b16 %v1553, %v1545
    %v1826 = vpack.c.b16 %v1554, %v1546
    %v1827 = vpack.c.b16 %v1555, %v1547
    %v1828 = vpack.c.b16 %v1556, %v1548
    %v1829 = vpack.c.b16 %v1557, %v1549
    %v1830 = vpack.c.b16 %v1558, %v1550
    %v1831 = vpack.c.b16 %v1559, %v1551
    %v1832 = vpack.c.b16 %v1568, %v1560
    %v1833 = vpack.c.b16 %v1569, %v1561
    %v1834 = vpack.c.b16 %v1570, %v1562
    %v1835 = vpack.c.b16 %v1571, %v1563
    %v1836 = vpack.c.b16 %v1572, %v1564
    %v1837 = vpack.c.b16 %v1573, %v1565
    %v1838 = vpack.c.b16 %v1574, %v1566
    %v1839 = vpack.c.b16 %v1575, %v1567
    %v1840 = vpack.c.b16 %v1584, %v1576
    %v1841 = vpack.c.b16 %v1585, %v1577
    %v1842 = vpack.c.b16 %v1586, %v1578
    %v1843 = vpack.c.b16 %v1587, %v1579
    %v1844 = vpack.c.b16 %v1588, %v1580
    %v1845 = vpack.c.b16 %v1589, %v1581
    %v1846 = vpack.c.b16 %v1590, %v1582
    %v1847 = vpack.c.b16 %v1591, %v1583
    %v1848 = vpack.c.b16 %v1600, %v1592
    %v1849 = vpack.c.b16 %v1601, %v1593
    %v1850 = vpack.c.b16 %v1602, %v1594
    %v1851 = vpack.c.b16 %v1603, %v1595
    %v1852 = vpack.c.b16 %v1604, %v1596
    %v1853 = vpack.c.b16 %v1605, %v1597
    %v1854 = vpack.c.b16 %v1606, %v1598
    %v1855 = vpack.c.b16 %v1607, %v1599
    %v1856 = vpack.c.b16 %v1616, %v1608
    %v1857 = vpack.c.b16 %v1617, %v1609
    %v1858 = vpack.c.b16 %v1618, %v1610
    %v1859 = vpack.c.b16 %v1619, %v1611
    %v1860 = vpack.c.b16 %v1620, %v1612
    %v1861 = vpack.c.b16 %v1621, %v1613
    %v1862 = vpack.c.b16 %v1622, %v1614
    %v1863 = vpack.c.b16 %v1623, %v1615
    %v1864 = vpack.c.b16 %v1632, %v1624
    %v1865 = vpack.c.b16 %v1633, %v1625
    %v1866 = vpack.c.b16 %v1634, %v1626
    %v1867 = vpack.c.b16 %v1635, %v1627
    %v1868 = vpack.c.b16 %v1636, %v1628
    %v1869 = vpack.c.b16 %v1637, %v1629
    %v1870 = vpack.c.b16 %v1638, %v1630
    %v1871 = vpack.c.b16 %v1639, %v1631
    %v1872 = vpack.c.b16 %v1648, %v1640
    %v1873 = vpack.c.b16 %v1649, %v1641
    %v1874 = vpack.c.b16 %v1650, %v1642
    %v1875 = vpack.c.b16 %v1651, %v1643
    %v1876 = vpack.c.b16 %v1652, %v1644
    %v1877 = vpack.c.b16 %v1653, %v1645
    %v1878 = vpack.c.b16 %v1654, %v1646
    %v1879 = vpack.c.b16 %v1655, %v1647
    %v1880 = vpack.c.b16 %v1664, %v1656
    %v1881 = vpack.c.b16 %v1665, %v1657
    %v1882 = vpack.c.b16 %v1666, %v1658
    %v1883 = vpack.c.b16 %v1667, %v1659
    %v1884 = vpack.c.b16 %v1668, %v1660
    %v1885 = vpack.c.b16 %v1669, %v1661
    %v1886 = vpack.c.b16 %v1670, %v1662
    %v1887 = vpack.c.b16 %v1671, %v1663
    %v1888 = vpack.c.b16 %v1680, %v1672
    %v1889 = vpack.c.b16 %v1681, %v1673
    %v1890 = vpack.c.b16 %v1682, %v1674
    %v1891 = vpack.c.b16 %v1683, %v1675
    %v1892 = vpack.c.b16 %v1684, %v1676
    %v1893 = vpack.c.b16 %v1685, %v1677
    %v1894 = vpack.c.b16 %v1686, %v1678
    %v1895 = vpack.c.b16 %v1687, %v1679
    %v1896 = vpack.c.b16 %v1696, %v1688
    %v1897 = vpack.c.b16 %v1697, %v1689
    %v1898 = vpack.c.b16 %v1698, %v1690
    %v1899 = vpack.c.b16 %v1699, %v1691
    %v1900 = vpack.c.b16 %v1700, %v1692
    %v1901 = vpack.c.b16 %v1701, %v1693
    %v1902 = vpack.c.b16 %v1702, %v1694
    %v1903 = vpack.c.b16 %v1703, %v1695
    %v1904 = vpack.c.b16 %v1712, %v1704
    %v1905 = vpack.c.b16 %v1713, %v1705
    %v1906 = vpack.c.b16 %v1714, %v1706
    %v1907 = vpack.c.b16 %v1715, %v1707
    %v1908 = vpack.c.b16 %v1716, %v1708
    %v1909 = vpack.c.b16 %v1717, %v1709
    %v1910 = vpack.c.b16 %v1718, %v1710
    %v1911 = vpack.c.b16 %v1719, %v1711
    %v1912 = vpack.c.b16 %v1728, %v1720
    %v1913 = vpack.c.b16 %v1729, %v1721
    %v1914 = vpack.c.b16 %v1730, %v1722
    %v1915 = vpack.c.b16 %v1731, %v1723
    %v1916 = vpack.c.b16 %v1732, %v1724
    %v1917 = vpack.c.b16 %v1733, %v1725
    %v1918 = vpack.c.b16 %v1734, %v1726
    %v1919 = vpack.c.b16 %v1735, %v1727
    %v1920 = vpack.c.b16 %v1744, %v1736
    %v1921 = vpack.c.b16 %v1745, %v1737
    %v1922 = vpack.c.b16 %v1746, %v1738
    %v1923 = vpack.c.b16 %v1747, %v1739
    %v1924 = vpack.c.b16 %v1748, %v1740
    %v1925 = vpack.c.b16 %v1749, %v1741
    %v1926 = vpack.c.b16 %v1750, %v1742
    %v1927 = vpack.c.b16 %v1751, %v1743
    %v1928 = vpack.c.b16 %v1760, %v1752
    %v1929 = vpack.c.b16 %v1761, %v1753
    %v1930 = vpack.c.b16 %v1762, %v1754
    %v1931 = vpack.c.b16 %v1763, %v1755
    %v1932 = vpack.c.b16 %v1764, %v1756
    %v1933 = vpack.c.b16 %v1765, %v1757
    %v1934 = vpack.c.b16 %v1766, %v1758
    %v1935 = vpack.c.b16 %v1767, %v1759
    %v1936 = vpack.c.b16 %v1776, %v1768
    %v1937 = vpack.c.b16 %v1777, %v1769
    %v1938 = vpack.c.b16 %v1778, %v1770
    %v1939 = vpack.c.b16 %v1779, %v1771
    %v1940 = vpack.c.b16 %v1780, %v1772
    %v1941 = vpack.c.b16 %v1781, %v1773
    %v1942 = vpack.c.b16 %v1782, %v1774
    %v1943 = vpack.c.b16 %v1783, %v1775
    %v1944 = vpack.c.b16 %v1784, %v1784
    %v1945 = vpack.c.b16 %v1785, %v1785
    %v1946 = vpack.c.b16 %v1786, %v1786
    %v1947 = vpack.c.b16 %v1787, %v1787
    %v1948 = vpack.c.b16 %v1788, %v1788
    %v1949 = vpack.c.b16 %v1789, %v1789
    %v1950 = vpack.c.b16 %v1790, %v1790
    %v1951 = vpack.c.b16 %v1791, %v1791
    %vm2104 = vcmask 457728
    %v2106 = vsel %vm2104, %v143, 0
    %vm2108 = vcmask 1043456
    %v2110 = vsel %vm2108, %v1944, 0
    %v2113 = vsel %vm2108, %v1945, 0
    %v2116 = vsel %vm2108, %v1946, 0
    %v2119 = vsel %vm2108, %v1947, 0
    %v2122 = vsel %vm2108, %v1948, 0
    %v2125 = vsel %vm2108, %v1949, 0
    %v2128 = vsel %vm2108, %v1950, 0
    %v2131 = vsel %vm2108, %v1951, 0
    %2133 = vmatprep.subr.bf16.mxu0 %v1849
    %2134 = vmatpush1.bf16.msra.mxu0 %v1848
    %2135 = vmatprep.subr.bf16.mxu0 %v1841
    %2136 = vmatpush1.bf16.msra.mxu0 %v1840
    %2137 = vmatprep.subr.bf16.mxu0 %v1833
    %2138 = vmatpush1.bf16.msra.mxu0 %v1832
    %2139 = vmatprep.subr.bf16.mxu0 %v1825
    %2140 = vmatpush1.bf16.msra.mxu0 %v1824
    %2141 = vmatprep.subr.bf16.mxu0 %v1817
    %2142 = vmatpush1.bf16.msra.mxu0 %v1816
    %2143 = vmatprep.subr.bf16.mxu0 %v1809
    %2144 = vmatpush1.bf16.msra.mxu0 %v1808
    %2145 = vmatprep.subr.bf16.mxu0 %v1801
    %2146 = vmatpush1.bf16.msra.mxu0 %v1800
    %2147 = vmatprep.subr.bf16.mxu0 %v1793
    %2148 = vmatpush1.bf16.msra.mxu0 %v1792
    %2149 = vmatprep.subr.bf16.mxu0 %v1913
    %2150 = vmatpush2.bf16.msra.mxu0 %v1912
    %2151 = vmatprep.subr.bf16.mxu0 %v1905
    %2152 = vmatpush2.bf16.msra.mxu0 %v1904
    %2153 = vmatprep.subr.bf16.mxu0 %v1897
    %2154 = vmatpush2.bf16.msra.mxu0 %v1896
    %2155 = vmatprep.subr.bf16.mxu0 %v1889
    %2156 = vmatpush2.bf16.msra.mxu0 %v1888
    %2157 = vmatprep.subr.bf16.mxu0 %v1881
    %2158 = vmatpush2.bf16.msra.mxu0 %v1880
    %2159 = vmatprep.subr.bf16.mxu0 %v1873
    %2160 = vmatpush2.bf16.msra.mxu0 %v1872
    %2161 = vmatprep.subr.bf16.mxu0 %v1865
    %2162 = vmatpush2.bf16.msra.mxu0 %v1864
    %2163 = vmatprep.subr.bf16.mxu0 %v1857
    %2164 = vmatpush2.bf16.msra.mxu0 %v1856
    %2165 = vmatprep.mubr.bf16.mxu0 %v142
    %2166 = vmatmul.mubr.bf16.gmra.mxu0 %v141
    %v2167 = vpop.f32.mrf.mxu0
    %v2168 = vadd.f32 0.0, %v2167
    %v2169 = vpop.f32.mrf.mxu0
    %v2170 = vadd.f32 0.0, %v2169
    %v2171 = vpop.f32.mrf.mxu0
    %v2172 = vpop.f32.mrf.mxu0
    %2173 = vdwg.mxu0
    %2174 = vmatprep.subr.bf16.mxu0 0
    %2175 = vmatpush1.bf16.msra.mxu0 0
    %2176 = vmatprep.subr.bf16.mxu0 0
    %2177 = vmatpush1.bf16.msra.mxu0 0
    %2178 = vmatprep.subr.bf16.mxu0 0
    %2179 = vmatpush1.bf16.msra.mxu0 0
    %2180 = vmatprep.subr.bf16.mxu0 0
    %2181 = vmatpush1.bf16.msra.mxu0 0
    %2182 = vmatprep.subr.bf16.mxu0 %v2113
    %2183 = vmatpush1.bf16.msra.mxu0 %v2110
    %2184 = vmatprep.subr.bf16.mxu0 %v1937
    %2185 = vmatpush1.bf16.msra.mxu0 %v1936
    %2186 = vmatprep.subr.bf16.mxu0 %v1929
    %2187 = vmatpush1.bf16.msra.mxu0 %v1928
    %2188 = vmatprep.subr.bf16.mxu0 %v1921
    %2189 = vmatpush1.bf16.msra.mxu0 %v1920
    %2190 = vmatprep.subr.bf16.mxu0 0
    %2191 = vmatpush2.bf16.msra.mxu0 0
    %2192 = vmatprep.subr.bf16.mxu0 0
    %2193 = vmatpush2.bf16.msra.mxu0 0
    %2194 = vmatprep.subr.bf16.mxu0 0
    %2195 = vmatpush2.bf16.msra.mxu0 0
    %2196 = vmatprep.subr.bf16.mxu0 0
    %2197 = vmatpush2.bf16.msra.mxu0 0
    %2198 = vmatprep.subr.bf16.mxu0 0
    %2199 = vmatpush2.bf16.msra.mxu0 0
    %2200 = vmatprep.subr.bf16.mxu0 0
    %2201 = vmatpush2.bf16.msra.mxu0 0
    %2202 = vmatprep.subr.bf16.mxu0 0
    %2203 = vmatpush2.bf16.msra.mxu0 0
    %2204 = vmatprep.subr.bf16.mxu0 0
    %2205 = vmatpush2.bf16.msra.mxu0 0
    %2206 = vmatprep.mubr.bf16.mxu0 0
    %2207 = vmatmul.mubr.bf16.gmra.mxu0 %v2106
    %v2208 = vpop.f32.mrf.mxu0
    %v2209 = vadd.f32 %v2168, %v2208
    %v2210 = vpop.f32.mrf.mxu0
    %v2211 = vadd.f32 %v2170, %v2210
    %v2212 = vpop.f32.mrf.mxu0
    %v2213 = vpop.f32.mrf.mxu0
    %2214 = vdwg.mxu0
    %2215 = vmatprep.subr.bf16.mxu0 %v1851
    %2216 = vmatpush1.bf16.msra.mxu0 %v1850
    %2217 = vmatprep.subr.bf16.mxu0 %v1843
    %2218 = vmatpush1.bf16.msra.mxu0 %v1842
    %2219 = vmatprep.subr.bf16.mxu0 %v1835
    %2220 = vmatpush1.bf16.msra.mxu0 %v1834
    %2221 = vmatprep.subr.bf16.mxu0 %v1827
    %2222 = vmatpush1.bf16.msra.mxu0 %v1826
    %2223 = vmatprep.subr.bf16.mxu0 %v1819
    %2224 = vmatpush1.bf16.msra.mxu0 %v1818
    %2225 = vmatprep.subr.bf16.mxu0 %v1811
    %2226 = vmatpush1.bf16.msra.mxu0 %v1810
    %2227 = vmatprep.subr.bf16.mxu0 %v1803
    %2228 = vmatpush1.bf16.msra.mxu0 %v1802
    %2229 = vmatprep.subr.bf16.mxu0 %v1795
    %2230 = vmatpush1.bf16.msra.mxu0 %v1794
    %2231 = vmatprep.subr.bf16.mxu0 %v1915
    %2232 = vmatpush2.bf16.msra.mxu0 %v1914
    %2233 = vmatprep.subr.bf16.mxu0 %v1907
    %2234 = vmatpush2.bf16.msra.mxu0 %v1906
    %2235 = vmatprep.subr.bf16.mxu0 %v1899
    %2236 = vmatpush2.bf16.msra.mxu0 %v1898
    %2237 = vmatprep.subr.bf16.mxu0 %v1891
    %2238 = vmatpush2.bf16.msra.mxu0 %v1890
    %2239 = vmatprep.subr.bf16.mxu0 %v1883
    %2240 = vmatpush2.bf16.msra.mxu0 %v1882
    %2241 = vmatprep.subr.bf16.mxu0 %v1875
    %2242 = vmatpush2.bf16.msra.mxu0 %v1874
    %2243 = vmatprep.subr.bf16.mxu0 %v1867
    %2244 = vmatpush2.bf16.msra.mxu0 %v1866
    %2245 = vmatprep.subr.bf16.mxu0 %v1859
    %2246 = vmatpush2.bf16.msra.mxu0 %v1858
    %2247 = vmatprep.mubr.bf16.mxu0 %v142
    %2248 = vmatmul.mubr.bf16.gmra.mxu0 %v141
    %v2249 = vpop.f32.mrf.mxu0
    %v2250 = vadd.f32 0.0, %v2249
    %v2251 = vpop.f32.mrf.mxu0
    %v2252 = vadd.f32 0.0, %v2251
    %v2253 = vpop.f32.mrf.mxu0
    %v2254 = vpop.f32.mrf.mxu0
    %2255 = vdwg.mxu0
    %2256 = vmatprep.subr.bf16.mxu0 0
    %2257 = vmatpush1.bf16.msra.mxu0 0
    %2258 = vmatprep.subr.bf16.mxu0 0
    %2259 = vmatpush1.bf16.msra.mxu0 0
    %2260 = vmatprep.subr.bf16.mxu0 0
    %2261 = vmatpush1.bf16.msra.mxu0 0
    %2262 = vmatprep.subr.bf16.mxu0 0
    %2263 = vmatpush1.bf16.msra.mxu0 0
    %2264 = vmatprep.subr.bf16.mxu0 %v2119
    %2265 = vmatpush1.bf16.msra.mxu0 %v2116
    %2266 = vmatprep.subr.bf16.mxu0 %v1939
    %2267 = vmatpush1.bf16.msra.mxu0 %v1938
    %2268 = vmatprep.subr.bf16.mxu0 %v1931
    %2269 = vmatpush1.bf16.msra.mxu0 %v1930
    %2270 = vmatprep.subr.bf16.mxu0 %v1923
    %2271 = vmatpush1.bf16.msra.mxu0 %v1922
    %2272 = vmatprep.subr.bf16.mxu0 0
    %2273 = vmatpush2.bf16.msra.mxu0 0
    %2274 = vmatprep.subr.bf16.mxu0 0
    %2275 = vmatpush2.bf16.msra.mxu0 0
    %2276 = vmatprep.subr.bf16.mxu0 0
    %2277 = vmatpush2.bf16.msra.mxu0 0
    %2278 = vmatprep.subr.bf16.mxu0 0
    %2279 = vmatpush2.bf16.msra.mxu0 0
    %2280 = vmatprep.subr.bf16.mxu0 0
    %2281 = vmatpush2.bf16.msra.mxu0 0
    %2282 = vmatprep.subr.bf16.mxu0 0
    %2283 = vmatpush2.bf16.msra.mxu0 0
    %2284 = vmatprep.subr.bf16.mxu0 0
    %2285 = vmatpush2.bf16.msra.mxu0 0
    %2286 = vmatprep.subr.bf16.mxu0 0
    %2287 = vmatpush2.bf16.msra.mxu0 0
    %2288 = vmatprep.mubr.bf16.mxu0 0
    %2289 = vmatmul.mubr.bf16.gmra.mxu0 %v2106
    %v2290 = vpop.f32.mrf.mxu0
    %v2291 = vadd.f32 %v2250, %v2290
    %v2292 = vpop.f32.mrf.mxu0
    %v2293 = vadd.f32 %v2252, %v2292
    %v2294 = vpop.f32.mrf.mxu0
    %v2295 = vpop.f32.mrf.mxu0
    %2296 = vdwg.mxu0
    %2297 = vmatprep.subr.bf16.mxu0 %v1853
    %2298 = vmatpush1.bf16.msra.mxu0 %v1852
    %2299 = vmatprep.subr.bf16.mxu0 %v1845
    %2300 = vmatpush1.bf16.msra.mxu0 %v1844
    %2301 = vmatprep.subr.bf16.mxu0 %v1837
    %2302 = vmatpush1.bf16.msra.mxu0 %v1836
    %2303 = vmatprep.subr.bf16.mxu0 %v1829
    %2304 = vmatpush1.bf16.msra.mxu0 %v1828
    %2305 = vmatprep.subr.bf16.mxu0 %v1821
    %2306 = vmatpush1.bf16.msra.mxu0 %v1820
    %2307 = vmatprep.subr.bf16.mxu0 %v1813
    %2308 = vmatpush1.bf16.msra.mxu0 %v1812
    %2309 = vmatprep.subr.bf16.mxu0 %v1805
    %2310 = vmatpush1.bf16.msra.mxu0 %v1804
    %2311 = vmatprep.subr.bf16.mxu0 %v1797
    %2312 = vmatpush1.bf16.msra.mxu0 %v1796
    %2313 = vmatprep.subr.bf16.mxu0 %v1917
    %2314 = vmatpush2.bf16.msra.mxu0 %v1916
    %2315 = vmatprep.subr.bf16.mxu0 %v1909
    %2316 = vmatpush2.bf16.msra.mxu0 %v1908
    %2317 = vmatprep.subr.bf16.mxu0 %v1901
    %2318 = vmatpush2.bf16.msra.mxu0 %v1900
    %2319 = vmatprep.subr.bf16.mxu0 %v1893
    %2320 = vmatpush2.bf16.msra.mxu0 %v1892
    %2321 = vmatprep.subr.bf16.mxu0 %v1885
    %2322 = vmatpush2.bf16.msra.mxu0 %v1884
    %2323 = vmatprep.subr.bf16.mxu0 %v1877
    %2324 = vmatpush2.bf16.msra.mxu0 %v1876
    %2325 = vmatprep.subr.bf16.mxu0 %v1869
    %2326 = vmatpush2.bf16.msra.mxu0 %v1868
    %2327 = vmatprep.subr.bf16.mxu0 %v1861
    %2328 = vmatpush2.bf16.msra.mxu0 %v1860
    %2329 = vmatprep.mubr.bf16.mxu0 %v142
    %2330 = vmatmul.mubr.bf16.gmra.mxu0 %v141
    %v2331 = vpop.f32.mrf.mxu0
    %v2332 = vadd.f32 0.0, %v2331
    %v2333 = vpop.f32.mrf.mxu0
    %v2334 = vadd.f32 0.0, %v2333
    %v2335 = vpop.f32.mrf.mxu0
    %v2336 = vpop.f32.mrf.mxu0
    %2337 = vdwg.mxu0
    %2338 = vmatprep.subr.bf16.mxu0 0
    %2339 = vmatpush1.bf16.msra.mxu0 0
    %2340 = vmatprep.subr.bf16.mxu0 0
    %2341 = vmatpush1.bf16.msra.mxu0 0
    %2342 = vmatprep.subr.bf16.mxu0 0
    %2343 = vmatpush1.bf16.msra.mxu0 0
    %2344 = vmatprep.subr.bf16.mxu0 0
    %2345 = vmatpush1.bf16.msra.mxu0 0
    %2346 = vmatprep.subr.bf16.mxu0 %v2125
    %2347 = vmatpush1.bf16.msra.mxu0 %v2122
    %2348 = vmatprep.subr.bf16.mxu0 %v1941
    %2349 = vmatpush1.bf16.msra.mxu0 %v1940
    %2350 = vmatprep.subr.bf16.mxu0 %v1933
    %2351 = vmatpush1.bf16.msra.mxu0 %v1932
    %2352 = vmatprep.subr.bf16.mxu0 %v1925
    %2353 = vmatpush1.bf16.msra.mxu0 %v1924
    %2354 = vmatprep.subr.bf16.mxu0 0
    %2355 = vmatpush2.bf16.msra.mxu0 0
    %2356 = vmatprep.subr.bf16.mxu0 0
    %2357 = vmatpush2.bf16.msra.mxu0 0
    %2358 = vmatprep.subr.bf16.mxu0 0
    %2359 = vmatpush2.bf16.msra.mxu0 0
    %2360 = vmatprep.subr.bf16.mxu0 0
    %2361 = vmatpush2.bf16.msra.mxu0 0
    %2362 = vmatprep.subr.bf16.mxu0 0
    %2363 = vmatpush2.bf16.msra.mxu0 0
    %2364 = vmatprep.subr.bf16.mxu0 0
    %2365 = vmatpush2.bf16.msra.mxu0 0
    %2366 = vmatprep.subr.bf16.mxu0 0
    %2367 = vmatpush2.bf16.msra.mxu0 0
    %2368 = vmatprep.subr.bf16.mxu0 0
    %2369 = vmatpush2.bf16.msra.mxu0 0
    %2370 = vmatprep.mubr.bf16.mxu0 0
    %2371 = vmatmul.mubr.bf16.gmra.mxu0 %v2106
    %v2372 = vpop.f32.mrf.mxu0
    %v2373 = vadd.f32 %v2332, %v2372
    %v2374 = vpop.f32.mrf.mxu0
    %v2375 = vadd.f32 %v2334, %v2374
    %v2376 = vpop.f32.mrf.mxu0
    %v2377 = vpop.f32.mrf.mxu0
    %2378 = vdwg.mxu0
    %2379 = vmatprep.subr.bf16.mxu0 %v1855
    %2380 = vmatpush1.bf16.msra.mxu0 %v1854
    %2381 = vmatprep.subr.bf16.mxu0 %v1847
    %2382 = vmatpush1.bf16.msra.mxu0 %v1846
    %2383 = vmatprep.subr.bf16.mxu0 %v1839
    %2384 = vmatpush1.bf16.msra.mxu0 %v1838
    %2385 = vmatprep.subr.bf16.mxu0 %v1831
    %2386 = vmatpush1.bf16.msra.mxu0 %v1830
    %2387 = vmatprep.subr.bf16.mxu0 %v1823
    %2388 = vmatpush1.bf16.msra.mxu0 %v1822
    %2389 = vmatprep.subr.bf16.mxu0 %v1815
    %2390 = vmatpush1.bf16.msra.mxu0 %v1814
    %2391 = vmatprep.subr.bf16.mxu0 %v1807
    %2392 = vmatpush1.bf16.msra.mxu0 %v1806
    %2393 = vmatprep.subr.bf16.mxu0 %v1799
    %2394 = vmatpush1.bf16.msra.mxu0 %v1798
    %2395 = vmatprep.subr.bf16.mxu0 %v1919
    %2396 = vmatpush2.bf16.msra.mxu0 %v1918
    %2397 = vmatprep.subr.bf16.mxu0 %v1911
    %2398 = vmatpush2.bf16.msra.mxu0 %v1910
    %2399 = vmatprep.subr.bf16.mxu0 %v1903
    %2400 = vmatpush2.bf16.msra.mxu0 %v1902
    %2401 = vmatprep.subr.bf16.mxu0 %v1895
    %2402 = vmatpush2.bf16.msra.mxu0 %v1894
    %2403 = vmatprep.subr.bf16.mxu0 %v1887
    %2404 = vmatpush2.bf16.msra.mxu0 %v1886
    %2405 = vmatprep.subr.bf16.mxu0 %v1879
    %2406 = vmatpush2.bf16.msra.mxu0 %v1878
    %2407 = vmatprep.subr.bf16.mxu0 %v1871
    %2408 = vmatpush2.bf16.msra.mxu0 %v1870
    %2409 = vmatprep.subr.bf16.mxu0 %v1863
    %2410 = vmatpush2.bf16.msra.mxu0 %v1862
    %2411 = vmatprep.mubr.bf16.mxu0 %v142
    %2412 = vmatmul.mubr.bf16.gmra.mxu0 %v141
    %v2413 = vpop.f32.mrf.mxu0
    %v2414 = vadd.f32 0.0, %v2413
    %v2415 = vpop.f32.mrf.mxu0
    %v2416 = vadd.f32 0.0, %v2415
    %v2417 = vpop.f32.mrf.mxu0
    %v2418 = vpop.f32.mrf.mxu0
    %2419 = vdwg.mxu0
    %2420 = vmatprep.subr.bf16.mxu0 0
    %2421 = vmatpush1.bf16.msra.mxu0 0
    %2422 = vmatprep.subr.bf16.mxu0 0
    %2423 = vmatpush1.bf16.msra.mxu0 0
    %2424 = vmatprep.subr.bf16.mxu0 0
    %2425 = vmatpush1.bf16.msra.mxu0 0
    %2426 = vmatprep.subr.bf16.mxu0 0
    %2427 = vmatpush1.bf16.msra.mxu0 0
    %2428 = vmatprep.subr.bf16.mxu0 %v2131
    %2429 = vmatpush1.bf16.msra.mxu0 %v2128
    %2430 = vmatprep.subr.bf16.mxu0 %v1943
    %2431 = vmatpush1.bf16.msra.mxu0 %v1942
    %2432 = vmatprep.subr.bf16.mxu0 %v1935
    %2433 = vmatpush1.bf16.msra.mxu0 %v1934
    %2434 = vmatprep.subr.bf16.mxu0 %v1927
    %2435 = vmatpush1.bf16.msra.mxu0 %v1926
    %2436 = vmatprep.subr.bf16.mxu0 0
    %2437 = vmatpush2.bf16.msra.mxu0 0
    %2438 = vmatprep.subr.bf16.mxu0 0
    %2439 = vmatpush2.bf16.msra.mxu0 0
    %2440 = vmatprep.subr.bf16.mxu0 0
    %2441 = vmatpush2.bf16.msra.mxu0 0
    %2442 = vmatprep.subr.bf16.mxu0 0
    %2443 = vmatpush2.bf16.msra.mxu0 0
    %2444 = vmatprep.subr.bf16.mxu0 0
    %2445 = vmatpush2.bf16.msra.mxu0 0
    %2446 = vmatprep.subr.bf16.mxu0 0
    %2447 = vmatpush2.bf16.msra.mxu0 0
    %2448 = vmatprep.subr.bf16.mxu0 0
    %2449 = vmatpush2.bf16.msra.mxu0 0
    %2450 = vmatprep.subr.bf16.mxu0 0
    %2451 = vmatpush2.bf16.msra.mxu0 0
    %2452 = vmatprep.mubr.bf16.mxu0 0
    %2453 = vmatmul.mubr.bf16.gmra.mxu0 %v2106
    %v2454 = vpop.f32.mrf.mxu0
    %v2455 = vadd.f32 %v2414, %v2454
    %v2456 = vpop.f32.mrf.mxu0
    %v2457 = vadd.f32 %v2416, %v2456
    %v2458 = vpop.f32.mrf.mxu0
    %v2459 = vpop.f32.mrf.mxu0
    %2460 = vdwg.mxu0
    %v3485 = vunpack.c.l.b16 %v144
    %v3486 = vunpack.c.h.b16 %v144
    %v3487 = vunpack.c.l.b16 %v145
    %v3488 = vunpack.c.h.b16 %v145
    %v3489 = vunpack.c.l.b16 %v146
    %v3490 = vunpack.c.h.b16 %v146
    %v3491 = vunpack.c.l.b16 %v147
    %v3492 = vunpack.c.h.b16 %v147
    %v3493 = vunpack.c.l.b16 %v148
    %v3494 = vunpack.c.h.b16 %v148
    %v3495 = vunpack.c.l.b16 %v149
    %v3496 = vunpack.c.h.b16 %v149
    %v3497 = vunpack.c.l.b16 %v150
    %v3498 = vunpack.c.h.b16 %v150
    %v3499 = vunpack.c.l.b16 %v151
    %v3500 = vunpack.c.h.b16 %v151
    %v3501 = vunpack.c.l.b16 %v152
    %v3502 = vunpack.c.h.b16 %v152
    %v3503 = vunpack.c.l.b16 %v153
    %v3504 = vunpack.c.h.b16 %v153
    %v3505 = vunpack.c.l.b16 %v154
    %v3506 = vunpack.c.h.b16 %v154
    %v3507 = vunpack.c.l.b16 %v155
    %v3508 = vunpack.c.h.b16 %v155
    %v3509 = vunpack.c.l.b16 %v156
    %v3510 = vunpack.c.h.b16 %v156
    %v3511 = vunpack.c.l.b16 %v157
    %v3512 = vunpack.c.h.b16 %v157
    %v3513 = vunpack.c.l.b16 %v158
    %v3514 = vunpack.c.h.b16 %v158
    %v3515 = vunpack.c.l.b16 %v159
    %v3516 = vunpack.c.h.b16 %v159
    %v3517 = vunpack.c.l.b16 %v160
    %v3518 = vunpack.c.h.b16 %v160
    %v3519 = vunpack.c.l.b16 %v161
    %v3520 = vunpack.c.h.b16 %v161
    %v3521 = vunpack.c.l.b16 %v162
    %v3522 = vunpack.c.h.b16 %v162
    %v3523 = vunpack.c.l.b16 %v163
    %v3524 = vunpack.c.h.b16 %v163
    %v3525 = vunpack.c.l.b16 %v164
    %v3526 = vunpack.c.h.b16 %v164
    %v3527 = vunpack.c.l.b16 %v165
    %v3528 = vunpack.c.h.b16 %v165
    %v3529 = vunpack.c.l.b16 %v166
    %v3530 = vunpack.c.h.b16 %v166
    %v3531 = vunpack.c.l.b16 %v167
    %v3532 = vunpack.c.h.b16 %v167
    %v3533 = vunpack.c.l.b16 %v168
    %v3534 = vunpack.c.h.b16 %v168
    %v3535 = vunpack.c.l.b16 %v169
    %v3536 = vunpack.c.h.b16 %v169
    %v3537 = vunpack.c.l.b16 %v170
    %v3538 = vunpack.c.h.b16 %v170
    %v3539 = vunpack.c.l.b16 %v171
    %v3540 = vunpack.c.h.b16 %v171
    %v3541 = vunpack.c.l.b16 %v172
    %v3542 = vunpack.c.h.b16 %v172
    %v3543 = vunpack.c.l.b16 %v173
    %v3544 = vunpack.c.h.b16 %v173
    %v3545 = vunpack.c.l.b16 %v174
    %v3546 = vunpack.c.h.b16 %v174
    %v3547 = vunpack.c.l.b16 %v175
    %v3548 = vunpack.c.h.b16 %v175
    %v3549 = vunpack.c.l.b16 %v176
    %v3550 = vunpack.c.h.b16 %v176
    %v3551 = vunpack.c.l.b16 %v177
    %v3552 = vunpack.c.h.b16 %v177
    %v3553 = vunpack.c.l.b16 %v178
    %v3554 = vunpack.c.h.b16 %v178
    %v3555 = vunpack.c.l.b16 %v179
    %v3556 = vunpack.c.h.b16 %v179
    %v3557 = vunpack.c.l.b16 %v180
    %v3558 = vunpack.c.h.b16 %v180
    %v3559 = vunpack.c.l.b16 %v181
    %v3560 = vunpack.c.h.b16 %v181
    %v3561 = vunpack.c.l.b16 %v182
    %v3562 = vunpack.c.h.b16 %v182
    %v3563 = vunpack.c.l.b16 %v183
    %v3564 = vunpack.c.h.b16 %v183
    %v3565 = vunpack.c.l.b16 %v184
    %v3566 = vunpack.c.h.b16 %v184
    %v3567 = vunpack.c.l.b16 %v185
    %v3568 = vunpack.c.h.b16 %v185
    %v3569 = vunpack.c.l.b16 %v186
    %v3570 = vunpack.c.h.b16 %v186
    %v3571 = vunpack.c.l.b16 %v187
    %v3572 = vunpack.c.h.b16 %v187
    %v3573 = vunpack.c.l.b16 %v188
    %v3574 = vunpack.c.h.b16 %v188
    %v3575 = vunpack.c.l.b16 %v189
    %v3576 = vunpack.c.h.b16 %v189
    %v3577 = vunpack.c.l.b16 %v190
    %v3578 = vunpack.c.h.b16 %v190
    %v3579 = vunpack.c.l.b16 %v191
    %v3580 = vunpack.c.h.b16 %v191
    %v3581 = vunpack.c.l.b16 %v192
    %v3582 = vunpack.c.h.b16 %v192
    %v3583 = vunpack.c.l.b16 %v193
    %v3584 = vunpack.c.h.b16 %v193
    %v3585 = vunpack.c.l.b16 %v194
    %v3586 = vunpack.c.h.b16 %v194
    %v3587 = vunpack.c.l.b16 %v195
    %v3588 = vunpack.c.h.b16 %v195
    %v3589 = vunpack.c.l.b16 %v196
    %v3590 = vunpack.c.h.b16 %v196
    %v3591 = vunpack.c.l.b16 %v197
    %v3592 = vunpack.c.h.b16 %v197
    %v3593 = vunpack.c.l.b16 %v198
    %v3594 = vunpack.c.h.b16 %v198
    %v3595 = vunpack.c.l.b16 %v199
    %v3596 = vunpack.c.h.b16 %v199
    %v3597 = vunpack.c.l.b16 %v200
    %v3598 = vunpack.c.h.b16 %v200
    %v3599 = vunpack.c.l.b16 %v201
    %v3600 = vunpack.c.h.b16 %v201
    %v3601 = vunpack.c.l.b16 %v202
    %v3602 = vunpack.c.h.b16 %v202
    %v3603 = vunpack.c.l.b16 %v203
    %v3604 = vunpack.c.h.b16 %v203
    %v3605 = vunpack.c.l.b16 %v204
    %v3606 = vunpack.c.h.b16 %v204
    %v3607 = vunpack.c.l.b16 %v205
    %v3608 = vunpack.c.h.b16 %v205
    %v3609 = vunpack.c.l.b16 %v206
    %v3610 = vunpack.c.h.b16 %v206
    %v3611 = vunpack.c.l.b16 %v207
    %v3612 = vunpack.c.h.b16 %v207
    %v3613 = vunpack.c.l.b16 %v208
    %v3614 = vunpack.c.h.b16 %v208
    %v3615 = vunpack.c.l.b16 %v209
    %v3616 = vunpack.c.h.b16 %v209
    %v3617 = vunpack.c.l.b16 %v210
    %v3618 = vunpack.c.h.b16 %v210
    %v3619 = vunpack.c.l.b16 %v211
    %v3620 = vunpack.c.h.b16 %v211
    %v3621 = vunpack.c.l.b16 %v212
    %v3622 = vunpack.c.h.b16 %v212
    %v3623 = vunpack.c.l.b16 %v213
    %v3624 = vunpack.c.h.b16 %v213
    %v3625 = vunpack.c.l.b16 %v214
    %v3626 = vunpack.c.h.b16 %v214
    %v3627 = vunpack.c.l.b16 %v215
    %v3628 = vunpack.c.h.b16 %v215
    %v3629 = vunpack.c.l.b16 %v216
    %v3630 = vunpack.c.h.b16 %v216
    %v3631 = vunpack.c.l.b16 %v217
    %v3632 = vunpack.c.h.b16 %v217
    %v3633 = vunpack.c.l.b16 %v218
    %v3634 = vunpack.c.h.b16 %v218
    %v3635 = vunpack.c.l.b16 %v219
    %v3636 = vunpack.c.h.b16 %v219
    %v3637 = vunpack.c.l.b16 %v220
    %v3638 = vunpack.c.h.b16 %v220
    %v3639 = vunpack.c.l.b16 %v221
    %v3640 = vunpack.c.h.b16 %v221
    %v3641 = vunpack.c.l.b16 %v222
    %v3642 = vunpack.c.h.b16 %v222
    %v3643 = vunpack.c.l.b16 %v223
    %v3644 = vunpack.c.h.b16 %v223
    %v3645 = vunpack.c.l.b16 %v224
    %v3646 = vunpack.c.h.b16 %v224
    %v3647 = vunpack.c.l.b16 %v225
    %v3648 = vunpack.c.h.b16 %v225
    %v3649 = vunpack.c.l.b16 %v226
    %v3650 = vunpack.c.h.b16 %v226
    %v3651 = vunpack.c.l.b16 %v227
    %v3652 = vunpack.c.h.b16 %v227
    %v3653 = vunpack.c.l.b16 %v228
    %v3654 = vunpack.c.h.b16 %v228
    %v3655 = vunpack.c.l.b16 %v229
    %v3656 = vunpack.c.h.b16 %v229
    %v3657 = vunpack.c.l.b16 %v230
    %v3658 = vunpack.c.h.b16 %v230
    %v3659 = vunpack.c.l.b16 %v231
    %v3660 = vunpack.c.h.b16 %v231
    %v3661 = vunpack.c.l.b16 %v232
    %v3662 = vunpack.c.h.b16 %v232
    %v3663 = vunpack.c.l.b16 %v233
    %v3664 = vunpack.c.h.b16 %v233
    %v3665 = vunpack.c.l.b16 %v234
    %v3666 = vunpack.c.h.b16 %v234
    %v3667 = vunpack.c.l.b16 %v235
    %v3668 = vunpack.c.h.b16 %v235
    %v3669 = vunpack.c.l.b16 %v236
    %v3670 = vunpack.c.h.b16 %v236
    %v3671 = vunpack.c.l.b16 %v237
    %v3672 = vunpack.c.h.b16 %v237
    %v3673 = vunpack.c.l.b16 %v238
    %v3674 = vunpack.c.h.b16 %v238
    %v3675 = vunpack.c.l.b16 %v239
    %v3676 = vunpack.c.h.b16 %v239
    %v3677 = vunpack.c.l.b16 %v240
    %v3678 = vunpack.c.h.b16 %v240
    %v3679 = vunpack.c.l.b16 %v241
    %v3680 = vunpack.c.h.b16 %v241
    %v3681 = vunpack.c.l.b16 %v242
    %v3682 = vunpack.c.h.b16 %v242
    %v3683 = vunpack.c.l.b16 %v243
    %v3684 = vunpack.c.h.b16 %v243
    %v3685 = vunpack.c.l.b16 %v244
    %v3686 = vunpack.c.h.b16 %v244
    %v3687 = vunpack.c.l.b16 %v245
    %v3688 = vunpack.c.h.b16 %v245
    %v3689 = vunpack.c.l.b16 %v246
    %v3690 = vunpack.c.h.b16 %v246
    %v3691 = vunpack.c.l.b16 %v247
    %v3692 = vunpack.c.h.b16 %v247
    %v3693 = vunpack.c.l.b16 %v248
    %v3694 = vunpack.c.h.b16 %v248
    %v3695 = vunpack.c.l.b16 %v249
    %v3696 = vunpack.c.h.b16 %v249
    %v3697 = vunpack.c.l.b16 %v250
    %v3698 = vunpack.c.h.b16 %v250
    %v3699 = vunpack.c.l.b16 %v251
    %v3700 = vunpack.c.h.b16 %v251
    %v3701 = vunpack.c.l.b16 %v252
    %v3702 = vunpack.c.h.b16 %v252
    %v3703 = vunpack.c.l.b16 %v253
    %v3704 = vunpack.c.h.b16 %v253
    %v3705 = vunpack.c.l.b16 %v254
    %v3706 = vunpack.c.h.b16 %v254
    %v3707 = vunpack.c.l.b16 %v255
    %v3708 = vunpack.c.h.b16 %v255
    %v3709 = vunpack.c.l.b16 %v256
    %v3710 = vunpack.c.h.b16 %v256
    %v3711 = vunpack.c.l.b16 %v257
    %v3712 = vunpack.c.h.b16 %v257
    %v3713 = vunpack.c.l.b16 %v258
    %v3714 = vunpack.c.h.b16 %v258
    %v3715 = vunpack.c.l.b16 %v259
    %v3716 = vunpack.c.h.b16 %v259
    %v3717 = vunpack.c.l.b16 %v260
    %v3718 = vunpack.c.h.b16 %v260
    %v3719 = vunpack.c.l.b16 %v261
    %v3720 = vunpack.c.h.b16 %v261
    %v3721 = vunpack.c.l.b16 %v262
    %v3722 = vunpack.c.h.b16 %v262
    %v3723 = vunpack.c.l.b16 %v263
    %v3724 = vunpack.c.h.b16 %v263
    %v3725 = vunpack.c.l.b16 %v264
    %v3726 = vunpack.c.h.b16 %v264
    %v3727 = vunpack.c.l.b16 %v265
    %v3728 = vunpack.c.h.b16 %v265
    %v3729 = vunpack.c.l.b16 %v266
    %v3730 = vunpack.c.h.b16 %v266
    %v3731 = vunpack.c.l.b16 %v267
    %v3732 = vunpack.c.h.b16 %v267
    %v3733 = vunpack.c.l.b16 %v268
    %v3734 = vunpack.c.h.b16 %v268
    %v3735 = vunpack.c.l.b16 %v269
    %v3736 = vunpack.c.h.b16 %v269
    %v3737 = vunpack.c.l.b16 %v270
    %v3738 = vunpack.c.h.b16 %v270
    %v3739 = vunpack.c.l.b16 %v271
    %v3740 = vunpack.c.h.b16 %v271
    %v3741 = vunpack.c.l.b16 %v272
    %v3742 = vunpack.c.h.b16 %v272
    %v3743 = vunpack.c.l.b16 %v273
    %v3744 = vunpack.c.h.b16 %v273
    %v3745 = vunpack.c.l.b16 %v274
    %v3746 = vunpack.c.h.b16 %v274
    %v3747 = vunpack.c.l.b16 %v275
    %v3748 = vunpack.c.h.b16 %v275
    %v3749 = vunpack.c.l.b16 %v276
    %v3750 = vunpack.c.h.b16 %v276
    %v3751 = vunpack.c.l.b16 %v277
    %v3752 = vunpack.c.h.b16 %v277
    %v3753 = vunpack.c.l.b16 %v278
    %v3754 = vunpack.c.h.b16 %v278
    %v3755 = vunpack.c.l.b16 %v279
    %v3756 = vunpack.c.h.b16 %v279
    %v3757 = vunpack.c.l.b16 %v280
    %v3758 = vunpack.c.h.b16 %v280
    %v3759 = vunpack.c.l.b16 %v281
    %v3760 = vunpack.c.h.b16 %v281
    %v3761 = vunpack.c.l.b16 %v282
    %v3762 = vunpack.c.h.b16 %v282
    %v3763 = vunpack.c.l.b16 %v283
    %v3764 = vunpack.c.h.b16 %v283
    %v3765 = vunpack.c.l.b16 %v284
    %v3766 = vunpack.c.h.b16 %v284
    %v3767 = vunpack.c.l.b16 %v285
    %v3768 = vunpack.c.h.b16 %v285
    %v3769 = vunpack.c.l.b16 %v286
    %v3770 = vunpack.c.h.b16 %v286
    %v3771 = vunpack.c.l.b16 %v287
    %v3772 = vunpack.c.h.b16 %v287
    %v3773 = vunpack.c.l.b16 %v288
    %v3774 = vunpack.c.h.b16 %v288
    %v3775 = vunpack.c.l.b16 %v289
    %v3776 = vunpack.c.h.b16 %v289
    %v3777 = vunpack.c.l.b16 %v290
    %v3778 = vunpack.c.h.b16 %v290
    %v3779 = vunpack.c.l.b16 %v291
    %v3780 = vunpack.c.h.b16 %v291
    %v3781 = vunpack.c.l.b16 %v292
    %v3782 = vunpack.c.h.b16 %v292
    %v3783 = vunpack.c.l.b16 %v293
    %v3784 = vunpack.c.h.b16 %v293
    %v3785 = vunpack.c.l.b16 %v294
    %v3786 = vunpack.c.h.b16 %v294
    %v3787 = vunpack.c.l.b16 %v295
    %v3788 = vunpack.c.h.b16 %v295
    %v3789 = vunpack.c.l.b16 %v296
    %v3790 = vunpack.c.h.b16 %v296
    %v3791 = vunpack.c.l.b16 %v297
    %v3792 = vunpack.c.h.b16 %v297
    %v3793 = vunpack.c.l.b16 %v298
    %v3794 = vunpack.c.h.b16 %v298
    %v3795 = vunpack.c.l.b16 %v299
    %v3796 = vunpack.c.h.b16 %v299
    %v3797 = vunpack.c.l.b16 %v300
    %v3798 = vunpack.c.h.b16 %v300
    %v3799 = vunpack.c.l.b16 %v301
    %v3800 = vunpack.c.h.b16 %v301
    %v3801 = vunpack.c.l.b16 %v302
    %v3802 = vunpack.c.h.b16 %v302
    %v3803 = vunpack.c.l.b16 %v303
    %v3804 = vunpack.c.h.b16 %v303
    %v3805 = vunpack.c.l.b16 %v304
    %v3806 = vunpack.c.h.b16 %v304
    %v3807 = vunpack.c.l.b16 %v305
    %v3808 = vunpack.c.h.b16 %v305
    %v3809 = vunpack.c.l.b16 %v306
    %v3810 = vunpack.c.h.b16 %v306
    %v3811 = vunpack.c.l.b16 %v307
    %v3812 = vunpack.c.h.b16 %v307
    %v3813 = vunpack.c.l.b16 %v308
    %v3814 = vunpack.c.h.b16 %v308
    %v3815 = vunpack.c.l.b16 %v309
    %v3816 = vunpack.c.h.b16 %v309
    %v3817 = vunpack.c.l.b16 %v310
    %v3818 = vunpack.c.h.b16 %v310
    %v3819 = vunpack.c.l.b16 %v311
    %v3820 = vunpack.c.h.b16 %v311
    %v3821 = vunpack.c.l.b16 %v312
    %v3822 = vunpack.c.h.b16 %v312
    %v3823 = vunpack.c.l.b16 %v313
    %v3824 = vunpack.c.h.b16 %v313
    %v3825 = vunpack.c.l.b16 %v314
    %v3826 = vunpack.c.h.b16 %v314
    %v3827 = vunpack.c.l.b16 %v315
    %v3828 = vunpack.c.h.b16 %v315
    %v3829 = vunpack.c.l.b16 %v316
    %v3830 = vunpack.c.h.b16 %v316
    %v3831 = vunpack.c.l.b16 %v317
    %v3832 = vunpack.c.h.b16 %v317
    %v3833 = vunpack.c.l.b16 %v318
    %v3834 = vunpack.c.h.b16 %v318
    %v3835 = vunpack.c.l.b16 %v319
    %v3836 = vunpack.c.h.b16 %v319
    %v3837 = vunpack.c.l.b16 %v320
    %v3838 = vunpack.c.h.b16 %v320
    %v3839 = vunpack.c.l.b16 %v321
    %v3840 = vunpack.c.h.b16 %v321
    %v3841 = vunpack.c.l.b16 %v322
    %v3842 = vunpack.c.h.b16 %v322
    %v3843 = vunpack.c.l.b16 %v323
    %v3844 = vunpack.c.h.b16 %v323
    %v3845 = vunpack.c.l.b16 %v324
    %v3846 = vunpack.c.h.b16 %v324
    %v3847 = vunpack.c.l.b16 %v325
    %v3848 = vunpack.c.h.b16 %v325
    %v3849 = vunpack.c.l.b16 %v326
    %v3850 = vunpack.c.h.b16 %v326
    %v3851 = vunpack.c.l.b16 %v327
    %v3852 = vunpack.c.h.b16 %v327
    %v3853 = vunpack.c.l.b16 %v328
    %v3854 = vunpack.c.h.b16 %v328
    %v3855 = vunpack.c.l.b16 %v329
    %v3856 = vunpack.c.h.b16 %v329
    %v3857 = vunpack.c.l.b16 %v330
    %v3858 = vunpack.c.h.b16 %v330
    %v3859 = vunpack.c.l.b16 %v331
    %v3860 = vunpack.c.h.b16 %v331
    %v3861 = vunpack.c.l.b16 %v332
    %v3862 = vunpack.c.h.b16 %v332
    %v3863 = vunpack.c.l.b16 %v333
    %v3864 = vunpack.c.h.b16 %v333
    %v3865 = vunpack.c.l.b16 %v334
    %v3866 = vunpack.c.h.b16 %v334
    %v3867 = vunpack.c.l.b16 %v335
    %v3868 = vunpack.c.h.b16 %v335
    %v3869 = vunpack.c.l.b16 %v336
    %v3870 = vunpack.c.h.b16 %v336
    %v3871 = vunpack.c.l.b16 %v337
    %v3872 = vunpack.c.h.b16 %v337
    %v3873 = vunpack.c.l.b16 %v338
    %v3874 = vunpack.c.h.b16 %v338
    %v3875 = vunpack.c.l.b16 %v339
    %v3876 = vunpack.c.h.b16 %v339
    %v3877 = vunpack.c.l.b16 %v340
    %v3878 = vunpack.c.h.b16 %v340
    %v3879 = vunpack.c.l.b16 %v341
    %v3880 = vunpack.c.h.b16 %v341
    %v3881 = vunpack.c.l.b16 %v342
    %v3882 = vunpack.c.h.b16 %v342
    %v3883 = vunpack.c.l.b16 %v343
    %v3884 = vunpack.c.h.b16 %v343
    %v3885 = vunpack.c.l.b16 %v344
    %v3886 = vunpack.c.h.b16 %v344
    %v3887 = vunpack.c.l.b16 %v345
    %v3888 = vunpack.c.h.b16 %v345
    %v3889 = vunpack.c.l.b16 %v346
    %v3890 = vunpack.c.h.b16 %v346
    %v3891 = vunpack.c.l.b16 %v347
    %v3892 = vunpack.c.h.b16 %v347
    %v3893 = vunpack.c.l.b16 %v348
    %v3894 = vunpack.c.h.b16 %v348
    %v3895 = vunpack.c.l.b16 %v349
    %v3896 = vunpack.c.h.b16 %v349
    %v3897 = vunpack.c.l.b16 %v350
    %v3898 = vunpack.c.h.b16 %v350
    %v3899 = vunpack.c.l.b16 %v351
    %v3900 = vunpack.c.h.b16 %v351
    %v3901 = vunpack.c.l.b16 %v352
    %v3902 = vunpack.c.h.b16 %v352
    %v3903 = vunpack.c.l.b16 %v353
    %v3904 = vunpack.c.h.b16 %v353
    %v3905 = vunpack.c.l.b16 %v354
    %v3906 = vunpack.c.h.b16 %v354
    %v3907 = vunpack.c.l.b16 %v355
    %v3908 = vunpack.c.h.b16 %v355
    %v3909 = vunpack.c.l.b16 %v356
    %v3910 = vunpack.c.h.b16 %v356
    %v3911 = vunpack.c.l.b16 %v357
    %v3912 = vunpack.c.h.b16 %v357
    %v3913 = vunpack.c.l.b16 %v358
    %v3914 = vunpack.c.h.b16 %v358
    %v3915 = vunpack.c.l.b16 %v359
    %v3916 = vunpack.c.h.b16 %v359
    %v3917 = vunpack.c.l.b16 %v360
    %v3918 = vunpack.c.h.b16 %v360
    %v3919 = vunpack.c.l.b16 %v361
    %v3920 = vunpack.c.h.b16 %v361
    %v3921 = vunpack.c.l.b16 %v362
    %v3922 = vunpack.c.h.b16 %v362
    %v3923 = vunpack.c.l.b16 %v363
    %v3924 = vunpack.c.h.b16 %v363
    %v3925 = vunpack.c.l.b16 %v364
    %v3926 = vunpack.c.h.b16 %v364
    %v3927 = vunpack.c.l.b16 %v365
    %v3928 = vunpack.c.h.b16 %v365
    %v3929 = vunpack.c.l.b16 %v366
    %v3930 = vunpack.c.h.b16 %v366
    %v3931 = vunpack.c.l.b16 %v367
    %v3932 = vunpack.c.h.b16 %v367
    %v3933 = vunpack.c.l.b16 %v368
    %v3934 = vunpack.c.h.b16 %v368
    %v3935 = vunpack.c.l.b16 %v369
    %v3936 = vunpack.c.h.b16 %v369
    %v3937 = vunpack.c.l.b16 %v370
    %v3938 = vunpack.c.h.b16 %v370
    %v3939 = vunpack.c.l.b16 %v371
    %v3940 = vunpack.c.h.b16 %v371
    %v3941 = vunpack.c.l.b16 %v372
    %v3942 = vunpack.c.h.b16 %v372
    %v3943 = vunpack.c.l.b16 %v373
    %v3944 = vunpack.c.h.b16 %v373
    %v3945 = vunpack.c.l.b16 %v374
    %v3946 = vunpack.c.h.b16 %v374
    %v3947 = vunpack.c.l.b16 %v375
    %v3948 = vunpack.c.h.b16 %v375
    %v3949 = vunpack.c.l.b16 %v376
    %v3950 = vunpack.c.h.b16 %v376
    %v3951 = vunpack.c.l.b16 %v377
    %v3952 = vunpack.c.h.b16 %v377
    %v3953 = vunpack.c.l.b16 %v378
    %v3954 = vunpack.c.h.b16 %v378
    %v3955 = vunpack.c.l.b16 %v379
    %v3956 = vunpack.c.h.b16 %v379
    %v3957 = vunpack.c.l.b16 %v380
    %v3958 = vunpack.c.h.b16 %v380
    %v3959 = vunpack.c.l.b16 %v381
    %v3960 = vunpack.c.h.b16 %v381
    %v3961 = vunpack.c.l.b16 %v382
    %v3962 = vunpack.c.h.b16 %v382
    %v3963 = vunpack.c.l.b16 %v383
    %v3964 = vunpack.c.h.b16 %v383
    %v3965 = vunpack.c.l.b16 %v384
    %v3966 = vunpack.c.h.b16 %v384
    %v3967 = vunpack.c.l.b16 %v385
    %v3968 = vunpack.c.h.b16 %v385
    %v3969 = vunpack.c.l.b16 %v386
    %v3970 = vunpack.c.h.b16 %v386
    %v3971 = vunpack.c.l.b16 %v387
    %v3972 = vunpack.c.h.b16 %v387
    %v3973 = vunpack.c.l.b16 %v388
    %v3974 = vunpack.c.h.b16 %v388
    %v3975 = vunpack.c.l.b16 %v389
    %v3976 = vunpack.c.h.b16 %v389
    %v3977 = vunpack.c.l.b16 %v390
    %v3978 = vunpack.c.h.b16 %v390
    %v3979 = vunpack.c.l.b16 %v391
    %v3980 = vunpack.c.h.b16 %v391
    %v3981 = vunpack.c.l.b16 %v392
    %v3982 = vunpack.c.h.b16 %v392
    %v3983 = vunpack.c.l.b16 %v393
    %v3984 = vunpack.c.h.b16 %v393
    %v3985 = vunpack.c.l.b16 %v394
    %v3986 = vunpack.c.h.b16 %v394
    %v3987 = vunpack.c.l.b16 %v395
    %v3988 = vunpack.c.h.b16 %v395
    %v3989 = vunpack.c.l.b16 %v396
    %v3990 = vunpack.c.h.b16 %v396
    %v3991 = vunpack.c.l.b16 %v397
    %v3992 = vunpack.c.h.b16 %v397
    %v3993 = vunpack.c.l.b16 %v398
    %v3994 = vunpack.c.h.b16 %v398
    %v3995 = vunpack.c.l.b16 %v399
    %v3996 = vunpack.c.h.b16 %v399
    %v3997 = vunpack.c.l.b16 %v400
    %v3998 = vunpack.c.h.b16 %v400
    %v3999 = vunpack.c.l.b16 %v401
    %v4000 = vunpack.c.h.b16 %v401
    %v4001 = vunpack.c.l.b16 %v402
    %v4002 = vunpack.c.h.b16 %v402
    %v4003 = vunpack.c.l.b16 %v403
    %v4004 = vunpack.c.h.b16 %v403
    %v4005 = vunpack.c.l.b16 %v404
    %v4006 = vunpack.c.h.b16 %v404
    %v4007 = vunpack.c.l.b16 %v405
    %v4008 = vunpack.c.h.b16 %v405
    %v4009 = vunpack.c.l.b16 %v406
    %v4010 = vunpack.c.h.b16 %v406
    %v4011 = vunpack.c.l.b16 %v407
    %v4012 = vunpack.c.h.b16 %v407
    %v4013 = vunpack.c.l.b16 %v408
    %v4014 = vunpack.c.h.b16 %v408
    %v4015 = vunpack.c.l.b16 %v409
    %v4016 = vunpack.c.h.b16 %v409
    %v4017 = vunpack.c.l.b16 %v410
    %v4018 = vunpack.c.h.b16 %v410
    %v4019 = vunpack.c.l.b16 %v411
    %v4020 = vunpack.c.h.b16 %v411
    %v4021 = vunpack.c.l.b16 %v412
    %v4022 = vunpack.c.h.b16 %v412
    %v4023 = vunpack.c.l.b16 %v413
    %v4024 = vunpack.c.h.b16 %v413
    %v4025 = vunpack.c.l.b16 %v414
    %v4026 = vunpack.c.h.b16 %v414
    %v4027 = vunpack.c.l.b16 %v415
    %v4028 = vunpack.c.h.b16 %v415
    %v4029 = vunpack.c.l.b16 %v416
    %v4030 = vunpack.c.h.b16 %v416
    %v4031 = vunpack.c.l.b16 %v417
    %v4032 = vunpack.c.h.b16 %v417
    %v4033 = vunpack.c.l.b16 %v418
    %v4034 = vunpack.c.h.b16 %v418
    %v4035 = vunpack.c.l.b16 %v419
    %v4036 = vunpack.c.h.b16 %v419
    %v4037 = vunpack.c.l.b16 %v420
    %v4038 = vunpack.c.h.b16 %v420
    %v4039 = vunpack.c.l.b16 %v421
    %v4040 = vunpack.c.h.b16 %v421
    %v4041 = vunpack.c.l.b16 %v422
    %v4042 = vunpack.c.h.b16 %v422
    %v4043 = vunpack.c.l.b16 %v423
    %v4044 = vunpack.c.h.b16 %v423
    %v4045 = vunpack.c.l.b16 %v424
    %v4046 = vunpack.c.h.b16 %v424
    %v4047 = vunpack.c.l.b16 %v425
    %v4048 = vunpack.c.h.b16 %v425
    %v4049 = vunpack.c.l.b16 %v426
    %v4050 = vunpack.c.h.b16 %v426
    %v4051 = vunpack.c.l.b16 %v427
    %v4052 = vunpack.c.h.b16 %v427
    %v4053 = vunpack.c.l.b16 %v428
    %v4054 = vunpack.c.h.b16 %v428
    %v4055 = vunpack.c.l.b16 %v429
    %v4056 = vunpack.c.h.b16 %v429
    %v4057 = vunpack.c.l.b16 %v430
    %v4058 = vunpack.c.h.b16 %v430
    %v4059 = vunpack.c.l.b16 %v431
    %v4060 = vunpack.c.h.b16 %v431
    %v4061 = vunpack.c.l.b16 %v432
    %v4062 = vunpack.c.h.b16 %v432
    %v4063 = vunpack.c.l.b16 %v433
    %v4064 = vunpack.c.h.b16 %v433
    %v4065 = vunpack.c.l.b16 %v434
    %v4066 = vunpack.c.h.b16 %v434
    %v4067 = vunpack.c.l.b16 %v435
    %v4068 = vunpack.c.h.b16 %v435
    %v4069 = vunpack.c.l.b16 %v436
    %v4070 = vunpack.c.h.b16 %v436
    %v4071 = vunpack.c.l.b16 %v437
    %v4072 = vunpack.c.h.b16 %v437
    %v4073 = vunpack.c.l.b16 %v438
    %v4074 = vunpack.c.h.b16 %v438
    %v4075 = vunpack.c.l.b16 %v439
    %v4076 = vunpack.c.h.b16 %v439
    %v4077 = vunpack.c.l.b16 %v440
    %v4078 = vunpack.c.h.b16 %v440
    %v4079 = vunpack.c.l.b16 %v441
    %v4080 = vunpack.c.h.b16 %v441
    %v4081 = vunpack.c.l.b16 %v442
    %v4082 = vunpack.c.h.b16 %v442
    %v4083 = vunpack.c.l.b16 %v443
    %v4084 = vunpack.c.h.b16 %v443
    %v4085 = vunpack.c.l.b16 %v444
    %v4086 = vunpack.c.h.b16 %v444
    %v4087 = vunpack.c.l.b16 %v445
    %v4088 = vunpack.c.h.b16 %v445
    %v4089 = vunpack.c.l.b16 %v446
    %v4090 = vunpack.c.h.b16 %v446
    %v4091 = vunpack.c.l.b16 %v447
    %v4092 = vunpack.c.h.b16 %v447
    %v4093 = vunpack.c.l.b16 %v448
    %v4094 = vunpack.c.h.b16 %v448
    %v4095 = vunpack.c.l.b16 %v449
    %v4096 = vunpack.c.h.b16 %v449
    %v4097 = vunpack.c.l.b16 %v450
    %v4098 = vunpack.c.h.b16 %v450
    %v4099 = vunpack.c.l.b16 %v451
    %v4100 = vunpack.c.h.b16 %v451
    %v4101 = vunpack.c.l.b16 %v452
    %v4102 = vunpack.c.h.b16 %v452
    %v4103 = vunpack.c.l.b16 %v453
    %v4104 = vunpack.c.h.b16 %v453
    %v4105 = vunpack.c.l.b16 %v454
    %v4106 = vunpack.c.h.b16 %v454
    %v4107 = vunpack.c.l.b16 %v455
    %v4108 = vunpack.c.h.b16 %v455
    %v4109 = vunpack.c.l.b16 %v456
    %v4110 = vunpack.c.h.b16 %v456
    %v4111 = vunpack.c.l.b16 %v457
    %v4112 = vunpack.c.h.b16 %v457
    %v4113 = vunpack.c.l.b16 %v458
    %v4114 = vunpack.c.h.b16 %v458
    %v4115 = vunpack.c.l.b16 %v459
    %v4116 = vunpack.c.h.b16 %v459
    %v4117 = vunpack.c.l.b16 %v460
    %v4118 = vunpack.c.h.b16 %v460
    %v4119 = vunpack.c.l.b16 %v461
    %v4120 = vunpack.c.h.b16 %v461
    %v4121 = vunpack.c.l.b16 %v462
    %v4122 = vunpack.c.h.b16 %v462
    %v4123 = vunpack.c.l.b16 %v463
    %v4124 = vunpack.c.h.b16 %v463
    %v4125 = vunpack.c.l.b16 %v464
    %v4126 = vunpack.c.h.b16 %v464
    %v4127 = vunpack.c.l.b16 %v465
    %v4128 = vunpack.c.h.b16 %v465
    %v4129 = vunpack.c.l.b16 %v466
    %v4130 = vunpack.c.h.b16 %v466
    %v4131 = vunpack.c.l.b16 %v467
    %v4132 = vunpack.c.h.b16 %v467
    %v4133 = vunpack.c.l.b16 %v468
    %v4134 = vunpack.c.h.b16 %v468
    %v4135 = vunpack.c.l.b16 %v469
    %v4136 = vunpack.c.h.b16 %v469
    %v4137 = vunpack.c.l.b16 %v470
    %v4138 = vunpack.c.h.b16 %v470
    %v4139 = vunpack.c.l.b16 %v471
    %v4140 = vunpack.c.h.b16 %v471
    %v4141 = vunpack.c.l.b16 %v472
    %v4142 = vunpack.c.h.b16 %v472
    %v4143 = vunpack.c.l.b16 %v473
    %v4144 = vunpack.c.h.b16 %v473
    %v4145 = vunpack.c.l.b16 %v474
    %v4146 = vunpack.c.h.b16 %v474
    %v4147 = vunpack.c.l.b16 %v475
    %v4148 = vunpack.c.h.b16 %v475
    %v4149 = vunpack.c.l.b16 %v476
    %v4150 = vunpack.c.h.b16 %v476
    %v4151 = vunpack.c.l.b16 %v477
    %v4152 = vunpack.c.h.b16 %v477
    %v4153 = vunpack.c.l.b16 %v478
    %v4154 = vunpack.c.h.b16 %v478
    %v4155 = vunpack.c.l.b16 %v479
    %v4156 = vunpack.c.h.b16 %v479
    %v4157 = vunpack.c.l.b16 %v480
    %v4158 = vunpack.c.h.b16 %v480
    %v4159 = vunpack.c.l.b16 %v481
    %v4160 = vunpack.c.h.b16 %v481
    %v4161 = vunpack.c.l.b16 %v482
    %v4162 = vunpack.c.h.b16 %v482
    %v4163 = vunpack.c.l.b16 %v483
    %v4164 = vunpack.c.h.b16 %v483
    %v4165 = vunpack.c.l.b16 %v484
    %v4166 = vunpack.c.h.b16 %v484
    %v4167 = vunpack.c.l.b16 %v485
    %v4168 = vunpack.c.h.b16 %v485
    %v4169 = vunpack.c.l.b16 %v486
    %v4170 = vunpack.c.h.b16 %v486
    %v4171 = vunpack.c.l.b16 %v487
    %v4172 = vunpack.c.h.b16 %v487
    %v4173 = vunpack.c.l.b16 %v488
    %v4174 = vunpack.c.h.b16 %v488
    %v4175 = vunpack.c.l.b16 %v489
    %v4176 = vunpack.c.h.b16 %v489
    %v4177 = vunpack.c.l.b16 %v490
    %v4178 = vunpack.c.h.b16 %v490
    %v4179 = vunpack.c.l.b16 %v491
    %v4180 = vunpack.c.h.b16 %v491
    %v4181 = vunpack.c.l.b16 %v492
    %v4182 = vunpack.c.h.b16 %v492
    %v4183 = vunpack.c.l.b16 %v493
    %v4184 = vunpack.c.h.b16 %v493
    %v4185 = vunpack.c.l.b16 %v494
    %v4186 = vunpack.c.h.b16 %v494
    %v4187 = vunpack.c.l.b16 %v495
    %v4188 = vunpack.c.h.b16 %v495
    %v4189 = vunpack.c.l.b16 %v496
    %v4190 = vunpack.c.h.b16 %v496
    %v4191 = vunpack.c.l.b16 %v497
    %v4192 = vunpack.c.h.b16 %v497
    %v4193 = vunpack.c.l.b16 %v498
    %v4194 = vunpack.c.h.b16 %v498
    %v4195 = vunpack.c.l.b16 %v499
    %v4196 = vunpack.c.h.b16 %v499
    %v4197 = vunpack.c.l.b16 %v500
    %v4198 = vunpack.c.h.b16 %v500
    %v4199 = vunpack.c.l.b16 %v501
    %v4200 = vunpack.c.h.b16 %v501
    %v4201 = vunpack.c.l.b16 %v502
    %v4202 = vunpack.c.h.b16 %v502
    %v4203 = vunpack.c.l.b16 %v503
    %v4204 = vunpack.c.h.b16 %v503
    %v4205 = vunpack.c.l.b16 %v504
    %v4206 = vunpack.c.h.b16 %v504
    %v4207 = vunpack.c.l.b16 %v505
    %v4208 = vunpack.c.h.b16 %v505
    %v4209 = vunpack.c.l.b16 %v506
    %v4210 = vunpack.c.h.b16 %v506
    %v4211 = vunpack.c.l.b16 %v507
    %v4212 = vunpack.c.h.b16 %v507
    %v4213 = vunpack.c.l.b16 %v508
    %v4214 = vunpack.c.h.b16 %v508
    %v4215 = vunpack.c.l.b16 %v509
    %v4216 = vunpack.c.h.b16 %v509
    %v4217 = vunpack.c.l.b16 %v510
    %v4218 = vunpack.c.h.b16 %v510
    %v4219 = vunpack.c.l.b16 %v511
    %v4220 = vunpack.c.h.b16 %v511
    %v4221 = vunpack.c.l.b16 %v512
    %v4222 = vunpack.c.h.b16 %v512
    %v4223 = vunpack.c.l.b16 %v513
    %v4224 = vunpack.c.h.b16 %v513
    %v4225 = vunpack.c.l.b16 %v514
    %v4226 = vunpack.c.h.b16 %v514
    %v4227 = vunpack.c.l.b16 %v515
    %v4228 = vunpack.c.h.b16 %v515
    %v4229 = vunpack.c.l.b16 %v516
    %v4230 = vunpack.c.h.b16 %v516
    %v4231 = vunpack.c.l.b16 %v517
    %v4232 = vunpack.c.h.b16 %v517
    %v4233 = vunpack.c.l.b16 %v518
    %v4234 = vunpack.c.h.b16 %v518
    %v4235 = vunpack.c.l.b16 %v519
    %v4236 = vunpack.c.h.b16 %v519
    %v4237 = vunpack.c.l.b16 %v520
    %v4238 = vunpack.c.h.b16 %v520
    %v4239 = vunpack.c.l.b16 %v521
    %v4240 = vunpack.c.h.b16 %v521
    %v4241 = vunpack.c.l.b16 %v522
    %v4242 = vunpack.c.h.b16 %v522
    %v4243 = vunpack.c.l.b16 %v523
    %v4244 = vunpack.c.h.b16 %v523
    %v4245 = vunpack.c.l.b16 %v524
    %v4246 = vunpack.c.h.b16 %v524
    %v4247 = vunpack.c.l.b16 %v525
    %v4248 = vunpack.c.h.b16 %v525
    %v4249 = vunpack.c.l.b16 %v526
    %v4250 = vunpack.c.h.b16 %v526
    %v4251 = vunpack.c.l.b16 %v527
    %v4252 = vunpack.c.h.b16 %v527
    %v4253 = vunpack.c.l.b16 %v528
    %v4254 = vunpack.c.h.b16 %v528
    %v4255 = vunpack.c.l.b16 %v529
    %v4256 = vunpack.c.h.b16 %v529
    %v4257 = vunpack.c.l.b16 %v530
    %v4258 = vunpack.c.h.b16 %v530
    %v4259 = vunpack.c.l.b16 %v531
    %v4260 = vunpack.c.h.b16 %v531
    %v4261 = vunpack.c.l.b16 %v532
    %v4262 = vunpack.c.h.b16 %v532
    %v4263 = vunpack.c.l.b16 %v533
    %v4264 = vunpack.c.h.b16 %v533
    %v4265 = vunpack.c.l.b16 %v534
    %v4266 = vunpack.c.h.b16 %v534
    %v4267 = vunpack.c.l.b16 %v535
    %v4268 = vunpack.c.h.b16 %v535
    %v4269 = vunpack.c.l.b16 %v536
    %v4270 = vunpack.c.h.b16 %v536
    %v4271 = vunpack.c.l.b16 %v537
    %v4272 = vunpack.c.h.b16 %v537
    %v4273 = vunpack.c.l.b16 %v538
    %v4274 = vunpack.c.h.b16 %v538
    %v4275 = vunpack.c.l.b16 %v539
    %v4276 = vunpack.c.h.b16 %v539
    %v4277 = vunpack.c.l.b16 %v540
    %v4278 = vunpack.c.h.b16 %v540
    %v4279 = vunpack.c.l.b16 %v541
    %v4280 = vunpack.c.h.b16 %v541
    %v4281 = vunpack.c.l.b16 %v542
    %v4282 = vunpack.c.h.b16 %v542
    %v4283 = vunpack.c.l.b16 %v543
    %v4284 = vunpack.c.h.b16 %v543
    %v4285 = vunpack.c.l.b16 %v544
    %v4286 = vunpack.c.h.b16 %v544
    %v4287 = vunpack.c.l.b16 %v545
    %v4288 = vunpack.c.h.b16 %v545
    %v4289 = vunpack.c.l.b16 %v546
    %v4290 = vunpack.c.h.b16 %v546
    %v4291 = vunpack.c.l.b16 %v547
    %v4292 = vunpack.c.h.b16 %v547
    %v4293 = vunpack.c.l.b16 %v548
    %v4294 = vunpack.c.h.b16 %v548
    %v4295 = vunpack.c.l.b16 %v549
    %v4296 = vunpack.c.h.b16 %v549
    %v4297 = vunpack.c.l.b16 %v550
    %v4298 = vunpack.c.h.b16 %v550
    %v4299 = vunpack.c.l.b16 %v551
    %v4300 = vunpack.c.h.b16 %v551
    %v4301 = vunpack.c.l.b16 %v552
    %v4302 = vunpack.c.h.b16 %v552
    %v4303 = vunpack.c.l.b16 %v553
    %v4304 = vunpack.c.h.b16 %v553
    %v4305 = vunpack.c.l.b16 %v554
    %v4306 = vunpack.c.h.b16 %v554
    %v4307 = vunpack.c.l.b16 %v555
    %v4308 = vunpack.c.h.b16 %v555
    %v4309 = vunpack.c.l.b16 %v556
    %v4310 = vunpack.c.h.b16 %v556
    %v4311 = vunpack.c.l.b16 %v557
    %v4312 = vunpack.c.h.b16 %v557
    %v4313 = vunpack.c.l.b16 %v558
    %v4314 = vunpack.c.h.b16 %v558
    %v4315 = vunpack.c.l.b16 %v559
    %v4316 = vunpack.c.h.b16 %v559
    %v4317 = vunpack.c.l.b16 %v560
    %v4318 = vunpack.c.h.b16 %v560
    %v4319 = vunpack.c.l.b16 %v561
    %v4320 = vunpack.c.h.b16 %v561
    %v4321 = vunpack.c.l.b16 %v562
    %v4322 = vunpack.c.h.b16 %v562
    %v4323 = vunpack.c.l.b16 %v563
    %v4324 = vunpack.c.h.b16 %v563
    %v4325 = vunpack.c.l.b16 %v564
    %v4326 = vunpack.c.h.b16 %v564
    %v4327 = vunpack.c.l.b16 %v565
    %v4328 = vunpack.c.h.b16 %v565
    %v4329 = vunpack.c.l.b16 %v566
    %v4330 = vunpack.c.h.b16 %v566
    %v4331 = vunpack.c.l.b16 %v567
    %v4332 = vunpack.c.h.b16 %v567
    %v4333 = vunpack.c.l.b16 %v568
    %v4334 = vunpack.c.h.b16 %v568
    %v4335 = vunpack.c.l.b16 %v569
    %v4336 = vunpack.c.h.b16 %v569
    %v4337 = vunpack.c.l.b16 %v570
    %v4338 = vunpack.c.h.b16 %v570
    %v4339 = vunpack.c.l.b16 %v571
    %v4340 = vunpack.c.h.b16 %v571
    %v4341 = vunpack.c.l.b16 %v572
    %v4342 = vunpack.c.h.b16 %v572
    %v4343 = vunpack.c.l.b16 %v573
    %v4344 = vunpack.c.h.b16 %v573
    %v4345 = vunpack.c.l.b16 %v574
    %v4346 = vunpack.c.h.b16 %v574
    %v4347 = vunpack.c.l.b16 %v575
    %v4348 = vunpack.c.h.b16 %v575
    %v4349 = vunpack.c.l.b16 %v576
    %v4350 = vunpack.c.h.b16 %v576
    %v4351 = vunpack.c.l.b16 %v577
    %v4352 = vunpack.c.h.b16 %v577
    %v4353 = vunpack.c.l.b16 %v578
    %v4354 = vunpack.c.h.b16 %v578
    %v4355 = vunpack.c.l.b16 %v579
    %v4356 = vunpack.c.h.b16 %v579
    %v4357 = vunpack.c.l.b16 %v580
    %v4358 = vunpack.c.h.b16 %v580
    %v4359 = vunpack.c.l.b16 %v581
    %v4360 = vunpack.c.h.b16 %v581
    %v4361 = vunpack.c.l.b16 %v582
    %v4362 = vunpack.c.h.b16 %v582
    %v4363 = vunpack.c.l.b16 %v583
    %v4364 = vunpack.c.h.b16 %v583
    %v4365 = vunpack.c.l.b16 %v584
    %v4366 = vunpack.c.h.b16 %v584
    %v4367 = vunpack.c.l.b16 %v585
    %v4368 = vunpack.c.h.b16 %v585
    %v4369 = vunpack.c.l.b16 %v586
    %v4370 = vunpack.c.h.b16 %v586
    %v4371 = vunpack.c.l.b16 %v587
    %v4372 = vunpack.c.h.b16 %v587
    %v4373 = vunpack.c.l.b16 %v588
    %v4374 = vunpack.c.h.b16 %v588
    %v4375 = vunpack.c.l.b16 %v589
    %v4376 = vunpack.c.h.b16 %v589
    %v4377 = vunpack.c.l.b16 %v590
    %v4378 = vunpack.c.h.b16 %v590
    %v4379 = vunpack.c.l.b16 %v591
    %v4380 = vunpack.c.h.b16 %v591
    %v4381 = vunpack.c.l.b16 %v592
    %v4382 = vunpack.c.h.b16 %v592
    %v4383 = vunpack.c.l.b16 %v593
    %v4384 = vunpack.c.h.b16 %v593
    %v4385 = vunpack.c.l.b16 %v594
    %v4386 = vunpack.c.h.b16 %v594
    %v4387 = vunpack.c.l.b16 %v595
    %v4388 = vunpack.c.h.b16 %v595
    %v4389 = vunpack.c.l.b16 %v596
    %v4390 = vunpack.c.h.b16 %v596
    %v4391 = vunpack.c.l.b16 %v597
    %v4392 = vunpack.c.h.b16 %v597
    %v4393 = vunpack.c.l.b16 %v598
    %v4394 = vunpack.c.h.b16 %v598
    %v4395 = vunpack.c.l.b16 %v599
    %v4396 = vunpack.c.h.b16 %v599
    %v4397 = vunpack.c.l.b16 %v600
    %v4398 = vunpack.c.h.b16 %v600
    %v4399 = vunpack.c.l.b16 %v601
    %v4400 = vunpack.c.h.b16 %v601
    %v4401 = vunpack.c.l.b16 %v602
    %v4402 = vunpack.c.h.b16 %v602
    %v4403 = vunpack.c.l.b16 %v603
    %v4404 = vunpack.c.h.b16 %v603
    %v4405 = vunpack.c.l.b16 %v604
    %v4406 = vunpack.c.h.b16 %v604
    %v4407 = vunpack.c.l.b16 %v605
    %v4408 = vunpack.c.h.b16 %v605
    %v4409 = vunpack.c.l.b16 %v606
    %v4410 = vunpack.c.h.b16 %v606
    %v4411 = vunpack.c.l.b16 %v607
    %v4412 = vunpack.c.h.b16 %v607
    %v4413 = vunpack.c.l.b16 %v608
    %v4414 = vunpack.c.h.b16 %v608
    %v4415 = vunpack.c.l.b16 %v609
    %v4416 = vunpack.c.h.b16 %v609
    %v4417 = vunpack.c.l.b16 %v610
    %v4418 = vunpack.c.h.b16 %v610
    %v4419 = vunpack.c.l.b16 %v611
    %v4420 = vunpack.c.h.b16 %v611
    %v4421 = vunpack.c.l.b16 %v612
    %v4422 = vunpack.c.h.b16 %v612
    %v4423 = vunpack.c.l.b16 %v613
    %v4424 = vunpack.c.h.b16 %v613
    %v4425 = vunpack.c.l.b16 %v614
    %v4426 = vunpack.c.h.b16 %v614
    %v4427 = vunpack.c.l.b16 %v615
    %v4428 = vunpack.c.h.b16 %v615
    %v4429 = vunpack.c.l.b16 %v616
    %v4430 = vunpack.c.h.b16 %v616
    %v4431 = vunpack.c.l.b16 %v617
    %v4432 = vunpack.c.h.b16 %v617
    %v4433 = vunpack.c.l.b16 %v618
    %v4434 = vunpack.c.h.b16 %v618
    %v4435 = vunpack.c.l.b16 %v619
    %v4436 = vunpack.c.h.b16 %v619
    %v4437 = vunpack.c.l.b16 %v620
    %v4438 = vunpack.c.h.b16 %v620
    %v4439 = vunpack.c.l.b16 %v621
    %v4440 = vunpack.c.h.b16 %v621
    %v4441 = vunpack.c.l.b16 %v622
    %v4442 = vunpack.c.h.b16 %v622
    %v4443 = vunpack.c.l.b16 %v623
    %v4444 = vunpack.c.h.b16 %v623
    %v4445 = vunpack.c.l.b16 %v624
    %v4446 = vunpack.c.h.b16 %v624
    %v4447 = vunpack.c.l.b16 %v625
    %v4448 = vunpack.c.h.b16 %v625
    %v4449 = vunpack.c.l.b16 %v626
    %v4450 = vunpack.c.h.b16 %v626
    %v4451 = vunpack.c.l.b16 %v627
    %v4452 = vunpack.c.h.b16 %v627
    %v4453 = vunpack.c.l.b16 %v628
    %v4454 = vunpack.c.h.b16 %v628
    %v4455 = vunpack.c.l.b16 %v629
    %v4456 = vunpack.c.h.b16 %v629
    %v4457 = vunpack.c.l.b16 %v630
    %v4458 = vunpack.c.h.b16 %v630
    %v4459 = vunpack.c.l.b16 %v631
    %v4460 = vunpack.c.h.b16 %v631
    %v4461 = vunpack.c.l.b16 %v632
    %v4462 = vunpack.c.h.b16 %v632
    %v4463 = vunpack.c.l.b16 %v633
    %v4464 = vunpack.c.h.b16 %v633
    %v4465 = vunpack.c.l.b16 %v634
    %v4466 = vunpack.c.h.b16 %v634
    %v4467 = vunpack.c.l.b16 %v635
    %v4468 = vunpack.c.h.b16 %v635
    %v4469 = vunpack.c.l.b16 %v636
    %v4470 = vunpack.c.h.b16 %v636
    %v4471 = vunpack.c.l.b16 %v637
    %v4472 = vunpack.c.h.b16 %v637
    %v4473 = vunpack.c.l.b16 %v638
    %v4474 = vunpack.c.h.b16 %v638
    %v4475 = vunpack.c.l.b16 %v639
    %v4476 = vunpack.c.h.b16 %v639
    %v4477 = vunpack.c.l.b16 %v640
    %v4478 = vunpack.c.h.b16 %v640
    %v4479 = vunpack.c.l.b16 %v641
    %v4480 = vunpack.c.h.b16 %v641
    %v4481 = vunpack.c.l.b16 %v642
    %v4482 = vunpack.c.h.b16 %v642
    %v4483 = vunpack.c.l.b16 %v643
    %v4484 = vunpack.c.h.b16 %v643
    %v4485 = vunpack.c.l.b16 %v644
    %v4486 = vunpack.c.h.b16 %v644
    %v4487 = vunpack.c.l.b16 %v645
    %v4488 = vunpack.c.h.b16 %v645
    %v4489 = vunpack.c.l.b16 %v646
    %v4490 = vunpack.c.h.b16 %v646
    %v4491 = vunpack.c.l.b16 %v647
    %v4492 = vunpack.c.h.b16 %v647
    %v4493 = vunpack.c.l.b16 %v648
    %v4494 = vunpack.c.h.b16 %v648
    %v4495 = vunpack.c.l.b16 %v649
    %v4496 = vunpack.c.h.b16 %v649
    %v4497 = vunpack.c.l.b16 %v650
    %v4498 = vunpack.c.h.b16 %v650
    %v4499 = vunpack.c.l.b16 %v651
    %v4500 = vunpack.c.h.b16 %v651
    %v4501 = vunpack.c.l.b16 %v652
    %v4502 = vunpack.c.h.b16 %v652
    %v4503 = vunpack.c.l.b16 %v653
    %v4504 = vunpack.c.h.b16 %v653
    %v4505 = vunpack.c.l.b16 %v654
    %v4506 = vunpack.c.h.b16 %v654
    %v4507 = vunpack.c.l.b16 %v655
    %v4508 = vunpack.c.h.b16 %v655
    %v4509 = vunpack.c.l.b16 %v656
    %v4510 = vunpack.c.h.b16 %v656
    %v4511 = vunpack.c.l.b16 %v657
    %v4512 = vunpack.c.h.b16 %v657
    %v4513 = vunpack.c.l.b16 %v658
    %v4514 = vunpack.c.h.b16 %v658
    %v4515 = vunpack.c.l.b16 %v659
    %v4516 = vunpack.c.h.b16 %v659
    %v4517 = vunpack.c.l.b16 %v660
    %v4518 = vunpack.c.h.b16 %v660
    %v4519 = vunpack.c.l.b16 %v661
    %v4520 = vunpack.c.h.b16 %v661
    %v4521 = vunpack.c.l.b16 %v662
    %v4522 = vunpack.c.h.b16 %v662
    %v4523 = vunpack.c.l.b16 %v663
    %v4524 = vunpack.c.h.b16 %v663
    %v4525 = vunpack.c.l.b16 %v664
    %v4526 = vunpack.c.h.b16 %v664
    %v4527 = vunpack.c.l.b16 %v665
    %v4528 = vunpack.c.h.b16 %v665
    %v4529 = vunpack.c.l.b16 %v666
    %v4530 = vunpack.c.h.b16 %v666
    %v4531 = vunpack.c.l.b16 %v667
    %v4532 = vunpack.c.h.b16 %v667
    %v4533 = vunpack.c.l.b16 %v668
    %v4534 = vunpack.c.h.b16 %v668
    %v4535 = vunpack.c.l.b16 %v669
    %v4536 = vunpack.c.h.b16 %v669
    %v4537 = vunpack.c.l.b16 %v670
    %v4538 = vunpack.c.h.b16 %v670
    %v4539 = vunpack.c.l.b16 %v671
    %v4540 = vunpack.c.h.b16 %v671
    %v4541 = vunpack.c.l.b16 %v672
    %v4542 = vunpack.c.h.b16 %v672
    %v4543 = vunpack.c.l.b16 %v673
    %v4544 = vunpack.c.h.b16 %v673
    %v4545 = vunpack.c.l.b16 %v674
    %v4546 = vunpack.c.h.b16 %v674
    %v4547 = vunpack.c.l.b16 %v675
    %v4548 = vunpack.c.h.b16 %v675
    %v4549 = vunpack.c.l.b16 %v676
    %v4550 = vunpack.c.h.b16 %v676
    %v4551 = vunpack.c.l.b16 %v677
    %v4552 = vunpack.c.h.b16 %v677
    %v4553 = vunpack.c.l.b16 %v678
    %v4554 = vunpack.c.h.b16 %v678
    %v4555 = vunpack.c.l.b16 %v679
    %v4556 = vunpack.c.h.b16 %v679
    %v4557 = vunpack.c.l.b16 %v680
    %v4558 = vunpack.c.h.b16 %v680
    %v4559 = vunpack.c.l.b16 %v681
    %v4560 = vunpack.c.h.b16 %v681
    %v4561 = vunpack.c.l.b16 %v682
    %v4562 = vunpack.c.h.b16 %v682
    %v4563 = vunpack.c.l.b16 %v683
    %v4564 = vunpack.c.h.b16 %v683
    %v4565 = vunpack.c.l.b16 %v684
    %v4566 = vunpack.c.h.b16 %v684
    %v4567 = vunpack.c.l.b16 %v685
    %v4568 = vunpack.c.h.b16 %v685
    %v4569 = vunpack.c.l.b16 %v686
    %v4570 = vunpack.c.h.b16 %v686
    %v4571 = vunpack.c.l.b16 %v687
    %v4572 = vunpack.c.h.b16 %v687
    %v4573 = vunpack.c.l.b16 %v688
    %v4574 = vunpack.c.h.b16 %v688
    %v4575 = vunpack.c.l.b16 %v689
    %v4576 = vunpack.c.h.b16 %v689
    %v4577 = vunpack.c.l.b16 %v690
    %v4578 = vunpack.c.h.b16 %v690
    %v4579 = vunpack.c.l.b16 %v691
    %v4580 = vunpack.c.h.b16 %v691
    %v4581 = vunpack.c.l.b16 %v692
    %v4582 = vunpack.c.h.b16 %v692
    %v4583 = vunpack.c.l.b16 %v693
    %v4584 = vunpack.c.h.b16 %v693
    %v4585 = vunpack.c.l.b16 %v694
    %v4586 = vunpack.c.h.b16 %v694
    %v4587 = vunpack.c.l.b16 %v695
    %v4588 = vunpack.c.h.b16 %v695
    %v4589 = vunpack.c.l.b16 %v696
    %v4590 = vunpack.c.h.b16 %v696
    %v4591 = vunpack.c.l.b16 %v697
    %v4592 = vunpack.c.h.b16 %v697
    %v4593 = vunpack.c.l.b16 %v698
    %v4594 = vunpack.c.h.b16 %v698
    %v4595 = vunpack.c.l.b16 %v699
    %v4596 = vunpack.c.h.b16 %v699
    %v4597 = vunpack.c.l.b16 %v700
    %v4598 = vunpack.c.h.b16 %v700
    %v4599 = vunpack.c.l.b16 %v701
    %v4600 = vunpack.c.h.b16 %v701
    %v4601 = vunpack.c.l.b16 %v702
    %v4602 = vunpack.c.h.b16 %v702
    %v4603 = vunpack.c.l.b16 %v703
    %v4604 = vunpack.c.h.b16 %v703
    %v4605 = vunpack.c.l.b16 %v704
    %v4606 = vunpack.c.h.b16 %v704
    %v4607 = vunpack.c.l.b16 %v705
    %v4608 = vunpack.c.h.b16 %v705
    %v4609 = vunpack.c.l.b16 %v706
    %v4610 = vunpack.c.h.b16 %v706
    %v4611 = vunpack.c.l.b16 %v707
    %v4612 = vunpack.c.h.b16 %v707
    %v4613 = vunpack.c.l.b16 %v708
    %v4614 = vunpack.c.h.b16 %v708
    %v4615 = vunpack.c.l.b16 %v709
    %v4616 = vunpack.c.h.b16 %v709
    %v4617 = vunpack.c.l.b16 %v710
    %v4618 = vunpack.c.h.b16 %v710
    %v4619 = vunpack.c.l.b16 %v711
    %v4620 = vunpack.c.h.b16 %v711
    %v4621 = vunpack.c.l.b16 %v712
    %v4622 = vunpack.c.h.b16 %v712
    %v4623 = vunpack.c.l.b16 %v713
    %v4624 = vunpack.c.h.b16 %v713
    %v4625 = vunpack.c.l.b16 %v714
    %v4626 = vunpack.c.h.b16 %v714
    %v4627 = vunpack.c.l.b16 %v715
    %v4628 = vunpack.c.h.b16 %v715
    %v4629 = vunpack.c.l.b16 %v716
    %v4630 = vunpack.c.h.b16 %v716
    %v4631 = vunpack.c.l.b16 %v717
    %v4632 = vunpack.c.h.b16 %v717
    %v4633 = vunpack.c.l.b16 %v718
    %v4634 = vunpack.c.h.b16 %v718
    %v4635 = vunpack.c.l.b16 %v719
    %v4636 = vunpack.c.h.b16 %v719
    %v4637 = vunpack.c.l.b16 %v720
    %v4638 = vunpack.c.h.b16 %v720
    %v4639 = vunpack.c.l.b16 %v721
    %v4640 = vunpack.c.h.b16 %v721
    %v4641 = vunpack.c.l.b16 %v722
    %v4642 = vunpack.c.h.b16 %v722
    %v4643 = vunpack.c.l.b16 %v723
    %v4644 = vunpack.c.h.b16 %v723
    %v4645 = vunpack.c.l.b16 %v724
    %v4646 = vunpack.c.h.b16 %v724
    %v4647 = vunpack.c.l.b16 %v725
    %v4648 = vunpack.c.h.b16 %v725
    %v4649 = vunpack.c.l.b16 %v726
    %v4650 = vunpack.c.h.b16 %v726
    %v4651 = vunpack.c.l.b16 %v727
    %v4652 = vunpack.c.h.b16 %v727
    %v4653 = vunpack.c.l.b16 %v728
    %v4654 = vunpack.c.h.b16 %v728
    %v4655 = vunpack.c.l.b16 %v729
    %v4656 = vunpack.c.h.b16 %v729
    %v4657 = vunpack.c.l.b16 %v730
    %v4658 = vunpack.c.h.b16 %v730
    %v4659 = vunpack.c.l.b16 %v731
    %v4660 = vunpack.c.h.b16 %v731
    %v4661 = vunpack.c.l.b16 %v732
    %v4662 = vunpack.c.h.b16 %v732
    %v4663 = vunpack.c.l.b16 %v733
    %v4664 = vunpack.c.h.b16 %v733
    %v4665 = vunpack.c.l.b16 %v734
    %v4666 = vunpack.c.h.b16 %v734
    %v4667 = vunpack.c.l.b16 %v735
    %v4668 = vunpack.c.h.b16 %v735
    %v4669 = vunpack.c.l.b16 %v736
    %v4670 = vunpack.c.h.b16 %v736
    %v4671 = vunpack.c.l.b16 %v737
    %v4672 = vunpack.c.h.b16 %v737
    %v4673 = vunpack.c.l.b16 %v738
    %v4674 = vunpack.c.h.b16 %v738
    %v4675 = vunpack.c.l.b16 %v739
    %v4676 = vunpack.c.h.b16 %v739
    %v4677 = vunpack.c.l.b16 %v740
    %v4678 = vunpack.c.h.b16 %v740
    %v4679 = vunpack.c.l.b16 %v741
    %v4680 = vunpack.c.h.b16 %v741
    %v4681 = vunpack.c.l.b16 %v742
    %v4682 = vunpack.c.h.b16 %v742
    %v4683 = vunpack.c.l.b16 %v743
    %v4684 = vunpack.c.h.b16 %v743
    %v4685 = vunpack.c.l.b16 %v744
    %v4686 = vunpack.c.h.b16 %v744
    %v4687 = vunpack.c.l.b16 %v745
    %v4688 = vunpack.c.h.b16 %v745
    %v4689 = vunpack.c.l.b16 %v746
    %v4690 = vunpack.c.h.b16 %v746
    %v4691 = vunpack.c.l.b16 %v747
    %v4692 = vunpack.c.h.b16 %v747
    %v4693 = vunpack.c.l.b16 %v748
    %v4694 = vunpack.c.h.b16 %v748
    %v4695 = vunpack.c.l.b16 %v749
    %v4696 = vunpack.c.h.b16 %v749
    %v4697 = vunpack.c.l.b16 %v750
    %v4698 = vunpack.c.h.b16 %v750
    %v4699 = vunpack.c.l.b16 %v751
    %v4700 = vunpack.c.h.b16 %v751
    %v4701 = vunpack.c.l.b16 %v752
    %v4702 = vunpack.c.h.b16 %v752
    %v4703 = vunpack.c.l.b16 %v753
    %v4704 = vunpack.c.h.b16 %v753
    %v4705 = vunpack.c.l.b16 %v754
    %v4706 = vunpack.c.h.b16 %v754
    %v4707 = vunpack.c.l.b16 %v755
    %v4708 = vunpack.c.h.b16 %v755
    %v4709 = vunpack.c.l.b16 %v756
    %v4710 = vunpack.c.h.b16 %v756
    %v4711 = vunpack.c.l.b16 %v757
    %v4712 = vunpack.c.h.b16 %v757
    %v4713 = vunpack.c.l.b16 %v758
    %v4714 = vunpack.c.h.b16 %v758
    %v4715 = vunpack.c.l.b16 %v759
    %v4716 = vunpack.c.h.b16 %v759
    %v4717 = vunpack.c.l.b16 %v760
    %v4718 = vunpack.c.h.b16 %v760
    %v4719 = vunpack.c.l.b16 %v761
    %v4720 = vunpack.c.h.b16 %v761
    %v4721 = vunpack.c.l.b16 %v762
    %v4722 = vunpack.c.h.b16 %v762
    %v4723 = vunpack.c.l.b16 %v763
    %v4724 = vunpack.c.h.b16 %v763
    %v4725 = vunpack.c.l.b16 %v764
    %v4726 = vunpack.c.h.b16 %v764
    %v4727 = vunpack.c.l.b16 %v765
    %v4728 = vunpack.c.h.b16 %v765
    %v4729 = vunpack.c.l.b16 %v766
    %v4730 = vunpack.c.h.b16 %v766
    %v4731 = vunpack.c.l.b16 %v767
    %v4732 = vunpack.c.h.b16 %v767
    %v4733 = vunpack.c.l.b16 %v768
    %v4734 = vunpack.c.h.b16 %v768
    %v4735 = vunpack.c.l.b16 %v769
    %v4736 = vunpack.c.h.b16 %v769
    %v4737 = vunpack.c.l.b16 %v770
    %v4738 = vunpack.c.h.b16 %v770
    %v4739 = vunpack.c.l.b16 %v771
    %v4740 = vunpack.c.h.b16 %v771
    %v4741 = vunpack.c.l.b16 %v772
    %v4742 = vunpack.c.h.b16 %v772
    %v4743 = vunpack.c.l.b16 %v773
    %v4744 = vunpack.c.h.b16 %v773
    %v4745 = vunpack.c.l.b16 %v774
    %v4746 = vunpack.c.h.b16 %v774
    %v4747 = vunpack.c.l.b16 %v775
    %v4748 = vunpack.c.h.b16 %v775
    %v4749 = vunpack.c.l.b16 %v776
    %v4750 = vunpack.c.h.b16 %v776
    %v4751 = vunpack.c.l.b16 %v777
    %v4752 = vunpack.c.h.b16 %v777
    %v4753 = vunpack.c.l.b16 %v778
    %v4754 = vunpack.c.h.b16 %v778
    %v4755 = vunpack.c.l.b16 %v779
    %v4756 = vunpack.c.h.b16 %v779
    %v4757 = vunpack.c.l.b16 %v780
    %v4758 = vunpack.c.h.b16 %v780
    %v4759 = vunpack.c.l.b16 %v781
    %v4760 = vunpack.c.h.b16 %v781
    %v4761 = vunpack.c.l.b16 %v782
    %v4762 = vunpack.c.h.b16 %v782
    %v4763 = vunpack.c.l.b16 %v783
    %v4764 = vunpack.c.h.b16 %v783
    %v4765 = vunpack.c.l.b16 %v784
    %v4766 = vunpack.c.h.b16 %v784
    %v4767 = vunpack.c.l.b16 %v785
    %v4768 = vunpack.c.h.b16 %v785
    %v4769 = vunpack.c.l.b16 %v786
    %v4770 = vunpack.c.h.b16 %v786
    %v4771 = vunpack.c.l.b16 %v787
    %v4772 = vunpack.c.h.b16 %v787
    %v4773 = vunpack.c.l.b16 %v788
    %v4774 = vunpack.c.h.b16 %v788
    %v4775 = vunpack.c.l.b16 %v789
    %v4776 = vunpack.c.h.b16 %v789
    %v4777 = vunpack.c.l.b16 %v790
    %v4778 = vunpack.c.h.b16 %v790
    %v4779 = vunpack.c.l.b16 %v791
    %v4780 = vunpack.c.h.b16 %v791
    %v4781 = vunpack.c.l.b16 %v792
    %v4782 = vunpack.c.h.b16 %v792
    %v4783 = vunpack.c.l.b16 %v793
    %v4784 = vunpack.c.h.b16 %v793
    %v4785 = vunpack.c.l.b16 %v794
    %v4786 = vunpack.c.h.b16 %v794
    %v4787 = vunpack.c.l.b16 %v795
    %v4788 = vunpack.c.h.b16 %v795
    %v4789 = vunpack.c.l.b16 %v796
    %v4790 = vunpack.c.h.b16 %v796
    %v4791 = vunpack.c.l.b16 %v797
    %v4792 = vunpack.c.h.b16 %v797
    %v4793 = vunpack.c.l.b16 %v798
    %v4794 = vunpack.c.h.b16 %v798
    %v4795 = vunpack.c.l.b16 %v799
    %v4796 = vunpack.c.h.b16 %v799
    %v4797 = vunpack.c.l.b16 %v800
    %v4798 = vunpack.c.h.b16 %v800
    %v4799 = vunpack.c.l.b16 %v801
    %v4800 = vunpack.c.h.b16 %v801
    %v4801 = vunpack.c.l.b16 %v802
    %v4802 = vunpack.c.h.b16 %v802
    %v4803 = vunpack.c.l.b16 %v803
    %v4804 = vunpack.c.h.b16 %v803
    %v4805 = vunpack.c.l.b16 %v804
    %v4806 = vunpack.c.h.b16 %v804
    %v4807 = vunpack.c.l.b16 %v805
    %v4808 = vunpack.c.h.b16 %v805
    %v4809 = vunpack.c.l.b16 %v806
    %v4810 = vunpack.c.h.b16 %v806
    %v4811 = vunpack.c.l.b16 %v807
    %v4812 = vunpack.c.h.b16 %v807
    %v4813 = vunpack.c.l.b16 %v808
    %v4814 = vunpack.c.h.b16 %v808
    %v4815 = vunpack.c.l.b16 %v809
    %v4816 = vunpack.c.h.b16 %v809
    %v4817 = vunpack.c.l.b16 %v810
    %v4818 = vunpack.c.h.b16 %v810
    %v4819 = vunpack.c.l.b16 %v811
    %v4820 = vunpack.c.h.b16 %v811
    %v4821 = vunpack.c.l.b16 %v812
    %v4822 = vunpack.c.h.b16 %v812
    %v4823 = vunpack.c.l.b16 %v813
    %v4824 = vunpack.c.h.b16 %v813
    %v4825 = vunpack.c.l.b16 %v814
    %v4826 = vunpack.c.h.b16 %v814
    %v4827 = vunpack.c.l.b16 %v815
    %v4828 = vunpack.c.h.b16 %v815
    %v4829 = vunpack.c.l.b16 %v816
    %v4830 = vunpack.c.h.b16 %v816
    %v4831 = vunpack.c.l.b16 %v817
    %v4832 = vunpack.c.h.b16 %v817
    %v4833 = vunpack.c.l.b16 %v818
    %v4834 = vunpack.c.h.b16 %v818
    %v4835 = vunpack.c.l.b16 %v819
    %v4836 = vunpack.c.h.b16 %v819
    %v4837 = vunpack.c.l.b16 %v820
    %v4838 = vunpack.c.h.b16 %v820
    %v4839 = vunpack.c.l.b16 %v821
    %v4840 = vunpack.c.h.b16 %v821
    %v4841 = vunpack.c.l.b16 %v822
    %v4842 = vunpack.c.h.b16 %v822
    %v4843 = vunpack.c.l.b16 %v823
    %v4844 = vunpack.c.h.b16 %v823
    %v4845 = vunpack.c.l.b16 %v824
    %v4846 = vunpack.c.h.b16 %v824
    %v4847 = vunpack.c.l.b16 %v825
    %v4848 = vunpack.c.h.b16 %v825
    %v4849 = vunpack.c.l.b16 %v826
    %v4850 = vunpack.c.h.b16 %v826
    %v4851 = vunpack.c.l.b16 %v827
    %v4852 = vunpack.c.h.b16 %v827
    %v4853 = vunpack.c.l.b16 %v828
    %v4854 = vunpack.c.h.b16 %v828
    %v4855 = vunpack.c.l.b16 %v829
    %v4856 = vunpack.c.h.b16 %v829
    %v4857 = vunpack.c.l.b16 %v830
    %v4858 = vunpack.c.h.b16 %v830
    %v4859 = vunpack.c.l.b16 %v831
    %v4860 = vunpack.c.h.b16 %v831
    %v4861 = vunpack.c.l.b16 %v832
    %v4862 = vunpack.c.h.b16 %v832
    %v4863 = vunpack.c.l.b16 %v833
    %v4864 = vunpack.c.h.b16 %v833
    %v4865 = vunpack.c.l.b16 %v834
    %v4866 = vunpack.c.h.b16 %v834
    %v4867 = vunpack.c.l.b16 %v835
    %v4868 = vunpack.c.h.b16 %v835
    %v4869 = vunpack.c.l.b16 %v836
    %v4870 = vunpack.c.h.b16 %v836
    %v4871 = vunpack.c.l.b16 %v837
    %v4872 = vunpack.c.h.b16 %v837
    %v4873 = vunpack.c.l.b16 %v838
    %v4874 = vunpack.c.h.b16 %v838
    %v4875 = vunpack.c.l.b16 %v839
    %v4876 = vunpack.c.h.b16 %v839
    %v4877 = vunpack.c.l.b16 %v840
    %v4878 = vunpack.c.h.b16 %v840
    %v4879 = vunpack.c.l.b16 %v841
    %v4880 = vunpack.c.h.b16 %v841
    %v4881 = vunpack.c.l.b16 %v842
    %v4882 = vunpack.c.h.b16 %v842
    %v4883 = vunpack.c.l.b16 %v843
    %v4884 = vunpack.c.h.b16 %v843
    %v4885 = vunpack.c.l.b16 %v844
    %v4886 = vunpack.c.h.b16 %v844
    %v4887 = vunpack.c.l.b16 %v845
    %v4888 = vunpack.c.h.b16 %v845
    %v4889 = vunpack.c.l.b16 %v846
    %v4890 = vunpack.c.h.b16 %v846
    %v4891 = vunpack.c.l.b16 %v847
    %v4892 = vunpack.c.h.b16 %v847
    %v4893 = vunpack.c.l.b16 %v848
    %v4894 = vunpack.c.h.b16 %v848
    %v4895 = vunpack.c.l.b16 %v849
    %v4896 = vunpack.c.h.b16 %v849
    %v4897 = vunpack.c.l.b16 %v850
    %v4898 = vunpack.c.h.b16 %v850
    %v4899 = vunpack.c.l.b16 %v851
    %v4900 = vunpack.c.h.b16 %v851
    %v4901 = vunpack.c.l.b16 %v852
    %v4902 = vunpack.c.h.b16 %v852
    %v4903 = vunpack.c.l.b16 %v853
    %v4904 = vunpack.c.h.b16 %v853
    %v4905 = vunpack.c.l.b16 %v854
    %v4906 = vunpack.c.h.b16 %v854
    %v4907 = vunpack.c.l.b16 %v855
    %v4908 = vunpack.c.h.b16 %v855
    %v4909 = vunpack.c.l.b16 %v856
    %v4910 = vunpack.c.h.b16 %v856
    %v4911 = vunpack.c.l.b16 %v857
    %v4912 = vunpack.c.h.b16 %v857
    %v4913 = vunpack.c.l.b16 %v858
    %v4914 = vunpack.c.h.b16 %v858
    %v4915 = vunpack.c.l.b16 %v859
    %v4916 = vunpack.c.h.b16 %v859
    %v4917 = vunpack.c.l.b16 %v860
    %v4918 = vunpack.c.h.b16 %v860
    %v4919 = vunpack.c.l.b16 %v861
    %v4920 = vunpack.c.h.b16 %v861
    %v4921 = vunpack.c.l.b16 %v862
    %v4922 = vunpack.c.h.b16 %v862
    %v4923 = vunpack.c.l.b16 %v863
    %v4924 = vunpack.c.h.b16 %v863
    %v4925 = vunpack.c.l.b16 %v864
    %v4926 = vunpack.c.h.b16 %v864
    %v4927 = vunpack.c.l.b16 %v865
    %v4928 = vunpack.c.h.b16 %v865
    %v4929 = vunpack.c.l.b16 %v866
    %v4930 = vunpack.c.h.b16 %v866
    %v4931 = vunpack.c.l.b16 %v867
    %v4932 = vunpack.c.h.b16 %v867
    %v4933 = vunpack.c.l.b16 %v868
    %v4934 = vunpack.c.h.b16 %v868
    %v4935 = vunpack.c.l.b16 %v869
    %v4936 = vunpack.c.h.b16 %v869
    %v4937 = vunpack.c.l.b16 %v870
    %v4938 = vunpack.c.h.b16 %v870
    %v4939 = vunpack.c.l.b16 %v871
    %v4940 = vunpack.c.h.b16 %v871
    %v4941 = vunpack.c.l.b16 %v872
    %v4942 = vunpack.c.h.b16 %v872
    %v4943 = vunpack.c.l.b16 %v873
    %v4944 = vunpack.c.h.b16 %v873
    %v4945 = vunpack.c.l.b16 %v874
    %v4946 = vunpack.c.h.b16 %v874
    %v4947 = vunpack.c.l.b16 %v875
    %v4948 = vunpack.c.h.b16 %v875
    %v4949 = vunpack.c.l.b16 %v876
    %v4950 = vunpack.c.h.b16 %v876
    %v4951 = vunpack.c.l.b16 %v877
    %v4952 = vunpack.c.h.b16 %v877
    %v4953 = vunpack.c.l.b16 %v878
    %v4954 = vunpack.c.h.b16 %v878
    %v4955 = vunpack.c.l.b16 %v879
    %v4956 = vunpack.c.h.b16 %v879
    %v4957 = vunpack.c.l.b16 %v880
    %v4958 = vunpack.c.h.b16 %v880
    %v4959 = vunpack.c.l.b16 %v881
    %v4960 = vunpack.c.h.b16 %v881
    %v4961 = vunpack.c.l.b16 %v882
    %v4962 = vunpack.c.h.b16 %v882
    %v4963 = vunpack.c.l.b16 %v883
    %v4964 = vunpack.c.h.b16 %v883
    %v4965 = vunpack.c.l.b16 %v884
    %v4966 = vunpack.c.h.b16 %v884
    %v4967 = vunpack.c.l.b16 %v885
    %v4968 = vunpack.c.h.b16 %v885
    %v4969 = vunpack.c.l.b16 %v886
    %v4970 = vunpack.c.h.b16 %v886
    %v4971 = vunpack.c.l.b16 %v887
    %v4972 = vunpack.c.h.b16 %v887
    %v4973 = vunpack.c.l.b16 %v888
    %v4974 = vunpack.c.h.b16 %v888
    %v4975 = vunpack.c.l.b16 %v889
    %v4976 = vunpack.c.h.b16 %v889
    %v4977 = vunpack.c.l.b16 %v890
    %v4978 = vunpack.c.h.b16 %v890
    %v4979 = vunpack.c.l.b16 %v891
    %v4980 = vunpack.c.h.b16 %v891
    %v4981 = vunpack.c.l.b16 %v892
    %v4982 = vunpack.c.h.b16 %v892
    %v4983 = vunpack.c.l.b16 %v893
    %v4984 = vunpack.c.h.b16 %v893
    %v4985 = vunpack.c.l.b16 %v894
    %v4986 = vunpack.c.h.b16 %v894
    %v4987 = vunpack.c.l.b16 %v895
    %v4988 = vunpack.c.h.b16 %v895
    %v4989 = vunpack.c.l.b16 %v896
    %v4990 = vunpack.c.h.b16 %v896
    %v4991 = vunpack.c.l.b16 %v897
    %v4992 = vunpack.c.h.b16 %v897
    %v4993 = vunpack.c.l.b16 %v898
    %v4994 = vunpack.c.h.b16 %v898
    %v4995 = vunpack.c.l.b16 %v899
    %v4996 = vunpack.c.h.b16 %v899
    %v4997 = vunpack.c.l.b16 %v900
    %v4998 = vunpack.c.h.b16 %v900
    %v4999 = vunpack.c.l.b16 %v901
    %v5000 = vunpack.c.h.b16 %v901
    %v5001 = vunpack.c.l.b16 %v902
    %v5002 = vunpack.c.h.b16 %v902
    %v5003 = vunpack.c.l.b16 %v903
    %v5004 = vunpack.c.h.b16 %v903
    %v5005 = vunpack.c.l.b16 %v904
    %v5006 = vunpack.c.h.b16 %v904
    %v5007 = vunpack.c.l.b16 %v905
    %v5008 = vunpack.c.h.b16 %v905
    %v5009 = vunpack.c.l.b16 %v906
    %v5010 = vunpack.c.h.b16 %v906
    %v5011 = vunpack.c.l.b16 %v907
    %v5012 = vunpack.c.h.b16 %v907
    %v5013 = vunpack.c.l.b16 %v908
    %v5014 = vunpack.c.h.b16 %v908
    %v5015 = vunpack.c.l.b16 %v909
    %v5016 = vunpack.c.h.b16 %v909
    %v5017 = vunpack.c.l.b16 %v910
    %v5018 = vunpack.c.h.b16 %v910
    %v5019 = vunpack.c.l.b16 %v911
    %v5020 = vunpack.c.h.b16 %v911
    %v5021 = vunpack.c.l.b16 %v912
    %v5022 = vunpack.c.h.b16 %v912
    %v5023 = vunpack.c.l.b16 %v913
    %v5024 = vunpack.c.h.b16 %v913
    %v5025 = vunpack.c.l.b16 %v914
    %v5026 = vunpack.c.h.b16 %v914
    %v5027 = vunpack.c.l.b16 %v915
    %v5028 = vunpack.c.h.b16 %v915
    %v5029 = vunpack.c.l.b16 %v916
    %v5030 = vunpack.c.h.b16 %v916
    %v5031 = vunpack.c.l.b16 %v917
    %v5032 = vunpack.c.h.b16 %v917
    %v5033 = vunpack.c.l.b16 %v918
    %v5034 = vunpack.c.h.b16 %v918
    %v5035 = vunpack.c.l.b16 %v919
    %v5036 = vunpack.c.h.b16 %v919
    %v5037 = vunpack.c.l.b16 %v920
    %v5038 = vunpack.c.h.b16 %v920
    %v5039 = vunpack.c.l.b16 %v921
    %v5040 = vunpack.c.h.b16 %v921
    %v5041 = vunpack.c.l.b16 %v922
    %v5042 = vunpack.c.h.b16 %v922
    %v5043 = vunpack.c.l.b16 %v923
    %v5044 = vunpack.c.h.b16 %v923
    %v5045 = vunpack.c.l.b16 %v924
    %v5046 = vunpack.c.h.b16 %v924
    %v5047 = vunpack.c.l.b16 %v925
    %v5048 = vunpack.c.h.b16 %v925
    %v5049 = vunpack.c.l.b16 %v926
    %v5050 = vunpack.c.h.b16 %v926
    %v5051 = vunpack.c.l.b16 %v927
    %v5052 = vunpack.c.h.b16 %v927
    %v5053 = vunpack.c.l.b16 %v928
    %v5054 = vunpack.c.h.b16 %v928
    %v5055 = vunpack.c.l.b16 %v929
    %v5056 = vunpack.c.h.b16 %v929
    %v5057 = vunpack.c.l.b16 %v930
    %v5058 = vunpack.c.h.b16 %v930
    %v5059 = vunpack.c.l.b16 %v931
    %v5060 = vunpack.c.h.b16 %v931
    %v5061 = vunpack.c.l.b16 %v932
    %v5062 = vunpack.c.h.b16 %v932
    %v5063 = vunpack.c.l.b16 %v933
    %v5064 = vunpack.c.h.b16 %v933
    %v5065 = vunpack.c.l.b16 %v934
    %v5066 = vunpack.c.h.b16 %v934
    %v5067 = vunpack.c.l.b16 %v935
    %v5068 = vunpack.c.h.b16 %v935
    %v5069 = vunpack.c.l.b16 %v936
    %v5070 = vunpack.c.h.b16 %v936
    %v5071 = vunpack.c.l.b16 %v937
    %v5072 = vunpack.c.h.b16 %v937
    %v5073 = vunpack.c.l.b16 %v938
    %v5074 = vunpack.c.h.b16 %v938
    %v5075 = vunpack.c.l.b16 %v939
    %v5076 = vunpack.c.h.b16 %v939
    %v5077 = vunpack.c.l.b16 %v940
    %v5078 = vunpack.c.h.b16 %v940
    %v5079 = vunpack.c.l.b16 %v941
    %v5080 = vunpack.c.h.b16 %v941
    %v5081 = vunpack.c.l.b16 %v942
    %v5082 = vunpack.c.h.b16 %v942
    %v5083 = vunpack.c.l.b16 %v943
    %v5084 = vunpack.c.h.b16 %v943
    %v5085 = vunpack.c.l.b16 %v944
    %v5086 = vunpack.c.h.b16 %v944
    %v5087 = vunpack.c.l.b16 %v945
    %v5088 = vunpack.c.h.b16 %v945
    %v5089 = vunpack.c.l.b16 %v946
    %v5090 = vunpack.c.h.b16 %v946
    %v5091 = vunpack.c.l.b16 %v947
    %v5092 = vunpack.c.h.b16 %v947
    %v5093 = vunpack.c.l.b16 %v948
    %v5094 = vunpack.c.h.b16 %v948
    %v5095 = vunpack.c.l.b16 %v949
    %v5096 = vunpack.c.h.b16 %v949
    %v5097 = vunpack.c.l.b16 %v950
    %v5098 = vunpack.c.h.b16 %v950
    %v5099 = vunpack.c.l.b16 %v951
    %v5100 = vunpack.c.h.b16 %v951
    %v5101 = vunpack.c.l.b16 %v952
    %v5102 = vunpack.c.h.b16 %v952
    %v5103 = vunpack.c.l.b16 %v953
    %v5104 = vunpack.c.h.b16 %v953
    %v5105 = vunpack.c.l.b16 %v954
    %v5106 = vunpack.c.h.b16 %v954
    %v5107 = vunpack.c.l.b16 %v955
    %v5108 = vunpack.c.h.b16 %v955
    %v5109 = vunpack.c.l.b16 %v956
    %v5110 = vunpack.c.h.b16 %v956
    %v5111 = vunpack.c.l.b16 %v957
    %v5112 = vunpack.c.h.b16 %v957
    %v5113 = vunpack.c.l.b16 %v958
    %v5114 = vunpack.c.h.b16 %v958
    %v5115 = vunpack.c.l.b16 %v959
    %v5116 = vunpack.c.h.b16 %v959
    %v5117 = vunpack.c.l.b16 %v960
    %v5118 = vunpack.c.h.b16 %v960
    %v5119 = vunpack.c.l.b16 %v961
    %v5120 = vunpack.c.h.b16 %v961
    %v5121 = vunpack.c.l.b16 %v962
    %v5122 = vunpack.c.h.b16 %v962
    %v5123 = vunpack.c.l.b16 %v963
    %v5124 = vunpack.c.h.b16 %v963
    %v5125 = vunpack.c.l.b16 %v964
    %v5126 = vunpack.c.h.b16 %v964
    %v5127 = vunpack.c.l.b16 %v965
    %v5128 = vunpack.c.h.b16 %v965
    %v5129 = vunpack.c.l.b16 %v966
    %v5130 = vunpack.c.h.b16 %v966
    %v5131 = vunpack.c.l.b16 %v967
    %v5132 = vunpack.c.h.b16 %v967
    %v5133 = vunpack.c.l.b16 %v968
    %v5134 = vunpack.c.h.b16 %v968
    %v5135 = vunpack.c.l.b16 %v969
    %v5136 = vunpack.c.h.b16 %v969
    %v5137 = vunpack.c.l.b16 %v970
    %v5138 = vunpack.c.h.b16 %v970
    %v5139 = vunpack.c.l.b16 %v971
    %v5140 = vunpack.c.h.b16 %v971
    %v5141 = vunpack.c.l.b16 %v972
    %v5142 = vunpack.c.h.b16 %v972
    %v5143 = vunpack.c.l.b16 %v973
    %v5144 = vunpack.c.h.b16 %v973
    %v5145 = vunpack.c.l.b16 %v974
    %v5146 = vunpack.c.h.b16 %v974
    %v5147 = vunpack.c.l.b16 %v975
    %v5148 = vunpack.c.h.b16 %v975
    %v5149 = vunpack.c.l.b16 %v976
    %v5150 = vunpack.c.h.b16 %v976
    %v5151 = vunpack.c.l.b16 %v977
    %v5152 = vunpack.c.h.b16 %v977
    %v5153 = vunpack.c.l.b16 %v978
    %v5154 = vunpack.c.h.b16 %v978
    %v5155 = vunpack.c.l.b16 %v979
    %v5156 = vunpack.c.h.b16 %v979
    %v5157 = vunpack.c.l.b16 %v980
    %v5158 = vunpack.c.h.b16 %v980
    %v5159 = vunpack.c.l.b16 %v981
    %v5160 = vunpack.c.h.b16 %v981
    %v5161 = vunpack.c.l.b16 %v982
    %v5162 = vunpack.c.h.b16 %v982
    %v5163 = vunpack.c.l.b16 %v983
    %v5164 = vunpack.c.h.b16 %v983
    %v5165 = vunpack.c.l.b16 %v984
    %v5166 = vunpack.c.h.b16 %v984
    %v5167 = vunpack.c.l.b16 %v985
    %v5168 = vunpack.c.h.b16 %v985
    %v5169 = vunpack.c.l.b16 %v986
    %v5170 = vunpack.c.h.b16 %v986
    %v5171 = vunpack.c.l.b16 %v987
    %v5172 = vunpack.c.h.b16 %v987
    %v5173 = vunpack.c.l.b16 %v988
    %v5174 = vunpack.c.h.b16 %v988
    %v5175 = vunpack.c.l.b16 %v989
    %v5176 = vunpack.c.h.b16 %v989
    %v5177 = vunpack.c.l.b16 %v990
    %v5178 = vunpack.c.h.b16 %v990
    %v5179 = vunpack.c.l.b16 %v991
    %v5180 = vunpack.c.h.b16 %v991
    %v5181 = vunpack.c.l.b16 %v992
    %v5182 = vunpack.c.h.b16 %v992
    %v5183 = vunpack.c.l.b16 %v993
    %v5184 = vunpack.c.h.b16 %v993
    %v5185 = vunpack.c.l.b16 %v994
    %v5186 = vunpack.c.h.b16 %v994
    %v5187 = vunpack.c.l.b16 %v995
    %v5188 = vunpack.c.h.b16 %v995
    %v5189 = vunpack.c.l.b16 %v996
    %v5190 = vunpack.c.h.b16 %v996
    %v5191 = vunpack.c.l.b16 %v997
    %v5192 = vunpack.c.h.b16 %v997
    %v5193 = vunpack.c.l.b16 %v998
    %v5194 = vunpack.c.h.b16 %v998
    %v5195 = vunpack.c.l.b16 %v999
    %v5196 = vunpack.c.h.b16 %v999
    %v5197 = vunpack.c.l.b16 %v1000
    %v5198 = vunpack.c.h.b16 %v1000
    %v5199 = vunpack.c.l.b16 %v1001
    %v5200 = vunpack.c.h.b16 %v1001
    %v5201 = vunpack.c.l.b16 %v1002
    %v5202 = vunpack.c.h.b16 %v1002
    %v5203 = vunpack.c.l.b16 %v1003
    %v5204 = vunpack.c.h.b16 %v1003
    %v5205 = vunpack.c.l.b16 %v1004
    %v5206 = vunpack.c.h.b16 %v1004
    %v5207 = vunpack.c.l.b16 %v1005
    %v5208 = vunpack.c.h.b16 %v1005
    %v5209 = vunpack.c.l.b16 %v1006
    %v5210 = vunpack.c.h.b16 %v1006
    %v5211 = vunpack.c.l.b16 %v1007
    %v5212 = vunpack.c.h.b16 %v1007
    %v5213 = vunpack.c.l.b16 %v1008
    %v5214 = vunpack.c.h.b16 %v1008
    %v5215 = vunpack.c.l.b16 %v1009
    %v5216 = vunpack.c.h.b16 %v1009
    %v5217 = vunpack.c.l.b16 %v1010
    %v5218 = vunpack.c.h.b16 %v1010
    %v5219 = vunpack.c.l.b16 %v1011
    %v5220 = vunpack.c.h.b16 %v1011
    %v5221 = vunpack.c.l.b16 %v1012
    %v5222 = vunpack.c.h.b16 %v1012
    %v5223 = vunpack.c.l.b16 %v1013
    %v5224 = vunpack.c.h.b16 %v1013
    %v5225 = vunpack.c.l.b16 %v1014
    %v5226 = vunpack.c.h.b16 %v1014
    %v5227 = vunpack.c.l.b16 %v1015
    %v5228 = vunpack.c.h.b16 %v1015
    %v5229 = vunpack.c.l.b16 %v1016
    %v5230 = vunpack.c.h.b16 %v1016
    %v5231 = vunpack.c.l.b16 %v1017
    %v5232 = vunpack.c.h.b16 %v1017
    %v5233 = vunpack.c.l.b16 %v1018
    %v5234 = vunpack.c.h.b16 %v1018
    %v5235 = vunpack.c.l.b16 %v1019
    %v5236 = vunpack.c.h.b16 %v1019
    %v5237 = vunpack.c.l.b16 %v1020
    %v5238 = vunpack.c.h.b16 %v1020
    %v5239 = vunpack.c.l.b16 %v1021
    %v5240 = vunpack.c.h.b16 %v1021
    %v5241 = vunpack.c.l.b16 %v1022
    %v5242 = vunpack.c.h.b16 %v1022
    %v5243 = vunpack.c.l.b16 %v1023
    %v5244 = vunpack.c.h.b16 %v1023
    %v5245 = vunpack.c.l.b16 %v1024
    %v5246 = vunpack.c.h.b16 %v1024
    %v5247 = vunpack.c.l.b16 %v1025
    %v5248 = vunpack.c.h.b16 %v1025
    %v5249 = vunpack.c.l.b16 %v1026
    %v5250 = vunpack.c.h.b16 %v1026
    %v5251 = vunpack.c.l.b16 %v1027
    %v5252 = vunpack.c.h.b16 %v1027
    %v5253 = vunpack.c.l.b16 %v1028
    %v5254 = vunpack.c.h.b16 %v1028
    %v5255 = vunpack.c.l.b16 %v1029
    %v5256 = vunpack.c.h.b16 %v1029
    %v5257 = vunpack.c.l.b16 %v1030
    %v5258 = vunpack.c.h.b16 %v1030
    %v5259 = vunpack.c.l.b16 %v1031
    %v5260 = vunpack.c.h.b16 %v1031
    %v5261 = vunpack.c.l.b16 %v1032
    %v5262 = vunpack.c.h.b16 %v1032
    %v5263 = vunpack.c.l.b16 %v1033
    %v5264 = vunpack.c.h.b16 %v1033
    %v5265 = vunpack.c.l.b16 %v1034
    %v5266 = vunpack.c.h.b16 %v1034
    %v5267 = vunpack.c.l.b16 %v1035
    %v5268 = vunpack.c.h.b16 %v1035
    %v5269 = vunpack.c.l.b16 %v1036
    %v5270 = vunpack.c.h.b16 %v1036
    %v5271 = vunpack.c.l.b16 %v1037
    %v5272 = vunpack.c.h.b16 %v1037
    %v5273 = vunpack.c.l.b16 %v1038
    %v5274 = vunpack.c.h.b16 %v1038
    %v5275 = vunpack.c.l.b16 %v1039
    %v5276 = vunpack.c.h.b16 %v1039
    %v5277 = vunpack.c.l.b16 %v1040
    %v5278 = vunpack.c.h.b16 %v1040
    %v5279 = vunpack.c.l.b16 %v1041
    %v5280 = vunpack.c.h.b16 %v1041
    %v5281 = vunpack.c.l.b16 %v1042
    %v5282 = vunpack.c.h.b16 %v1042
    %v5283 = vunpack.c.l.b16 %v1043
    %v5284 = vunpack.c.h.b16 %v1043
    %v5285 = vunpack.c.l.b16 %v1044
    %v5286 = vunpack.c.h.b16 %v1044
    %v5287 = vunpack.c.l.b16 %v1045
    %v5288 = vunpack.c.h.b16 %v1045
    %v5289 = vunpack.c.l.b16 %v1046
    %v5290 = vunpack.c.h.b16 %v1046
    %v5291 = vunpack.c.l.b16 %v1047
    %v5292 = vunpack.c.h.b16 %v1047
    %v5293 = vunpack.c.l.b16 %v1048
    %v5294 = vunpack.c.h.b16 %v1048
    %v5295 = vunpack.c.l.b16 %v1049
    %v5296 = vunpack.c.h.b16 %v1049
    %v5297 = vunpack.c.l.b16 %v1050
    %v5298 = vunpack.c.h.b16 %v1050
    %v5299 = vunpack.c.l.b16 %v1051
    %v5300 = vunpack.c.h.b16 %v1051
    %v5301 = vunpack.c.l.b16 %v1052
    %v5302 = vunpack.c.h.b16 %v1052
    %v5303 = vunpack.c.l.b16 %v1053
    %v5304 = vunpack.c.h.b16 %v1053
    %v5305 = vunpack.c.l.b16 %v1054
    %v5306 = vunpack.c.h.b16 %v1054
    %v5307 = vunpack.c.l.b16 %v1055
    %v5308 = vunpack.c.h.b16 %v1055
    %v5309 = vunpack.c.l.b16 %v1056
    %v5310 = vunpack.c.h.b16 %v1056
    %v5311 = vunpack.c.l.b16 %v1057
    %v5312 = vunpack.c.h.b16 %v1057
    %v5313 = vunpack.c.l.b16 %v1058
    %v5314 = vunpack.c.h.b16 %v1058
    %v5315 = vunpack.c.l.b16 %v1059
    %v5316 = vunpack.c.h.b16 %v1059
    %v5317 = vunpack.c.l.b16 %v1060
    %v5318 = vunpack.c.h.b16 %v1060
    %v5319 = vunpack.c.l.b16 %v1061
    %v5320 = vunpack.c.h.b16 %v1061
    %v5321 = vunpack.c.l.b16 %v1062
    %v5322 = vunpack.c.h.b16 %v1062
    %v5323 = vunpack.c.l.b16 %v1063
    %v5324 = vunpack.c.h.b16 %v1063
    %v5325 = vunpack.c.l.b16 %v1064
    %v5326 = vunpack.c.h.b16 %v1064
    %v5327 = vunpack.c.l.b16 %v1065
    %v5328 = vunpack.c.h.b16 %v1065
    %v5329 = vunpack.c.l.b16 %v1066
    %v5330 = vunpack.c.h.b16 %v1066
    %v5331 = vunpack.c.l.b16 %v1067
    %v5332 = vunpack.c.h.b16 %v1067
    %v5333 = vunpack.c.l.b16 %v1068
    %v5334 = vunpack.c.h.b16 %v1068
    %v5335 = vunpack.c.l.b16 %v1069
    %v5336 = vunpack.c.h.b16 %v1069
    %v5337 = vunpack.c.l.b16 %v1070
    %v5338 = vunpack.c.h.b16 %v1070
    %v5339 = vunpack.c.l.b16 %v1071
    %v5340 = vunpack.c.h.b16 %v1071
    %v5341 = vunpack.c.l.b16 %v1072
    %v5342 = vunpack.c.h.b16 %v1072
    %v5343 = vunpack.c.l.b16 %v1073
    %v5344 = vunpack.c.h.b16 %v1073
    %v5345 = vunpack.c.l.b16 %v1074
    %v5346 = vunpack.c.h.b16 %v1074
    %v5347 = vunpack.c.l.b16 %v1075
    %v5348 = vunpack.c.h.b16 %v1075
    %v5349 = vunpack.c.l.b16 %v1076
    %v5350 = vunpack.c.h.b16 %v1076
    %v5351 = vunpack.c.l.b16 %v1077
    %v5352 = vunpack.c.h.b16 %v1077
    %v5353 = vunpack.c.l.b16 %v1078
    %v5354 = vunpack.c.h.b16 %v1078
    %v5355 = vunpack.c.l.b16 %v1079
    %v5356 = vunpack.c.h.b16 %v1079
    %v5357 = vunpack.c.l.b16 %v1080
    %v5358 = vunpack.c.h.b16 %v1080
    %v5359 = vunpack.c.l.b16 %v1081
    %v5360 = vunpack.c.h.b16 %v1081
    %v5361 = vunpack.c.l.b16 %v1082
    %v5362 = vunpack.c.h.b16 %v1082
    %v5363 = vunpack.c.l.b16 %v1083
    %v5364 = vunpack.c.h.b16 %v1083
    %v5365 = vunpack.c.l.b16 %v1084
    %v5366 = vunpack.c.h.b16 %v1084
    %v5367 = vunpack.c.l.b16 %v1085
    %v5368 = vunpack.c.h.b16 %v1085
    %v5369 = vunpack.c.l.b16 %v1086
    %v5370 = vunpack.c.h.b16 %v1086
    %v5371 = vunpack.c.l.b16 %v1087
    %v5372 = vunpack.c.h.b16 %v1087
    %v5373 = vunpack.c.l.b16 %v1088
    %v5374 = vunpack.c.h.b16 %v1088
    %v5375 = vunpack.c.l.b16 %v1089
    %v5376 = vunpack.c.h.b16 %v1089
    %v5377 = vunpack.c.l.b16 %v1090
    %v5378 = vunpack.c.h.b16 %v1090
    %v5379 = vunpack.c.l.b16 %v1091
    %v5380 = vunpack.c.h.b16 %v1091
    %v5381 = vunpack.c.l.b16 %v1092
    %v5382 = vunpack.c.h.b16 %v1092
    %v5383 = vunpack.c.l.b16 %v1093
    %v5384 = vunpack.c.h.b16 %v1093
    %v5385 = vunpack.c.l.b16 %v1094
    %v5386 = vunpack.c.h.b16 %v1094
    %v5387 = vunpack.c.l.b16 %v1095
    %v5388 = vunpack.c.h.b16 %v1095
    %v5389 = vunpack.c.l.b16 %v1096
    %v5390 = vunpack.c.h.b16 %v1096
    %v5391 = vunpack.c.l.b16 %v1097
    %v5392 = vunpack.c.h.b16 %v1097
    %v5393 = vunpack.c.l.b16 %v1098
    %v5394 = vunpack.c.h.b16 %v1098
    %v5395 = vunpack.c.l.b16 %v1099
    %v5396 = vunpack.c.h.b16 %v1099
    %v5397 = vunpack.c.l.b16 %v1100
    %v5398 = vunpack.c.h.b16 %v1100
    %v5399 = vunpack.c.l.b16 %v1101
    %v5400 = vunpack.c.h.b16 %v1101
    %v5401 = vunpack.c.l.b16 %v1102
    %v5402 = vunpack.c.h.b16 %v1102
    %v5403 = vunpack.c.l.b16 %v1103
    %v5404 = vunpack.c.h.b16 %v1103
    %v5405 = vunpack.c.l.b16 %v1104
    %v5406 = vunpack.c.h.b16 %v1104
    %v5407 = vunpack.c.l.b16 %v1105
    %v5408 = vunpack.c.h.b16 %v1105
    %v5409 = vunpack.c.l.b16 %v1106
    %v5410 = vunpack.c.h.b16 %v1106
    %v5411 = vunpack.c.l.b16 %v1107
    %v5412 = vunpack.c.h.b16 %v1107
    %v5413 = vunpack.c.l.b16 %v1108
    %v5414 = vunpack.c.h.b16 %v1108
    %v5415 = vunpack.c.l.b16 %v1109
    %v5416 = vunpack.c.h.b16 %v1109
    %v5417 = vunpack.c.l.b16 %v1110
    %v5418 = vunpack.c.h.b16 %v1110
    %v5419 = vunpack.c.l.b16 %v1111
    %v5420 = vunpack.c.h.b16 %v1111
    %v5421 = vunpack.c.l.b16 %v1112
    %v5422 = vunpack.c.h.b16 %v1112
    %v5423 = vunpack.c.l.b16 %v1113
    %v5424 = vunpack.c.h.b16 %v1113
    %v5425 = vunpack.c.l.b16 %v1114
    %v5426 = vunpack.c.h.b16 %v1114
    %v5427 = vunpack.c.l.b16 %v1115
    %v5428 = vunpack.c.h.b16 %v1115
    %v5429 = vunpack.c.l.b16 %v1116
    %v5430 = vunpack.c.h.b16 %v1116
    %v5431 = vunpack.c.l.b16 %v1117
    %v5432 = vunpack.c.h.b16 %v1117
    %v5433 = vunpack.c.l.b16 %v1118
    %v5434 = vunpack.c.h.b16 %v1118
    %v5435 = vunpack.c.l.b16 %v1119
    %v5436 = vunpack.c.h.b16 %v1119
    %v5437 = vunpack.c.l.b16 %v1120
    %v5438 = vunpack.c.h.b16 %v1120
    %v5439 = vunpack.c.l.b16 %v1121
    %v5440 = vunpack.c.h.b16 %v1121
    %v5441 = vunpack.c.l.b16 %v1122
    %v5442 = vunpack.c.h.b16 %v1122
    %v5443 = vunpack.c.l.b16 %v1123
    %v5444 = vunpack.c.h.b16 %v1123
    %v5445 = vunpack.c.l.b16 %v1124
    %v5446 = vunpack.c.h.b16 %v1124
    %v5447 = vunpack.c.l.b16 %v1125
    %v5448 = vunpack.c.h.b16 %v1125
    %v5449 = vunpack.c.l.b16 %v1126
    %v5450 = vunpack.c.h.b16 %v1126
    %v5451 = vunpack.c.l.b16 %v1127
    %v5452 = vunpack.c.h.b16 %v1127
    %v5453 = vunpack.c.l.b16 %v1128
    %v5454 = vunpack.c.h.b16 %v1128
    %v5455 = vunpack.c.l.b16 %v1129
    %v5456 = vunpack.c.h.b16 %v1129
    %v5457 = vunpack.c.l.b16 %v1130
    %v5458 = vunpack.c.h.b16 %v1130
    %v5459 = vunpack.c.l.b16 %v1131
    %v5460 = vunpack.c.h.b16 %v1131
    %v5461 = vunpack.c.l.b16 %v1132
    %v5462 = vunpack.c.h.b16 %v1132
    %v5463 = vunpack.c.l.b16 %v1133
    %v5464 = vunpack.c.h.b16 %v1133
    %v5465 = vunpack.c.l.b16 %v1134
    %v5466 = vunpack.c.h.b16 %v1134
    %v5467 = vunpack.c.l.b16 %v1135
    %v5468 = vunpack.c.h.b16 %v1135
    %v5469 = vunpack.c.l.b16 %v1136
    %v5470 = vunpack.c.h.b16 %v1136
    %v5471 = vunpack.c.l.b16 %v1137
    %v5472 = vunpack.c.h.b16 %v1137
    %v5473 = vunpack.c.l.b16 %v1138
    %v5474 = vunpack.c.h.b16 %v1138
    %v5475 = vunpack.c.l.b16 %v1139
    %v5476 = vunpack.c.h.b16 %v1139
    %v5477 = vunpack.c.l.b16 %v1140
    %v5478 = vunpack.c.h.b16 %v1140
    %v5479 = vunpack.c.l.b16 %v1141
    %v5480 = vunpack.c.h.b16 %v1141
    %v5481 = vunpack.c.l.b16 %v1142
    %v5482 = vunpack.c.h.b16 %v1142
    %v5483 = vunpack.c.l.b16 %v1143
    %v5484 = vunpack.c.h.b16 %v1143
    %v5485 = vunpack.c.l.b16 %v1144
    %v5486 = vunpack.c.h.b16 %v1144
    %v5487 = vunpack.c.l.b16 %v1145
    %v5488 = vunpack.c.h.b16 %v1145
    %v5489 = vunpack.c.l.b16 %v1146
    %v5490 = vunpack.c.h.b16 %v1146
    %v5491 = vunpack.c.l.b16 %v1147
    %v5492 = vunpack.c.h.b16 %v1147
    %v5493 = vunpack.c.l.b16 %v1148
    %v5494 = vunpack.c.h.b16 %v1148
    %v5495 = vunpack.c.l.b16 %v1149
    %v5496 = vunpack.c.h.b16 %v1149
    %v5497 = vunpack.c.l.b16 %v1150
    %v5498 = vunpack.c.h.b16 %v1150
    %v5499 = vunpack.c.l.b16 %v1151
    %v5500 = vunpack.c.h.b16 %v1151
    %v5501 = vunpack.c.l.b16 %v1152
    %v5502 = vunpack.c.h.b16 %v1152
    %v5503 = vunpack.c.l.b16 %v1153
    %v5504 = vunpack.c.h.b16 %v1153
    %v5505 = vunpack.c.l.b16 %v1154
    %v5506 = vunpack.c.h.b16 %v1154
    %v5507 = vunpack.c.l.b16 %v1155
    %v5508 = vunpack.c.h.b16 %v1155
    %v5509 = vunpack.c.l.b16 %v1156
    %v5510 = vunpack.c.h.b16 %v1156
    %v5511 = vunpack.c.l.b16 %v1157
    %v5512 = vunpack.c.h.b16 %v1157
    %v5513 = vunpack.c.l.b16 %v1158
    %v5514 = vunpack.c.h.b16 %v1158
    %v5515 = vunpack.c.l.b16 %v1159
    %v5516 = vunpack.c.h.b16 %v1159
    %v5517 = vunpack.c.l.b16 %v1160
    %v5518 = vunpack.c.h.b16 %v1160
    %v5519 = vunpack.c.l.b16 %v1161
    %v5520 = vunpack.c.h.b16 %v1161
    %v5521 = vunpack.c.l.b16 %v1162
    %v5522 = vunpack.c.h.b16 %v1162
    %v5523 = vunpack.c.l.b16 %v1163
    %v5524 = vunpack.c.h.b16 %v1163
    %v5525 = vunpack.c.l.b16 %v1164
    %v5526 = vunpack.c.h.b16 %v1164
    %v5527 = vunpack.c.l.b16 %v1165
    %v5528 = vunpack.c.h.b16 %v1165
    %v5529 = vunpack.c.l.b16 %v1166
    %v5530 = vunpack.c.h.b16 %v1166
    %v5531 = vunpack.c.l.b16 %v1167
    %v5532 = vunpack.c.h.b16 %v1167
    %v5533 = vpack.c.b16 %v3493, %v3485
    %v5534 = vpack.c.b16 %v3494, %v3486
    %v5535 = vpack.c.b16 %v3495, %v3487
    %v5536 = vpack.c.b16 %v3496, %v3488
    %v5537 = vpack.c.b16 %v3497, %v3489
    %v5538 = vpack.c.b16 %v3498, %v3490
    %v5539 = vpack.c.b16 %v3499, %v3491
    %v5540 = vpack.c.b16 %v3500, %v3492
    %v5541 = vpack.c.b16 %v3509, %v3501
    %v5542 = vpack.c.b16 %v3510, %v3502
    %v5543 = vpack.c.b16 %v3511, %v3503
    %v5544 = vpack.c.b16 %v3512, %v3504
    %v5545 = vpack.c.b16 %v3513, %v3505
    %v5546 = vpack.c.b16 %v3514, %v3506
    %v5547 = vpack.c.b16 %v3515, %v3507
    %v5548 = vpack.c.b16 %v3516, %v3508
    %v5549 = vpack.c.b16 %v3525, %v3517
    %v5550 = vpack.c.b16 %v3526, %v3518
    %v5551 = vpack.c.b16 %v3527, %v3519
    %v5552 = vpack.c.b16 %v3528, %v3520
    %v5553 = vpack.c.b16 %v3529, %v3521
    %v5554 = vpack.c.b16 %v3530, %v3522
    %v5555 = vpack.c.b16 %v3531, %v3523
    %v5556 = vpack.c.b16 %v3532, %v3524
    %v5557 = vpack.c.b16 %v3541, %v3533
    %v5558 = vpack.c.b16 %v3542, %v3534
    %v5559 = vpack.c.b16 %v3543, %v3535
    %v5560 = vpack.c.b16 %v3544, %v3536
    %v5561 = vpack.c.b16 %v3545, %v3537
    %v5562 = vpack.c.b16 %v3546, %v3538
    %v5563 = vpack.c.b16 %v3547, %v3539
    %v5564 = vpack.c.b16 %v3548, %v3540
    %v5565 = vpack.c.b16 %v3557, %v3549
    %v5566 = vpack.c.b16 %v3558, %v3550
    %v5567 = vpack.c.b16 %v3559, %v3551
    %v5568 = vpack.c.b16 %v3560, %v3552
    %v5569 = vpack.c.b16 %v3561, %v3553
    %v5570 = vpack.c.b16 %v3562, %v3554
    %v5571 = vpack.c.b16 %v3563, %v3555
    %v5572 = vpack.c.b16 %v3564, %v3556
    %v5573 = vpack.c.b16 %v3573, %v3565
    %v5574 = vpack.c.b16 %v3574, %v3566
    %v5575 = vpack.c.b16 %v3575, %v3567
    %v5576 = vpack.c.b16 %v3576, %v3568
    %v5577 = vpack.c.b16 %v3577, %v3569
    %v5578 = vpack.c.b16 %v3578, %v3570
    %v5579 = vpack.c.b16 %v3579, %v3571
    %v5580 = vpack.c.b16 %v3580, %v3572
    %v5581 = vpack.c.b16 %v3589, %v3581
    %v5582 = vpack.c.b16 %v3590, %v3582
    %v5583 = vpack.c.b16 %v3591, %v3583
    %v5584 = vpack.c.b16 %v3592, %v3584
    %v5585 = vpack.c.b16 %v3593, %v3585
    %v5586 = vpack.c.b16 %v3594, %v3586
    %v5587 = vpack.c.b16 %v3595, %v3587
    %v5588 = vpack.c.b16 %v3596, %v3588
    %v5589 = vpack.c.b16 %v3605, %v3597
    %v5590 = vpack.c.b16 %v3606, %v3598
    %v5591 = vpack.c.b16 %v3607, %v3599
    %v5592 = vpack.c.b16 %v3608, %v3600
    %v5593 = vpack.c.b16 %v3609, %v3601
    %v5594 = vpack.c.b16 %v3610, %v3602
    %v5595 = vpack.c.b16 %v3611, %v3603
    %v5596 = vpack.c.b16 %v3612, %v3604
    %v5597 = vpack.c.b16 %v3621, %v3613
    %v5598 = vpack.c.b16 %v3622, %v3614
    %v5599 = vpack.c.b16 %v3623, %v3615
    %v5600 = vpack.c.b16 %v3624, %v3616
    %v5601 = vpack.c.b16 %v3625, %v3617
    %v5602 = vpack.c.b16 %v3626, %v3618
    %v5603 = vpack.c.b16 %v3627, %v3619
    %v5604 = vpack.c.b16 %v3628, %v3620
    %v5605 = vpack.c.b16 %v3637, %v3629
    %v5606 = vpack.c.b16 %v3638, %v3630
    %v5607 = vpack.c.b16 %v3639, %v3631
    %v5608 = vpack.c.b16 %v3640, %v3632
    %v5609 = vpack.c.b16 %v3641, %v3633
    %v5610 = vpack.c.b16 %v3642, %v3634
    %v5611 = vpack.c.b16 %v3643, %v3635
    %v5612 = vpack.c.b16 %v3644, %v3636
    %v5613 = vpack.c.b16 %v3653, %v3645
    %v5614 = vpack.c.b16 %v3654, %v3646
    %v5615 = vpack.c.b16 %v3655, %v3647
    %v5616 = vpack.c.b16 %v3656, %v3648
    %v5617 = vpack.c.b16 %v3657, %v3649
    %v5618 = vpack.c.b16 %v3658, %v3650
    %v5619 = vpack.c.b16 %v3659, %v3651
    %v5620 = vpack.c.b16 %v3660, %v3652
    %v5621 = vpack.c.b16 %v3669, %v3661
    %v5622 = vpack.c.b16 %v3670, %v3662
    %v5623 = vpack.c.b16 %v3671, %v3663
    %v5624 = vpack.c.b16 %v3672, %v3664
    %v5625 = vpack.c.b16 %v3673, %v3665
    %v5626 = vpack.c.b16 %v3674, %v3666
    %v5627 = vpack.c.b16 %v3675, %v3667
    %v5628 = vpack.c.b16 %v3676, %v3668
    %v5629 = vpack.c.b16 %v3685, %v3677
    %v5630 = vpack.c.b16 %v3686, %v3678
    %v5631 = vpack.c.b16 %v3687, %v3679
    %v5632 = vpack.c.b16 %v3688, %v3680
    %v5633 = vpack.c.b16 %v3689, %v3681
    %v5634 = vpack.c.b16 %v3690, %v3682
    %v5635 = vpack.c.b16 %v3691, %v3683
    %v5636 = vpack.c.b16 %v3692, %v3684
    %v5637 = vpack.c.b16 %v3701, %v3693
    %v5638 = vpack.c.b16 %v3702, %v3694
    %v5639 = vpack.c.b16 %v3703, %v3695
    %v5640 = vpack.c.b16 %v3704, %v3696
    %v5641 = vpack.c.b16 %v3705, %v3697
    %v5642 = vpack.c.b16 %v3706, %v3698
    %v5643 = vpack.c.b16 %v3707, %v3699
    %v5644 = vpack.c.b16 %v3708, %v3700
    %v5645 = vpack.c.b16 %v3717, %v3709
    %v5646 = vpack.c.b16 %v3718, %v3710
    %v5647 = vpack.c.b16 %v3719, %v3711
    %v5648 = vpack.c.b16 %v3720, %v3712
    %v5649 = vpack.c.b16 %v3721, %v3713
    %v5650 = vpack.c.b16 %v3722, %v3714
    %v5651 = vpack.c.b16 %v3723, %v3715
    %v5652 = vpack.c.b16 %v3724, %v3716
    %v5653 = vpack.c.b16 %v3733, %v3725
    %v5654 = vpack.c.b16 %v3734, %v3726
    %v5655 = vpack.c.b16 %v3735, %v3727
    %v5656 = vpack.c.b16 %v3736, %v3728
    %v5657 = vpack.c.b16 %v3737, %v3729
    %v5658 = vpack.c.b16 %v3738, %v3730
    %v5659 = vpack.c.b16 %v3739, %v3731
    %v5660 = vpack.c.b16 %v3740, %v3732
    %v5661 = vpack.c.b16 %v3749, %v3741
    %v5662 = vpack.c.b16 %v3750, %v3742
    %v5663 = vpack.c.b16 %v3751, %v3743
    %v5664 = vpack.c.b16 %v3752, %v3744
    %v5665 = vpack.c.b16 %v3753, %v3745
    %v5666 = vpack.c.b16 %v3754, %v3746
    %v5667 = vpack.c.b16 %v3755, %v3747
    %v5668 = vpack.c.b16 %v3756, %v3748
    %v5669 = vpack.c.b16 %v3765, %v3757
    %v5670 = vpack.c.b16 %v3766, %v3758
    %v5671 = vpack.c.b16 %v3767, %v3759
    %v5672 = vpack.c.b16 %v3768, %v3760
    %v5673 = vpack.c.b16 %v3769, %v3761
    %v5674 = vpack.c.b16 %v3770, %v3762
    %v5675 = vpack.c.b16 %v3771, %v3763
    %v5676 = vpack.c.b16 %v3772, %v3764
    %v5677 = vpack.c.b16 %v3781, %v3773
    %v5678 = vpack.c.b16 %v3782, %v3774
    %v5679 = vpack.c.b16 %v3783, %v3775
    %v5680 = vpack.c.b16 %v3784, %v3776
    %v5681 = vpack.c.b16 %v3785, %v3777
    %v5682 = vpack.c.b16 %v3786, %v3778
    %v5683 = vpack.c.b16 %v3787, %v3779
    %v5684 = vpack.c.b16 %v3788, %v3780
    %v5685 = vpack.c.b16 %v3797, %v3789
    %v5686 = vpack.c.b16 %v3798, %v3790
    %v5687 = vpack.c.b16 %v3799, %v3791
    %v5688 = vpack.c.b16 %v3800, %v3792
    %v5689 = vpack.c.b16 %v3801, %v3793
    %v5690 = vpack.c.b16 %v3802, %v3794
    %v5691 = vpack.c.b16 %v3803, %v3795
    %v5692 = vpack.c.b16 %v3804, %v3796
    %v5693 = vpack.c.b16 %v3813, %v3805
    %v5694 = vpack.c.b16 %v3814, %v3806
    %v5695 = vpack.c.b16 %v3815, %v3807
    %v5696 = vpack.c.b16 %v3816, %v3808
    %v5697 = vpack.c.b16 %v3817, %v3809
    %v5698 = vpack.c.b16 %v3818, %v3810
    %v5699 = vpack.c.b16 %v3819, %v3811
    %v5700 = vpack.c.b16 %v3820, %v3812
    %v5701 = vpack.c.b16 %v3829, %v3821
    %v5702 = vpack.c.b16 %v3830, %v3822
    %v5703 = vpack.c.b16 %v3831, %v3823
    %v5704 = vpack.c.b16 %v3832, %v3824
    %v5705 = vpack.c.b16 %v3833, %v3825
    %v5706 = vpack.c.b16 %v3834, %v3826
    %v5707 = vpack.c.b16 %v3835, %v3827
    %v5708 = vpack.c.b16 %v3836, %v3828
    %v5709 = vpack.c.b16 %v3845, %v3837
    %v5710 = vpack.c.b16 %v3846, %v3838
    %v5711 = vpack.c.b16 %v3847, %v3839
    %v5712 = vpack.c.b16 %v3848, %v3840
    %v5713 = vpack.c.b16 %v3849, %v3841
    %v5714 = vpack.c.b16 %v3850, %v3842
    %v5715 = vpack.c.b16 %v3851, %v3843
    %v5716 = vpack.c.b16 %v3852, %v3844
    %v5717 = vpack.c.b16 %v3861, %v3853
    %v5718 = vpack.c.b16 %v3862, %v3854
    %v5719 = vpack.c.b16 %v3863, %v3855
    %v5720 = vpack.c.b16 %v3864, %v3856
    %v5721 = vpack.c.b16 %v3865, %v3857
    %v5722 = vpack.c.b16 %v3866, %v3858
    %v5723 = vpack.c.b16 %v3867, %v3859
    %v5724 = vpack.c.b16 %v3868, %v3860
    %v5725 = vpack.c.b16 %v3877, %v3869
    %v5726 = vpack.c.b16 %v3878, %v3870
    %v5727 = vpack.c.b16 %v3879, %v3871
    %v5728 = vpack.c.b16 %v3880, %v3872
    %v5729 = vpack.c.b16 %v3881, %v3873
    %v5730 = vpack.c.b16 %v3882, %v3874
    %v5731 = vpack.c.b16 %v3883, %v3875
    %v5732 = vpack.c.b16 %v3884, %v3876
    %v5733 = vpack.c.b16 %v3893, %v3885
    %v5734 = vpack.c.b16 %v3894, %v3886
    %v5735 = vpack.c.b16 %v3895, %v3887
    %v5736 = vpack.c.b16 %v3896, %v3888
    %v5737 = vpack.c.b16 %v3897, %v3889
    %v5738 = vpack.c.b16 %v3898, %v3890
    %v5739 = vpack.c.b16 %v3899, %v3891
    %v5740 = vpack.c.b16 %v3900, %v3892
    %v5741 = vpack.c.b16 %v3909, %v3901
    %v5742 = vpack.c.b16 %v3910, %v3902
    %v5743 = vpack.c.b16 %v3911, %v3903
    %v5744 = vpack.c.b16 %v3912, %v3904
    %v5745 = vpack.c.b16 %v3913, %v3905
    %v5746 = vpack.c.b16 %v3914, %v3906
    %v5747 = vpack.c.b16 %v3915, %v3907
    %v5748 = vpack.c.b16 %v3916, %v3908
    %v5749 = vpack.c.b16 %v3925, %v3917
    %v5750 = vpack.c.b16 %v3926, %v3918
    %v5751 = vpack.c.b16 %v3927, %v3919
    %v5752 = vpack.c.b16 %v3928, %v3920
    %v5753 = vpack.c.b16 %v3929, %v3921
    %v5754 = vpack.c.b16 %v3930, %v3922
    %v5755 = vpack.c.b16 %v3931, %v3923
    %v5756 = vpack.c.b16 %v3932, %v3924
    %v5757 = vpack.c.b16 %v3941, %v3933
    %v5758 = vpack.c.b16 %v3942, %v3934
    %v5759 = vpack.c.b16 %v3943, %v3935
    %v5760 = vpack.c.b16 %v3944, %v3936
    %v5761 = vpack.c.b16 %v3945, %v3937
    %v5762 = vpack.c.b16 %v3946, %v3938
    %v5763 = vpack.c.b16 %v3947, %v3939
    %v5764 = vpack.c.b16 %v3948, %v3940
    %v5765 = vpack.c.b16 %v3957, %v3949
    %v5766 = vpack.c.b16 %v3958, %v3950
    %v5767 = vpack.c.b16 %v3959, %v3951
    %v5768 = vpack.c.b16 %v3960, %v3952
    %v5769 = vpack.c.b16 %v3961, %v3953
    %v5770 = vpack.c.b16 %v3962, %v3954
    %v5771 = vpack.c.b16 %v3963, %v3955
    %v5772 = vpack.c.b16 %v3964, %v3956
    %v5773 = vpack.c.b16 %v3973, %v3965
    %v5774 = vpack.c.b16 %v3974, %v3966
    %v5775 = vpack.c.b16 %v3975, %v3967
    %v5776 = vpack.c.b16 %v3976, %v3968
    %v5777 = vpack.c.b16 %v3977, %v3969
    %v5778 = vpack.c.b16 %v3978, %v3970
    %v5779 = vpack.c.b16 %v3979, %v3971
    %v5780 = vpack.c.b16 %v3980, %v3972
    %v5781 = vpack.c.b16 %v3989, %v3981
    %v5782 = vpack.c.b16 %v3990, %v3982
    %v5783 = vpack.c.b16 %v3991, %v3983
    %v5784 = vpack.c.b16 %v3992, %v3984
    %v5785 = vpack.c.b16 %v3993, %v3985
    %v5786 = vpack.c.b16 %v3994, %v3986
    %v5787 = vpack.c.b16 %v3995, %v3987
    %v5788 = vpack.c.b16 %v3996, %v3988
    %v5789 = vpack.c.b16 %v4005, %v3997
    %v5790 = vpack.c.b16 %v4006, %v3998
    %v5791 = vpack.c.b16 %v4007, %v3999
    %v5792 = vpack.c.b16 %v4008, %v4000
    %v5793 = vpack.c.b16 %v4009, %v4001
    %v5794 = vpack.c.b16 %v4010, %v4002
    %v5795 = vpack.c.b16 %v4011, %v4003
    %v5796 = vpack.c.b16 %v4012, %v4004
    %v5797 = vpack.c.b16 %v4021, %v4013
    %v5798 = vpack.c.b16 %v4022, %v4014
    %v5799 = vpack.c.b16 %v4023, %v4015
    %v5800 = vpack.c.b16 %v4024, %v4016
    %v5801 = vpack.c.b16 %v4025, %v4017
    %v5802 = vpack.c.b16 %v4026, %v4018
    %v5803 = vpack.c.b16 %v4027, %v4019
    %v5804 = vpack.c.b16 %v4028, %v4020
    %v5805 = vpack.c.b16 %v4037, %v4029
    %v5806 = vpack.c.b16 %v4038, %v4030
    %v5807 = vpack.c.b16 %v4039, %v4031
    %v5808 = vpack.c.b16 %v4040, %v4032
    %v5809 = vpack.c.b16 %v4041, %v4033
    %v5810 = vpack.c.b16 %v4042, %v4034
    %v5811 = vpack.c.b16 %v4043, %v4035
    %v5812 = vpack.c.b16 %v4044, %v4036
    %v5813 = vpack.c.b16 %v4053, %v4045
    %v5814 = vpack.c.b16 %v4054, %v4046
    %v5815 = vpack.c.b16 %v4055, %v4047
    %v5816 = vpack.c.b16 %v4056, %v4048
    %v5817 = vpack.c.b16 %v4057, %v4049
    %v5818 = vpack.c.b16 %v4058, %v4050
    %v5819 = vpack.c.b16 %v4059, %v4051
    %v5820 = vpack.c.b16 %v4060, %v4052
    %v5821 = vpack.c.b16 %v4069, %v4061
    %v5822 = vpack.c.b16 %v4070, %v4062
    %v5823 = vpack.c.b16 %v4071, %v4063
    %v5824 = vpack.c.b16 %v4072, %v4064
    %v5825 = vpack.c.b16 %v4073, %v4065
    %v5826 = vpack.c.b16 %v4074, %v4066
    %v5827 = vpack.c.b16 %v4075, %v4067
    %v5828 = vpack.c.b16 %v4076, %v4068
    %v5829 = vpack.c.b16 %v4085, %v4077
    %v5830 = vpack.c.b16 %v4086, %v4078
    %v5831 = vpack.c.b16 %v4087, %v4079
    %v5832 = vpack.c.b16 %v4088, %v4080
    %v5833 = vpack.c.b16 %v4089, %v4081
    %v5834 = vpack.c.b16 %v4090, %v4082
    %v5835 = vpack.c.b16 %v4091, %v4083
    %v5836 = vpack.c.b16 %v4092, %v4084
    %v5837 = vpack.c.b16 %v4101, %v4093
    %v5838 = vpack.c.b16 %v4102, %v4094
    %v5839 = vpack.c.b16 %v4103, %v4095
    %v5840 = vpack.c.b16 %v4104, %v4096
    %v5841 = vpack.c.b16 %v4105, %v4097
    %v5842 = vpack.c.b16 %v4106, %v4098
    %v5843 = vpack.c.b16 %v4107, %v4099
    %v5844 = vpack.c.b16 %v4108, %v4100
    %v5845 = vpack.c.b16 %v4117, %v4109
    %v5846 = vpack.c.b16 %v4118, %v4110
    %v5847 = vpack.c.b16 %v4119, %v4111
    %v5848 = vpack.c.b16 %v4120, %v4112
    %v5849 = vpack.c.b16 %v4121, %v4113
    %v5850 = vpack.c.b16 %v4122, %v4114
    %v5851 = vpack.c.b16 %v4123, %v4115
    %v5852 = vpack.c.b16 %v4124, %v4116
    %v5853 = vpack.c.b16 %v4133, %v4125
    %v5854 = vpack.c.b16 %v4134, %v4126
    %v5855 = vpack.c.b16 %v4135, %v4127
    %v5856 = vpack.c.b16 %v4136, %v4128
    %v5857 = vpack.c.b16 %v4137, %v4129
    %v5858 = vpack.c.b16 %v4138, %v4130
    %v5859 = vpack.c.b16 %v4139, %v4131
    %v5860 = vpack.c.b16 %v4140, %v4132
    %v5861 = vpack.c.b16 %v4149, %v4141
    %v5862 = vpack.c.b16 %v4150, %v4142
    %v5863 = vpack.c.b16 %v4151, %v4143
    %v5864 = vpack.c.b16 %v4152, %v4144
    %v5865 = vpack.c.b16 %v4153, %v4145
    %v5866 = vpack.c.b16 %v4154, %v4146
    %v5867 = vpack.c.b16 %v4155, %v4147
    %v5868 = vpack.c.b16 %v4156, %v4148
    %v5869 = vpack.c.b16 %v4165, %v4157
    %v5870 = vpack.c.b16 %v4166, %v4158
    %v5871 = vpack.c.b16 %v4167, %v4159
    %v5872 = vpack.c.b16 %v4168, %v4160
    %v5873 = vpack.c.b16 %v4169, %v4161
    %v5874 = vpack.c.b16 %v4170, %v4162
    %v5875 = vpack.c.b16 %v4171, %v4163
    %v5876 = vpack.c.b16 %v4172, %v4164
    %v5877 = vpack.c.b16 %v4181, %v4173
    %v5878 = vpack.c.b16 %v4182, %v4174
    %v5879 = vpack.c.b16 %v4183, %v4175
    %v5880 = vpack.c.b16 %v4184, %v4176
    %v5881 = vpack.c.b16 %v4185, %v4177
    %v5882 = vpack.c.b16 %v4186, %v4178
    %v5883 = vpack.c.b16 %v4187, %v4179
    %v5884 = vpack.c.b16 %v4188, %v4180
    %v5885 = vpack.c.b16 %v4197, %v4189
    %v5886 = vpack.c.b16 %v4198, %v4190
    %v5887 = vpack.c.b16 %v4199, %v4191
    %v5888 = vpack.c.b16 %v4200, %v4192
    %v5889 = vpack.c.b16 %v4201, %v4193
    %v5890 = vpack.c.b16 %v4202, %v4194
    %v5891 = vpack.c.b16 %v4203, %v4195
    %v5892 = vpack.c.b16 %v4204, %v4196
    %v5893 = vpack.c.b16 %v4213, %v4205
    %v5894 = vpack.c.b16 %v4214, %v4206
    %v5895 = vpack.c.b16 %v4215, %v4207
    %v5896 = vpack.c.b16 %v4216, %v4208
    %v5897 = vpack.c.b16 %v4217, %v4209
    %v5898 = vpack.c.b16 %v4218, %v4210
    %v5899 = vpack.c.b16 %v4219, %v4211
    %v5900 = vpack.c.b16 %v4220, %v4212
    %v5901 = vpack.c.b16 %v4229, %v4221
    %v5902 = vpack.c.b16 %v4230, %v4222
    %v5903 = vpack.c.b16 %v4231, %v4223
    %v5904 = vpack.c.b16 %v4232, %v4224
    %v5905 = vpack.c.b16 %v4233, %v4225
    %v5906 = vpack.c.b16 %v4234, %v4226
    %v5907 = vpack.c.b16 %v4235, %v4227
    %v5908 = vpack.c.b16 %v4236, %v4228
    %v5909 = vpack.c.b16 %v4245, %v4237
    %v5910 = vpack.c.b16 %v4246, %v4238
    %v5911 = vpack.c.b16 %v4247, %v4239
    %v5912 = vpack.c.b16 %v4248, %v4240
    %v5913 = vpack.c.b16 %v4249, %v4241
    %v5914 = vpack.c.b16 %v4250, %v4242
    %v5915 = vpack.c.b16 %v4251, %v4243
    %v5916 = vpack.c.b16 %v4252, %v4244
    %v5917 = vpack.c.b16 %v4261, %v4253
    %v5918 = vpack.c.b16 %v4262, %v4254
    %v5919 = vpack.c.b16 %v4263, %v4255
    %v5920 = vpack.c.b16 %v4264, %v4256
    %v5921 = vpack.c.b16 %v4265, %v4257
    %v5922 = vpack.c.b16 %v4266, %v4258
    %v5923 = vpack.c.b16 %v4267, %v4259
    %v5924 = vpack.c.b16 %v4268, %v4260
    %v5925 = vpack.c.b16 %v4277, %v4269
    %v5926 = vpack.c.b16 %v4278, %v4270
    %v5927 = vpack.c.b16 %v4279, %v4271
    %v5928 = vpack.c.b16 %v4280, %v4272
    %v5929 = vpack.c.b16 %v4281, %v4273
    %v5930 = vpack.c.b16 %v4282, %v4274
    %v5931 = vpack.c.b16 %v4283, %v4275
    %v5932 = vpack.c.b16 %v4284, %v4276
    %v5933 = vpack.c.b16 %v4293, %v4285
    %v5934 = vpack.c.b16 %v4294, %v4286
    %v5935 = vpack.c.b16 %v4295, %v4287
    %v5936 = vpack.c.b16 %v4296, %v4288
    %v5937 = vpack.c.b16 %v4297, %v4289
    %v5938 = vpack.c.b16 %v4298, %v4290
    %v5939 = vpack.c.b16 %v4299, %v4291
    %v5940 = vpack.c.b16 %v4300, %v4292
    %v5941 = vpack.c.b16 %v4309, %v4301
    %v5942 = vpack.c.b16 %v4310, %v4302
    %v5943 = vpack.c.b16 %v4311, %v4303
    %v5944 = vpack.c.b16 %v4312, %v4304
    %v5945 = vpack.c.b16 %v4313, %v4305
    %v5946 = vpack.c.b16 %v4314, %v4306
    %v5947 = vpack.c.b16 %v4315, %v4307
    %v5948 = vpack.c.b16 %v4316, %v4308
    %v5949 = vpack.c.b16 %v4325, %v4317
    %v5950 = vpack.c.b16 %v4326, %v4318
    %v5951 = vpack.c.b16 %v4327, %v4319
    %v5952 = vpack.c.b16 %v4328, %v4320
    %v5953 = vpack.c.b16 %v4329, %v4321
    %v5954 = vpack.c.b16 %v4330, %v4322
    %v5955 = vpack.c.b16 %v4331, %v4323
    %v5956 = vpack.c.b16 %v4332, %v4324
    %v5957 = vpack.c.b16 %v4341, %v4333
    %v5958 = vpack.c.b16 %v4342, %v4334
    %v5959 = vpack.c.b16 %v4343, %v4335
    %v5960 = vpack.c.b16 %v4344, %v4336
    %v5961 = vpack.c.b16 %v4345, %v4337
    %v5962 = vpack.c.b16 %v4346, %v4338
    %v5963 = vpack.c.b16 %v4347, %v4339
    %v5964 = vpack.c.b16 %v4348, %v4340
    %v5965 = vpack.c.b16 %v4357, %v4349
    %v5966 = vpack.c.b16 %v4358, %v4350
    %v5967 = vpack.c.b16 %v4359, %v4351
    %v5968 = vpack.c.b16 %v4360, %v4352
    %v5969 = vpack.c.b16 %v4361, %v4353
    %v5970 = vpack.c.b16 %v4362, %v4354
    %v5971 = vpack.c.b16 %v4363, %v4355
    %v5972 = vpack.c.b16 %v4364, %v4356
    %v5973 = vpack.c.b16 %v4373, %v4365
    %v5974 = vpack.c.b16 %v4374, %v4366
    %v5975 = vpack.c.b16 %v4375, %v4367
    %v5976 = vpack.c.b16 %v4376, %v4368
    %v5977 = vpack.c.b16 %v4377, %v4369
    %v5978 = vpack.c.b16 %v4378, %v4370
    %v5979 = vpack.c.b16 %v4379, %v4371
    %v5980 = vpack.c.b16 %v4380, %v4372
    %v5981 = vpack.c.b16 %v4389, %v4381
    %v5982 = vpack.c.b16 %v4390, %v4382
    %v5983 = vpack.c.b16 %v4391, %v4383
    %v5984 = vpack.c.b16 %v4392, %v4384
    %v5985 = vpack.c.b16 %v4393, %v4385
    %v5986 = vpack.c.b16 %v4394, %v4386
    %v5987 = vpack.c.b16 %v4395, %v4387
    %v5988 = vpack.c.b16 %v4396, %v4388
    %v5989 = vpack.c.b16 %v4405, %v4397
    %v5990 = vpack.c.b16 %v4406, %v4398
    %v5991 = vpack.c.b16 %v4407, %v4399
    %v5992 = vpack.c.b16 %v4408, %v4400
    %v5993 = vpack.c.b16 %v4409, %v4401
    %v5994 = vpack.c.b16 %v4410, %v4402
    %v5995 = vpack.c.b16 %v4411, %v4403
    %v5996 = vpack.c.b16 %v4412, %v4404
    %v5997 = vpack.c.b16 %v4421, %v4413
    %v5998 = vpack.c.b16 %v4422, %v4414
    %v5999 = vpack.c.b16 %v4423, %v4415
    %v6000 = vpack.c.b16 %v4424, %v4416
    %v6001 = vpack.c.b16 %v4425, %v4417
    %v6002 = vpack.c.b16 %v4426, %v4418
    %v6003 = vpack.c.b16 %v4427, %v4419
    %v6004 = vpack.c.b16 %v4428, %v4420
    %v6005 = vpack.c.b16 %v4437, %v4429
    %v6006 = vpack.c.b16 %v4438, %v4430
    %v6007 = vpack.c.b16 %v4439, %v4431
    %v6008 = vpack.c.b16 %v4440, %v4432
    %v6009 = vpack.c.b16 %v4441, %v4433
    %v6010 = vpack.c.b16 %v4442, %v4434
    %v6011 = vpack.c.b16 %v4443, %v4435
    %v6012 = vpack.c.b16 %v4444, %v4436
    %v6013 = vpack.c.b16 %v4453, %v4445
    %v6014 = vpack.c.b16 %v4454, %v4446
    %v6015 = vpack.c.b16 %v4455, %v4447
    %v6016 = vpack.c.b16 %v4456, %v4448
    %v6017 = vpack.c.b16 %v4457, %v4449
    %v6018 = vpack.c.b16 %v4458, %v4450
    %v6019 = vpack.c.b16 %v4459, %v4451
    %v6020 = vpack.c.b16 %v4460, %v4452
    %v6021 = vpack.c.b16 %v4469, %v4461
    %v6022 = vpack.c.b16 %v4470, %v4462
    %v6023 = vpack.c.b16 %v4471, %v4463
    %v6024 = vpack.c.b16 %v4472, %v4464
    %v6025 = vpack.c.b16 %v4473, %v4465
    %v6026 = vpack.c.b16 %v4474, %v4466
    %v6027 = vpack.c.b16 %v4475, %v4467
    %v6028 = vpack.c.b16 %v4476, %v4468
    %v6029 = vpack.c.b16 %v4485, %v4477
    %v6030 = vpack.c.b16 %v4486, %v4478
    %v6031 = vpack.c.b16 %v4487, %v4479
    %v6032 = vpack.c.b16 %v4488, %v4480
    %v6033 = vpack.c.b16 %v4489, %v4481
    %v6034 = vpack.c.b16 %v4490, %v4482
    %v6035 = vpack.c.b16 %v4491, %v4483
    %v6036 = vpack.c.b16 %v4492, %v4484
    %v6037 = vpack.c.b16 %v4501, %v4493
    %v6038 = vpack.c.b16 %v4502, %v4494
    %v6039 = vpack.c.b16 %v4503, %v4495
    %v6040 = vpack.c.b16 %v4504, %v4496
    %v6041 = vpack.c.b16 %v4505, %v4497
    %v6042 = vpack.c.b16 %v4506, %v4498
    %v6043 = vpack.c.b16 %v4507, %v4499
    %v6044 = vpack.c.b16 %v4508, %v4500
    %v6045 = vpack.c.b16 %v4517, %v4509
    %v6046 = vpack.c.b16 %v4518, %v4510
    %v6047 = vpack.c.b16 %v4519, %v4511
    %v6048 = vpack.c.b16 %v4520, %v4512
    %v6049 = vpack.c.b16 %v4521, %v4513
    %v6050 = vpack.c.b16 %v4522, %v4514
    %v6051 = vpack.c.b16 %v4523, %v4515
    %v6052 = vpack.c.b16 %v4524, %v4516
    %v6053 = vpack.c.b16 %v4533, %v4525
    %v6054 = vpack.c.b16 %v4534, %v4526
    %v6055 = vpack.c.b16 %v4535, %v4527
    %v6056 = vpack.c.b16 %v4536, %v4528
    %v6057 = vpack.c.b16 %v4537, %v4529
    %v6058 = vpack.c.b16 %v4538, %v4530
    %v6059 = vpack.c.b16 %v4539, %v4531
    %v6060 = vpack.c.b16 %v4540, %v4532
    %v6061 = vpack.c.b16 %v4549, %v4541
    %v6062 = vpack.c.b16 %v4550, %v4542
    %v6063 = vpack.c.b16 %v4551, %v4543
    %v6064 = vpack.c.b16 %v4552, %v4544
    %v6065 = vpack.c.b16 %v4553, %v4545
    %v6066 = vpack.c.b16 %v4554, %v4546
    %v6067 = vpack.c.b16 %v4555, %v4547
    %v6068 = vpack.c.b16 %v4556, %v4548
    %v6069 = vpack.c.b16 %v4565, %v4557
    %v6070 = vpack.c.b16 %v4566, %v4558
    %v6071 = vpack.c.b16 %v4567, %v4559
    %v6072 = vpack.c.b16 %v4568, %v4560
    %v6073 = vpack.c.b16 %v4569, %v4561
    %v6074 = vpack.c.b16 %v4570, %v4562
    %v6075 = vpack.c.b16 %v4571, %v4563
    %v6076 = vpack.c.b16 %v4572, %v4564
    %v6077 = vpack.c.b16 %v4581, %v4573
    %v6078 = vpack.c.b16 %v4582, %v4574
    %v6079 = vpack.c.b16 %v4583, %v4575
    %v6080 = vpack.c.b16 %v4584, %v4576
    %v6081 = vpack.c.b16 %v4585, %v4577
    %v6082 = vpack.c.b16 %v4586, %v4578
    %v6083 = vpack.c.b16 %v4587, %v4579
    %v6084 = vpack.c.b16 %v4588, %v4580
    %v6085 = vpack.c.b16 %v4597, %v4589
    %v6086 = vpack.c.b16 %v4598, %v4590
    %v6087 = vpack.c.b16 %v4599, %v4591
    %v6088 = vpack.c.b16 %v4600, %v4592
    %v6089 = vpack.c.b16 %v4601, %v4593
    %v6090 = vpack.c.b16 %v4602, %v4594
    %v6091 = vpack.c.b16 %v4603, %v4595
    %v6092 = vpack.c.b16 %v4604, %v4596
    %v6093 = vpack.c.b16 %v4613, %v4605
    %v6094 = vpack.c.b16 %v4614, %v4606
    %v6095 = vpack.c.b16 %v4615, %v4607
    %v6096 = vpack.c.b16 %v4616, %v4608
    %v6097 = vpack.c.b16 %v4617, %v4609
    %v6098 = vpack.c.b16 %v4618, %v4610
    %v6099 = vpack.c.b16 %v4619, %v4611
    %v6100 = vpack.c.b16 %v4620, %v4612
    %v6101 = vpack.c.b16 %v4629, %v4621
    %v6102 = vpack.c.b16 %v4630, %v4622
    %v6103 = vpack.c.b16 %v4631, %v4623
    %v6104 = vpack.c.b16 %v4632, %v4624
    %v6105 = vpack.c.b16 %v4633, %v4625
    %v6106 = vpack.c.b16 %v4634, %v4626
    %v6107 = vpack.c.b16 %v4635, %v4627
    %v6108 = vpack.c.b16 %v4636, %v4628
    %v6109 = vpack.c.b16 %v4645, %v4637
    %v6110 = vpack.c.b16 %v4646, %v4638
    %v6111 = vpack.c.b16 %v4647, %v4639
    %v6112 = vpack.c.b16 %v4648, %v4640
    %v6113 = vpack.c.b16 %v4649, %v4641
    %v6114 = vpack.c.b16 %v4650, %v4642
    %v6115 = vpack.c.b16 %v4651, %v4643
    %v6116 = vpack.c.b16 %v4652, %v4644
    %v6117 = vpack.c.b16 %v4661, %v4653
    %v6118 = vpack.c.b16 %v4662, %v4654
    %v6119 = vpack.c.b16 %v4663, %v4655
    %v6120 = vpack.c.b16 %v4664, %v4656
    %v6121 = vpack.c.b16 %v4665, %v4657
    %v6122 = vpack.c.b16 %v4666, %v4658
    %v6123 = vpack.c.b16 %v4667, %v4659
    %v6124 = vpack.c.b16 %v4668, %v4660
    %v6125 = vpack.c.b16 %v4677, %v4669
    %v6126 = vpack.c.b16 %v4678, %v4670
    %v6127 = vpack.c.b16 %v4679, %v4671
    %v6128 = vpack.c.b16 %v4680, %v4672
    %v6129 = vpack.c.b16 %v4681, %v4673
    %v6130 = vpack.c.b16 %v4682, %v4674
    %v6131 = vpack.c.b16 %v4683, %v4675
    %v6132 = vpack.c.b16 %v4684, %v4676
    %v6133 = vpack.c.b16 %v4693, %v4685
    %v6134 = vpack.c.b16 %v4694, %v4686
    %v6135 = vpack.c.b16 %v4695, %v4687
    %v6136 = vpack.c.b16 %v4696, %v4688
    %v6137 = vpack.c.b16 %v4697, %v4689
    %v6138 = vpack.c.b16 %v4698, %v4690
    %v6139 = vpack.c.b16 %v4699, %v4691
    %v6140 = vpack.c.b16 %v4700, %v4692
    %v6141 = vpack.c.b16 %v4709, %v4701
    %v6142 = vpack.c.b16 %v4710, %v4702
    %v6143 = vpack.c.b16 %v4711, %v4703
    %v6144 = vpack.c.b16 %v4712, %v4704
    %v6145 = vpack.c.b16 %v4713, %v4705
    %v6146 = vpack.c.b16 %v4714, %v4706
    %v6147 = vpack.c.b16 %v4715, %v4707
    %v6148 = vpack.c.b16 %v4716, %v4708
    %v6149 = vpack.c.b16 %v4725, %v4717
    %v6150 = vpack.c.b16 %v4726, %v4718
    %v6151 = vpack.c.b16 %v4727, %v4719
    %v6152 = vpack.c.b16 %v4728, %v4720
    %v6153 = vpack.c.b16 %v4729, %v4721
    %v6154 = vpack.c.b16 %v4730, %v4722
    %v6155 = vpack.c.b16 %v4731, %v4723
    %v6156 = vpack.c.b16 %v4732, %v4724
    %v6157 = vpack.c.b16 %v4741, %v4733
    %v6158 = vpack.c.b16 %v4742, %v4734
    %v6159 = vpack.c.b16 %v4743, %v4735
    %v6160 = vpack.c.b16 %v4744, %v4736
    %v6161 = vpack.c.b16 %v4745, %v4737
    %v6162 = vpack.c.b16 %v4746, %v4738
    %v6163 = vpack.c.b16 %v4747, %v4739
    %v6164 = vpack.c.b16 %v4748, %v4740
    %v6165 = vpack.c.b16 %v4757, %v4749
    %v6166 = vpack.c.b16 %v4758, %v4750
    %v6167 = vpack.c.b16 %v4759, %v4751
    %v6168 = vpack.c.b16 %v4760, %v4752
    %v6169 = vpack.c.b16 %v4761, %v4753
    %v6170 = vpack.c.b16 %v4762, %v4754
    %v6171 = vpack.c.b16 %v4763, %v4755
    %v6172 = vpack.c.b16 %v4764, %v4756
    %v6173 = vpack.c.b16 %v4773, %v4765
    %v6174 = vpack.c.b16 %v4774, %v4766
    %v6175 = vpack.c.b16 %v4775, %v4767
    %v6176 = vpack.c.b16 %v4776, %v4768
    %v6177 = vpack.c.b16 %v4777, %v4769
    %v6178 = vpack.c.b16 %v4778, %v4770
    %v6179 = vpack.c.b16 %v4779, %v4771
    %v6180 = vpack.c.b16 %v4780, %v4772
    %v6181 = vpack.c.b16 %v4789, %v4781
    %v6182 = vpack.c.b16 %v4790, %v4782
    %v6183 = vpack.c.b16 %v4791, %v4783
    %v6184 = vpack.c.b16 %v4792, %v4784
    %v6185 = vpack.c.b16 %v4793, %v4785
    %v6186 = vpack.c.b16 %v4794, %v4786
    %v6187 = vpack.c.b16 %v4795, %v4787
    %v6188 = vpack.c.b16 %v4796, %v4788
    %v6189 = vpack.c.b16 %v4805, %v4797
    %v6190 = vpack.c.b16 %v4806, %v4798
    %v6191 = vpack.c.b16 %v4807, %v4799
    %v6192 = vpack.c.b16 %v4808, %v4800
    %v6193 = vpack.c.b16 %v4809, %v4801
    %v6194 = vpack.c.b16 %v4810, %v4802
    %v6195 = vpack.c.b16 %v4811, %v4803
    %v6196 = vpack.c.b16 %v4812, %v4804
    %v6197 = vpack.c.b16 %v4821, %v4813
    %v6198 = vpack.c.b16 %v4822, %v4814
    %v6199 = vpack.c.b16 %v4823, %v4815
    %v6200 = vpack.c.b16 %v4824, %v4816
    %v6201 = vpack.c.b16 %v4825, %v4817
    %v6202 = vpack.c.b16 %v4826, %v4818
    %v6203 = vpack.c.b16 %v4827, %v4819
    %v6204 = vpack.c.b16 %v4828, %v4820
    %v6205 = vpack.c.b16 %v4837, %v4829
    %v6206 = vpack.c.b16 %v4838, %v4830
    %v6207 = vpack.c.b16 %v4839, %v4831
    %v6208 = vpack.c.b16 %v4840, %v4832
    %v6209 = vpack.c.b16 %v4841, %v4833
    %v6210 = vpack.c.b16 %v4842, %v4834
    %v6211 = vpack.c.b16 %v4843, %v4835
    %v6212 = vpack.c.b16 %v4844, %v4836
    %v6213 = vpack.c.b16 %v4853, %v4845
    %v6214 = vpack.c.b16 %v4854, %v4846
    %v6215 = vpack.c.b16 %v4855, %v4847
    %v6216 = vpack.c.b16 %v4856, %v4848
    %v6217 = vpack.c.b16 %v4857, %v4849
    %v6218 = vpack.c.b16 %v4858, %v4850
    %v6219 = vpack.c.b16 %v4859, %v4851
    %v6220 = vpack.c.b16 %v4860, %v4852
    %v6221 = vpack.c.b16 %v4869, %v4861
    %v6222 = vpack.c.b16 %v4870, %v4862
    %v6223 = vpack.c.b16 %v4871, %v4863
    %v6224 = vpack.c.b16 %v4872, %v4864
    %v6225 = vpack.c.b16 %v4873, %v4865
    %v6226 = vpack.c.b16 %v4874, %v4866
    %v6227 = vpack.c.b16 %v4875, %v4867
    %v6228 = vpack.c.b16 %v4876, %v4868
    %v6229 = vpack.c.b16 %v4885, %v4877
    %v6230 = vpack.c.b16 %v4886, %v4878
    %v6231 = vpack.c.b16 %v4887, %v4879
    %v6232 = vpack.c.b16 %v4888, %v4880
    %v6233 = vpack.c.b16 %v4889, %v4881
    %v6234 = vpack.c.b16 %v4890, %v4882
    %v6235 = vpack.c.b16 %v4891, %v4883
    %v6236 = vpack.c.b16 %v4892, %v4884
    %v6237 = vpack.c.b16 %v4901, %v4893
    %v6238 = vpack.c.b16 %v4902, %v4894
    %v6239 = vpack.c.b16 %v4903, %v4895
    %v6240 = vpack.c.b16 %v4904, %v4896
    %v6241 = vpack.c.b16 %v4905, %v4897
    %v6242 = vpack.c.b16 %v4906, %v4898
    %v6243 = vpack.c.b16 %v4907, %v4899
    %v6244 = vpack.c.b16 %v4908, %v4900
    %v6245 = vpack.c.b16 %v4917, %v4909
    %v6246 = vpack.c.b16 %v4918, %v4910
    %v6247 = vpack.c.b16 %v4919, %v4911
    %v6248 = vpack.c.b16 %v4920, %v4912
    %v6249 = vpack.c.b16 %v4921, %v4913
    %v6250 = vpack.c.b16 %v4922, %v4914
    %v6251 = vpack.c.b16 %v4923, %v4915
    %v6252 = vpack.c.b16 %v4924, %v4916
    %v6253 = vpack.c.b16 %v4933, %v4925
    %v6254 = vpack.c.b16 %v4934, %v4926
    %v6255 = vpack.c.b16 %v4935, %v4927
    %v6256 = vpack.c.b16 %v4936, %v4928
    %v6257 = vpack.c.b16 %v4937, %v4929
    %v6258 = vpack.c.b16 %v4938, %v4930
    %v6259 = vpack.c.b16 %v4939, %v4931
    %v6260 = vpack.c.b16 %v4940, %v4932
    %v6261 = vpack.c.b16 %v4949, %v4941
    %v6262 = vpack.c.b16 %v4950, %v4942
    %v6263 = vpack.c.b16 %v4951, %v4943
    %v6264 = vpack.c.b16 %v4952, %v4944
    %v6265 = vpack.c.b16 %v4953, %v4945
    %v6266 = vpack.c.b16 %v4954, %v4946
    %v6267 = vpack.c.b16 %v4955, %v4947
    %v6268 = vpack.c.b16 %v4956, %v4948
    %v6269 = vpack.c.b16 %v4965, %v4957
    %v6270 = vpack.c.b16 %v4966, %v4958
    %v6271 = vpack.c.b16 %v4967, %v4959
    %v6272 = vpack.c.b16 %v4968, %v4960
    %v6273 = vpack.c.b16 %v4969, %v4961
    %v6274 = vpack.c.b16 %v4970, %v4962
    %v6275 = vpack.c.b16 %v4971, %v4963
    %v6276 = vpack.c.b16 %v4972, %v4964
    %v6277 = vpack.c.b16 %v4981, %v4973
    %v6278 = vpack.c.b16 %v4982, %v4974
    %v6279 = vpack.c.b16 %v4983, %v4975
    %v6280 = vpack.c.b16 %v4984, %v4976
    %v6281 = vpack.c.b16 %v4985, %v4977
    %v6282 = vpack.c.b16 %v4986, %v4978
    %v6283 = vpack.c.b16 %v4987, %v4979
    %v6284 = vpack.c.b16 %v4988, %v4980
    %v6285 = vpack.c.b16 %v4997, %v4989
    %v6286 = vpack.c.b16 %v4998, %v4990
    %v6287 = vpack.c.b16 %v4999, %v4991
    %v6288 = vpack.c.b16 %v5000, %v4992
    %v6289 = vpack.c.b16 %v5001, %v4993
    %v6290 = vpack.c.b16 %v5002, %v4994
    %v6291 = vpack.c.b16 %v5003, %v4995
    %v6292 = vpack.c.b16 %v5004, %v4996
    %v6293 = vpack.c.b16 %v5013, %v5005
    %v6294 = vpack.c.b16 %v5014, %v5006
    %v6295 = vpack.c.b16 %v5015, %v5007
    %v6296 = vpack.c.b16 %v5016, %v5008
    %v6297 = vpack.c.b16 %v5017, %v5009
    %v6298 = vpack.c.b16 %v5018, %v5010
    %v6299 = vpack.c.b16 %v5019, %v5011
    %v6300 = vpack.c.b16 %v5020, %v5012
    %v6301 = vpack.c.b16 %v5029, %v5021
    %v6302 = vpack.c.b16 %v5030, %v5022
    %v6303 = vpack.c.b16 %v5031, %v5023
    %v6304 = vpack.c.b16 %v5032, %v5024
    %v6305 = vpack.c.b16 %v5033, %v5025
    %v6306 = vpack.c.b16 %v5034, %v5026
    %v6307 = vpack.c.b16 %v5035, %v5027
    %v6308 = vpack.c.b16 %v5036, %v5028
    %v6309 = vpack.c.b16 %v5045, %v5037
    %v6310 = vpack.c.b16 %v5046, %v5038
    %v6311 = vpack.c.b16 %v5047, %v5039
    %v6312 = vpack.c.b16 %v5048, %v5040
    %v6313 = vpack.c.b16 %v5049, %v5041
    %v6314 = vpack.c.b16 %v5050, %v5042
    %v6315 = vpack.c.b16 %v5051, %v5043
    %v6316 = vpack.c.b16 %v5052, %v5044
    %v6317 = vpack.c.b16 %v5061, %v5053
    %v6318 = vpack.c.b16 %v5062, %v5054
    %v6319 = vpack.c.b16 %v5063, %v5055
    %v6320 = vpack.c.b16 %v5064, %v5056
    %v6321 = vpack.c.b16 %v5065, %v5057
    %v6322 = vpack.c.b16 %v5066, %v5058
    %v6323 = vpack.c.b16 %v5067, %v5059
    %v6324 = vpack.c.b16 %v5068, %v5060
    %v6325 = vpack.c.b16 %v5077, %v5069
    %v6326 = vpack.c.b16 %v5078, %v5070
    %v6327 = vpack.c.b16 %v5079, %v5071
    %v6328 = vpack.c.b16 %v5080, %v5072
    %v6329 = vpack.c.b16 %v5081, %v5073
    %v6330 = vpack.c.b16 %v5082, %v5074
    %v6331 = vpack.c.b16 %v5083, %v5075
    %v6332 = vpack.c.b16 %v5084, %v5076
    %v6333 = vpack.c.b16 %v5093, %v5085
    %v6334 = vpack.c.b16 %v5094, %v5086
    %v6335 = vpack.c.b16 %v5095, %v5087
    %v6336 = vpack.c.b16 %v5096, %v5088
    %v6337 = vpack.c.b16 %v5097, %v5089
    %v6338 = vpack.c.b16 %v5098, %v5090
    %v6339 = vpack.c.b16 %v5099, %v5091
    %v6340 = vpack.c.b16 %v5100, %v5092
    %v6341 = vpack.c.b16 %v5109, %v5101
    %v6342 = vpack.c.b16 %v5110, %v5102
    %v6343 = vpack.c.b16 %v5111, %v5103
    %v6344 = vpack.c.b16 %v5112, %v5104
    %v6345 = vpack.c.b16 %v5113, %v5105
    %v6346 = vpack.c.b16 %v5114, %v5106
    %v6347 = vpack.c.b16 %v5115, %v5107
    %v6348 = vpack.c.b16 %v5116, %v5108
    %v6349 = vpack.c.b16 %v5125, %v5117
    %v6350 = vpack.c.b16 %v5126, %v5118
    %v6351 = vpack.c.b16 %v5127, %v5119
    %v6352 = vpack.c.b16 %v5128, %v5120
    %v6353 = vpack.c.b16 %v5129, %v5121
    %v6354 = vpack.c.b16 %v5130, %v5122
    %v6355 = vpack.c.b16 %v5131, %v5123
    %v6356 = vpack.c.b16 %v5132, %v5124
    %v6357 = vpack.c.b16 %v5141, %v5133
    %v6358 = vpack.c.b16 %v5142, %v5134
    %v6359 = vpack.c.b16 %v5143, %v5135
    %v6360 = vpack.c.b16 %v5144, %v5136
    %v6361 = vpack.c.b16 %v5145, %v5137
    %v6362 = vpack.c.b16 %v5146, %v5138
    %v6363 = vpack.c.b16 %v5147, %v5139
    %v6364 = vpack.c.b16 %v5148, %v5140
    %v6365 = vpack.c.b16 %v5157, %v5149
    %v6366 = vpack.c.b16 %v5158, %v5150
    %v6367 = vpack.c.b16 %v5159, %v5151
    %v6368 = vpack.c.b16 %v5160, %v5152
    %v6369 = vpack.c.b16 %v5161, %v5153
    %v6370 = vpack.c.b16 %v5162, %v5154
    %v6371 = vpack.c.b16 %v5163, %v5155
    %v6372 = vpack.c.b16 %v5164, %v5156
    %v6373 = vpack.c.b16 %v5173, %v5165
    %v6374 = vpack.c.b16 %v5174, %v5166
    %v6375 = vpack.c.b16 %v5175, %v5167
    %v6376 = vpack.c.b16 %v5176, %v5168
    %v6377 = vpack.c.b16 %v5177, %v5169
    %v6378 = vpack.c.b16 %v5178, %v5170
    %v6379 = vpack.c.b16 %v5179, %v5171
    %v6380 = vpack.c.b16 %v5180, %v5172
    %v6381 = vpack.c.b16 %v5189, %v5181
    %v6382 = vpack.c.b16 %v5190, %v5182
    %v6383 = vpack.c.b16 %v5191, %v5183
    %v6384 = vpack.c.b16 %v5192, %v5184
    %v6385 = vpack.c.b16 %v5193, %v5185
    %v6386 = vpack.c.b16 %v5194, %v5186
    %v6387 = vpack.c.b16 %v5195, %v5187
    %v6388 = vpack.c.b16 %v5196, %v5188
    %v6389 = vpack.c.b16 %v5205, %v5197
    %v6390 = vpack.c.b16 %v5206, %v5198
    %v6391 = vpack.c.b16 %v5207, %v5199
    %v6392 = vpack.c.b16 %v5208, %v5200
    %v6393 = vpack.c.b16 %v5209, %v5201
    %v6394 = vpack.c.b16 %v5210, %v5202
    %v6395 = vpack.c.b16 %v5211, %v5203
    %v6396 = vpack.c.b16 %v5212, %v5204
    %v6397 = vpack.c.b16 %v5221, %v5213
    %v6398 = vpack.c.b16 %v5222, %v5214
    %v6399 = vpack.c.b16 %v5223, %v5215
    %v6400 = vpack.c.b16 %v5224, %v5216
    %v6401 = vpack.c.b16 %v5225, %v5217
    %v6402 = vpack.c.b16 %v5226, %v5218
    %v6403 = vpack.c.b16 %v5227, %v5219
    %v6404 = vpack.c.b16 %v5228, %v5220
    %v6405 = vpack.c.b16 %v5237, %v5229
    %v6406 = vpack.c.b16 %v5238, %v5230
    %v6407 = vpack.c.b16 %v5239, %v5231
    %v6408 = vpack.c.b16 %v5240, %v5232
    %v6409 = vpack.c.b16 %v5241, %v5233
    %v6410 = vpack.c.b16 %v5242, %v5234
    %v6411 = vpack.c.b16 %v5243, %v5235
    %v6412 = vpack.c.b16 %v5244, %v5236
    %v6413 = vpack.c.b16 %v5253, %v5245
    %v6414 = vpack.c.b16 %v5254, %v5246
    %v6415 = vpack.c.b16 %v5255, %v5247
    %v6416 = vpack.c.b16 %v5256, %v5248
    %v6417 = vpack.c.b16 %v5257, %v5249
    %v6418 = vpack.c.b16 %v5258, %v5250
    %v6419 = vpack.c.b16 %v5259, %v5251
    %v6420 = vpack.c.b16 %v5260, %v5252
    %v6421 = vpack.c.b16 %v5269, %v5261
    %v6422 = vpack.c.b16 %v5270, %v5262
    %v6423 = vpack.c.b16 %v5271, %v5263
    %v6424 = vpack.c.b16 %v5272, %v5264
    %v6425 = vpack.c.b16 %v5273, %v5265
    %v6426 = vpack.c.b16 %v5274, %v5266
    %v6427 = vpack.c.b16 %v5275, %v5267
    %v6428 = vpack.c.b16 %v5276, %v5268
    %v6429 = vpack.c.b16 %v5285, %v5277
    %v6430 = vpack.c.b16 %v5286, %v5278
    %v6431 = vpack.c.b16 %v5287, %v5279
    %v6432 = vpack.c.b16 %v5288, %v5280
    %v6433 = vpack.c.b16 %v5289, %v5281
    %v6434 = vpack.c.b16 %v5290, %v5282
    %v6435 = vpack.c.b16 %v5291, %v5283
    %v6436 = vpack.c.b16 %v5292, %v5284
    %v6437 = vpack.c.b16 %v5301, %v5293
    %v6438 = vpack.c.b16 %v5302, %v5294
    %v6439 = vpack.c.b16 %v5303, %v5295
    %v6440 = vpack.c.b16 %v5304, %v5296
    %v6441 = vpack.c.b16 %v5305, %v5297
    %v6442 = vpack.c.b16 %v5306, %v5298
    %v6443 = vpack.c.b16 %v5307, %v5299
    %v6444 = vpack.c.b16 %v5308, %v5300
    %v6445 = vpack.c.b16 %v5317, %v5309
    %v6446 = vpack.c.b16 %v5318, %v5310
    %v6447 = vpack.c.b16 %v5319, %v5311
    %v6448 = vpack.c.b16 %v5320, %v5312
    %v6449 = vpack.c.b16 %v5321, %v5313
    %v6450 = vpack.c.b16 %v5322, %v5314
    %v6451 = vpack.c.b16 %v5323, %v5315
    %v6452 = vpack.c.b16 %v5324, %v5316
    %v6453 = vpack.c.b16 %v5333, %v5325
    %v6454 = vpack.c.b16 %v5334, %v5326
    %v6455 = vpack.c.b16 %v5335, %v5327
    %v6456 = vpack.c.b16 %v5336, %v5328
    %v6457 = vpack.c.b16 %v5337, %v5329
    %v6458 = vpack.c.b16 %v5338, %v5330
    %v6459 = vpack.c.b16 %v5339, %v5331
    %v6460 = vpack.c.b16 %v5340, %v5332
    %v6461 = vpack.c.b16 %v5349, %v5341
    %v6462 = vpack.c.b16 %v5350, %v5342
    %v6463 = vpack.c.b16 %v5351, %v5343
    %v6464 = vpack.c.b16 %v5352, %v5344
    %v6465 = vpack.c.b16 %v5353, %v5345
    %v6466 = vpack.c.b16 %v5354, %v5346
    %v6467 = vpack.c.b16 %v5355, %v5347
    %v6468 = vpack.c.b16 %v5356, %v5348
    %v6469 = vpack.c.b16 %v5365, %v5357
    %v6470 = vpack.c.b16 %v5366, %v5358
    %v6471 = vpack.c.b16 %v5367, %v5359
    %v6472 = vpack.c.b16 %v5368, %v5360
    %v6473 = vpack.c.b16 %v5369, %v5361
    %v6474 = vpack.c.b16 %v5370, %v5362
    %v6475 = vpack.c.b16 %v5371, %v5363
    %v6476 = vpack.c.b16 %v5372, %v5364
    %v6477 = vpack.c.b16 %v5381, %v5373
    %v6478 = vpack.c.b16 %v5382, %v5374
    %v6479 = vpack.c.b16 %v5383, %v5375
    %v6480 = vpack.c.b16 %v5384, %v5376
    %v6481 = vpack.c.b16 %v5385, %v5377
    %v6482 = vpack.c.b16 %v5386, %v5378
    %v6483 = vpack.c.b16 %v5387, %v5379
    %v6484 = vpack.c.b16 %v5388, %v5380
    %v6485 = vpack.c.b16 %v5397, %v5389
    %v6486 = vpack.c.b16 %v5398, %v5390
    %v6487 = vpack.c.b16 %v5399, %v5391
    %v6488 = vpack.c.b16 %v5400, %v5392
    %v6489 = vpack.c.b16 %v5401, %v5393
    %v6490 = vpack.c.b16 %v5402, %v5394
    %v6491 = vpack.c.b16 %v5403, %v5395
    %v6492 = vpack.c.b16 %v5404, %v5396
    %v6493 = vpack.c.b16 %v5413, %v5405
    %v6494 = vpack.c.b16 %v5414, %v5406
    %v6495 = vpack.c.b16 %v5415, %v5407
    %v6496 = vpack.c.b16 %v5416, %v5408
    %v6497 = vpack.c.b16 %v5417, %v5409
    %v6498 = vpack.c.b16 %v5418, %v5410
    %v6499 = vpack.c.b16 %v5419, %v5411
    %v6500 = vpack.c.b16 %v5420, %v5412
    %v6501 = vpack.c.b16 %v5429, %v5421
    %v6502 = vpack.c.b16 %v5430, %v5422
    %v6503 = vpack.c.b16 %v5431, %v5423
    %v6504 = vpack.c.b16 %v5432, %v5424
    %v6505 = vpack.c.b16 %v5433, %v5425
    %v6506 = vpack.c.b16 %v5434, %v5426
    %v6507 = vpack.c.b16 %v5435, %v5427
    %v6508 = vpack.c.b16 %v5436, %v5428
    %v6509 = vpack.c.b16 %v5445, %v5437
    %v6510 = vpack.c.b16 %v5446, %v5438
    %v6511 = vpack.c.b16 %v5447, %v5439
    %v6512 = vpack.c.b16 %v5448, %v5440
    %v6513 = vpack.c.b16 %v5449, %v5441
    %v6514 = vpack.c.b16 %v5450, %v5442
    %v6515 = vpack.c.b16 %v5451, %v5443
    %v6516 = vpack.c.b16 %v5452, %v5444
    %v6517 = vpack.c.b16 %v5461, %v5453
    %v6518 = vpack.c.b16 %v5462, %v5454
    %v6519 = vpack.c.b16 %v5463, %v5455
    %v6520 = vpack.c.b16 %v5464, %v5456
    %v6521 = vpack.c.b16 %v5465, %v5457
    %v6522 = vpack.c.b16 %v5466, %v5458
    %v6523 = vpack.c.b16 %v5467, %v5459
    %v6524 = vpack.c.b16 %v5468, %v5460
    %v6525 = vpack.c.b16 %v5477, %v5469
    %v6526 = vpack.c.b16 %v5478, %v5470
    %v6527 = vpack.c.b16 %v5479, %v5471
    %v6528 = vpack.c.b16 %v5480, %v5472
    %v6529 = vpack.c.b16 %v5481, %v5473
    %v6530 = vpack.c.b16 %v5482, %v5474
    %v6531 = vpack.c.b16 %v5483, %v5475
    %v6532 = vpack.c.b16 %v5484, %v5476
    %v6533 = vpack.c.b16 %v5493, %v5485
    %v6534 = vpack.c.b16 %v5494, %v5486
    %v6535 = vpack.c.b16 %v5495, %v5487
    %v6536 = vpack.c.b16 %v5496, %v5488
    %v6537 = vpack.c.b16 %v5497, %v5489
    %v6538 = vpack.c.b16 %v5498, %v5490
    %v6539 = vpack.c.b16 %v5499, %v5491
    %v6540 = vpack.c.b16 %v5500, %v5492
    %v6541 = vpack.c.b16 %v5509, %v5501
    %v6542 = vpack.c.b16 %v5510, %v5502
    %v6543 = vpack.c.b16 %v5511, %v5503
    %v6544 = vpack.c.b16 %v5512, %v5504
    %v6545 = vpack.c.b16 %v5513, %v5505
    %v6546 = vpack.c.b16 %v5514, %v5506
    %v6547 = vpack.c.b16 %v5515, %v5507
    %v6548 = vpack.c.b16 %v5516, %v5508
    %v6549 = vpack.c.b16 %v5525, %v5517
    %v6550 = vpack.c.b16 %v5526, %v5518
    %v6551 = vpack.c.b16 %v5527, %v5519
    %v6552 = vpack.c.b16 %v5528, %v5520
    %v6553 = vpack.c.b16 %v5529, %v5521
    %v6554 = vpack.c.b16 %v5530, %v5522
    %v6555 = vpack.c.b16 %v5531, %v5523
    %v6556 = vpack.c.b16 %v5532, %v5524
    %7581 = vmatprep.subr.bf16.mxu0 %v5590
    %7582 = vmatpush1.bf16.msra.mxu0 %v5589
    %7583 = vmatprep.subr.bf16.mxu0 %v5582
    %7584 = vmatpush1.bf16.msra.mxu0 %v5581
    %7585 = vmatprep.subr.bf16.mxu0 %v5574
    %7586 = vmatpush1.bf16.msra.mxu0 %v5573
    %7587 = vmatprep.subr.bf16.mxu0 %v5566
    %7588 = vmatpush1.bf16.msra.mxu0 %v5565
    %7589 = vmatprep.subr.bf16.mxu0 %v5558
    %7590 = vmatpush1.bf16.msra.mxu0 %v5557
    %7591 = vmatprep.subr.bf16.mxu0 %v5550
    %7592 = vmatpush1.bf16.msra.mxu0 %v5549
    %7593 = vmatprep.subr.bf16.mxu0 %v5542
    %7594 = vmatpush1.bf16.msra.mxu0 %v5541
    %7595 = vmatprep.subr.bf16.mxu0 %v5534
    %7596 = vmatpush1.bf16.msra.mxu0 %v5533
    %7597 = vmatprep.subr.bf16.mxu0 %v5654
    %7598 = vmatpush2.bf16.msra.mxu0 %v5653
    %7599 = vmatprep.subr.bf16.mxu0 %v5646
    %7600 = vmatpush2.bf16.msra.mxu0 %v5645
    %7601 = vmatprep.subr.bf16.mxu0 %v5638
    %7602 = vmatpush2.bf16.msra.mxu0 %v5637
    %7603 = vmatprep.subr.bf16.mxu0 %v5630
    %7604 = vmatpush2.bf16.msra.mxu0 %v5629
    %7605 = vmatprep.subr.bf16.mxu0 %v5622
    %7606 = vmatpush2.bf16.msra.mxu0 %v5621
    %7607 = vmatprep.subr.bf16.mxu0 %v5614
    %7608 = vmatpush2.bf16.msra.mxu0 %v5613
    %7609 = vmatprep.subr.bf16.mxu0 %v5606
    %7610 = vmatpush2.bf16.msra.mxu0 %v5605
    %7611 = vmatprep.subr.bf16.mxu0 %v5598
    %7612 = vmatpush2.bf16.msra.mxu0 %v5597
    %7613 = vmatprep.mubr.bf16.mxu0 %v123
    %7614 = vmatmul.mubr.bf16.gmra.mxu0 %v122
    %v7615 = vpop.f32.mrf.mxu0
    %v7616 = vadd.f32 %v2209, %v7615
    %v7617 = vpop.f32.mrf.mxu0
    %v7618 = vadd.f32 %v2211, %v7617
    %v7619 = vpop.f32.mrf.mxu0
    %v7620 = vpop.f32.mrf.mxu0
    %7621 = vdwg.mxu0
    %7622 = vmatprep.subr.bf16.mxu0 %v5718
    %7623 = vmatpush1.bf16.msra.mxu0 %v5717
    %7624 = vmatprep.subr.bf16.mxu0 %v5710
    %7625 = vmatpush1.bf16.msra.mxu0 %v5709
    %7626 = vmatprep.subr.bf16.mxu0 %v5702
    %7627 = vmatpush1.bf16.msra.mxu0 %v5701
    %7628 = vmatprep.subr.bf16.mxu0 %v5694
    %7629 = vmatpush1.bf16.msra.mxu0 %v5693
    %7630 = vmatprep.subr.bf16.mxu0 %v5686
    %7631 = vmatpush1.bf16.msra.mxu0 %v5685
    %7632 = vmatprep.subr.bf16.mxu0 %v5678
    %7633 = vmatpush1.bf16.msra.mxu0 %v5677
    %7634 = vmatprep.subr.bf16.mxu0 %v5670
    %7635 = vmatpush1.bf16.msra.mxu0 %v5669
    %7636 = vmatprep.subr.bf16.mxu0 %v5662
    %7637 = vmatpush1.bf16.msra.mxu0 %v5661
    %7638 = vmatprep.subr.bf16.mxu0 %v5782
    %7639 = vmatpush2.bf16.msra.mxu0 %v5781
    %7640 = vmatprep.subr.bf16.mxu0 %v5774
    %7641 = vmatpush2.bf16.msra.mxu0 %v5773
    %7642 = vmatprep.subr.bf16.mxu0 %v5766
    %7643 = vmatpush2.bf16.msra.mxu0 %v5765
    %7644 = vmatprep.subr.bf16.mxu0 %v5758
    %7645 = vmatpush2.bf16.msra.mxu0 %v5757
    %7646 = vmatprep.subr.bf16.mxu0 %v5750
    %7647 = vmatpush2.bf16.msra.mxu0 %v5749
    %7648 = vmatprep.subr.bf16.mxu0 %v5742
    %7649 = vmatpush2.bf16.msra.mxu0 %v5741
    %7650 = vmatprep.subr.bf16.mxu0 %v5734
    %7651 = vmatpush2.bf16.msra.mxu0 %v5733
    %7652 = vmatprep.subr.bf16.mxu0 %v5726
    %7653 = vmatpush2.bf16.msra.mxu0 %v5725
    %7654 = vmatprep.mubr.bf16.mxu0 %v125
    %7655 = vmatmul.mubr.bf16.gmra.mxu0 %v124
    %v7656 = vpop.f32.mrf.mxu0
    %v7657 = vadd.f32 %v7616, %v7656
    %v7658 = vpop.f32.mrf.mxu0
    %v7659 = vadd.f32 %v7618, %v7658
    %v7660 = vpop.f32.mrf.mxu0
    %v7661 = vpop.f32.mrf.mxu0
    %7662 = vdwg.mxu0
    %7663 = vmatprep.subr.bf16.mxu0 %v5846
    %7664 = vmatpush1.bf16.msra.mxu0 %v5845
    %7665 = vmatprep.subr.bf16.mxu0 %v5838
    %7666 = vmatpush1.bf16.msra.mxu0 %v5837
    %7667 = vmatprep.subr.bf16.mxu0 %v5830
    %7668 = vmatpush1.bf16.msra.mxu0 %v5829
    %7669 = vmatprep.subr.bf16.mxu0 %v5822
    %7670 = vmatpush1.bf16.msra.mxu0 %v5821
    %7671 = vmatprep.subr.bf16.mxu0 %v5814
    %7672 = vmatpush1.bf16.msra.mxu0 %v5813
    %7673 = vmatprep.subr.bf16.mxu0 %v5806
    %7674 = vmatpush1.bf16.msra.mxu0 %v5805
    %7675 = vmatprep.subr.bf16.mxu0 %v5798
    %7676 = vmatpush1.bf16.msra.mxu0 %v5797
    %7677 = vmatprep.subr.bf16.mxu0 %v5790
    %7678 = vmatpush1.bf16.msra.mxu0 %v5789
    %7679 = vmatprep.subr.bf16.mxu0 %v5910
    %7680 = vmatpush2.bf16.msra.mxu0 %v5909
    %7681 = vmatprep.subr.bf16.mxu0 %v5902
    %7682 = vmatpush2.bf16.msra.mxu0 %v5901
    %7683 = vmatprep.subr.bf16.mxu0 %v5894
    %7684 = vmatpush2.bf16.msra.mxu0 %v5893
    %7685 = vmatprep.subr.bf16.mxu0 %v5886
    %7686 = vmatpush2.bf16.msra.mxu0 %v5885
    %7687 = vmatprep.subr.bf16.mxu0 %v5878
    %7688 = vmatpush2.bf16.msra.mxu0 %v5877
    %7689 = vmatprep.subr.bf16.mxu0 %v5870
    %7690 = vmatpush2.bf16.msra.mxu0 %v5869
    %7691 = vmatprep.subr.bf16.mxu0 %v5862
    %7692 = vmatpush2.bf16.msra.mxu0 %v5861
    %7693 = vmatprep.subr.bf16.mxu0 %v5854
    %7694 = vmatpush2.bf16.msra.mxu0 %v5853
    %7695 = vmatprep.mubr.bf16.mxu0 %v127
    %7696 = vmatmul.mubr.bf16.gmra.mxu0 %v126
    %v7697 = vpop.f32.mrf.mxu0
    %v7698 = vadd.f32 %v7657, %v7697
    %v7699 = vpop.f32.mrf.mxu0
    %v7700 = vadd.f32 %v7659, %v7699
    %v7701 = vpop.f32.mrf.mxu0
    %v7702 = vpop.f32.mrf.mxu0
    %7703 = vdwg.mxu0
    %7704 = vmatprep.subr.bf16.mxu0 %v5974
    %7705 = vmatpush1.bf16.msra.mxu0 %v5973
    %7706 = vmatprep.subr.bf16.mxu0 %v5966
    %7707 = vmatpush1.bf16.msra.mxu0 %v5965
    %7708 = vmatprep.subr.bf16.mxu0 %v5958
    %7709 = vmatpush1.bf16.msra.mxu0 %v5957
    %7710 = vmatprep.subr.bf16.mxu0 %v5950
    %7711 = vmatpush1.bf16.msra.mxu0 %v5949
    %7712 = vmatprep.subr.bf16.mxu0 %v5942
    %7713 = vmatpush1.bf16.msra.mxu0 %v5941
    %7714 = vmatprep.subr.bf16.mxu0 %v5934
    %7715 = vmatpush1.bf16.msra.mxu0 %v5933
    %7716 = vmatprep.subr.bf16.mxu0 %v5926
    %7717 = vmatpush1.bf16.msra.mxu0 %v5925
    %7718 = vmatprep.subr.bf16.mxu0 %v5918
    %7719 = vmatpush1.bf16.msra.mxu0 %v5917
    %7720 = vmatprep.subr.bf16.mxu0 %v6038
    %7721 = vmatpush2.bf16.msra.mxu0 %v6037
    %7722 = vmatprep.subr.bf16.mxu0 %v6030
    %7723 = vmatpush2.bf16.msra.mxu0 %v6029
    %7724 = vmatprep.subr.bf16.mxu0 %v6022
    %7725 = vmatpush2.bf16.msra.mxu0 %v6021
    %7726 = vmatprep.subr.bf16.mxu0 %v6014
    %7727 = vmatpush2.bf16.msra.mxu0 %v6013
    %7728 = vmatprep.subr.bf16.mxu0 %v6006
    %7729 = vmatpush2.bf16.msra.mxu0 %v6005
    %7730 = vmatprep.subr.bf16.mxu0 %v5998
    %7731 = vmatpush2.bf16.msra.mxu0 %v5997
    %7732 = vmatprep.subr.bf16.mxu0 %v5990
    %7733 = vmatpush2.bf16.msra.mxu0 %v5989
    %7734 = vmatprep.subr.bf16.mxu0 %v5982
    %7735 = vmatpush2.bf16.msra.mxu0 %v5981
    %7736 = vmatprep.mubr.bf16.mxu0 %v129
    %7737 = vmatmul.mubr.bf16.gmra.mxu0 %v128
    %v7738 = vpop.f32.mrf.mxu0
    %v7739 = vadd.f32 %v7698, %v7738
    %v7740 = vpop.f32.mrf.mxu0
    %v7741 = vadd.f32 %v7700, %v7740
    %v7742 = vpop.f32.mrf.mxu0
    %v7743 = vpop.f32.mrf.mxu0
    %7744 = vdwg.mxu0
    %7745 = vmatprep.subr.bf16.mxu0 %v6102
    %7746 = vmatpush1.bf16.msra.mxu0 %v6101
    %7747 = vmatprep.subr.bf16.mxu0 %v6094
    %7748 = vmatpush1.bf16.msra.mxu0 %v6093
    %7749 = vmatprep.subr.bf16.mxu0 %v6086
    %7750 = vmatpush1.bf16.msra.mxu0 %v6085
    %7751 = vmatprep.subr.bf16.mxu0 %v6078
    %7752 = vmatpush1.bf16.msra.mxu0 %v6077
    %7753 = vmatprep.subr.bf16.mxu0 %v6070
    %7754 = vmatpush1.bf16.msra.mxu0 %v6069
    %7755 = vmatprep.subr.bf16.mxu0 %v6062
    %7756 = vmatpush1.bf16.msra.mxu0 %v6061
    %7757 = vmatprep.subr.bf16.mxu0 %v6054
    %7758 = vmatpush1.bf16.msra.mxu0 %v6053
    %7759 = vmatprep.subr.bf16.mxu0 %v6046
    %7760 = vmatpush1.bf16.msra.mxu0 %v6045
    %7761 = vmatprep.subr.bf16.mxu0 %v6166
    %7762 = vmatpush2.bf16.msra.mxu0 %v6165
    %7763 = vmatprep.subr.bf16.mxu0 %v6158
    %7764 = vmatpush2.bf16.msra.mxu0 %v6157
    %7765 = vmatprep.subr.bf16.mxu0 %v6150
    %7766 = vmatpush2.bf16.msra.mxu0 %v6149
    %7767 = vmatprep.subr.bf16.mxu0 %v6142
    %7768 = vmatpush2.bf16.msra.mxu0 %v6141
    %7769 = vmatprep.subr.bf16.mxu0 %v6134
    %7770 = vmatpush2.bf16.msra.mxu0 %v6133
    %7771 = vmatprep.subr.bf16.mxu0 %v6126
    %7772 = vmatpush2.bf16.msra.mxu0 %v6125
    %7773 = vmatprep.subr.bf16.mxu0 %v6118
    %7774 = vmatpush2.bf16.msra.mxu0 %v6117
    %7775 = vmatprep.subr.bf16.mxu0 %v6110
    %7776 = vmatpush2.bf16.msra.mxu0 %v6109
    %7777 = vmatprep.mubr.bf16.mxu0 %v131
    %7778 = vmatmul.mubr.bf16.gmra.mxu0 %v130
    %v7779 = vpop.f32.mrf.mxu0
    %v7780 = vadd.f32 %v7739, %v7779
    %v7781 = vpop.f32.mrf.mxu0
    %v7782 = vadd.f32 %v7741, %v7781
    %v7783 = vpop.f32.mrf.mxu0
    %v7784 = vpop.f32.mrf.mxu0
    %7785 = vdwg.mxu0
    %7786 = vmatprep.subr.bf16.mxu0 %v6230
    %7787 = vmatpush1.bf16.msra.mxu0 %v6229
    %7788 = vmatprep.subr.bf16.mxu0 %v6222
    %7789 = vmatpush1.bf16.msra.mxu0 %v6221
    %7790 = vmatprep.subr.bf16.mxu0 %v6214
    %7791 = vmatpush1.bf16.msra.mxu0 %v6213
    %7792 = vmatprep.subr.bf16.mxu0 %v6206
    %7793 = vmatpush1.bf16.msra.mxu0 %v6205
    %7794 = vmatprep.subr.bf16.mxu0 %v6198
    %7795 = vmatpush1.bf16.msra.mxu0 %v6197
    %7796 = vmatprep.subr.bf16.mxu0 %v6190
    %7797 = vmatpush1.bf16.msra.mxu0 %v6189
    %7798 = vmatprep.subr.bf16.mxu0 %v6182
    %7799 = vmatpush1.bf16.msra.mxu0 %v6181
    %7800 = vmatprep.subr.bf16.mxu0 %v6174
    %7801 = vmatpush1.bf16.msra.mxu0 %v6173
    %7802 = vmatprep.subr.bf16.mxu0 %v6294
    %7803 = vmatpush2.bf16.msra.mxu0 %v6293
    %7804 = vmatprep.subr.bf16.mxu0 %v6286
    %7805 = vmatpush2.bf16.msra.mxu0 %v6285
    %7806 = vmatprep.subr.bf16.mxu0 %v6278
    %7807 = vmatpush2.bf16.msra.mxu0 %v6277
    %7808 = vmatprep.subr.bf16.mxu0 %v6270
    %7809 = vmatpush2.bf16.msra.mxu0 %v6269
    %7810 = vmatprep.subr.bf16.mxu0 %v6262
    %7811 = vmatpush2.bf16.msra.mxu0 %v6261
    %7812 = vmatprep.subr.bf16.mxu0 %v6254
    %7813 = vmatpush2.bf16.msra.mxu0 %v6253
    %7814 = vmatprep.subr.bf16.mxu0 %v6246
    %7815 = vmatpush2.bf16.msra.mxu0 %v6245
    %7816 = vmatprep.subr.bf16.mxu0 %v6238
    %7817 = vmatpush2.bf16.msra.mxu0 %v6237
    %7818 = vmatprep.mubr.bf16.mxu0 %v133
    %7819 = vmatmul.mubr.bf16.gmra.mxu0 %v132
    %v7820 = vpop.f32.mrf.mxu0
    %v7821 = vadd.f32 %v7780, %v7820
    %v7822 = vpop.f32.mrf.mxu0
    %v7823 = vadd.f32 %v7782, %v7822
    %v7824 = vpop.f32.mrf.mxu0
    %v7825 = vpop.f32.mrf.mxu0
    %7826 = vdwg.mxu0
    %7827 = vmatprep.subr.bf16.mxu0 %v6358
    %7828 = vmatpush1.bf16.msra.mxu0 %v6357
    %7829 = vmatprep.subr.bf16.mxu0 %v6350
    %7830 = vmatpush1.bf16.msra.mxu0 %v6349
    %7831 = vmatprep.subr.bf16.mxu0 %v6342
    %7832 = vmatpush1.bf16.msra.mxu0 %v6341
    %7833 = vmatprep.subr.bf16.mxu0 %v6334
    %7834 = vmatpush1.bf16.msra.mxu0 %v6333
    %7835 = vmatprep.subr.bf16.mxu0 %v6326
    %7836 = vmatpush1.bf16.msra.mxu0 %v6325
    %7837 = vmatprep.subr.bf16.mxu0 %v6318
    %7838 = vmatpush1.bf16.msra.mxu0 %v6317
    %7839 = vmatprep.subr.bf16.mxu0 %v6310
    %7840 = vmatpush1.bf16.msra.mxu0 %v6309
    %7841 = vmatprep.subr.bf16.mxu0 %v6302
    %7842 = vmatpush1.bf16.msra.mxu0 %v6301
    %7843 = vmatprep.subr.bf16.mxu0 %v6422
    %7844 = vmatpush2.bf16.msra.mxu0 %v6421
    %7845 = vmatprep.subr.bf16.mxu0 %v6414
    %7846 = vmatpush2.bf16.msra.mxu0 %v6413
    %7847 = vmatprep.subr.bf16.mxu0 %v6406
    %7848 = vmatpush2.bf16.msra.mxu0 %v6405
    %7849 = vmatprep.subr.bf16.mxu0 %v6398
    %7850 = vmatpush2.bf16.msra.mxu0 %v6397
    %7851 = vmatprep.subr.bf16.mxu0 %v6390
    %7852 = vmatpush2.bf16.msra.mxu0 %v6389
    %7853 = vmatprep.subr.bf16.mxu0 %v6382
    %7854 = vmatpush2.bf16.msra.mxu0 %v6381
    %7855 = vmatprep.subr.bf16.mxu0 %v6374
    %7856 = vmatpush2.bf16.msra.mxu0 %v6373
    %7857 = vmatprep.subr.bf16.mxu0 %v6366
    %7858 = vmatpush2.bf16.msra.mxu0 %v6365
    %7859 = vmatprep.mubr.bf16.mxu0 %v135
    %7860 = vmatmul.mubr.bf16.gmra.mxu0 %v134
    %v7861 = vpop.f32.mrf.mxu0
    %v7862 = vadd.f32 %v7821, %v7861
    %v7863 = vpop.f32.mrf.mxu0
    %v7864 = vadd.f32 %v7823, %v7863
    %v7865 = vpop.f32.mrf.mxu0
    %v7866 = vpop.f32.mrf.mxu0
    %7867 = vdwg.mxu0
    %7868 = vmatprep.subr.bf16.mxu0 %v6486
    %7869 = vmatpush1.bf16.msra.mxu0 %v6485
    %7870 = vmatprep.subr.bf16.mxu0 %v6478
    %7871 = vmatpush1.bf16.msra.mxu0 %v6477
    %7872 = vmatprep.subr.bf16.mxu0 %v6470
    %7873 = vmatpush1.bf16.msra.mxu0 %v6469
    %7874 = vmatprep.subr.bf16.mxu0 %v6462
    %7875 = vmatpush1.bf16.msra.mxu0 %v6461
    %7876 = vmatprep.subr.bf16.mxu0 %v6454
    %7877 = vmatpush1.bf16.msra.mxu0 %v6453
    %7878 = vmatprep.subr.bf16.mxu0 %v6446
    %7879 = vmatpush1.bf16.msra.mxu0 %v6445
    %7880 = vmatprep.subr.bf16.mxu0 %v6438
    %7881 = vmatpush1.bf16.msra.mxu0 %v6437
    %7882 = vmatprep.subr.bf16.mxu0 %v6430
    %7883 = vmatpush1.bf16.msra.mxu0 %v6429
    %7884 = vmatprep.subr.bf16.mxu0 %v6550
    %7885 = vmatpush2.bf16.msra.mxu0 %v6549
    %7886 = vmatprep.subr.bf16.mxu0 %v6542
    %7887 = vmatpush2.bf16.msra.mxu0 %v6541
    %7888 = vmatprep.subr.bf16.mxu0 %v6534
    %7889 = vmatpush2.bf16.msra.mxu0 %v6533
    %7890 = vmatprep.subr.bf16.mxu0 %v6526
    %7891 = vmatpush2.bf16.msra.mxu0 %v6525
    %7892 = vmatprep.subr.bf16.mxu0 %v6518
    %7893 = vmatpush2.bf16.msra.mxu0 %v6517
    %7894 = vmatprep.subr.bf16.mxu0 %v6510
    %7895 = vmatpush2.bf16.msra.mxu0 %v6509
    %7896 = vmatprep.subr.bf16.mxu0 %v6502
    %7897 = vmatpush2.bf16.msra.mxu0 %v6501
    %7898 = vmatprep.subr.bf16.mxu0 %v6494
    %7899 = vmatpush2.bf16.msra.mxu0 %v6493
    %7900 = vmatprep.mubr.bf16.mxu0 %v137
    %7901 = vmatmul.mubr.bf16.gmra.mxu0 %v136
    %v7902 = vpop.f32.mrf.mxu0
    %v7903 = vadd.f32 %v7862, %v7902
    %v7904 = vpop.f32.mrf.mxu0
    %v7905 = vadd.f32 %v7864, %v7904
    %v7906 = vpop.f32.mrf.mxu0
    %v7907 = vpop.f32.mrf.mxu0
    %7908 = vdwg.mxu0
    %7909 = vmatprep.subr.bf16.mxu0 %v5592
    %7910 = vmatpush1.bf16.msra.mxu0 %v5591
    %7911 = vmatprep.subr.bf16.mxu0 %v5584
    %7912 = vmatpush1.bf16.msra.mxu0 %v5583
    %7913 = vmatprep.subr.bf16.mxu0 %v5576
    %7914 = vmatpush1.bf16.msra.mxu0 %v5575
    %7915 = vmatprep.subr.bf16.mxu0 %v5568
    %7916 = vmatpush1.bf16.msra.mxu0 %v5567
    %7917 = vmatprep.subr.bf16.mxu0 %v5560
    %7918 = vmatpush1.bf16.msra.mxu0 %v5559
    %7919 = vmatprep.subr.bf16.mxu0 %v5552
    %7920 = vmatpush1.bf16.msra.mxu0 %v5551
    %7921 = vmatprep.subr.bf16.mxu0 %v5544
    %7922 = vmatpush1.bf16.msra.mxu0 %v5543
    %7923 = vmatprep.subr.bf16.mxu0 %v5536
    %7924 = vmatpush1.bf16.msra.mxu0 %v5535
    %7925 = vmatprep.subr.bf16.mxu0 %v5656
    %7926 = vmatpush2.bf16.msra.mxu0 %v5655
    %7927 = vmatprep.subr.bf16.mxu0 %v5648
    %7928 = vmatpush2.bf16.msra.mxu0 %v5647
    %7929 = vmatprep.subr.bf16.mxu0 %v5640
    %7930 = vmatpush2.bf16.msra.mxu0 %v5639
    %7931 = vmatprep.subr.bf16.mxu0 %v5632
    %7932 = vmatpush2.bf16.msra.mxu0 %v5631
    %7933 = vmatprep.subr.bf16.mxu0 %v5624
    %7934 = vmatpush2.bf16.msra.mxu0 %v5623
    %7935 = vmatprep.subr.bf16.mxu0 %v5616
    %7936 = vmatpush2.bf16.msra.mxu0 %v5615
    %7937 = vmatprep.subr.bf16.mxu0 %v5608
    %7938 = vmatpush2.bf16.msra.mxu0 %v5607
    %7939 = vmatprep.subr.bf16.mxu0 %v5600
    %7940 = vmatpush2.bf16.msra.mxu0 %v5599
    %7941 = vmatprep.mubr.bf16.mxu0 %v123
    %7942 = vmatmul.mubr.bf16.gmra.mxu0 %v122
    %v7943 = vpop.f32.mrf.mxu0
    %v7944 = vadd.f32 %v2291, %v7943
    %v7945 = vpop.f32.mrf.mxu0
    %v7946 = vadd.f32 %v2293, %v7945
    %v7947 = vpop.f32.mrf.mxu0
    %v7948 = vpop.f32.mrf.mxu0
    %7949 = vdwg.mxu0
    %7950 = vmatprep.subr.bf16.mxu0 %v5720
    %7951 = vmatpush1.bf16.msra.mxu0 %v5719
    %7952 = vmatprep.subr.bf16.mxu0 %v5712
    %7953 = vmatpush1.bf16.msra.mxu0 %v5711
    %7954 = vmatprep.subr.bf16.mxu0 %v5704
    %7955 = vmatpush1.bf16.msra.mxu0 %v5703
    %7956 = vmatprep.subr.bf16.mxu0 %v5696
    %7957 = vmatpush1.bf16.msra.mxu0 %v5695
    %7958 = vmatprep.subr.bf16.mxu0 %v5688
    %7959 = vmatpush1.bf16.msra.mxu0 %v5687
    %7960 = vmatprep.subr.bf16.mxu0 %v5680
    %7961 = vmatpush1.bf16.msra.mxu0 %v5679
    %7962 = vmatprep.subr.bf16.mxu0 %v5672
    %7963 = vmatpush1.bf16.msra.mxu0 %v5671
    %7964 = vmatprep.subr.bf16.mxu0 %v5664
    %7965 = vmatpush1.bf16.msra.mxu0 %v5663
    %7966 = vmatprep.subr.bf16.mxu0 %v5784
    %7967 = vmatpush2.bf16.msra.mxu0 %v5783
    %7968 = vmatprep.subr.bf16.mxu0 %v5776
    %7969 = vmatpush2.bf16.msra.mxu0 %v5775
    %7970 = vmatprep.subr.bf16.mxu0 %v5768
    %7971 = vmatpush2.bf16.msra.mxu0 %v5767
    %7972 = vmatprep.subr.bf16.mxu0 %v5760
    %7973 = vmatpush2.bf16.msra.mxu0 %v5759
    %7974 = vmatprep.subr.bf16.mxu0 %v5752
    %7975 = vmatpush2.bf16.msra.mxu0 %v5751
    %7976 = vmatprep.subr.bf16.mxu0 %v5744
    %7977 = vmatpush2.bf16.msra.mxu0 %v5743
    %7978 = vmatprep.subr.bf16.mxu0 %v5736
    %7979 = vmatpush2.bf16.msra.mxu0 %v5735
    %7980 = vmatprep.subr.bf16.mxu0 %v5728
    %7981 = vmatpush2.bf16.msra.mxu0 %v5727
    %7982 = vmatprep.mubr.bf16.mxu0 %v125
    %7983 = vmatmul.mubr.bf16.gmra.mxu0 %v124
    %v7984 = vpop.f32.mrf.mxu0
    %v7985 = vadd.f32 %v7944, %v7984
    %v7986 = vpop.f32.mrf.mxu0
    %v7987 = vadd.f32 %v7946, %v7986
    %v7988 = vpop.f32.mrf.mxu0
    %v7989 = vpop.f32.mrf.mxu0
    %7990 = vdwg.mxu0
    %7991 = vmatprep.subr.bf16.mxu0 %v5848
    %7992 = vmatpush1.bf16.msra.mxu0 %v5847
    %7993 = vmatprep.subr.bf16.mxu0 %v5840
    %7994 = vmatpush1.bf16.msra.mxu0 %v5839
    %7995 = vmatprep.subr.bf16.mxu0 %v5832
    %7996 = vmatpush1.bf16.msra.mxu0 %v5831
    %7997 = vmatprep.subr.bf16.mxu0 %v5824
    %7998 = vmatpush1.bf16.msra.mxu0 %v5823
    %7999 = vmatprep.subr.bf16.mxu0 %v5816
    %8000 = vmatpush1.bf16.msra.mxu0 %v5815
    %8001 = vmatprep.subr.bf16.mxu0 %v5808
    %8002 = vmatpush1.bf16.msra.mxu0 %v5807
    %8003 = vmatprep.subr.bf16.mxu0 %v5800
    %8004 = vmatpush1.bf16.msra.mxu0 %v5799
    %8005 = vmatprep.subr.bf16.mxu0 %v5792
    %8006 = vmatpush1.bf16.msra.mxu0 %v5791
    %8007 = vmatprep.subr.bf16.mxu0 %v5912
    %8008 = vmatpush2.bf16.msra.mxu0 %v5911
    %8009 = vmatprep.subr.bf16.mxu0 %v5904
    %8010 = vmatpush2.bf16.msra.mxu0 %v5903
    %8011 = vmatprep.subr.bf16.mxu0 %v5896
    %8012 = vmatpush2.bf16.msra.mxu0 %v5895
    %8013 = vmatprep.subr.bf16.mxu0 %v5888
    %8014 = vmatpush2.bf16.msra.mxu0 %v5887
    %8015 = vmatprep.subr.bf16.mxu0 %v5880
    %8016 = vmatpush2.bf16.msra.mxu0 %v5879
    %8017 = vmatprep.subr.bf16.mxu0 %v5872
    %8018 = vmatpush2.bf16.msra.mxu0 %v5871
    %8019 = vmatprep.subr.bf16.mxu0 %v5864
    %8020 = vmatpush2.bf16.msra.mxu0 %v5863
    %8021 = vmatprep.subr.bf16.mxu0 %v5856
    %8022 = vmatpush2.bf16.msra.mxu0 %v5855
    %8023 = vmatprep.mubr.bf16.mxu0 %v127
    %8024 = vmatmul.mubr.bf16.gmra.mxu0 %v126
    %v8025 = vpop.f32.mrf.mxu0
    %v8026 = vadd.f32 %v7985, %v8025
    %v8027 = vpop.f32.mrf.mxu0
    %v8028 = vadd.f32 %v7987, %v8027
    %v8029 = vpop.f32.mrf.mxu0
    %v8030 = vpop.f32.mrf.mxu0
    %8031 = vdwg.mxu0
    %8032 = vmatprep.subr.bf16.mxu0 %v5976
    %8033 = vmatpush1.bf16.msra.mxu0 %v5975
    %8034 = vmatprep.subr.bf16.mxu0 %v5968
    %8035 = vmatpush1.bf16.msra.mxu0 %v5967
    %8036 = vmatprep.subr.bf16.mxu0 %v5960
    %8037 = vmatpush1.bf16.msra.mxu0 %v5959
    %8038 = vmatprep.subr.bf16.mxu0 %v5952
    %8039 = vmatpush1.bf16.msra.mxu0 %v5951
    %8040 = vmatprep.subr.bf16.mxu0 %v5944
    %8041 = vmatpush1.bf16.msra.mxu0 %v5943
    %8042 = vmatprep.subr.bf16.mxu0 %v5936
    %8043 = vmatpush1.bf16.msra.mxu0 %v5935
    %8044 = vmatprep.subr.bf16.mxu0 %v5928
    %8045 = vmatpush1.bf16.msra.mxu0 %v5927
    %8046 = vmatprep.subr.bf16.mxu0 %v5920
    %8047 = vmatpush1.bf16.msra.mxu0 %v5919
    %8048 = vmatprep.subr.bf16.mxu0 %v6040
    %8049 = vmatpush2.bf16.msra.mxu0 %v6039
    %8050 = vmatprep.subr.bf16.mxu0 %v6032
    %8051 = vmatpush2.bf16.msra.mxu0 %v6031
    %8052 = vmatprep.subr.bf16.mxu0 %v6024
    %8053 = vmatpush2.bf16.msra.mxu0 %v6023
    %8054 = vmatprep.subr.bf16.mxu0 %v6016
    %8055 = vmatpush2.bf16.msra.mxu0 %v6015
    %8056 = vmatprep.subr.bf16.mxu0 %v6008
    %8057 = vmatpush2.bf16.msra.mxu0 %v6007
    %8058 = vmatprep.subr.bf16.mxu0 %v6000
    %8059 = vmatpush2.bf16.msra.mxu0 %v5999
    %8060 = vmatprep.subr.bf16.mxu0 %v5992
    %8061 = vmatpush2.bf16.msra.mxu0 %v5991
    %8062 = vmatprep.subr.bf16.mxu0 %v5984
    %8063 = vmatpush2.bf16.msra.mxu0 %v5983
    %8064 = vmatprep.mubr.bf16.mxu0 %v129
    %8065 = vmatmul.mubr.bf16.gmra.mxu0 %v128
    %v8066 = vpop.f32.mrf.mxu0
    %v8067 = vadd.f32 %v8026, %v8066
    %v8068 = vpop.f32.mrf.mxu0
    %v8069 = vadd.f32 %v8028, %v8068
    %v8070 = vpop.f32.mrf.mxu0
    %v8071 = vpop.f32.mrf.mxu0
    %8072 = vdwg.mxu0
    %8073 = vmatprep.subr.bf16.mxu0 %v6104
    %8074 = vmatpush1.bf16.msra.mxu0 %v6103
    %8075 = vmatprep.subr.bf16.mxu0 %v6096
    %8076 = vmatpush1.bf16.msra.mxu0 %v6095
    %8077 = vmatprep.subr.bf16.mxu0 %v6088
    %8078 = vmatpush1.bf16.msra.mxu0 %v6087
    %8079 = vmatprep.subr.bf16.mxu0 %v6080
    %8080 = vmatpush1.bf16.msra.mxu0 %v6079
    %8081 = vmatprep.subr.bf16.mxu0 %v6072
    %8082 = vmatpush1.bf16.msra.mxu0 %v6071
    %8083 = vmatprep.subr.bf16.mxu0 %v6064
    %8084 = vmatpush1.bf16.msra.mxu0 %v6063
    %8085 = vmatprep.subr.bf16.mxu0 %v6056
    %8086 = vmatpush1.bf16.msra.mxu0 %v6055
    %8087 = vmatprep.subr.bf16.mxu0 %v6048
    %8088 = vmatpush1.bf16.msra.mxu0 %v6047
    %8089 = vmatprep.subr.bf16.mxu0 %v6168
    %8090 = vmatpush2.bf16.msra.mxu0 %v6167
    %8091 = vmatprep.subr.bf16.mxu0 %v6160
    %8092 = vmatpush2.bf16.msra.mxu0 %v6159
    %8093 = vmatprep.subr.bf16.mxu0 %v6152
    %8094 = vmatpush2.bf16.msra.mxu0 %v6151
    %8095 = vmatprep.subr.bf16.mxu0 %v6144
    %8096 = vmatpush2.bf16.msra.mxu0 %v6143
    %8097 = vmatprep.subr.bf16.mxu0 %v6136
    %8098 = vmatpush2.bf16.msra.mxu0 %v6135
    %8099 = vmatprep.subr.bf16.mxu0 %v6128
    %8100 = vmatpush2.bf16.msra.mxu0 %v6127
    %8101 = vmatprep.subr.bf16.mxu0 %v6120
    %8102 = vmatpush2.bf16.msra.mxu0 %v6119
    %8103 = vmatprep.subr.bf16.mxu0 %v6112
    %8104 = vmatpush2.bf16.msra.mxu0 %v6111
    %8105 = vmatprep.mubr.bf16.mxu0 %v131
    %8106 = vmatmul.mubr.bf16.gmra.mxu0 %v130
    %v8107 = vpop.f32.mrf.mxu0
    %v8108 = vadd.f32 %v8067, %v8107
    %v8109 = vpop.f32.mrf.mxu0
    %v8110 = vadd.f32 %v8069, %v8109
    %v8111 = vpop.f32.mrf.mxu0
    %v8112 = vpop.f32.mrf.mxu0
    %8113 = vdwg.mxu0
    %8114 = vmatprep.subr.bf16.mxu0 %v6232
    %8115 = vmatpush1.bf16.msra.mxu0 %v6231
    %8116 = vmatprep.subr.bf16.mxu0 %v6224
    %8117 = vmatpush1.bf16.msra.mxu0 %v6223
    %8118 = vmatprep.subr.bf16.mxu0 %v6216
    %8119 = vmatpush1.bf16.msra.mxu0 %v6215
    %8120 = vmatprep.subr.bf16.mxu0 %v6208
    %8121 = vmatpush1.bf16.msra.mxu0 %v6207
    %8122 = vmatprep.subr.bf16.mxu0 %v6200
    %8123 = vmatpush1.bf16.msra.mxu0 %v6199
    %8124 = vmatprep.subr.bf16.mxu0 %v6192
    %8125 = vmatpush1.bf16.msra.mxu0 %v6191
    %8126 = vmatprep.subr.bf16.mxu0 %v6184
    %8127 = vmatpush1.bf16.msra.mxu0 %v6183
    %8128 = vmatprep.subr.bf16.mxu0 %v6176
    %8129 = vmatpush1.bf16.msra.mxu0 %v6175
    %8130 = vmatprep.subr.bf16.mxu0 %v6296
    %8131 = vmatpush2.bf16.msra.mxu0 %v6295
    %8132 = vmatprep.subr.bf16.mxu0 %v6288
    %8133 = vmatpush2.bf16.msra.mxu0 %v6287
    %8134 = vmatprep.subr.bf16.mxu0 %v6280
    %8135 = vmatpush2.bf16.msra.mxu0 %v6279
    %8136 = vmatprep.subr.bf16.mxu0 %v6272
    %8137 = vmatpush2.bf16.msra.mxu0 %v6271
    %8138 = vmatprep.subr.bf16.mxu0 %v6264
    %8139 = vmatpush2.bf16.msra.mxu0 %v6263
    %8140 = vmatprep.subr.bf16.mxu0 %v6256
    %8141 = vmatpush2.bf16.msra.mxu0 %v6255
    %8142 = vmatprep.subr.bf16.mxu0 %v6248
    %8143 = vmatpush2.bf16.msra.mxu0 %v6247
    %8144 = vmatprep.subr.bf16.mxu0 %v6240
    %8145 = vmatpush2.bf16.msra.mxu0 %v6239
    %8146 = vmatprep.mubr.bf16.mxu0 %v133
    %8147 = vmatmul.mubr.bf16.gmra.mxu0 %v132
    %v8148 = vpop.f32.mrf.mxu0
    %v8149 = vadd.f32 %v8108, %v8148
    %v8150 = vpop.f32.mrf.mxu0
    %v8151 = vadd.f32 %v8110, %v8150
    %v8152 = vpop.f32.mrf.mxu0
    %v8153 = vpop.f32.mrf.mxu0
    %8154 = vdwg.mxu0
    %8155 = vmatprep.subr.bf16.mxu0 %v6360
    %8156 = vmatpush1.bf16.msra.mxu0 %v6359
    %8157 = vmatprep.subr.bf16.mxu0 %v6352
    %8158 = vmatpush1.bf16.msra.mxu0 %v6351
    %8159 = vmatprep.subr.bf16.mxu0 %v6344
    %8160 = vmatpush1.bf16.msra.mxu0 %v6343
    %8161 = vmatprep.subr.bf16.mxu0 %v6336
    %8162 = vmatpush1.bf16.msra.mxu0 %v6335
    %8163 = vmatprep.subr.bf16.mxu0 %v6328
    %8164 = vmatpush1.bf16.msra.mxu0 %v6327
    %8165 = vmatprep.subr.bf16.mxu0 %v6320
    %8166 = vmatpush1.bf16.msra.mxu0 %v6319
    %8167 = vmatprep.subr.bf16.mxu0 %v6312
    %8168 = vmatpush1.bf16.msra.mxu0 %v6311
    %8169 = vmatprep.subr.bf16.mxu0 %v6304
    %8170 = vmatpush1.bf16.msra.mxu0 %v6303
    %8171 = vmatprep.subr.bf16.mxu0 %v6424
    %8172 = vmatpush2.bf16.msra.mxu0 %v6423
    %8173 = vmatprep.subr.bf16.mxu0 %v6416
    %8174 = vmatpush2.bf16.msra.mxu0 %v6415
    %8175 = vmatprep.subr.bf16.mxu0 %v6408
    %8176 = vmatpush2.bf16.msra.mxu0 %v6407
    %8177 = vmatprep.subr.bf16.mxu0 %v6400
    %8178 = vmatpush2.bf16.msra.mxu0 %v6399
    %8179 = vmatprep.subr.bf16.mxu0 %v6392
    %8180 = vmatpush2.bf16.msra.mxu0 %v6391
    %8181 = vmatprep.subr.bf16.mxu0 %v6384
    %8182 = vmatpush2.bf16.msra.mxu0 %v6383
    %8183 = vmatprep.subr.bf16.mxu0 %v6376
    %8184 = vmatpush2.bf16.msra.mxu0 %v6375
    %8185 = vmatprep.subr.bf16.mxu0 %v6368
    %8186 = vmatpush2.bf16.msra.mxu0 %v6367
    %8187 = vmatprep.mubr.bf16.mxu0 %v135
    %8188 = vmatmul.mubr.bf16.gmra.mxu0 %v134
    %v8189 = vpop.f32.mrf.mxu0
    %v8190 = vadd.f32 %v8149, %v8189
    %v8191 = vpop.f32.mrf.mxu0
    %v8192 = vadd.f32 %v8151, %v8191
    %v8193 = vpop.f32.mrf.mxu0
    %v8194 = vpop.f32.mrf.mxu0
    %8195 = vdwg.mxu0
    %8196 = vmatprep.subr.bf16.mxu0 %v6488
    %8197 = vmatpush1.bf16.msra.mxu0 %v6487
    %8198 = vmatprep.subr.bf16.mxu0 %v6480
    %8199 = vmatpush1.bf16.msra.mxu0 %v6479
    %8200 = vmatprep.subr.bf16.mxu0 %v6472
    %8201 = vmatpush1.bf16.msra.mxu0 %v6471
    %8202 = vmatprep.subr.bf16.mxu0 %v6464
    %8203 = vmatpush1.bf16.msra.mxu0 %v6463
    %8204 = vmatprep.subr.bf16.mxu0 %v6456
    %8205 = vmatpush1.bf16.msra.mxu0 %v6455
    %8206 = vmatprep.subr.bf16.mxu0 %v6448
    %8207 = vmatpush1.bf16.msra.mxu0 %v6447
    %8208 = vmatprep.subr.bf16.mxu0 %v6440
    %8209 = vmatpush1.bf16.msra.mxu0 %v6439
    %8210 = vmatprep.subr.bf16.mxu0 %v6432
    %8211 = vmatpush1.bf16.msra.mxu0 %v6431
    %8212 = vmatprep.subr.bf16.mxu0 %v6552
    %8213 = vmatpush2.bf16.msra.mxu0 %v6551
    %8214 = vmatprep.subr.bf16.mxu0 %v6544
    %8215 = vmatpush2.bf16.msra.mxu0 %v6543
    %8216 = vmatprep.subr.bf16.mxu0 %v6536
    %8217 = vmatpush2.bf16.msra.mxu0 %v6535
    %8218 = vmatprep.subr.bf16.mxu0 %v6528
    %8219 = vmatpush2.bf16.msra.mxu0 %v6527
    %8220 = vmatprep.subr.bf16.mxu0 %v6520
    %8221 = vmatpush2.bf16.msra.mxu0 %v6519
    %8222 = vmatprep.subr.bf16.mxu0 %v6512
    %8223 = vmatpush2.bf16.msra.mxu0 %v6511
    %8224 = vmatprep.subr.bf16.mxu0 %v6504
    %8225 = vmatpush2.bf16.msra.mxu0 %v6503
    %8226 = vmatprep.subr.bf16.mxu0 %v6496
    %8227 = vmatpush2.bf16.msra.mxu0 %v6495
    %8228 = vmatprep.mubr.bf16.mxu0 %v137
    %8229 = vmatmul.mubr.bf16.gmra.mxu0 %v136
    %v8230 = vpop.f32.mrf.mxu0
    %v8231 = vadd.f32 %v8190, %v8230
    %v8232 = vpop.f32.mrf.mxu0
    %v8233 = vadd.f32 %v8192, %v8232
    %v8234 = vpop.f32.mrf.mxu0
    %v8235 = vpop.f32.mrf.mxu0
    %8236 = vdwg.mxu0
    %8237 = vmatprep.subr.bf16.mxu0 %v5594
    %8238 = vmatpush1.bf16.msra.mxu0 %v5593
    %8239 = vmatprep.subr.bf16.mxu0 %v5586
    %8240 = vmatpush1.bf16.msra.mxu0 %v5585
    %8241 = vmatprep.subr.bf16.mxu0 %v5578
    %8242 = vmatpush1.bf16.msra.mxu0 %v5577
    %8243 = vmatprep.subr.bf16.mxu0 %v5570
    %8244 = vmatpush1.bf16.msra.mxu0 %v5569
    %8245 = vmatprep.subr.bf16.mxu0 %v5562
    %8246 = vmatpush1.bf16.msra.mxu0 %v5561
    %8247 = vmatprep.subr.bf16.mxu0 %v5554
    %8248 = vmatpush1.bf16.msra.mxu0 %v5553
    %8249 = vmatprep.subr.bf16.mxu0 %v5546
    %8250 = vmatpush1.bf16.msra.mxu0 %v5545
    %8251 = vmatprep.subr.bf16.mxu0 %v5538
    %8252 = vmatpush1.bf16.msra.mxu0 %v5537
    %8253 = vmatprep.subr.bf16.mxu0 %v5658
    %8254 = vmatpush2.bf16.msra.mxu0 %v5657
    %8255 = vmatprep.subr.bf16.mxu0 %v5650
    %8256 = vmatpush2.bf16.msra.mxu0 %v5649
    %8257 = vmatprep.subr.bf16.mxu0 %v5642
    %8258 = vmatpush2.bf16.msra.mxu0 %v5641
    %8259 = vmatprep.subr.bf16.mxu0 %v5634
    %8260 = vmatpush2.bf16.msra.mxu0 %v5633
    %8261 = vmatprep.subr.bf16.mxu0 %v5626
    %8262 = vmatpush2.bf16.msra.mxu0 %v5625
    %8263 = vmatprep.subr.bf16.mxu0 %v5618
    %8264 = vmatpush2.bf16.msra.mxu0 %v5617
    %8265 = vmatprep.subr.bf16.mxu0 %v5610
    %8266 = vmatpush2.bf16.msra.mxu0 %v5609
    %8267 = vmatprep.subr.bf16.mxu0 %v5602
    %8268 = vmatpush2.bf16.msra.mxu0 %v5601
    %8269 = vmatprep.mubr.bf16.mxu0 %v123
    %8270 = vmatmul.mubr.bf16.gmra.mxu0 %v122
    %v8271 = vpop.f32.mrf.mxu0
    %v8272 = vadd.f32 %v2373, %v8271
    %v8273 = vpop.f32.mrf.mxu0
    %v8274 = vadd.f32 %v2375, %v8273
    %v8275 = vpop.f32.mrf.mxu0
    %v8276 = vpop.f32.mrf.mxu0
    %8277 = vdwg.mxu0
    %8278 = vmatprep.subr.bf16.mxu0 %v5722
    %8279 = vmatpush1.bf16.msra.mxu0 %v5721
    %8280 = vmatprep.subr.bf16.mxu0 %v5714
    %8281 = vmatpush1.bf16.msra.mxu0 %v5713
    %8282 = vmatprep.subr.bf16.mxu0 %v5706
    %8283 = vmatpush1.bf16.msra.mxu0 %v5705
    %8284 = vmatprep.subr.bf16.mxu0 %v5698
    %8285 = vmatpush1.bf16.msra.mxu0 %v5697
    %8286 = vmatprep.subr.bf16.mxu0 %v5690
    %8287 = vmatpush1.bf16.msra.mxu0 %v5689
    %8288 = vmatprep.subr.bf16.mxu0 %v5682
    %8289 = vmatpush1.bf16.msra.mxu0 %v5681
    %8290 = vmatprep.subr.bf16.mxu0 %v5674
    %8291 = vmatpush1.bf16.msra.mxu0 %v5673
    %8292 = vmatprep.subr.bf16.mxu0 %v5666
    %8293 = vmatpush1.bf16.msra.mxu0 %v5665
    %8294 = vmatprep.subr.bf16.mxu0 %v5786
    %8295 = vmatpush2.bf16.msra.mxu0 %v5785
    %8296 = vmatprep.subr.bf16.mxu0 %v5778
    %8297 = vmatpush2.bf16.msra.mxu0 %v5777
    %8298 = vmatprep.subr.bf16.mxu0 %v5770
    %8299 = vmatpush2.bf16.msra.mxu0 %v5769
    %8300 = vmatprep.subr.bf16.mxu0 %v5762
    %8301 = vmatpush2.bf16.msra.mxu0 %v5761
    %8302 = vmatprep.subr.bf16.mxu0 %v5754
    %8303 = vmatpush2.bf16.msra.mxu0 %v5753
    %8304 = vmatprep.subr.bf16.mxu0 %v5746
    %8305 = vmatpush2.bf16.msra.mxu0 %v5745
    %8306 = vmatprep.subr.bf16.mxu0 %v5738
    %8307 = vmatpush2.bf16.msra.mxu0 %v5737
    %8308 = vmatprep.subr.bf16.mxu0 %v5730
    %8309 = vmatpush2.bf16.msra.mxu0 %v5729
    %8310 = vmatprep.mubr.bf16.mxu0 %v125
    %8311 = vmatmul.mubr.bf16.gmra.mxu0 %v124
    %v8312 = vpop.f32.mrf.mxu0
    %v8313 = vadd.f32 %v8272, %v8312
    %v8314 = vpop.f32.mrf.mxu0
    %v8315 = vadd.f32 %v8274, %v8314
    %v8316 = vpop.f32.mrf.mxu0
    %v8317 = vpop.f32.mrf.mxu0
    %8318 = vdwg.mxu0
    %8319 = vmatprep.subr.bf16.mxu0 %v5850
    %8320 = vmatpush1.bf16.msra.mxu0 %v5849
    %8321 = vmatprep.subr.bf16.mxu0 %v5842
    %8322 = vmatpush1.bf16.msra.mxu0 %v5841
    %8323 = vmatprep.subr.bf16.mxu0 %v5834
    %8324 = vmatpush1.bf16.msra.mxu0 %v5833
    %8325 = vmatprep.subr.bf16.mxu0 %v5826
    %8326 = vmatpush1.bf16.msra.mxu0 %v5825
    %8327 = vmatprep.subr.bf16.mxu0 %v5818
    %8328 = vmatpush1.bf16.msra.mxu0 %v5817
    %8329 = vmatprep.subr.bf16.mxu0 %v5810
    %8330 = vmatpush1.bf16.msra.mxu0 %v5809
    %8331 = vmatprep.subr.bf16.mxu0 %v5802
    %8332 = vmatpush1.bf16.msra.mxu0 %v5801
    %8333 = vmatprep.subr.bf16.mxu0 %v5794
    %8334 = vmatpush1.bf16.msra.mxu0 %v5793
    %8335 = vmatprep.subr.bf16.mxu0 %v5914
    %8336 = vmatpush2.bf16.msra.mxu0 %v5913
    %8337 = vmatprep.subr.bf16.mxu0 %v5906
    %8338 = vmatpush2.bf16.msra.mxu0 %v5905
    %8339 = vmatprep.subr.bf16.mxu0 %v5898
    %8340 = vmatpush2.bf16.msra.mxu0 %v5897
    %8341 = vmatprep.subr.bf16.mxu0 %v5890
    %8342 = vmatpush2.bf16.msra.mxu0 %v5889
    %8343 = vmatprep.subr.bf16.mxu0 %v5882
    %8344 = vmatpush2.bf16.msra.mxu0 %v5881
    %8345 = vmatprep.subr.bf16.mxu0 %v5874
    %8346 = vmatpush2.bf16.msra.mxu0 %v5873
    %8347 = vmatprep.subr.bf16.mxu0 %v5866
    %8348 = vmatpush2.bf16.msra.mxu0 %v5865
    %8349 = vmatprep.subr.bf16.mxu0 %v5858
    %8350 = vmatpush2.bf16.msra.mxu0 %v5857
    %8351 = vmatprep.mubr.bf16.mxu0 %v127
    %8352 = vmatmul.mubr.bf16.gmra.mxu0 %v126
    %v8353 = vpop.f32.mrf.mxu0
    %v8354 = vadd.f32 %v8313, %v8353
    %v8355 = vpop.f32.mrf.mxu0
    %v8356 = vadd.f32 %v8315, %v8355
    %v8357 = vpop.f32.mrf.mxu0
    %v8358 = vpop.f32.mrf.mxu0
    %8359 = vdwg.mxu0
    %8360 = vmatprep.subr.bf16.mxu0 %v5978
    %8361 = vmatpush1.bf16.msra.mxu0 %v5977
    %8362 = vmatprep.subr.bf16.mxu0 %v5970
    %8363 = vmatpush1.bf16.msra.mxu0 %v5969
    %8364 = vmatprep.subr.bf16.mxu0 %v5962
    %8365 = vmatpush1.bf16.msra.mxu0 %v5961
    %8366 = vmatprep.subr.bf16.mxu0 %v5954
    %8367 = vmatpush1.bf16.msra.mxu0 %v5953
    %8368 = vmatprep.subr.bf16.mxu0 %v5946
    %8369 = vmatpush1.bf16.msra.mxu0 %v5945
    %8370 = vmatprep.subr.bf16.mxu0 %v5938
    %8371 = vmatpush1.bf16.msra.mxu0 %v5937
    %8372 = vmatprep.subr.bf16.mxu0 %v5930
    %8373 = vmatpush1.bf16.msra.mxu0 %v5929
    %8374 = vmatprep.subr.bf16.mxu0 %v5922
    %8375 = vmatpush1.bf16.msra.mxu0 %v5921
    %8376 = vmatprep.subr.bf16.mxu0 %v6042
    %8377 = vmatpush2.bf16.msra.mxu0 %v6041
    %8378 = vmatprep.subr.bf16.mxu0 %v6034
    %8379 = vmatpush2.bf16.msra.mxu0 %v6033
    %8380 = vmatprep.subr.bf16.mxu0 %v6026
    %8381 = vmatpush2.bf16.msra.mxu0 %v6025
    %8382 = vmatprep.subr.bf16.mxu0 %v6018
    %8383 = vmatpush2.bf16.msra.mxu0 %v6017
    %8384 = vmatprep.subr.bf16.mxu0 %v6010
    %8385 = vmatpush2.bf16.msra.mxu0 %v6009
    %8386 = vmatprep.subr.bf16.mxu0 %v6002
    %8387 = vmatpush2.bf16.msra.mxu0 %v6001
    %8388 = vmatprep.subr.bf16.mxu0 %v5994
    %8389 = vmatpush2.bf16.msra.mxu0 %v5993
    %8390 = vmatprep.subr.bf16.mxu0 %v5986
    %8391 = vmatpush2.bf16.msra.mxu0 %v5985
    %8392 = vmatprep.mubr.bf16.mxu0 %v129
    %8393 = vmatmul.mubr.bf16.gmra.mxu0 %v128
    %v8394 = vpop.f32.mrf.mxu0
    %v8395 = vadd.f32 %v8354, %v8394
    %v8396 = vpop.f32.mrf.mxu0
    %v8397 = vadd.f32 %v8356, %v8396
    %v8398 = vpop.f32.mrf.mxu0
    %v8399 = vpop.f32.mrf.mxu0
    %8400 = vdwg.mxu0
    %8401 = vmatprep.subr.bf16.mxu0 %v6106
    %8402 = vmatpush1.bf16.msra.mxu0 %v6105
    %8403 = vmatprep.subr.bf16.mxu0 %v6098
    %8404 = vmatpush1.bf16.msra.mxu0 %v6097
    %8405 = vmatprep.subr.bf16.mxu0 %v6090
    %8406 = vmatpush1.bf16.msra.mxu0 %v6089
    %8407 = vmatprep.subr.bf16.mxu0 %v6082
    %8408 = vmatpush1.bf16.msra.mxu0 %v6081
    %8409 = vmatprep.subr.bf16.mxu0 %v6074
    %8410 = vmatpush1.bf16.msra.mxu0 %v6073
    %8411 = vmatprep.subr.bf16.mxu0 %v6066
    %8412 = vmatpush1.bf16.msra.mxu0 %v6065
    %8413 = vmatprep.subr.bf16.mxu0 %v6058
    %8414 = vmatpush1.bf16.msra.mxu0 %v6057
    %8415 = vmatprep.subr.bf16.mxu0 %v6050
    %8416 = vmatpush1.bf16.msra.mxu0 %v6049
    %8417 = vmatprep.subr.bf16.mxu0 %v6170
    %8418 = vmatpush2.bf16.msra.mxu0 %v6169
    %8419 = vmatprep.subr.bf16.mxu0 %v6162
    %8420 = vmatpush2.bf16.msra.mxu0 %v6161
    %8421 = vmatprep.subr.bf16.mxu0 %v6154
    %8422 = vmatpush2.bf16.msra.mxu0 %v6153
    %8423 = vmatprep.subr.bf16.mxu0 %v6146
    %8424 = vmatpush2.bf16.msra.mxu0 %v6145
    %8425 = vmatprep.subr.bf16.mxu0 %v6138
    %8426 = vmatpush2.bf16.msra.mxu0 %v6137
    %8427 = vmatprep.subr.bf16.mxu0 %v6130
    %8428 = vmatpush2.bf16.msra.mxu0 %v6129
    %8429 = vmatprep.subr.bf16.mxu0 %v6122
    %8430 = vmatpush2.bf16.msra.mxu0 %v6121
    %8431 = vmatprep.subr.bf16.mxu0 %v6114
    %8432 = vmatpush2.bf16.msra.mxu0 %v6113
    %8433 = vmatprep.mubr.bf16.mxu0 %v131
    %8434 = vmatmul.mubr.bf16.gmra.mxu0 %v130
    %v8435 = vpop.f32.mrf.mxu0
    %v8436 = vadd.f32 %v8395, %v8435
    %v8437 = vpop.f32.mrf.mxu0
    %v8438 = vadd.f32 %v8397, %v8437
    %v8439 = vpop.f32.mrf.mxu0
    %v8440 = vpop.f32.mrf.mxu0
    %8441 = vdwg.mxu0
    %8442 = vmatprep.subr.bf16.mxu0 %v6234
    %8443 = vmatpush1.bf16.msra.mxu0 %v6233
    %8444 = vmatprep.subr.bf16.mxu0 %v6226
    %8445 = vmatpush1.bf16.msra.mxu0 %v6225
    %8446 = vmatprep.subr.bf16.mxu0 %v6218
    %8447 = vmatpush1.bf16.msra.mxu0 %v6217
    %8448 = vmatprep.subr.bf16.mxu0 %v6210
    %8449 = vmatpush1.bf16.msra.mxu0 %v6209
    %8450 = vmatprep.subr.bf16.mxu0 %v6202
    %8451 = vmatpush1.bf16.msra.mxu0 %v6201
    %8452 = vmatprep.subr.bf16.mxu0 %v6194
    %8453 = vmatpush1.bf16.msra.mxu0 %v6193
    %8454 = vmatprep.subr.bf16.mxu0 %v6186
    %8455 = vmatpush1.bf16.msra.mxu0 %v6185
    %8456 = vmatprep.subr.bf16.mxu0 %v6178
    %8457 = vmatpush1.bf16.msra.mxu0 %v6177
    %8458 = vmatprep.subr.bf16.mxu0 %v6298
    %8459 = vmatpush2.bf16.msra.mxu0 %v6297
    %8460 = vmatprep.subr.bf16.mxu0 %v6290
    %8461 = vmatpush2.bf16.msra.mxu0 %v6289
    %8462 = vmatprep.subr.bf16.mxu0 %v6282
    %8463 = vmatpush2.bf16.msra.mxu0 %v6281
    %8464 = vmatprep.subr.bf16.mxu0 %v6274
    %8465 = vmatpush2.bf16.msra.mxu0 %v6273
    %8466 = vmatprep.subr.bf16.mxu0 %v6266
    %8467 = vmatpush2.bf16.msra.mxu0 %v6265
    %8468 = vmatprep.subr.bf16.mxu0 %v6258
    %8469 = vmatpush2.bf16.msra.mxu0 %v6257
    %8470 = vmatprep.subr.bf16.mxu0 %v6250
    %8471 = vmatpush2.bf16.msra.mxu0 %v6249
    %8472 = vmatprep.subr.bf16.mxu0 %v6242
    %8473 = vmatpush2.bf16.msra.mxu0 %v6241
    %8474 = vmatprep.mubr.bf16.mxu0 %v133
    %8475 = vmatmul.mubr.bf16.gmra.mxu0 %v132
    %v8476 = vpop.f32.mrf.mxu0
    %v8477 = vadd.f32 %v8436, %v8476
    %v8478 = vpop.f32.mrf.mxu0
    %v8479 = vadd.f32 %v8438, %v8478
    %v8480 = vpop.f32.mrf.mxu0
    %v8481 = vpop.f32.mrf.mxu0
    %8482 = vdwg.mxu0
    %8483 = vmatprep.subr.bf16.mxu0 %v6362
    %8484 = vmatpush1.bf16.msra.mxu0 %v6361
    %8485 = vmatprep.subr.bf16.mxu0 %v6354
    %8486 = vmatpush1.bf16.msra.mxu0 %v6353
    %8487 = vmatprep.subr.bf16.mxu0 %v6346
    %8488 = vmatpush1.bf16.msra.mxu0 %v6345
    %8489 = vmatprep.subr.bf16.mxu0 %v6338
    %8490 = vmatpush1.bf16.msra.mxu0 %v6337
    %8491 = vmatprep.subr.bf16.mxu0 %v6330
    %8492 = vmatpush1.bf16.msra.mxu0 %v6329
    %8493 = vmatprep.subr.bf16.mxu0 %v6322
    %8494 = vmatpush1.bf16.msra.mxu0 %v6321
    %8495 = vmatprep.subr.bf16.mxu0 %v6314
    %8496 = vmatpush1.bf16.msra.mxu0 %v6313
    %8497 = vmatprep.subr.bf16.mxu0 %v6306
    %8498 = vmatpush1.bf16.msra.mxu0 %v6305
    %8499 = vmatprep.subr.bf16.mxu0 %v6426
    %8500 = vmatpush2.bf16.msra.mxu0 %v6425
    %8501 = vmatprep.subr.bf16.mxu0 %v6418
    %8502 = vmatpush2.bf16.msra.mxu0 %v6417
    %8503 = vmatprep.subr.bf16.mxu0 %v6410
    %8504 = vmatpush2.bf16.msra.mxu0 %v6409
    %8505 = vmatprep.subr.bf16.mxu0 %v6402
    %8506 = vmatpush2.bf16.msra.mxu0 %v6401
    %8507 = vmatprep.subr.bf16.mxu0 %v6394
    %8508 = vmatpush2.bf16.msra.mxu0 %v6393
    %8509 = vmatprep.subr.bf16.mxu0 %v6386
    %8510 = vmatpush2.bf16.msra.mxu0 %v6385
    %8511 = vmatprep.subr.bf16.mxu0 %v6378
    %8512 = vmatpush2.bf16.msra.mxu0 %v6377
    %8513 = vmatprep.subr.bf16.mxu0 %v6370
    %8514 = vmatpush2.bf16.msra.mxu0 %v6369
    %8515 = vmatprep.mubr.bf16.mxu0 %v135
    %8516 = vmatmul.mubr.bf16.gmra.mxu0 %v134
    %v8517 = vpop.f32.mrf.mxu0
    %v8518 = vadd.f32 %v8477, %v8517
    %v8519 = vpop.f32.mrf.mxu0
    %v8520 = vadd.f32 %v8479, %v8519
    %v8521 = vpop.f32.mrf.mxu0
    %v8522 = vpop.f32.mrf.mxu0
    %8523 = vdwg.mxu0
    %8524 = vmatprep.subr.bf16.mxu0 %v6490
    %8525 = vmatpush1.bf16.msra.mxu0 %v6489
    %8526 = vmatprep.subr.bf16.mxu0 %v6482
    %8527 = vmatpush1.bf16.msra.mxu0 %v6481
    %8528 = vmatprep.subr.bf16.mxu0 %v6474
    %8529 = vmatpush1.bf16.msra.mxu0 %v6473
    %8530 = vmatprep.subr.bf16.mxu0 %v6466
    %8531 = vmatpush1.bf16.msra.mxu0 %v6465
    %8532 = vmatprep.subr.bf16.mxu0 %v6458
    %8533 = vmatpush1.bf16.msra.mxu0 %v6457
    %8534 = vmatprep.subr.bf16.mxu0 %v6450
    %8535 = vmatpush1.bf16.msra.mxu0 %v6449
    %8536 = vmatprep.subr.bf16.mxu0 %v6442
    %8537 = vmatpush1.bf16.msra.mxu0 %v6441
    %8538 = vmatprep.subr.bf16.mxu0 %v6434
    %8539 = vmatpush1.bf16.msra.mxu0 %v6433
    %8540 = vmatprep.subr.bf16.mxu0 %v6554
    %8541 = vmatpush2.bf16.msra.mxu0 %v6553
    %8542 = vmatprep.subr.bf16.mxu0 %v6546
    %8543 = vmatpush2.bf16.msra.mxu0 %v6545
    %8544 = vmatprep.subr.bf16.mxu0 %v6538
    %8545 = vmatpush2.bf16.msra.mxu0 %v6537
    %8546 = vmatprep.subr.bf16.mxu0 %v6530
    %8547 = vmatpush2.bf16.msra.mxu0 %v6529
    %8548 = vmatprep.subr.bf16.mxu0 %v6522
    %8549 = vmatpush2.bf16.msra.mxu0 %v6521
    %8550 = vmatprep.subr.bf16.mxu0 %v6514
    %8551 = vmatpush2.bf16.msra.mxu0 %v6513
    %8552 = vmatprep.subr.bf16.mxu0 %v6506
    %8553 = vmatpush2.bf16.msra.mxu0 %v6505
    %8554 = vmatprep.subr.bf16.mxu0 %v6498
    %8555 = vmatpush2.bf16.msra.mxu0 %v6497
    %8556 = vmatprep.mubr.bf16.mxu0 %v137
    %8557 = vmatmul.mubr.bf16.gmra.mxu0 %v136
    %v8558 = vpop.f32.mrf.mxu0
    %v8559 = vadd.f32 %v8518, %v8558
    %v8560 = vpop.f32.mrf.mxu0
    %v8561 = vadd.f32 %v8520, %v8560
    %v8562 = vpop.f32.mrf.mxu0
    %v8563 = vpop.f32.mrf.mxu0
    %8564 = vdwg.mxu0
    %8565 = vmatprep.subr.bf16.mxu0 %v5596
    %8566 = vmatpush1.bf16.msra.mxu0 %v5595
    %8567 = vmatprep.subr.bf16.mxu0 %v5588
    %8568 = vmatpush1.bf16.msra.mxu0 %v5587
    %8569 = vmatprep.subr.bf16.mxu0 %v5580
    %8570 = vmatpush1.bf16.msra.mxu0 %v5579
    %8571 = vmatprep.subr.bf16.mxu0 %v5572
    %8572 = vmatpush1.bf16.msra.mxu0 %v5571
    %8573 = vmatprep.subr.bf16.mxu0 %v5564
    %8574 = vmatpush1.bf16.msra.mxu0 %v5563
    %8575 = vmatprep.subr.bf16.mxu0 %v5556
    %8576 = vmatpush1.bf16.msra.mxu0 %v5555
    %8577 = vmatprep.subr.bf16.mxu0 %v5548
    %8578 = vmatpush1.bf16.msra.mxu0 %v5547
    %8579 = vmatprep.subr.bf16.mxu0 %v5540
    %8580 = vmatpush1.bf16.msra.mxu0 %v5539
    %8581 = vmatprep.subr.bf16.mxu0 %v5660
    %8582 = vmatpush2.bf16.msra.mxu0 %v5659
    %8583 = vmatprep.subr.bf16.mxu0 %v5652
    %8584 = vmatpush2.bf16.msra.mxu0 %v5651
    %8585 = vmatprep.subr.bf16.mxu0 %v5644
    %8586 = vmatpush2.bf16.msra.mxu0 %v5643
    %8587 = vmatprep.subr.bf16.mxu0 %v5636
    %8588 = vmatpush2.bf16.msra.mxu0 %v5635
    %8589 = vmatprep.subr.bf16.mxu0 %v5628
    %8590 = vmatpush2.bf16.msra.mxu0 %v5627
    %8591 = vmatprep.subr.bf16.mxu0 %v5620
    %8592 = vmatpush2.bf16.msra.mxu0 %v5619
    %8593 = vmatprep.subr.bf16.mxu0 %v5612
    %8594 = vmatpush2.bf16.msra.mxu0 %v5611
    %8595 = vmatprep.subr.bf16.mxu0 %v5604
    %8596 = vmatpush2.bf16.msra.mxu0 %v5603
    %8597 = vmatprep.mubr.bf16.mxu0 %v123
    %8598 = vmatmul.mubr.bf16.gmra.mxu0 %v122
    %v8599 = vpop.f32.mrf.mxu0
    %v8600 = vadd.f32 %v2455, %v8599
    %v8601 = vpop.f32.mrf.mxu0
    %v8602 = vadd.f32 %v2457, %v8601
    %v8603 = vpop.f32.mrf.mxu0
    %v8604 = vpop.f32.mrf.mxu0
    %8605 = vdwg.mxu0
    %8606 = vmatprep.subr.bf16.mxu0 %v5724
    %8607 = vmatpush1.bf16.msra.mxu0 %v5723
    %8608 = vmatprep.subr.bf16.mxu0 %v5716
    %8609 = vmatpush1.bf16.msra.mxu0 %v5715
    %8610 = vmatprep.subr.bf16.mxu0 %v5708
    %8611 = vmatpush1.bf16.msra.mxu0 %v5707
    %8612 = vmatprep.subr.bf16.mxu0 %v5700
    %8613 = vmatpush1.bf16.msra.mxu0 %v5699
    %8614 = vmatprep.subr.bf16.mxu0 %v5692
    %8615 = vmatpush1.bf16.msra.mxu0 %v5691
    %8616 = vmatprep.subr.bf16.mxu0 %v5684
    %8617 = vmatpush1.bf16.msra.mxu0 %v5683
    %8618 = vmatprep.subr.bf16.mxu0 %v5676
    %8619 = vmatpush1.bf16.msra.mxu0 %v5675
    %8620 = vmatprep.subr.bf16.mxu0 %v5668
    %8621 = vmatpush1.bf16.msra.mxu0 %v5667
    %8622 = vmatprep.subr.bf16.mxu0 %v5788
    %8623 = vmatpush2.bf16.msra.mxu0 %v5787
    %8624 = vmatprep.subr.bf16.mxu0 %v5780
    %8625 = vmatpush2.bf16.msra.mxu0 %v5779
    %8626 = vmatprep.subr.bf16.mxu0 %v5772
    %8627 = vmatpush2.bf16.msra.mxu0 %v5771
    %8628 = vmatprep.subr.bf16.mxu0 %v5764
    %8629 = vmatpush2.bf16.msra.mxu0 %v5763
    %8630 = vmatprep.subr.bf16.mxu0 %v5756
    %8631 = vmatpush2.bf16.msra.mxu0 %v5755
    %8632 = vmatprep.subr.bf16.mxu0 %v5748
    %8633 = vmatpush2.bf16.msra.mxu0 %v5747
    %8634 = vmatprep.subr.bf16.mxu0 %v5740
    %8635 = vmatpush2.bf16.msra.mxu0 %v5739
    %8636 = vmatprep.subr.bf16.mxu0 %v5732
    %8637 = vmatpush2.bf16.msra.mxu0 %v5731
    %8638 = vmatprep.mubr.bf16.mxu0 %v125
    %8639 = vmatmul.mubr.bf16.gmra.mxu0 %v124
    %v8640 = vpop.f32.mrf.mxu0
    %v8641 = vadd.f32 %v8600, %v8640
    %v8642 = vpop.f32.mrf.mxu0
    %v8643 = vadd.f32 %v8602, %v8642
    %v8644 = vpop.f32.mrf.mxu0
    %v8645 = vpop.f32.mrf.mxu0
    %8646 = vdwg.mxu0
    %8647 = vmatprep.subr.bf16.mxu0 %v5852
    %8648 = vmatpush1.bf16.msra.mxu0 %v5851
    %8649 = vmatprep.subr.bf16.mxu0 %v5844
    %8650 = vmatpush1.bf16.msra.mxu0 %v5843
    %8651 = vmatprep.subr.bf16.mxu0 %v5836
    %8652 = vmatpush1.bf16.msra.mxu0 %v5835
    %8653 = vmatprep.subr.bf16.mxu0 %v5828
    %8654 = vmatpush1.bf16.msra.mxu0 %v5827
    %8655 = vmatprep.subr.bf16.mxu0 %v5820
    %8656 = vmatpush1.bf16.msra.mxu0 %v5819
    %8657 = vmatprep.subr.bf16.mxu0 %v5812
    %8658 = vmatpush1.bf16.msra.mxu0 %v5811
    %8659 = vmatprep.subr.bf16.mxu0 %v5804
    %8660 = vmatpush1.bf16.msra.mxu0 %v5803
    %8661 = vmatprep.subr.bf16.mxu0 %v5796
    %8662 = vmatpush1.bf16.msra.mxu0 %v5795
    %8663 = vmatprep.subr.bf16.mxu0 %v5916
    %8664 = vmatpush2.bf16.msra.mxu0 %v5915
    %8665 = vmatprep.subr.bf16.mxu0 %v5908
    %8666 = vmatpush2.bf16.msra.mxu0 %v5907
    %8667 = vmatprep.subr.bf16.mxu0 %v5900
    %8668 = vmatpush2.bf16.msra.mxu0 %v5899
    %8669 = vmatprep.subr.bf16.mxu0 %v5892
    %8670 = vmatpush2.bf16.msra.mxu0 %v5891
    %8671 = vmatprep.subr.bf16.mxu0 %v5884
    %8672 = vmatpush2.bf16.msra.mxu0 %v5883
    %8673 = vmatprep.subr.bf16.mxu0 %v5876
    %8674 = vmatpush2.bf16.msra.mxu0 %v5875
    %8675 = vmatprep.subr.bf16.mxu0 %v5868
    %8676 = vmatpush2.bf16.msra.mxu0 %v5867
    %8677 = vmatprep.subr.bf16.mxu0 %v5860
    %8678 = vmatpush2.bf16.msra.mxu0 %v5859
    %8679 = vmatprep.mubr.bf16.mxu0 %v127
    %8680 = vmatmul.mubr.bf16.gmra.mxu0 %v126
    %v8681 = vpop.f32.mrf.mxu0
    %v8682 = vadd.f32 %v8641, %v8681
    %v8683 = vpop.f32.mrf.mxu0
    %v8684 = vadd.f32 %v8643, %v8683
    %v8685 = vpop.f32.mrf.mxu0
    %v8686 = vpop.f32.mrf.mxu0
    %8687 = vdwg.mxu0
    %8688 = vmatprep.subr.bf16.mxu0 %v5980
    %8689 = vmatpush1.bf16.msra.mxu0 %v5979
    %8690 = vmatprep.subr.bf16.mxu0 %v5972
    %8691 = vmatpush1.bf16.msra.mxu0 %v5971
    %8692 = vmatprep.subr.bf16.mxu0 %v5964
    %8693 = vmatpush1.bf16.msra.mxu0 %v5963
    %8694 = vmatprep.subr.bf16.mxu0 %v5956
    %8695 = vmatpush1.bf16.msra.mxu0 %v5955
    %8696 = vmatprep.subr.bf16.mxu0 %v5948
    %8697 = vmatpush1.bf16.msra.mxu0 %v5947
    %8698 = vmatprep.subr.bf16.mxu0 %v5940
    %8699 = vmatpush1.bf16.msra.mxu0 %v5939
    %8700 = vmatprep.subr.bf16.mxu0 %v5932
    %8701 = vmatpush1.bf16.msra.mxu0 %v5931
    %8702 = vmatprep.subr.bf16.mxu0 %v5924
    %8703 = vmatpush1.bf16.msra.mxu0 %v5923
    %8704 = vmatprep.subr.bf16.mxu0 %v6044
    %8705 = vmatpush2.bf16.msra.mxu0 %v6043
    %8706 = vmatprep.subr.bf16.mxu0 %v6036
    %8707 = vmatpush2.bf16.msra.mxu0 %v6035
    %8708 = vmatprep.subr.bf16.mxu0 %v6028
    %8709 = vmatpush2.bf16.msra.mxu0 %v6027
    %8710 = vmatprep.subr.bf16.mxu0 %v6020
    %8711 = vmatpush2.bf16.msra.mxu0 %v6019
    %8712 = vmatprep.subr.bf16.mxu0 %v6012
    %8713 = vmatpush2.bf16.msra.mxu0 %v6011
    %8714 = vmatprep.subr.bf16.mxu0 %v6004
    %8715 = vmatpush2.bf16.msra.mxu0 %v6003
    %8716 = vmatprep.subr.bf16.mxu0 %v5996
    %8717 = vmatpush2.bf16.msra.mxu0 %v5995
    %8718 = vmatprep.subr.bf16.mxu0 %v5988
    %8719 = vmatpush2.bf16.msra.mxu0 %v5987
    %8720 = vmatprep.mubr.bf16.mxu0 %v129
    %8721 = vmatmul.mubr.bf16.gmra.mxu0 %v128
    %v8722 = vpop.f32.mrf.mxu0
    %v8723 = vadd.f32 %v8682, %v8722
    %v8724 = vpop.f32.mrf.mxu0
    %v8725 = vadd.f32 %v8684, %v8724
    %v8726 = vpop.f32.mrf.mxu0
    %v8727 = vpop.f32.mrf.mxu0
    %8728 = vdwg.mxu0
    %8729 = vmatprep.subr.bf16.mxu0 %v6108
    %8730 = vmatpush1.bf16.msra.mxu0 %v6107
    %8731 = vmatprep.subr.bf16.mxu0 %v6100
    %8732 = vmatpush1.bf16.msra.mxu0 %v6099
    %8733 = vmatprep.subr.bf16.mxu0 %v6092
    %8734 = vmatpush1.bf16.msra.mxu0 %v6091
    %8735 = vmatprep.subr.bf16.mxu0 %v6084
    %8736 = vmatpush1.bf16.msra.mxu0 %v6083
    %8737 = vmatprep.subr.bf16.mxu0 %v6076
    %8738 = vmatpush1.bf16.msra.mxu0 %v6075
    %8739 = vmatprep.subr.bf16.mxu0 %v6068
    %8740 = vmatpush1.bf16.msra.mxu0 %v6067
    %8741 = vmatprep.subr.bf16.mxu0 %v6060
    %8742 = vmatpush1.bf16.msra.mxu0 %v6059
    %8743 = vmatprep.subr.bf16.mxu0 %v6052
    %8744 = vmatpush1.bf16.msra.mxu0 %v6051
    %8745 = vmatprep.subr.bf16.mxu0 %v6172
    %8746 = vmatpush2.bf16.msra.mxu0 %v6171
    %8747 = vmatprep.subr.bf16.mxu0 %v6164
    %8748 = vmatpush2.bf16.msra.mxu0 %v6163
    %8749 = vmatprep.subr.bf16.mxu0 %v6156
    %8750 = vmatpush2.bf16.msra.mxu0 %v6155
    %8751 = vmatprep.subr.bf16.mxu0 %v6148
    %8752 = vmatpush2.bf16.msra.mxu0 %v6147
    %8753 = vmatprep.subr.bf16.mxu0 %v6140
    %8754 = vmatpush2.bf16.msra.mxu0 %v6139
    %8755 = vmatprep.subr.bf16.mxu0 %v6132
    %8756 = vmatpush2.bf16.msra.mxu0 %v6131
    %8757 = vmatprep.subr.bf16.mxu0 %v6124
    %8758 = vmatpush2.bf16.msra.mxu0 %v6123
    %8759 = vmatprep.subr.bf16.mxu0 %v6116
    %8760 = vmatpush2.bf16.msra.mxu0 %v6115
    %8761 = vmatprep.mubr.bf16.mxu0 %v131
    %8762 = vmatmul.mubr.bf16.gmra.mxu0 %v130
    %v8763 = vpop.f32.mrf.mxu0
    %v8764 = vadd.f32 %v8723, %v8763
    %v8765 = vpop.f32.mrf.mxu0
    %v8766 = vadd.f32 %v8725, %v8765
    %v8767 = vpop.f32.mrf.mxu0
    %v8768 = vpop.f32.mrf.mxu0
    %8769 = vdwg.mxu0
    %8770 = vmatprep.subr.bf16.mxu0 %v6236
    %8771 = vmatpush1.bf16.msra.mxu0 %v6235
    %8772 = vmatprep.subr.bf16.mxu0 %v6228
    %8773 = vmatpush1.bf16.msra.mxu0 %v6227
    %8774 = vmatprep.subr.bf16.mxu0 %v6220
    %8775 = vmatpush1.bf16.msra.mxu0 %v6219
    %8776 = vmatprep.subr.bf16.mxu0 %v6212
    %8777 = vmatpush1.bf16.msra.mxu0 %v6211
    %8778 = vmatprep.subr.bf16.mxu0 %v6204
    %8779 = vmatpush1.bf16.msra.mxu0 %v6203
    %8780 = vmatprep.subr.bf16.mxu0 %v6196
    %8781 = vmatpush1.bf16.msra.mxu0 %v6195
    %8782 = vmatprep.subr.bf16.mxu0 %v6188
    %8783 = vmatpush1.bf16.msra.mxu0 %v6187
    %8784 = vmatprep.subr.bf16.mxu0 %v6180
    %8785 = vmatpush1.bf16.msra.mxu0 %v6179
    %8786 = vmatprep.subr.bf16.mxu0 %v6300
    %8787 = vmatpush2.bf16.msra.mxu0 %v6299
    %8788 = vmatprep.subr.bf16.mxu0 %v6292
    %8789 = vmatpush2.bf16.msra.mxu0 %v6291
    %8790 = vmatprep.subr.bf16.mxu0 %v6284
    %8791 = vmatpush2.bf16.msra.mxu0 %v6283
    %8792 = vmatprep.subr.bf16.mxu0 %v6276
    %8793 = vmatpush2.bf16.msra.mxu0 %v6275
    %8794 = vmatprep.subr.bf16.mxu0 %v6268
    %8795 = vmatpush2.bf16.msra.mxu0 %v6267
    %8796 = vmatprep.subr.bf16.mxu0 %v6260
    %8797 = vmatpush2.bf16.msra.mxu0 %v6259
    %8798 = vmatprep.subr.bf16.mxu0 %v6252
    %8799 = vmatpush2.bf16.msra.mxu0 %v6251
    %8800 = vmatprep.subr.bf16.mxu0 %v6244
    %8801 = vmatpush2.bf16.msra.mxu0 %v6243
    %8802 = vmatprep.mubr.bf16.mxu0 %v133
    %8803 = vmatmul.mubr.bf16.gmra.mxu0 %v132
    %v8804 = vpop.f32.mrf.mxu0
    %v8805 = vadd.f32 %v8764, %v8804
    %v8806 = vpop.f32.mrf.mxu0
    %v8807 = vadd.f32 %v8766, %v8806
    %v8808 = vpop.f32.mrf.mxu0
    %v8809 = vpop.f32.mrf.mxu0
    %8810 = vdwg.mxu0
    %8811 = vmatprep.subr.bf16.mxu0 %v6364
    %8812 = vmatpush1.bf16.msra.mxu0 %v6363
    %8813 = vmatprep.subr.bf16.mxu0 %v6356
    %8814 = vmatpush1.bf16.msra.mxu0 %v6355
    %8815 = vmatprep.subr.bf16.mxu0 %v6348
    %8816 = vmatpush1.bf16.msra.mxu0 %v6347
    %8817 = vmatprep.subr.bf16.mxu0 %v6340
    %8818 = vmatpush1.bf16.msra.mxu0 %v6339
    %8819 = vmatprep.subr.bf16.mxu0 %v6332
    %8820 = vmatpush1.bf16.msra.mxu0 %v6331
    %8821 = vmatprep.subr.bf16.mxu0 %v6324
    %8822 = vmatpush1.bf16.msra.mxu0 %v6323
    %8823 = vmatprep.subr.bf16.mxu0 %v6316
    %8824 = vmatpush1.bf16.msra.mxu0 %v6315
    %8825 = vmatprep.subr.bf16.mxu0 %v6308
    %8826 = vmatpush1.bf16.msra.mxu0 %v6307
    %8827 = vmatprep.subr.bf16.mxu0 %v6428
    %8828 = vmatpush2.bf16.msra.mxu0 %v6427
    %8829 = vmatprep.subr.bf16.mxu0 %v6420
    %8830 = vmatpush2.bf16.msra.mxu0 %v6419
    %8831 = vmatprep.subr.bf16.mxu0 %v6412
    %8832 = vmatpush2.bf16.msra.mxu0 %v6411
    %8833 = vmatprep.subr.bf16.mxu0 %v6404
    %8834 = vmatpush2.bf16.msra.mxu0 %v6403
    %8835 = vmatprep.subr.bf16.mxu0 %v6396
    %8836 = vmatpush2.bf16.msra.mxu0 %v6395
    %8837 = vmatprep.subr.bf16.mxu0 %v6388
    %8838 = vmatpush2.bf16.msra.mxu0 %v6387
    %8839 = vmatprep.subr.bf16.mxu0 %v6380
    %8840 = vmatpush2.bf16.msra.mxu0 %v6379
    %8841 = vmatprep.subr.bf16.mxu0 %v6372
    %8842 = vmatpush2.bf16.msra.mxu0 %v6371
    %8843 = vmatprep.mubr.bf16.mxu0 %v135
    %8844 = vmatmul.mubr.bf16.gmra.mxu0 %v134
    %v8845 = vpop.f32.mrf.mxu0
    %v8846 = vadd.f32 %v8805, %v8845
    %v8847 = vpop.f32.mrf.mxu0
    %v8848 = vadd.f32 %v8807, %v8847
    %v8849 = vpop.f32.mrf.mxu0
    %v8850 = vpop.f32.mrf.mxu0
    %8851 = vdwg.mxu0
    %8852 = vmatprep.subr.bf16.mxu0 %v6492
    %8853 = vmatpush1.bf16.msra.mxu0 %v6491
    %8854 = vmatprep.subr.bf16.mxu0 %v6484
    %8855 = vmatpush1.bf16.msra.mxu0 %v6483
    %8856 = vmatprep.subr.bf16.mxu0 %v6476
    %8857 = vmatpush1.bf16.msra.mxu0 %v6475
    %8858 = vmatprep.subr.bf16.mxu0 %v6468
    %8859 = vmatpush1.bf16.msra.mxu0 %v6467
    %8860 = vmatprep.subr.bf16.mxu0 %v6460
    %8861 = vmatpush1.bf16.msra.mxu0 %v6459
    %8862 = vmatprep.subr.bf16.mxu0 %v6452
    %8863 = vmatpush1.bf16.msra.mxu0 %v6451
    %8864 = vmatprep.subr.bf16.mxu0 %v6444
    %8865 = vmatpush1.bf16.msra.mxu0 %v6443
    %8866 = vmatprep.subr.bf16.mxu0 %v6436
    %8867 = vmatpush1.bf16.msra.mxu0 %v6435
    %8868 = vmatprep.subr.bf16.mxu0 %v6556
    %8869 = vmatpush2.bf16.msra.mxu0 %v6555
    %8870 = vmatprep.subr.bf16.mxu0 %v6548
    %8871 = vmatpush2.bf16.msra.mxu0 %v6547
    %8872 = vmatprep.subr.bf16.mxu0 %v6540
    %8873 = vmatpush2.bf16.msra.mxu0 %v6539
    %8874 = vmatprep.subr.bf16.mxu0 %v6532
    %8875 = vmatpush2.bf16.msra.mxu0 %v6531
    %8876 = vmatprep.subr.bf16.mxu0 %v6524
    %8877 = vmatpush2.bf16.msra.mxu0 %v6523
    %8878 = vmatprep.subr.bf16.mxu0 %v6516
    %8879 = vmatpush2.bf16.msra.mxu0 %v6515
    %8880 = vmatprep.subr.bf16.mxu0 %v6508
    %8881 = vmatpush2.bf16.msra.mxu0 %v6507
    %8882 = vmatprep.subr.bf16.mxu0 %v6500
    %8883 = vmatpush2.bf16.msra.mxu0 %v6499
    %8884 = vmatprep.mubr.bf16.mxu0 %v137
    %8885 = vmatmul.mubr.bf16.gmra.mxu0 %v136
    %v8886 = vpop.f32.mrf.mxu0
    %v8887 = vadd.f32 %v8846, %v8886
    %v8888 = vpop.f32.mrf.mxu0
    %v8889 = vadd.f32 %v8848, %v8888
    %v8890 = vpop.f32.mrf.mxu0
    %v8891 = vpop.f32.mrf.mxu0
    %8892 = vdwg.mxu0
    %v8893 = vld [vmem:[#allocation11] sm:$0xff]
    %v8895 = vlaneseq
    %v8896 = vshrl.u32 %v8895, 7
    %v8897 = vsub.s32 0, %v8896
    %v8898 = vrot.slane %v8893, %v8897
    %v8899 = vlaneseq
    %v8900 = vshrl.u32 %v8899, 7
    %v8901 = vsub.s32 1, %v8900
    %v8902 = vrot.slane %v8893, %v8901
    %v8903 = vlaneseq
    %v8904 = vshrl.u32 %v8903, 7
    %v8905 = vsub.s32 2, %v8904
    %v8906 = vrot.slane %v8893, %v8905
    %v8907 = vlaneseq
    %v8908 = vshrl.u32 %v8907, 7
    %v8909 = vsub.s32 3, %v8908
    %v8910 = vrot.slane %v8893, %v8909
    %v8911 = vlaneseq
    %v8912 = vshrl.u32 %v8911, 7
    %v8913 = vsub.s32 4, %v8912
    %v8914 = vrot.slane %v8893, %v8913
    %v8915 = vlaneseq
    %v8916 = vshrl.u32 %v8915, 7
    %v8917 = vsub.s32 5, %v8916
    %v8918 = vrot.slane %v8893, %v8917
    %v8919 = vlaneseq
    %v8920 = vshrl.u32 %v8919, 7
    %v8921 = vsub.s32 6, %v8920
    %v8922 = vrot.slane %v8893, %v8921
    %v8923 = vlaneseq
    %v8924 = vshrl.u32 %v8923, 7
    %v8925 = vsub.s32 7, %v8924
    %v8926 = vrot.slane %v8893, %v8925
    %v8935 = vadd.f32 %v7903, %v8898
    %v8936 = vadd.f32 %v7905, %v8902
    %v8937 = vadd.f32 %v8231, %v8906
    %v8938 = vadd.f32 %v8233, %v8910
    %v8939 = vadd.f32 %v8559, %v8914
    %v8940 = vadd.f32 %v8561, %v8918
    %v8941 = vadd.f32 %v8887, %v8922
    %v8942 = vadd.f32 %v8889, %v8926
    %vm8943 = vcmp.ge.f32.partialorder %v8935, 0.0
    %vm8944 = vcmp.ge.f32.partialorder %v8936, 0.0
    %vm8945 = vcmp.ge.f32.partialorder %v8937, 0.0
    %vm8946 = vcmp.ge.f32.partialorder %v8938, 0.0
    %vm8947 = vcmp.ge.f32.partialorder %v8939, 0.0
    %vm8948 = vcmp.ge.f32.partialorder %v8940, 0.0
    %vm8949 = vcmp.ge.f32.partialorder %v8941, 0.0
    %vm8950 = vcmp.ge.f32.partialorder %v8942, 0.0
    %v8951 = vmul.f32 %v8935, 0.2
    %v8952 = vmul.f32 %v8936, 0.2
    %v8953 = vmul.f32 %v8937, 0.2
    %v8954 = vmul.f32 %v8938, 0.2
    %v8955 = vmul.f32 %v8939, 0.2
    %v8956 = vmul.f32 %v8940, 0.2
    %v8957 = vmul.f32 %v8941, 0.2
    %v8958 = vmul.f32 %v8942, 0.2
    %v8959 = vsel %vm8943, %v8935, %v8951
    %v8960 = vsel %vm8944, %v8936, %v8952
    %v8961 = vsel %vm8945, %v8937, %v8953
    %v8962 = vsel %vm8946, %v8938, %v8954
    %v8963 = vsel %vm8947, %v8939, %v8955
    %v8964 = vsel %vm8948, %v8940, %v8956
    %v8965 = vsel %vm8949, %v8941, %v8957
    %v8966 = vsel %vm8950, %v8942, %v8958
    %8967 = vst [vmem:[#allocation14] sm:$0xff] %v8959
    %8968 = vst [vmem:[#allocation14 + $0x8] sm:$0xff] %v8960
    %8969 = vst [vmem:[#allocation14 + $0x10] sm:$0xff] %v8961
    %8970 = vst [vmem:[#allocation14 + $0x18] sm:$0xff] %v8962
    %8971 = vst [vmem:[#allocation14 + $0x20] sm:$0xff] %v8963
    %8972 = vst [vmem:[#allocation14 + $0x28] sm:$0xff] %v8964
    %8973 = vst [vmem:[#allocation14 + $0x30] sm:$0xff] %v8965
    %8974 = vst [vmem:[#allocation14 + $0x38] sm:$0xff] %v8966
    %v8975 = vld [vmem:[#allocation12] sm:$0xff]
    %v8977 = vlaneseq
    %v8978 = vshrl.u32 %v8977, 7
    %v8979 = vsub.s32 0, %v8978
    %v8980 = vrot.slane %v8975, %v8979
    %v8981 = vlaneseq
    %v8982 = vshrl.u32 %v8981, 7
    %v8983 = vsub.s32 1, %v8982
    %v8984 = vrot.slane %v8975, %v8983
    %v8985 = vlaneseq
    %v8986 = vshrl.u32 %v8985, 7
    %v8987 = vsub.s32 2, %v8986
    %v8988 = vrot.slane %v8975, %v8987
    %v8989 = vlaneseq
    %v8990 = vshrl.u32 %v8989, 7
    %v8991 = vsub.s32 3, %v8990
    %v8992 = vrot.slane %v8975, %v8991
    %v8993 = vlaneseq
    %v8994 = vshrl.u32 %v8993, 7
    %v8995 = vsub.s32 4, %v8994
    %v8996 = vrot.slane %v8975, %v8995
    %v8997 = vlaneseq
    %v8998 = vshrl.u32 %v8997, 7
    %v8999 = vsub.s32 5, %v8998
    %v9000 = vrot.slane %v8975, %v8999
    %v9001 = vlaneseq
    %v9002 = vshrl.u32 %v9001, 7
    %v9003 = vsub.s32 6, %v9002
    %v9004 = vrot.slane %v8975, %v9003
    %v9005 = vlaneseq
    %v9006 = vshrl.u32 %v9005, 7
    %v9007 = vsub.s32 7, %v9006
    %v9008 = vrot.slane %v8975, %v9007
    %v9017 = vmul.f32 %v8959, %v8980
    %v9018 = vmul.f32 %v8960, %v8984
    %v9019 = vmul.f32 %v8961, %v8988
    %v9020 = vmul.f32 %v8962, %v8992
    %v9021 = vmul.f32 %v8963, %v8996
    %v9022 = vmul.f32 %v8964, %v9000
    %v9023 = vmul.f32 %v8965, %v9004
    %v9024 = vmul.f32 %v8966, %v9008
    %v9025 = vadd.f32 %v9017, %v9018
    %v9026 = vadd.f32 %v9025, %v9019
    %v9027 = vadd.f32 %v9026, %v9020
    %v9028 = vadd.f32 %v9027, %v9021
    %v9029 = vadd.f32 %v9028, %v9022
    %v9030 = vadd.f32 %v9029, %v9023
    %v9031 = vadd.f32 %v9030, %v9024
    %9032 = vadd.xlane.f32.xlu0 %v9031
    %v9033 = vpop.xlane.xlu0 %9032
    %v9034 = vld [vmem:[#allocation2] sm:$0x1]
    %v9036 = vlaneseq
    %v9037 = vshrl.u32 %v9036, 7
    %v9038 = vsub.s32 0, %v9037
    %v9039 = vrot.slane %v9034, %v9038
    %v9041 = vadd.f32 %v9033, %v9039
    %vm9042 = vcmask 7168
    %9043 = vst.msk [vmem:[%s7] sm:$0xff] %vm9042, %v9041
    // Predicated region
    $region54: #{tpu_custom_call.1} parent=1 // pred_check
      _
    $region55: #{tpu_custom_call.1} parent=1 // pred_check_branch
      %9045 = sbr.rel (0) target = $region57
    $region56: #{tpu_custom_call.1} parent=1 // pred_region
      _
    $region57: #{tpu_custom_call.1} parent=1 // pred_fallthru
      _
    // Predicated region
    $region58: #{tpu_custom_call.1} parent=1 // pred_check
      _
    $region59: #{tpu_custom_call.1} parent=1 // pred_check_branch
      %9047 = sbr.rel (0) target = $region61
    $region60: #{tpu_custom_call.1} parent=1 // pred_region
      %s9049 = ssub.s32 1024, 1024
      %9050 = vsyncadd [#allocation5], %s9049
      %s9052 = sshll.u32 [#allocation14], 4
      %s9053 = int_to_ptr.vmem [resolvable:$true] %s9052
      %9055 = dma.vmem_to_hbm [thread:$0]  %s9053, 1024, %s8, [#allocation5]
    $region61: #{tpu_custom_call.1} parent=1 // pred_fallthru
      _
    // Predicated region
    $region62: #{tpu_custom_call.1} parent=1 // pred_check
      _
    $region63: #{tpu_custom_call.1} parent=1 // pred_check_branch
      %9057 = sbr.rel (0) target = $region65
    $region64: #{tpu_custom_call.1} parent=1 // pred_region
      _
    $region65: #{tpu_custom_call.1} parent=1 // pred_fallthru
      _
    // Predicated region
    $region66: #{tpu_custom_call.1} parent=1 // pred_check
      _
    $region67: #{tpu_custom_call.1} parent=1 // pred_check_branch
      %9059 = sbr.rel (0) target = $region69
    $region68: #{tpu_custom_call.1} parent=1 // pred_region
      %9060 = dma.done [#allocation5], 1024
    $region69: #{tpu_custom_call.1} parent=1 // pred_fallthru
      _
    %9061 = vsyncpa [#allocation4], 1
    %9062 = vsyncpa [#allocation7], 1
    %9063 = vsyncpa [#allocation10], 1
    %9064 = vsyncpa [#allocation13], 1
    %9065 = vsyncpa [#allocation5], 1

</llo_original>
